<compile_context>
chip_gen: v7x
topology: tpu7x:2x2x1
jax: 0.10.0
libtpu: 0.0.40
codegen_flags: <defaults>
</compile_context>

<pallas_src>
import functools

import jax
import jax.numpy as jnp
import numpy as np
from jax.experimental import pallas as pl
from jax.experimental.pallas import tpu as pltpu


def _round_up(x, m):
    return (x + m - 1) // m * m


def _conv_taps_kernel(xm_ref, xh_ref, w_ref, b_ref, o_ref, xwin_ref, *, tl, offs):
    """One grid step: TL flattened (padded) output positions for one sample.

    xm_ref  : (cin_p, tl)         main input window (flattened padded spatial on lanes)
    xh_ref  : (cin_p, h_pad)      halo window (next h_pad lanes) so shifted taps stay in-bounds
    w_ref   : (T, cout_p, cin_p)  per-tap weight tiles, t = dz*kh*kw + dy*kw + dx
    b_ref   : (cout_p, 1)         bias column
    o_ref   : (cout_p, tl)        lane-dense output block (channels on sublanes)
    xwin_ref: (cin_p, tl + h_pad) VMEM scratch: contiguous main+halo window
    """
    # Assemble the contiguous window (main block + halo) once in VMEM (cheap: ~tens of vregs).
    xwin_ref[:, :tl] = xm_ref[...]
    xwin_ref[:, tl:] = xh_ref[...]

    # Per-tap accumulating dots (statically unrolled).  The lane-shifted slice never hits
    # VMEM again — it is consumed directly by the MXU — so no im2col store traffic.
    # Bias folded into the first accumulation.
    acc = b_ref[...] + jnp.dot(w_ref[0], xwin_ref[:, offs[0]:offs[0] + tl],
                               preferred_element_type=jnp.float32)
    for t in range(1, len(offs)):
        off = offs[t]
        acc = acc + jnp.dot(w_ref[t], xwin_ref[:, off:off + tl],
                            preferred_element_type=jnp.float32)

    # Sigmoid: exp -> EUP slot; the divide is a handful of VPU ops per vreg.
    o_ref[...] = 1.0 / (1.0 + jnp.exp(-acc))


def conv3d_sigmoid_pallas(x, w, b, stride, padding, tl_req=2048):
    """x: (N, Cin, D, H, W); w: (Cout, Cin, kd, kh, kw); b: (Cout,)."""
    N, Cin, D, H, W = x.shape
    Cout, Cin_w, kd, kh, kw = w.shape
    assert Cin == Cin_w
    s, p = int(stride), int(padding)

    Dp, Hp, Wp = D + 2 * p, H + 2 * p, W + 2 * p
    # Stride-1 "valid" extents on the padded grid; a strided conv is a subsample of it.
    Do1, Ho1, Wo1 = Dp - kd + 1, Hp - kh + 1, Wp - kw + 1
    Do = (D + 2 * p - kd) // s + 1
    Ho = (H + 2 * p - kh) // s + 1
    Wo = (W + 2 * p - kw) // s + 1
    # TODO(synk): for stride > 1 this still evaluates every stride-1 position and the
    # wrapper subsamples; a strided output index map would skip the ~(1 - 1/s^3) waste.

    T = kd * kh * kw
    cin_p = _round_up(Cin, 8)
    cout_p = _round_up(Cout, 8)

    # Flattened-padded-spatial offset of each conv tap (per sample).
    offs = tuple(dz * Hp * Wp + dy * Wp + dx
                 for dz in range(kd) for dy in range(kh) for dx in range(kw))
    halo = offs[-1]
    h_pad = max(128, _round_up(halo, 128))        # halo window width (lane-aligned)

    L = Dp * Hp * Wp                              # flattened padded length per sample
    # TL: multiple of h_pad (so the halo BlockSpec index is integral), >= h_pad,
    # clamped so tiny volumes don't pay a huge tail.
    tl = _round_up(max(tl_req, h_pad), h_pad)
    tl = min(tl, _round_up(L, h_pad))
    ratio = tl // h_pad
    nb = pl.cdiv(L, tl)
    Lpad = nb * tl + h_pad                        # last block's halo stays in-bounds

    # ---- layout glue (NO N<->C transpose; N stays leading and becomes a grid axis) ----
    xp = jnp.pad(x.astype(jnp.float32),
                 ((0, 0), (0, cin_p - Cin), (p, p), (p, p), (p, p)))   # channels+spatial, one pad
    xflat = jnp.pad(xp.reshape(N, cin_p, L), ((0, 0), (0, 0), (0, Lpad - L)))  # lane tail

    # Weights: (Cout, Cin, kd, kh, kw) -> (T, cout_p, cin_p), tap-major (matches offs order).
    w_t = jnp.transpose(w.astype(jnp.float32), (2, 3, 4, 0, 1)).reshape(T, Cout, Cin)
    w_t = jnp.pad(w_t, ((0, 0), (0, cout_p - Cout), (0, cin_p - Cin)))
    b2 = jnp.pad(b.astype(jnp.float32), (0, cout_p - Cout)).reshape(cout_p, 1)

    kernel = functools.partial(_conv_taps_kernel, tl=tl, offs=offs)

    out_p = pl.pallas_call(
        kernel,
        out_shape=jax.ShapeDtypeStruct((N, cout_p, nb * tl), jnp.float32),
        grid_spec=pltpu.PrefetchScalarGridSpec(
            num_scalar_prefetch=0,
            grid=(N, nb),
            in_specs=[
                pl.BlockSpec((None, cin_p, tl), lambda n, i: (n, 0, i)),                   # main
                pl.BlockSpec((None, cin_p, h_pad), lambda n, i: (n, 0, (i + 1) * ratio)),  # halo
                pl.BlockSpec((T, cout_p, cin_p), lambda n, i: (0, 0, 0)),                  # weights
                pl.BlockSpec((cout_p, 1), lambda n, i: (0, 0)),                            # bias
            ],
            out_specs=pl.BlockSpec((None, cout_p, tl), lambda n, i: (n, 0, i)),
            scratch_shapes=[
                pltpu.VMEM((cin_p, tl + h_pad), jnp.float32),   # contiguous input window
            ],
        ),
        compiler_params=pltpu.CompilerParams(
            dimension_semantics=("parallel", "parallel"),   # N x blocks -> v7x megacore OK
            vmem_limit_bytes=48 * 1024 * 1024,              # fits v7x 64MiB/TC with headroom
        ),
    )(xflat, xflat, w_t, b2)

    # ---- unflatten (no transpose needed): slice valid region + stride subsample --------
    out = out_p[:, :Cout, :L].reshape(N, Cout, Dp, Hp, Wp)
    out = out[:, :, :Do1:s, :Ho1:s, :Wo1:s]
    assert out.shape == (N, Cout, Do, Ho, Wo)
    return out


class OpsLastPallas:
    """Mirrors ops_last.__init__/forward (only `layer` + Sigmoid is used in forward)."""

    def __init__(self, channel_in, channel_inter, kernel, stride, padding, key):
        self.stride = stride
        self.padding = padding
        k_w, k_b = jax.random.split(key)
        fan_in = channel_in * kernel ** 3
        bound = 1.0 / np.sqrt(fan_in)
        # deterministic PyTorch-style uniform init
        self.w = jax.random.uniform(
            k_w, (channel_inter, channel_in, kernel, kernel, kernel),
            minval=-bound, maxval=bound, dtype=jnp.float32)
        self.b = jax.random.uniform(
            k_b, (channel_inter,), minval=-bound, maxval=bound, dtype=jnp.float32)
        # layer_binary / layer_K exist in the torch module but are unused in forward.
        self._fwd = jax.jit(functools.partial(
            conv3d_sigmoid_pallas, stride=stride, padding=padding))

    def __call__(self, x):
        return self._fwd(x, self.w, self.b)


if __name__ == "__main__":
    # small shapes consistent with the module:
    # channel_in=4, channel_inter=3, kernel=3, stride=1, padding=1 (args.K unused in forward)
    key = jax.random.PRNGKey(0)
    k_x, k_params = jax.random.split(key)
    N, Cin, D, H, W = 2, 4, 8, 8, 8
    Cinter, kernel, stride, padding = 3, 3, 1, 1

    x = jax.random.normal(k_x, (N, Cin, D, H, W), dtype=jnp.float32)
    model = OpsLastPallas(Cin, Cinter, kernel, stride, padding, k_params)

    out = jax.block_until_ready(model(x))

    # correctness check against XLA's conv (same semantics as nn.Conv3d + Sigmoid).
    # Note: both sides use default f32 matmul precision (same configuration that passed
    # the previous validation); the kernel accumulates taps in f32 vregs, so splitting the
    # single K=216 dot into 27 K=8 dots does not loosen the parity.
    ref = jax.lax.conv_general_dilated(
        x, model.w, window_strides=(stride,) * 3,
        padding=[(padding, padding)] * 3,
        dimension_numbers=("NCDHW", "OIDHW", "NCDHW"))
    ref = jax.nn.sigmoid(ref + model.b.reshape(1, -1, 1, 1, 1))
    np.testing.assert_allclose(np.asarray(out), np.asarray(ref), rtol=1e-5, atol=1e-5)

    print("KERNEL_OK")
</pallas_src>

<mosaic_0001>
module attributes {stable_mosaic.version = 11 : i64} {
  func.func @_conv_taps_kernel(%arg0: i32, %arg1: i32, %arg2: memref<1x8x1024xf32, #tpu.memory_space<vmem>>, %arg3: memref<1x8x256xf32, #tpu.memory_space<vmem>>, %arg4: memref<27x8x8xf32, #tpu.memory_space<vmem>>, %arg5: memref<8x1xf32, #tpu.memory_space<vmem>>, %arg6: memref<1x8x1024xf32, #tpu.memory_space<vmem>>, %arg7: memref<8x1280xf32, #tpu.memory_space<vmem>>) attributes {dimension_semantics = [#tpu.dimension_semantics<parallel>, #tpu.dimension_semantics<parallel>], iteration_bounds = array<i64: 2, 1>, scalar_prefetch = 0 : i64, scratch_operands = 1 : i64, tpu.core_type = #tpu.core_type<tc>, window_params = [{transform_indices = @transform_0, window_bounds = array<i64: 1, 8, 1024>}, {transform_indices = @transform_1, window_bounds = array<i64: 1, 8, 256>}, {pipeline_mode = #tpu.pipeline_mode<synchronous>, transform_indices = @transform_2, window_bounds = array<i64: 27, 8, 8>}, {pipeline_mode = #tpu.pipeline_mode<synchronous>, transform_indices = @transform_3, window_bounds = array<i64: 8, 1>}, {transform_indices = @transform_4, window_bounds = array<i64: 1, 8, 1024>}]} {
    %c0 = arith.constant 0 : index
    %c0_0 = arith.constant 0 : index
    %c0_1 = arith.constant 0 : index
    %0 = vector.load %arg2[%c0, %c0_0, %c0_1] : memref<1x8x1024xf32, #tpu.memory_space<vmem>>, vector<1x8x1024xf32>
    %1 = vector.shape_cast %0 : vector<1x8x1024xf32> to vector<8x1024xf32>
    %c0_2 = arith.constant 0 : index
    %c0_3 = arith.constant 0 : index
    %2 = vector.load %arg7[%c0_2, %c0_3] : memref<8x1280xf32, #tpu.memory_space<vmem>>, vector<8x1024xf32>
    tpu.vector_store %arg7[%c0_2, %c0_3], %1 {strides = array<i32>} : memref<8x1280xf32, #tpu.memory_space<vmem>>, vector<8x1024xf32>,
    %c0_4 = arith.constant 0 : index
    %c0_5 = arith.constant 0 : index
    %c0_6 = arith.constant 0 : index
    %3 = vector.load %arg3[%c0_4, %c0_5, %c0_6] : memref<1x8x256xf32, #tpu.memory_space<vmem>>, vector<1x8x256xf32>
    %4 = vector.shape_cast %3 : vector<1x8x256xf32> to vector<8x256xf32>
    %c0_7 = arith.constant 0 : index
    %c1024 = arith.constant 1024 : index
    %5 = vector.load %arg7[%c0_7, %c1024] : memref<8x1280xf32, #tpu.memory_space<vmem>>, vector<8x256xf32>
    tpu.vector_store %arg7[%c0_7, %c1024], %4 {strides = array<i32>} : memref<8x1280xf32, #tpu.memory_space<vmem>>, vector<8x256xf32>,
    %c0_8 = arith.constant 0 : index
    %c0_9 = arith.constant 0 : index
    %6 = vector.load %arg5[%c0_8, %c0_9] : memref<8x1xf32, #tpu.memory_space<vmem>>, vector<8x1xf32>
    %c0_10 = arith.constant 0 : index
    %c0_11 = arith.constant 0 : index
    %c0_12 = arith.constant 0 : index
    %7 = vector.load %arg4[%c0_10, %c0_11, %c0_12] : memref<27x8x8xf32, #tpu.memory_space<vmem>>, vector<1x8x8xf32>
    %8 = vector.shape_cast %7 : vector<1x8x8xf32> to vector<8x8xf32>
    %c0_13 = arith.constant 0 : index
    %c0_14 = arith.constant 0 : index
    %9 = vector.load %arg7[%c0_13, %c0_14] : memref<8x1280xf32, #tpu.memory_space<vmem>>, vector<8x1024xf32>
    %cst = arith.constant dense<0.000000e+00> : vector<8x1024xf32>
    %10 = tpu.matmul %8, %9, %cst {dimension_numbers = #tpu.dot_dimension_numbers<[1], [0], [0], [1], [0, 0, 1, 1], [], []>} : vector<8x8xf32>, vector<8x1024xf32>, vector<8x1024xf32> -> vector<8x1024xf32>
    %11 = vector.broadcast %6 : vector<8x1xf32> to vector<8x1024xf32>
    %12 = arith.addf %11, %10 : vector<8x1024xf32>
    %c1 = arith.constant 1 : index
    %c0_15 = arith.constant 0 : index
    %c0_16 = arith.constant 0 : index
    %13 = vector.load %arg4[%c1, %c0_15, %c0_16] : memref<27x8x8xf32, #tpu.memory_space<vmem>>, vector<1x8x8xf32>
    %14 = vector.shape_cast %13 : vector<1x8x8xf32> to vector<8x8xf32>
    %c0_17 = arith.constant 0 : index
    %c1_18 = arith.constant 1 : index
    %15 = vector.load %arg7[%c0_17, %c1_18] : memref<8x1280xf32, #tpu.memory_space<vmem>>, vector<8x1024xf32>
    %cst_19 = arith.constant dense<0.000000e+00> : vector<8x1024xf32>
    %16 = tpu.matmul %14, %15, %cst_19 {dimension_numbers = #tpu.dot_dimension_numbers<[1], [0], [0], [1], [0, 0, 1, 1], [], []>} : vector<8x8xf32>, vector<8x1024xf32>, vector<8x1024xf32> -> vector<8x1024xf32>
    %17 = arith.addf %12, %16 : vector<8x1024xf32>
    %c2 = arith.constant 2 : index
    %c0_20 = arith.constant 0 : index
    %c0_21 = arith.constant 0 : index
    %18 = vector.load %arg4[%c2, %c0_20, %c0_21] : memref<27x8x8xf32, #tpu.memory_space<vmem>>, vector<1x8x8xf32>
    %19 = vector.shape_cast %18 : vector<1x8x8xf32> to vector<8x8xf32>
    %c0_22 = arith.constant 0 : index
    %c2_23 = arith.constant 2 : index
    %20 = vector.load %arg7[%c0_22, %c2_23] : memref<8x1280xf32, #tpu.memory_space<vmem>>, vector<8x1024xf32>
    %cst_24 = arith.constant dense<0.000000e+00> : vector<8x1024xf32>
    %21 = tpu.matmul %19, %20, %cst_24 {dimension_numbers = #tpu.dot_dimension_numbers<[1], [0], [0], [1], [0, 0, 1, 1], [], []>} : vector<8x8xf32>, vector<8x1024xf32>, vector<8x1024xf32> -> vector<8x1024xf32>
    %22 = arith.addf %17, %21 : vector<8x1024xf32>
    %c3 = arith.constant 3 : index
    %c0_25 = arith.constant 0 : index
    %c0_26 = arith.constant 0 : index
    %23 = vector.load %arg4[%c3, %c0_25, %c0_26] : memref<27x8x8xf32, #tpu.memory_space<vmem>>, vector<1x8x8xf32>
    %24 = vector.shape_cast %23 : vector<1x8x8xf32> to vector<8x8xf32>
    %c0_27 = arith.constant 0 : index
    %c10 = arith.constant 10 : index
    %25 = vector.load %arg7[%c0_27, %c10] : memref<8x1280xf32, #tpu.memory_space<vmem>>, vector<8x1024xf32>
    %cst_28 = arith.constant dense<0.000000e+00> : vector<8x1024xf32>
    %26 = tpu.matmul %24, %25, %cst_28 {dimension_numbers = #tpu.dot_dimension_numbers<[1], [0], [0], [1], [0, 0, 1, 1], [], []>} : vector<8x8xf32>, vector<8x1024xf32>, vector<8x1024xf32> -> vector<8x1024xf32>
    %27 = arith.addf %22, %26 : vector<8x1024xf32>
    %c4 = arith.constant 4 : index
    %c0_29 = arith.constant 0 : index
    %c0_30 = arith.constant 0 : index
    %28 = vector.load %arg4[%c4, %c0_29, %c0_30] : memref<27x8x8xf32, #tpu.memory_space<vmem>>, vector<1x8x8xf32>
    %29 = vector.shape_cast %28 : vector<1x8x8xf32> to vector<8x8xf32>
    %c0_31 = arith.constant 0 : index
    %c11 = arith.constant 11 : index
    %30 = vector.load %arg7[%c0_31, %c11] : memref<8x1280xf32, #tpu.memory_space<vmem>>, vector<8x1024xf32>
    %cst_32 = arith.constant dense<0.000000e+00> : vector<8x1024xf32>
    %31 = tpu.matmul %29, %30, %cst_32 {dimension_numbers = #tpu.dot_dimension_numbers<[1], [0], [0], [1], [0, 0, 1, 1], [], []>} : vector<8x8xf32>, vector<8x1024xf32>, vector<8x1024xf32> -> vector<8x1024xf32>
    %32 = arith.addf %27, %31 : vector<8x1024xf32>
    %c5 = arith.constant 5 : index
    %c0_33 = arith.constant 0 : index
    %c0_34 = arith.constant 0 : index
    %33 = vector.load %arg4[%c5, %c0_33, %c0_34] : memref<27x8x8xf32, #tpu.memory_space<vmem>>, vector<1x8x8xf32>
    %34 = vector.shape_cast %33 : vector<1x8x8xf32> to vector<8x8xf32>
    %c0_35 = arith.constant 0 : index
    %c12 = arith.constant 12 : index
    %35 = vector.load %arg7[%c0_35, %c12] : memref<8x1280xf32, #tpu.memory_space<vmem>>, vector<8x1024xf32>
    %cst_36 = arith.constant dense<0.000000e+00> : vector<8x1024xf32>
    %36 = tpu.matmul %34, %35, %cst_36 {dimension_numbers = #tpu.dot_dimension_numbers<[1], [0], [0], [1], [0, 0, 1, 1], [], []>} : vector<8x8xf32>, vector<8x1024xf32>, vector<8x1024xf32> -> vector<8x1024xf32>
    %37 = arith.addf %32, %36 : vector<8x1024xf32>
    %c6 = arith.constant 6 : index
    %c0_37 = arith.constant 0 : index
    %c0_38 = arith.constant 0 : index
    %38 = vector.load %arg4[%c6, %c0_37, %c0_38] : memref<27x8x8xf32, #tpu.memory_space<vmem>>, vector<1x8x8xf32>
    %39 = vector.shape_cast %38 : vector<1x8x8xf32> to vector<8x8xf32>
    %c0_39 = arith.constant 0 : index
    %c20 = arith.constant 20 : index
    %40 = vector.load %arg7[%c0_39, %c20] : memref<8x1280xf32, #tpu.memory_space<vmem>>, vector<8x1024xf32>
    %cst_40 = arith.constant dense<0.000000e+00> : vector<8x1024xf32>
    %41 = tpu.matmul %39, %40, %cst_40 {dimension_numbers = #tpu.dot_dimension_numbers<[1], [0], [0], [1], [0, 0, 1, 1], [], []>} : vector<8x8xf32>, vector<8x1024xf32>, vector<8x1024xf32> -> vector<8x1024xf32>
    %42 = arith.addf %37, %41 : vector<8x1024xf32>
    %c7 = arith.constant 7 : index
    %c0_41 = arith.constant 0 : index
    %c0_42 = arith.constant 0 : index
    %43 = vector.load %arg4[%c7, %c0_41, %c0_42] : memref<27x8x8xf32, #tpu.memory_space<vmem>>, vector<1x8x8xf32>
    %44 = vector.shape_cast %43 : vector<1x8x8xf32> to vector<8x8xf32>
    %c0_43 = arith.constant 0 : index
    %c21 = arith.constant 21 : index
    %45 = vector.load %arg7[%c0_43, %c21] : memref<8x1280xf32, #tpu.memory_space<vmem>>, vector<8x1024xf32>
    %cst_44 = arith.constant dense<0.000000e+00> : vector<8x1024xf32>
    %46 = tpu.matmul %44, %45, %cst_44 {dimension_numbers = #tpu.dot_dimension_numbers<[1], [0], [0], [1], [0, 0, 1, 1], [], []>} : vector<8x8xf32>, vector<8x1024xf32>, vector<8x1024xf32> -> vector<8x1024xf32>
    %47 = arith.addf %42, %46 : vector<8x1024xf32>
    %c8 = arith.constant 8 : index
    %c0_45 = arith.constant 0 : index
    %c0_46 = arith.constant 0 : index
    %48 = vector.load %arg4[%c8, %c0_45, %c0_46] : memref<27x8x8xf32, #tpu.memory_space<vmem>>, vector<1x8x8xf32>
    %49 = vector.shape_cast %48 : vector<1x8x8xf32> to vector<8x8xf32>
    %c0_47 = arith.constant 0 : index
    %c22 = arith.constant 22 : index
    %50 = vector.load %arg7[%c0_47, %c22] : memref<8x1280xf32, #tpu.memory_space<vmem>>, vector<8x1024xf32>
    %cst_48 = arith.constant dense<0.000000e+00> : vector<8x1024xf32>
    %51 = tpu.matmul %49, %50, %cst_48 {dimension_numbers = #tpu.dot_dimension_numbers<[1], [0], [0], [1], [0, 0, 1, 1], [], []>} : vector<8x8xf32>, vector<8x1024xf32>, vector<8x1024xf32> -> vector<8x1024xf32>
    %52 = arith.addf %47, %51 : vector<8x1024xf32>
    %c9 = arith.constant 9 : index
    %c0_49 = arith.constant 0 : index
    %c0_50 = arith.constant 0 : index
    %53 = vector.load %arg4[%c9, %c0_49, %c0_50] : memref<27x8x8xf32, #tpu.memory_space<vmem>>, vector<1x8x8xf32>
    %54 = vector.shape_cast %53 : vector<1x8x8xf32> to vector<8x8xf32>
    %c0_51 = arith.constant 0 : index
    %c100 = arith.constant 100 : index
    %55 = vector.load %arg7[%c0_51, %c100] : memref<8x1280xf32, #tpu.memory_space<vmem>>, vector<8x1024xf32>
    %cst_52 = arith.constant dense<0.000000e+00> : vector<8x1024xf32>
    %56 = tpu.matmul %54, %55, %cst_52 {dimension_numbers = #tpu.dot_dimension_numbers<[1], [0], [0], [1], [0, 0, 1, 1], [], []>} : vector<8x8xf32>, vector<8x1024xf32>, vector<8x1024xf32> -> vector<8x1024xf32>
    %57 = arith.addf %52, %56 : vector<8x1024xf32>
    %c10_53 = arith.constant 10 : index
    %c0_54 = arith.constant 0 : index
    %c0_55 = arith.constant 0 : index
    %58 = vector.load %arg4[%c10_53, %c0_54, %c0_55] : memref<27x8x8xf32, #tpu.memory_space<vmem>>, vector<1x8x8xf32>
    %59 = vector.shape_cast %58 : vector<1x8x8xf32> to vector<8x8xf32>
    %c0_56 = arith.constant 0 : index
    %c101 = arith.constant 101 : index
    %60 = vector.load %arg7[%c0_56, %c101] : memref<8x1280xf32, #tpu.memory_space<vmem>>, vector<8x1024xf32>
    %cst_57 = arith.constant dense<0.000000e+00> : vector<8x1024xf32>
    %61 = tpu.matmul %59, %60, %cst_57 {dimension_numbers = #tpu.dot_dimension_numbers<[1], [0], [0], [1], [0, 0, 1, 1], [], []>} : vector<8x8xf32>, vector<8x1024xf32>, vector<8x1024xf32> -> vector<8x1024xf32>
    %62 = arith.addf %57, %61 : vector<8x1024xf32>
    %c11_58 = arith.constant 11 : index
    %c0_59 = arith.constant 0 : index
    %c0_60 = arith.constant 0 : index
    %63 = vector.load %arg4[%c11_58, %c0_59, %c0_60] : memref<27x8x8xf32, #tpu.memory_space<vmem>>, vector<1x8x8xf32>
    %64 = vector.shape_cast %63 : vector<1x8x8xf32> to vector<8x8xf32>
    %c0_61 = arith.constant 0 : index
    %c102 = arith.constant 102 : index
    %65 = vector.load %arg7[%c0_61, %c102] : memref<8x1280xf32, #tpu.memory_space<vmem>>, vector<8x1024xf32>
    %cst_62 = arith.constant dense<0.000000e+00> : vector<8x1024xf32>
    %66 = tpu.matmul %64, %65, %cst_62 {dimension_numbers = #tpu.dot_dimension_numbers<[1], [0], [0], [1], [0, 0, 1, 1], [], []>} : vector<8x8xf32>, vector<8x1024xf32>, vector<8x1024xf32> -> vector<8x1024xf32>
    %67 = arith.addf %62, %66 : vector<8x1024xf32>
    %c12_63 = arith.constant 12 : index
    %c0_64 = arith.constant 0 : index
    %c0_65 = arith.constant 0 : index
    %68 = vector.load %arg4[%c12_63, %c0_64, %c0_65] : memref<27x8x8xf32, #tpu.memory_space<vmem>>, vector<1x8x8xf32>
    %69 = vector.shape_cast %68 : vector<1x8x8xf32> to vector<8x8xf32>
    %c0_66 = arith.constant 0 : index
    %c110 = arith.constant 110 : index
    %70 = vector.load %arg7[%c0_66, %c110] : memref<8x1280xf32, #tpu.memory_space<vmem>>, vector<8x1024xf32>
    %cst_67 = arith.constant dense<0.000000e+00> : vector<8x1024xf32>
    %71 = tpu.matmul %69, %70, %cst_67 {dimension_numbers = #tpu.dot_dimension_numbers<[1], [0], [0], [1], [0, 0, 1, 1], [], []>} : vector<8x8xf32>, vector<8x1024xf32>, vector<8x1024xf32> -> vector<8x1024xf32>
    %72 = arith.addf %67, %71 : vector<8x1024xf32>
    %c13 = arith.constant 13 : index
    %c0_68 = arith.constant 0 : index
    %c0_69 = arith.constant 0 : index
    %73 = vector.load %arg4[%c13, %c0_68, %c0_69] : memref<27x8x8xf32, #tpu.memory_space<vmem>>, vector<1x8x8xf32>
    %74 = vector.shape_cast %73 : vector<1x8x8xf32> to vector<8x8xf32>
    %c0_70 = arith.constant 0 : index
    %c111 = arith.constant 111 : index
    %75 = vector.load %arg7[%c0_70, %c111] : memref<8x1280xf32, #tpu.memory_space<vmem>>, vector<8x1024xf32>
    %cst_71 = arith.constant dense<0.000000e+00> : vector<8x1024xf32>
    %76 = tpu.matmul %74, %75, %cst_71 {dimension_numbers = #tpu.dot_dimension_numbers<[1], [0], [0], [1], [0, 0, 1, 1], [], []>} : vector<8x8xf32>, vector<8x1024xf32>, vector<8x1024xf32> -> vector<8x1024xf32>
    %77 = arith.addf %72, %76 : vector<8x1024xf32>
    %c14 = arith.constant 14 : index
    %c0_72 = arith.constant 0 : index
    %c0_73 = arith.constant 0 : index
    %78 = vector.load %arg4[%c14, %c0_72, %c0_73] : memref<27x8x8xf32, #tpu.memory_space<vmem>>, vector<1x8x8xf32>
    %79 = vector.shape_cast %78 : vector<1x8x8xf32> to vector<8x8xf32>
    %c0_74 = arith.constant 0 : index
    %c112 = arith.constant 112 : index
    %80 = vector.load %arg7[%c0_74, %c112] : memref<8x1280xf32, #tpu.memory_space<vmem>>, vector<8x1024xf32>
    %cst_75 = arith.constant dense<0.000000e+00> : vector<8x1024xf32>
    %81 = tpu.matmul %79, %80, %cst_75 {dimension_numbers = #tpu.dot_dimension_numbers<[1], [0], [0], [1], [0, 0, 1, 1], [], []>} : vector<8x8xf32>, vector<8x1024xf32>, vector<8x1024xf32> -> vector<8x1024xf32>
    %82 = arith.addf %77, %81 : vector<8x1024xf32>
    %c15 = arith.constant 15 : index
    %c0_76 = arith.constant 0 : index
    %c0_77 = arith.constant 0 : index
    %83 = vector.load %arg4[%c15, %c0_76, %c0_77] : memref<27x8x8xf32, #tpu.memory_space<vmem>>, vector<1x8x8xf32>
    %84 = vector.shape_cast %83 : vector<1x8x8xf32> to vector<8x8xf32>
    %c0_78 = arith.constant 0 : index
    %c120 = arith.constant 120 : index
    %85 = vector.load %arg7[%c0_78, %c120] : memref<8x1280xf32, #tpu.memory_space<vmem>>, vector<8x1024xf32>
    %cst_79 = arith.constant dense<0.000000e+00> : vector<8x1024xf32>
    %86 = tpu.matmul %84, %85, %cst_79 {dimension_numbers = #tpu.dot_dimension_numbers<[1], [0], [0], [1], [0, 0, 1, 1], [], []>} : vector<8x8xf32>, vector<8x1024xf32>, vector<8x1024xf32> -> vector<8x1024xf32>
    %87 = arith.addf %82, %86 : vector<8x1024xf32>
    %c16 = arith.constant 16 : index
    %c0_80 = arith.constant 0 : index
    %c0_81 = arith.constant 0 : index
    %88 = vector.load %arg4[%c16, %c0_80, %c0_81] : memref<27x8x8xf32, #tpu.memory_space<vmem>>, vector<1x8x8xf32>
    %89 = vector.shape_cast %88 : vector<1x8x8xf32> to vector<8x8xf32>
    %c0_82 = arith.constant 0 : index
    %c121 = arith.constant 121 : index
    %90 = vector.load %arg7[%c0_82, %c121] : memref<8x1280xf32, #tpu.memory_space<vmem>>, vector<8x1024xf32>
    %cst_83 = arith.constant dense<0.000000e+00> : vector<8x1024xf32>
    %91 = tpu.matmul %89, %90, %cst_83 {dimension_numbers = #tpu.dot_dimension_numbers<[1], [0], [0], [1], [0, 0, 1, 1], [], []>} : vector<8x8xf32>, vector<8x1024xf32>, vector<8x1024xf32> -> vector<8x1024xf32>
    %92 = arith.addf %87, %91 : vector<8x1024xf32>
    %c17 = arith.constant 17 : index
    %c0_84 = arith.constant 0 : index
    %c0_85 = arith.constant 0 : index
    %93 = vector.load %arg4[%c17, %c0_84, %c0_85] : memref<27x8x8xf32, #tpu.memory_space<vmem>>, vector<1x8x8xf32>
    %94 = vector.shape_cast %93 : vector<1x8x8xf32> to vector<8x8xf32>
    %c0_86 = arith.constant 0 : index
    %c122 = arith.constant 122 : index
    %95 = vector.load %arg7[%c0_86, %c122] : memref<8x1280xf32, #tpu.memory_space<vmem>>, vector<8x1024xf32>
    %cst_87 = arith.constant dense<0.000000e+00> : vector<8x1024xf32>
    %96 = tpu.matmul %94, %95, %cst_87 {dimension_numbers = #tpu.dot_dimension_numbers<[1], [0], [0], [1], [0, 0, 1, 1], [], []>} : vector<8x8xf32>, vector<8x1024xf32>, vector<8x1024xf32> -> vector<8x1024xf32>
    %97 = arith.addf %92, %96 : vector<8x1024xf32>
    %c18 = arith.constant 18 : index
    %c0_88 = arith.constant 0 : index
    %c0_89 = arith.constant 0 : index
    %98 = vector.load %arg4[%c18, %c0_88, %c0_89] : memref<27x8x8xf32, #tpu.memory_space<vmem>>, vector<1x8x8xf32>
    %99 = vector.shape_cast %98 : vector<1x8x8xf32> to vector<8x8xf32>
    %c0_90 = arith.constant 0 : index
    %c200 = arith.constant 200 : index
    %100 = vector.load %arg7[%c0_90, %c200] : memref<8x1280xf32, #tpu.memory_space<vmem>>, vector<8x1024xf32>
    %cst_91 = arith.constant dense<0.000000e+00> : vector<8x1024xf32>
    %101 = tpu.matmul %99, %100, %cst_91 {dimension_numbers = #tpu.dot_dimension_numbers<[1], [0], [0], [1], [0, 0, 1, 1], [], []>} : vector<8x8xf32>, vector<8x1024xf32>, vector<8x1024xf32> -> vector<8x1024xf32>
    %102 = arith.addf %97, %101 : vector<8x1024xf32>
    %c19 = arith.constant 19 : index
    %c0_92 = arith.constant 0 : index
    %c0_93 = arith.constant 0 : index
    %103 = vector.load %arg4[%c19, %c0_92, %c0_93] : memref<27x8x8xf32, #tpu.memory_space<vmem>>, vector<1x8x8xf32>
    %104 = vector.shape_cast %103 : vector<1x8x8xf32> to vector<8x8xf32>
    %c0_94 = arith.constant 0 : index
    %c201 = arith.constant 201 : index
    %105 = vector.load %arg7[%c0_94, %c201] : memref<8x1280xf32, #tpu.memory_space<vmem>>, vector<8x1024xf32>
    %cst_95 = arith.constant dense<0.000000e+00> : vector<8x1024xf32>
    %106 = tpu.matmul %104, %105, %cst_95 {dimension_numbers = #tpu.dot_dimension_numbers<[1], [0], [0], [1], [0, 0, 1, 1], [], []>} : vector<8x8xf32>, vector<8x1024xf32>, vector<8x1024xf32> -> vector<8x1024xf32>
    %107 = arith.addf %102, %106 : vector<8x1024xf32>
    %c20_96 = arith.constant 20 : index
    %c0_97 = arith.constant 0 : index
    %c0_98 = arith.constant 0 : index
    %108 = vector.load %arg4[%c20_96, %c0_97, %c0_98] : memref<27x8x8xf32, #tpu.memory_space<vmem>>, vector<1x8x8xf32>
    %109 = vector.shape_cast %108 : vector<1x8x8xf32> to vector<8x8xf32>
    %c0_99 = arith.constant 0 : index
    %c202 = arith.constant 202 : index
    %110 = vector.load %arg7[%c0_99, %c202] : memref<8x1280xf32, #tpu.memory_space<vmem>>, vector<8x1024xf32>
    %cst_100 = arith.constant dense<0.000000e+00> : vector<8x1024xf32>
    %111 = tpu.matmul %109, %110, %cst_100 {dimension_numbers = #tpu.dot_dimension_numbers<[1], [0], [0], [1], [0, 0, 1, 1], [], []>} : vector<8x8xf32>, vector<8x1024xf32>, vector<8x1024xf32> -> vector<8x1024xf32>
    %112 = arith.addf %107, %111 : vector<8x1024xf32>
    %c21_101 = arith.constant 21 : index
    %c0_102 = arith.constant 0 : index
    %c0_103 = arith.constant 0 : index
    %113 = vector.load %arg4[%c21_101, %c0_102, %c0_103] : memref<27x8x8xf32, #tpu.memory_space<vmem>>, vector<1x8x8xf32>
    %114 = vector.shape_cast %113 : vector<1x8x8xf32> to vector<8x8xf32>
    %c0_104 = arith.constant 0 : index
    %c210 = arith.constant 210 : index
    %115 = vector.load %arg7[%c0_104, %c210] : memref<8x1280xf32, #tpu.memory_space<vmem>>, vector<8x1024xf32>
    %cst_105 = arith.constant dense<0.000000e+00> : vector<8x1024xf32>
    %116 = tpu.matmul %114, %115, %cst_105 {dimension_numbers = #tpu.dot_dimension_numbers<[1], [0], [0], [1], [0, 0, 1, 1], [], []>} : vector<8x8xf32>, vector<8x1024xf32>, vector<8x1024xf32> -> vector<8x1024xf32>
    %117 = arith.addf %112, %116 : vector<8x1024xf32>
    %c22_106 = arith.constant 22 : index
    %c0_107 = arith.constant 0 : index
    %c0_108 = arith.constant 0 : index
    %118 = vector.load %arg4[%c22_106, %c0_107, %c0_108] : memref<27x8x8xf32, #tpu.memory_space<vmem>>, vector<1x8x8xf32>
    %119 = vector.shape_cast %118 : vector<1x8x8xf32> to vector<8x8xf32>
    %c0_109 = arith.constant 0 : index
    %c211 = arith.constant 211 : index
    %120 = vector.load %arg7[%c0_109, %c211] : memref<8x1280xf32, #tpu.memory_space<vmem>>, vector<8x1024xf32>
    %cst_110 = arith.constant dense<0.000000e+00> : vector<8x1024xf32>
    %121 = tpu.matmul %119, %120, %cst_110 {dimension_numbers = #tpu.dot_dimension_numbers<[1], [0], [0], [1], [0, 0, 1, 1], [], []>} : vector<8x8xf32>, vector<8x1024xf32>, vector<8x1024xf32> -> vector<8x1024xf32>
    %122 = arith.addf %117, %121 : vector<8x1024xf32>
    %c23 = arith.constant 23 : index
    %c0_111 = arith.constant 0 : index
    %c0_112 = arith.constant 0 : index
    %123 = vector.load %arg4[%c23, %c0_111, %c0_112] : memref<27x8x8xf32, #tpu.memory_space<vmem>>, vector<1x8x8xf32>
    %124 = vector.shape_cast %123 : vector<1x8x8xf32> to vector<8x8xf32>
    %c0_113 = arith.constant 0 : index
    %c212 = arith.constant 212 : index
    %125 = vector.load %arg7[%c0_113, %c212] : memref<8x1280xf32, #tpu.memory_space<vmem>>, vector<8x1024xf32>
    %cst_114 = arith.constant dense<0.000000e+00> : vector<8x1024xf32>
    %126 = tpu.matmul %124, %125, %cst_114 {dimension_numbers = #tpu.dot_dimension_numbers<[1], [0], [0], [1], [0, 0, 1, 1], [], []>} : vector<8x8xf32>, vector<8x1024xf32>, vector<8x1024xf32> -> vector<8x1024xf32>
    %127 = arith.addf %122, %126 : vector<8x1024xf32>
    %c24 = arith.constant 24 : index
    %c0_115 = arith.constant 0 : index
    %c0_116 = arith.constant 0 : index
    %128 = vector.load %arg4[%c24, %c0_115, %c0_116] : memref<27x8x8xf32, #tpu.memory_space<vmem>>, vector<1x8x8xf32>
    %129 = vector.shape_cast %128 : vector<1x8x8xf32> to vector<8x8xf32>
    %c0_117 = arith.constant 0 : index
    %c220 = arith.constant 220 : index
    %130 = vector.load %arg7[%c0_117, %c220] : memref<8x1280xf32, #tpu.memory_space<vmem>>, vector<8x1024xf32>
    %cst_118 = arith.constant dense<0.000000e+00> : vector<8x1024xf32>
    %131 = tpu.matmul %129, %130, %cst_118 {dimension_numbers = #tpu.dot_dimension_numbers<[1], [0], [0], [1], [0, 0, 1, 1], [], []>} : vector<8x8xf32>, vector<8x1024xf32>, vector<8x1024xf32> -> vector<8x1024xf32>
    %132 = arith.addf %127, %131 : vector<8x1024xf32>
    %c25 = arith.constant 25 : index
    %c0_119 = arith.constant 0 : index
    %c0_120 = arith.constant 0 : index
    %133 = vector.load %arg4[%c25, %c0_119, %c0_120] : memref<27x8x8xf32, #tpu.memory_space<vmem>>, vector<1x8x8xf32>
    %134 = vector.shape_cast %133 : vector<1x8x8xf32> to vector<8x8xf32>
    %c0_121 = arith.constant 0 : index
    %c221 = arith.constant 221 : index
    %135 = vector.load %arg7[%c0_121, %c221] : memref<8x1280xf32, #tpu.memory_space<vmem>>, vector<8x1024xf32>
    %cst_122 = arith.constant dense<0.000000e+00> : vector<8x1024xf32>
    %136 = tpu.matmul %134, %135, %cst_122 {dimension_numbers = #tpu.dot_dimension_numbers<[1], [0], [0], [1], [0, 0, 1, 1], [], []>} : vector<8x8xf32>, vector<8x1024xf32>, vector<8x1024xf32> -> vector<8x1024xf32>
    %137 = arith.addf %132, %136 : vector<8x1024xf32>
    %c26 = arith.constant 26 : index
    %c0_123 = arith.constant 0 : index
    %c0_124 = arith.constant 0 : index
    %138 = vector.load %arg4[%c26, %c0_123, %c0_124] : memref<27x8x8xf32, #tpu.memory_space<vmem>>, vector<1x8x8xf32>
    %139 = vector.shape_cast %138 : vector<1x8x8xf32> to vector<8x8xf32>
    %c0_125 = arith.constant 0 : index
    %c222 = arith.constant 222 : index
    %140 = vector.load %arg7[%c0_125, %c222] : memref<8x1280xf32, #tpu.memory_space<vmem>>, vector<8x1024xf32>
    %cst_126 = arith.constant dense<0.000000e+00> : vector<8x1024xf32>
    %141 = tpu.matmul %139, %140, %cst_126 {dimension_numbers = #tpu.dot_dimension_numbers<[1], [0], [0], [1], [0, 0, 1, 1], [], []>} : vector<8x8xf32>, vector<8x1024xf32>, vector<8x1024xf32> -> vector<8x1024xf32>
    %142 = arith.addf %137, %141 : vector<8x1024xf32>
    %cst_127 = arith.constant 0.000000e+00 : f32
    %143 = vector.broadcast %cst_127 : f32 to vector<8x1024xf32>
    %144 = arith.subf %143, %142 : vector<8x1024xf32>
    %145 = math.exp %144 : vector<8x1024xf32>
    %cst_128 = arith.constant 1.000000e+00 : f32
    %146 = vector.broadcast %cst_128 : f32 to vector<8x1024xf32>
    %147 = arith.addf %146, %145 : vector<8x1024xf32>
    %cst_129 = arith.constant 1.000000e+00 : f32
    %148 = vector.broadcast %cst_129 : f32 to vector<8x1024xf32>
    %149 = arith.divf %148, %147 : vector<8x1024xf32>
    %c0_130 = arith.constant 0 : index
    %c0_131 = arith.constant 0 : index
    %c0_132 = arith.constant 0 : index
    %150 = vector.load %arg6[%c0_130, %c0_131, %c0_132] : memref<1x8x1024xf32, #tpu.memory_space<vmem>>, vector<1x8x1024xf32>
    %151 = vector.shape_cast %150 : vector<1x8x1024xf32> to vector<8x1024xf32>
    %152 = vector.shape_cast %149 : vector<8x1024xf32> to vector<1x8x1024xf32>
    tpu.vector_store %arg6[%c0_130, %c0_131, %c0_132], %152 {strides = array<i32>} : memref<1x8x1024xf32, #tpu.memory_space<vmem>>, vector<1x8x1024xf32>,
    return
  }
  func.func @transform_0(%arg0: i32, %arg1: i32) -> (i32, i32, i32) {
    %c0_i32 = arith.constant 0 : i32
    %c0_i32_0 = arith.constant 0 : i32
    return %arg0, %c0_i32, %arg1 : i32, i32, i32
  }
  func.func @transform_1(%arg0: i32, %arg1: i32) -> (i32, i32, i32) {
    %c1_i32 = arith.constant 1 : i32
    %0 = arith.addi %arg1, %c1_i32 : i32
    %c4_i32 = arith.constant 4 : i32
    %1 = arith.muli %0, %c4_i32 : i32
    %c0_i32 = arith.constant 0 : i32
    %c0_i32_0 = arith.constant 0 : i32
    return %arg0, %c0_i32, %1 : i32, i32, i32
  }
  func.func @transform_2(%arg0: i32, %arg1: i32) -> (i32, i32, i32) {
    %c0_i32 = arith.constant 0 : i32
    %c0_i32_0 = arith.constant 0 : i32
    %c0_i32_1 = arith.constant 0 : i32
    %c0_i32_2 = arith.constant 0 : i32
    return %c0_i32, %c0_i32_0, %c0_i32_1 : i32, i32, i32
  }
  func.func @transform_3(%arg0: i32, %arg1: i32) -> (i32, i32) {
    %c0_i32 = arith.constant 0 : i32
    %c0_i32_0 = arith.constant 0 : i32
    %c0_i32_1 = arith.constant 0 : i32
    return %c0_i32, %c0_i32_0 : i32, i32
  }
  func.func @transform_4(%arg0: i32, %arg1: i32) -> (i32, i32, i32) {
    %c0_i32 = arith.constant 0 : i32
    %c0_i32_0 = arith.constant 0 : i32
    return %arg0, %c0_i32, %arg1 : i32, i32, i32
  }
}

</mosaic_0001>

<llo_original>
// kernel: conv3d_sigmoid_pallas.1
$region0: #{conv3d_sigmoid_pallas.1}
  #allocation0 [shape = 'u32[]', space=smem, size = 0x4, offset = 0x4, fixed_abs, tag = 'smem constant byte address 0x4 - core index']
  #allocation1 [shape = 'u32[144,128]{1,0:T(1,128)}', space=vmem, size = 0x12000, scoped, tag = 'internal scratch']
  #allocation2 [shape = 'f32[8,1280]{1,0:T(8,128)}', space=vmem, size = 0xa000, scoped, tag = 'scratch operand']
  %s0 = inlined_call_operand.vmem [shape: f32[2,8,1280], index: 0, kind: input, shape index: {}, may-alias: {0,1}]
  %s1 = inlined_call_operand.vmem [shape: f32[2,8,1280], index: 1, kind: input, shape index: {}, may-alias: {0,1}]
  %s2 = inlined_call_operand.vmem [shape: f32[27,8,8], index: 2, kind: input, shape index: {}]
  %s3 = inlined_call_operand.vmem [shape: f32[8,1], index: 3, kind: input, shape index: {}]
  %s4 = inlined_call_operand.vmem [shape: f32[2,8,1024], index: 4, kind: output, shape index: {}]
  %s5 = sld [smem:[#allocation0]]
  $region49: #{conv3d_sigmoid_pallas.1} parent=0
    _
  %s7 = ssub.s32 1, %s5
  %s8 = scalar_select 0, %s7, %s5
  loop: start=0, step=1, limit=4
  $region2: #{conv3d_sigmoid_pallas.1} parent=0 // loop_pre_header
    _
  $region3: #{conv3d_sigmoid_pallas.1} parent=0 // loop_header
    %s10 = sphi 0, %s14
    %p11 = scmp.ge.s32.totalorder %s10, 4
    %s17 = sphi 0, %s29
    %s18 = sphi 0, %s25
    %s19 = sphi 0, %s17
    %s20 = sphi 0, %s18
    %s21 = sphi 0, %s19
    %s22 = sphi 0, %s20
    %s34 = sphi 0, %s36
    %s37 = sphi 0, %s34
    %s38 = sphi 0, %s37
    %s54 = sphi 0, %s38
    %s66 = sphi 0, %s68
    %s69 = sphi 0, %s66
    %s70 = sphi 0, %s69
    %s86 = sphi 0, %s70
    %s90 = sphi 0, %s90
    %s92 = sphi 0, %s90
    %s93 = sphi 0, %s92
    %s107 = sphi 0, %s93
    %s111 = sphi 0, %s111
    %s113 = sphi 0, %s111
    %s114 = sphi 0, %s113
    %s128 = sphi 0, %s114
    %s136 = sphi 0, %s138
    %s139 = sphi 0, %s136
    %s140 = sphi 0, %s139
    %s156 = sphi 0, %s140
  $region4: #{conv3d_sigmoid_pallas.1} parent=0 // loop_header_branch
    %13 = sbr.rel (%p11) target = $region8
  $region5: #{conv3d_sigmoid_pallas.1} parent=0 // loop_body
    %s15 = ssub.s32 %s10, 1
    %s16 = ssub.s32 %s10, 2
    %s23 = sadd.s32 1, %s18
    %p24 = scmp.ge.s32.totalorder %s23, 1
    %s25 = scalar_select %p24, 0, %s23
    %s26 = sadd.s32 1, %s17
    %s27 = scalar_select %p24, %s26, %s17
    %p28 = scmp.ge.s32.totalorder %s27, 2
    %s29 = scalar_select %p28, 0, %s27
    %s30 = ssub.s32 %s17, %s29
    %s31 = ssub.s32 %s18, %s25
    %s32 = sor.u32 %s30, %s31
    %p33 = scmp.eq.s32.totalorder %s32, 0
    %s35 = sadd.s32 %s34, 1
    %s36 = scalar_select %p33, %s34, %s35
    %p39 = pneg %p33
    %p40 = scmp.eq.s32.totalorder %s10, 1
    %p41 = por %p39, %p40
    %p42 = scmp.ne.s32.totalorder %s34, %s37
    %p43 = scmp.eq.s32.totalorder %s10, 0
    %p44 = por %p42, %p43
    %p45 = scmp.ne.s32.totalorder %s34, %s37
    %p46 = scmp.eq.s32.totalorder %s15, 1
    %p47 = por %p45, %p46
    %p48 = scmp.ne.s32.totalorder %s37, %s38
    %p49 = scmp.eq.s32.totalorder %s15, 0
    %p50 = por %p48, %p49
    %p51 = scmp.ne.s32.totalorder %s37, %s38
    %p52 = scmp.eq.s32.totalorder %s16, 1
    %p53 = por %p51, %p52
    %p55 = scmp.ne.s32.totalorder %s38, %s54
    %p56 = scmp.eq.s32.totalorder %s16, 0
    %p57 = por %p55, %p56
    %s58 = sadd.s32 %s18, 1
    %s59 = smul.u32 %s58, 4
    %s60 = sadd.s32 %s25, 1
    %s61 = smul.u32 %s60, 4
    %s62 = ssub.s32 %s17, %s29
    %s63 = ssub.s32 %s59, %s61
    %s64 = sor.u32 %s62, %s63
    %p65 = scmp.eq.s32.totalorder %s64, 0
    %s67 = sadd.s32 %s66, 1
    %s68 = scalar_select %p65, %s66, %s67
    %p71 = pneg %p65
    %p72 = scmp.eq.s32.totalorder %s10, 1
    %p73 = por %p71, %p72
    %p74 = scmp.ne.s32.totalorder %s66, %s69
    %p75 = scmp.eq.s32.totalorder %s10, 0
    %p76 = por %p74, %p75
    %p77 = scmp.ne.s32.totalorder %s66, %s69
    %p78 = scmp.eq.s32.totalorder %s15, 1
    %p79 = por %p77, %p78
    %p80 = scmp.ne.s32.totalorder %s69, %s70
    %p81 = scmp.eq.s32.totalorder %s15, 0
    %p82 = por %p80, %p81
    %p83 = scmp.ne.s32.totalorder %s69, %s70
    %p84 = scmp.eq.s32.totalorder %s16, 1
    %p85 = por %p83, %p84
    %p87 = scmp.ne.s32.totalorder %s70, %s86
    %p88 = scmp.eq.s32.totalorder %s16, 0
    %p89 = por %p87, %p88
    %s91 = sadd.s32 %s90, 1
    %p94 = scmp.eq.s32.totalorder %s10, 1
    %p95 = scmp.ne.s32.totalorder %s90, %s92
    %p96 = scmp.eq.s32.totalorder %s10, 0
    %p97 = por %p95, %p96
    %p98 = scmp.ne.s32.totalorder %s90, %s92
    %p99 = scmp.eq.s32.totalorder %s15, 1
    %p100 = por %p98, %p99
    %p101 = scmp.ne.s32.totalorder %s92, %s93
    %p102 = scmp.eq.s32.totalorder %s15, 0
    %p103 = por %p101, %p102
    %p104 = scmp.ne.s32.totalorder %s92, %s93
    %p105 = scmp.eq.s32.totalorder %s16, 1
    %p106 = por %p104, %p105
    %p108 = scmp.ne.s32.totalorder %s93, %s107
    %p109 = scmp.eq.s32.totalorder %s16, 0
    %p110 = por %p108, %p109
    %s112 = sadd.s32 %s111, 1
    %p115 = scmp.eq.s32.totalorder %s10, 1
    %p116 = scmp.ne.s32.totalorder %s111, %s113
    %p117 = scmp.eq.s32.totalorder %s10, 0
    %p118 = por %p116, %p117
    %p119 = scmp.ne.s32.totalorder %s111, %s113
    %p120 = scmp.eq.s32.totalorder %s15, 1
    %p121 = por %p119, %p120
    %p122 = scmp.ne.s32.totalorder %s113, %s114
    %p123 = scmp.eq.s32.totalorder %s15, 0
    %p124 = por %p122, %p123
    %p125 = scmp.ne.s32.totalorder %s113, %s114
    %p126 = scmp.eq.s32.totalorder %s16, 1
    %p127 = por %p125, %p126
    %p129 = scmp.ne.s32.totalorder %s114, %s128
    %p130 = scmp.eq.s32.totalorder %s16, 0
    %p131 = por %p129, %p130
    %s132 = ssub.s32 %s17, %s29
    %s133 = ssub.s32 %s18, %s25
    %s134 = sor.u32 %s132, %s133
    %p135 = scmp.eq.s32.totalorder %s134, 0
    %s137 = sadd.s32 %s136, 1
    %s138 = scalar_select %p135, %s136, %s137
    %p141 = pneg %p135
    %p142 = scmp.eq.s32.totalorder %s10, 1
    %p143 = por %p141, %p142
    %p144 = scmp.ne.s32.totalorder %s136, %s139
    %p145 = scmp.eq.s32.totalorder %s10, 0
    %p146 = por %p144, %p145
    %p147 = scmp.ne.s32.totalorder %s136, %s139
    %p148 = scmp.eq.s32.totalorder %s15, 1
    %p149 = por %p147, %p148
    %p150 = scmp.ne.s32.totalorder %s139, %s140
    %p151 = scmp.eq.s32.totalorder %s15, 0
    %p152 = por %p150, %p151
    %p153 = scmp.ne.s32.totalorder %s139, %s140
    %p154 = scmp.eq.s32.totalorder %s16, 1
    %p155 = por %p153, %p154
    %p157 = scmp.ne.s32.totalorder %s140, %s156
    %p158 = scmp.eq.s32.totalorder %s16, 0
    %p159 = por %p157, %p158
    %p160 = scmp.le.s32.totalorder 1, %s10
    %p161 = scmp.lt.s32.totalorder %s10, 3
    %p162 = pnand %p160, %p161
    %p163 = pneg %p162
    // Predicated region
    $region9: #{conv3d_sigmoid_pallas.1} parent=5 // pred_check
      _
    $region10: #{conv3d_sigmoid_pallas.1} parent=5 // pred_check_branch
      %165 = sbr.rel (%p162) target = $region12
    $region11: #{conv3d_sigmoid_pallas.1} parent=5 // pred_region
      %s166 = ssub.s32 %s10, 1
      // Predicated region
      $region13: #{conv3d_sigmoid_pallas.1} parent=11 // pred_check
        %p167 = pneg %p103
      $region14: #{conv3d_sigmoid_pallas.1} parent=11 // pred_check_branch
        %169 = sbr.rel (%p167) target = $region16
      $region15: #{conv3d_sigmoid_pallas.1} parent=11 // pred_region
        _
      $region16: #{conv3d_sigmoid_pallas.1} parent=11 // pred_fallthru
        _
      // Predicated region
      $region17: #{conv3d_sigmoid_pallas.1} parent=11 // pred_check
        %p170 = pneg %p124
      $region18: #{conv3d_sigmoid_pallas.1} parent=11 // pred_check_branch
        %172 = sbr.rel (%p170) target = $region20
      $region19: #{conv3d_sigmoid_pallas.1} parent=11 // pred_region
        _
      $region20: #{conv3d_sigmoid_pallas.1} parent=11 // pred_fallthru
        _
    $region12: #{conv3d_sigmoid_pallas.1} parent=5 // pred_fallthru
      _
    %p173 = scmp.lt.s32.totalorder %s10, 2
    // Predicated region
    $region21: #{conv3d_sigmoid_pallas.1} parent=5 // pred_check
      %p174 = pneg %p173
    $region22: #{conv3d_sigmoid_pallas.1} parent=5 // pred_check_branch
      %176 = sbr.rel (%p174) target = $region24
    $region23: #{conv3d_sigmoid_pallas.1} parent=5 // pred_region
      // Predicated region
      $region25: #{conv3d_sigmoid_pallas.1} parent=23 // pred_check
        %p177 = pneg %p44
      $region26: #{conv3d_sigmoid_pallas.1} parent=23 // pred_check_branch
        %179 = sbr.rel (%p177) target = $region28
      $region27: #{conv3d_sigmoid_pallas.1} parent=23 // pred_region
        %s180 = smul.u32 8, %s18
        %s181 = ssub.s32 10, %s180
        %p182 = scmp.lt.s32.totalorder %s181, 8
        %s183 = scalar_select %p182, %s181, 8
        %s184 = smul.u32 128, %s183
        %p185 = scmp.lt.s32.totalorder %s17, 1
        %s186 = scalar_select %p185, %s17, 1
        %p187 = scmp.lt.s32.totalorder %s180, 9
        %s188 = scalar_select %p187, %s180, 9
        %s189 = smul.addr %s186, 10
        %s190 = sadd.s32 %s188, %s189
        %s191 = smul.addr %s190, 8
        %s192 = scalar_lea.vmem %s0, %s191
        %s193 = smul.u32 8, %s18
        %s194 = ssub.s32 10, %s193
        %p195 = scmp.lt.s32.totalorder %s194, 8
        %s196 = scalar_select %p195, %s194, 8
        %s197 = smul.u32 128, %s196
      $region28: #{conv3d_sigmoid_pallas.1} parent=23 // pred_fallthru
        _
      // Predicated region
      $region29: #{conv3d_sigmoid_pallas.1} parent=23 // pred_check
        %p198 = pneg %p76
      $region30: #{conv3d_sigmoid_pallas.1} parent=23 // pred_check_branch
        %200 = sbr.rel (%p198) target = $region32
      $region31: #{conv3d_sigmoid_pallas.1} parent=23 // pred_region
        %s201 = sadd.s32 %s18, 1
        %s202 = smul.u32 %s201, 4
        %s203 = smul.u32 2, %s202
        %p204 = scmp.lt.s32.totalorder %s17, 1
        %s205 = scalar_select %p204, %s17, 1
        %p206 = scmp.lt.s32.totalorder %s203, 9
        %s207 = scalar_select %p206, %s203, 9
        %s208 = smul.addr %s205, 10
        %s209 = sadd.s32 %s207, %s208
        %s210 = smul.addr %s209, 8
        %s211 = scalar_lea.vmem %s1, %s210
        %s212 = sadd.s32 %s18, 1
        %s213 = smul.u32 %s212, 4
        %s214 = smul.u32 2, %s213
      $region32: #{conv3d_sigmoid_pallas.1} parent=23 // pred_fallthru
        _
    $region24: #{conv3d_sigmoid_pallas.1} parent=5 // pred_fallthru
      _
    %p215 = scmp.le.s32.totalorder 1, %s10
    %p216 = scmp.lt.s32.totalorder %s10, 3
    %p217 = pnand %p215, %p216
    %p218 = pneg %p217
    // Predicated region
    $region33: #{conv3d_sigmoid_pallas.1} parent=5 // pred_check
      _
    $region34: #{conv3d_sigmoid_pallas.1} parent=5 // pred_check_branch
      %220 = sbr.rel (%p217) target = $region36
    $region35: #{conv3d_sigmoid_pallas.1} parent=5 // pred_region
      %s221 = ssub.s32 %s10, 1
      %s222 = smul.u32 8, %s20
      %s223 = ssub.s32 10, %s222
      %p224 = scmp.lt.s32.totalorder %s223, 8
      %s225 = scalar_select %p224, %s223, 8
      %s226 = smul.u32 128, %s225
      %p227 = scmp.lt.s32.totalorder %s19, 1
      %s228 = scalar_select %p227, %s19, 1
      %p229 = scmp.lt.s32.totalorder %s222, 9
      %s230 = scalar_select %p229, %s222, 9
      %s231 = smul.addr %s228, 10
      %s232 = sadd.s32 %s230, %s231
      %s233 = smul.addr %s232, 8
      %s234 = scalar_lea.vmem %s0, %s233
      %p235 = pneg %p50
      %p236 = pneg %p47
      %s237 = sadd.s32 %s20, 1
      %s238 = smul.u32 %s237, 4
      %s239 = smul.u32 2, %s238
      %p240 = scmp.lt.s32.totalorder %s19, 1
      %s241 = scalar_select %p240, %s19, 1
      %p242 = scmp.lt.s32.totalorder %s239, 9
      %s243 = scalar_select %p242, %s239, 9
      %s244 = smul.addr %s241, 10
      %s245 = sadd.s32 %s243, %s244
      %s246 = smul.addr %s245, 8
      %s247 = scalar_lea.vmem %s1, %s246
      %p248 = pneg %p82
      %p249 = pneg %p79
      %p250 = pneg %p103
      %p251 = pneg %p100
      %p252 = pneg %p124
      %p253 = pneg %p121
      %p254 = pneg %p152
      %p255 = pneg %p149
      %s256 = smul.u32 8, %s20
      %p257 = scmp.lt.s32.totalorder %s19, 1
      %s258 = scalar_select %p257, %s19, 1
      %p259 = scmp.lt.s32.totalorder %s256, 7
      %s260 = scalar_select %p259, %s256, 7
      %s261 = smul.addr %s258, 8
      %s262 = sadd.s32 %s260, %s261
      %s263 = smul.addr %s262, 8
      %s264 = scalar_lea.vmem %s4, %s263
      %s265 = smul.u32 8, %s20
      %s266 = ssub.s32 10, %s265
      %p267 = scmp.lt.s32.totalorder %s266, 8
      %s268 = scalar_select %p267, %s266, 8
      %s269 = smul.u32 128, %s268
      %p270 = scmp.lt.s32.totalorder %s19, 1
      %s271 = scalar_select %p270, %s19, 1
      %p272 = scmp.lt.s32.totalorder %s265, 9
      %s273 = scalar_select %p272, %s265, 9
      %s274 = smul.addr %s271, 10
      %s275 = sadd.s32 %s273, %s274
      %s276 = smul.addr %s275, 8
      %s277 = scalar_lea.vmem %s0, %s276
      %s278 = smul.u32 8, %s20
      %s279 = ssub.s32 10, %s278
      %p280 = scmp.lt.s32.totalorder %s279, 8
      %s281 = scalar_select %p280, %s279, 8
      %s282 = smul.u32 128, %s281
      %s283 = sadd.s32 %s20, 1
      %s284 = smul.u32 %s283, 4
      %s285 = smul.u32 2, %s284
      %p286 = scmp.lt.s32.totalorder %s19, 1
      %s287 = scalar_select %p286, %s19, 1
      %p288 = scmp.lt.s32.totalorder %s285, 9
      %s289 = scalar_select %p288, %s285, 9
      %s290 = smul.addr %s287, 10
      %s291 = sadd.s32 %s289, %s290
      %s292 = smul.addr %s291, 8
      %s293 = scalar_lea.vmem %s1, %s292
      %s294 = sadd.s32 %s20, 1
      %s295 = smul.u32 %s294, 4
      %s296 = smul.u32 2, %s295
      %s297 = smul.u32 8, %s20
      %p298 = scmp.lt.s32.totalorder %s19, 1
      %s299 = scalar_select %p298, %s19, 1
      %p300 = scmp.lt.s32.totalorder %s297, 7
      %s301 = scalar_select %p300, %s297, 7
      %s302 = smul.addr %s299, 8
      %s303 = sadd.s32 %s301, %s302
      %s304 = smul.addr %s303, 8
      %s305 = scalar_lea.vmem %s4, %s304
      %s306 = smul.u32 8, %s20
      %v307 = vld [vmem:[%s277] sm:$0xff]
      %v308 = vld [vmem:[%s277 + $0x8] sm:$0xff]
      %v309 = vld [vmem:[%s277 + $0x10] sm:$0xff]
      %v310 = vld [vmem:[%s277 + $0x18] sm:$0xff]
      %v311 = vld [vmem:[%s277 + $0x20] sm:$0xff]
      %v312 = vld [vmem:[%s277 + $0x28] sm:$0xff]
      %v313 = vld [vmem:[%s277 + $0x30] sm:$0xff]
      %v314 = vld [vmem:[%s277 + $0x38] sm:$0xff]
      %315 = vst [vmem:[#allocation2] sm:$0xff] %v307
      %316 = vst [vmem:[#allocation2 + $0x8] sm:$0xff] %v308
      %317 = vst [vmem:[#allocation2 + $0x10] sm:$0xff] %v309
      %318 = vst [vmem:[#allocation2 + $0x18] sm:$0xff] %v310
      %319 = vst [vmem:[#allocation2 + $0x20] sm:$0xff] %v311
      %320 = vst [vmem:[#allocation2 + $0x28] sm:$0xff] %v312
      %321 = vst [vmem:[#allocation2 + $0x30] sm:$0xff] %v313
      %322 = vst [vmem:[#allocation2 + $0x38] sm:$0xff] %v314
      %v323 = vld [vmem:[%s293] sm:$0xff]
      %v324 = vld [vmem:[%s293 + $0x8] sm:$0xff]
      %325 = vst [vmem:[#allocation2 + $0x40] sm:$0xff] %v323
      %326 = vst [vmem:[#allocation2 + $0x48] sm:$0xff] %v324
      %v327 = vld [vmem:[%s3] sm:$0xff]
      %v328 = vld [vmem:[%s2] sm:$0xff]
      %v329 = vld [vmem:[#allocation2] sm:$0xff]
      %v330 = vld [vmem:[#allocation2 + $0x8] sm:$0xff]
      %v331 = vld [vmem:[#allocation2 + $0x10] sm:$0xff]
      %v332 = vld [vmem:[#allocation2 + $0x18] sm:$0xff]
      %v333 = vld [vmem:[#allocation2 + $0x20] sm:$0xff]
      %v334 = vld [vmem:[#allocation2 + $0x28] sm:$0xff]
      %v335 = vld [vmem:[#allocation2 + $0x30] sm:$0xff]
      %v336 = vld [vmem:[#allocation2 + $0x38] sm:$0xff]
      %vm337 = vcmask 64512
      %v339 = vsel %vm337, %v328, 0
      %341 = vmatprep.subr.mxu0 %v330
      %342 = vmatpush1.msra.mxu0 %v329
      %343 = vmatprep.subr.mxu0 0.0
      %344 = vmatpush1.msra.mxu0 0.0
      %345 = vmatprep.subr.mxu0 0.0
      %346 = vmatpush1.msra.mxu0 0.0
      %347 = vmatprep.subr.mxu0 0.0
      %348 = vmatpush1.msra.mxu0 0.0
      %349 = vmatprep.subr.mxu0 0.0
      %350 = vmatpush1.msra.mxu0 0.0
      %351 = vmatprep.subr.mxu0 0.0
      %352 = vmatpush1.msra.mxu0 0.0
      %353 = vmatprep.subr.mxu0 0.0
      %354 = vmatpush1.msra.mxu0 0.0
      %355 = vmatprep.subr.mxu0 0.0
      %356 = vmatpush1.msra.mxu0 0.0
      %357 = vmatprep.subr.mxu0 0.0
      %358 = vmatpush1.msra.mxu0 0.0
      %359 = vmatprep.subr.mxu0 0.0
      %360 = vmatpush1.msra.mxu0 0.0
      %361 = vmatprep.subr.mxu0 0.0
      %362 = vmatpush1.msra.mxu0 0.0
      %363 = vmatprep.subr.mxu0 0.0
      %364 = vmatpush1.msra.mxu0 0.0
      %365 = vmatprep.subr.mxu0 0.0
      %366 = vmatpush1.msra.mxu0 0.0
      %367 = vmatprep.subr.mxu0 0.0
      %368 = vmatpush1.msra.mxu0 0.0
      %369 = vmatprep.subr.mxu0 0.0
      %370 = vmatpush1.msra.mxu0 0.0
      %371 = vmatprep.subr.mxu0 0.0
      %372 = vmatpush1.msra.mxu0 0.0
      %373 = vmatprep.subr.mxu0 0.0
      %374 = vmatpush1.msra.mxu0 0.0
      %375 = vmatprep.subr.mxu0 0.0
      %376 = vmatpush1.msra.mxu0 0.0
      %377 = vmatprep.subr.mxu0 0.0
      %378 = vmatpush1.msra.mxu0 0.0
      %379 = vmatprep.subr.mxu0 0.0
      %380 = vmatpush1.msra.mxu0 0.0
      %381 = vmatprep.subr.mxu0 0.0
      %382 = vmatpush1.msra.mxu0 0.0
      %383 = vmatprep.subr.mxu0 0.0
      %384 = vmatpush1.msra.mxu0 0.0
      %385 = vmatprep.subr.mxu0 0.0
      %386 = vmatpush1.msra.mxu0 0.0
      %387 = vmatprep.subr.mxu0 0.0
      %388 = vmatpush1.msra.mxu0 0.0
      %389 = vmatprep.subr.mxu0 0.0
      %390 = vmatpush1.msra.mxu0 0.0
      %391 = vmatprep.subr.mxu0 0.0
      %392 = vmatpush1.msra.mxu0 0.0
      %393 = vmatprep.subr.mxu0 0.0
      %394 = vmatpush1.msra.mxu0 0.0
      %395 = vmatprep.subr.mxu0 0.0
      %396 = vmatpush1.msra.mxu0 0.0
      %397 = vmatprep.subr.mxu0 0.0
      %398 = vmatpush1.msra.mxu0 0.0
      %399 = vmatprep.subr.mxu0 0.0
      %400 = vmatpush1.msra.mxu0 0.0
      %401 = vmatprep.subr.mxu0 0.0
      %402 = vmatpush1.msra.mxu0 0.0
      %403 = vmatprep.subr.mxu0 0.0
      %404 = vmatpush1.msra.mxu0 0.0
      %405 = vmatprep.mubr.f32.mxu0 0.0
      %406 = vmatmul.mubr.f32.gmra.mrb[0].mxu0 %v339
      %v407 = vpop.f32.mrb[0].mxu0
      %v408 = vadd.f32 0.0, %v407
      %v409 = vpop.f32.mrb[0].mxu0
      %v410 = vadd.f32 0.0, %v409
      %411 = vdwg.mxu0
      %412 = vmatprep.subr.mxu0 %v332
      %413 = vmatpush1.msra.mxu0 %v331
      %414 = vmatprep.subr.mxu0 0.0
      %415 = vmatpush1.msra.mxu0 0.0
      %416 = vmatprep.subr.mxu0 0.0
      %417 = vmatpush1.msra.mxu0 0.0
      %418 = vmatprep.subr.mxu0 0.0
      %419 = vmatpush1.msra.mxu0 0.0
      %420 = vmatprep.subr.mxu0 0.0
      %421 = vmatpush1.msra.mxu0 0.0
      %422 = vmatprep.subr.mxu0 0.0
      %423 = vmatpush1.msra.mxu0 0.0
      %424 = vmatprep.subr.mxu0 0.0
      %425 = vmatpush1.msra.mxu0 0.0
      %426 = vmatprep.subr.mxu0 0.0
      %427 = vmatpush1.msra.mxu0 0.0
      %428 = vmatprep.subr.mxu0 0.0
      %429 = vmatpush1.msra.mxu0 0.0
      %430 = vmatprep.subr.mxu0 0.0
      %431 = vmatpush1.msra.mxu0 0.0
      %432 = vmatprep.subr.mxu0 0.0
      %433 = vmatpush1.msra.mxu0 0.0
      %434 = vmatprep.subr.mxu0 0.0
      %435 = vmatpush1.msra.mxu0 0.0
      %436 = vmatprep.subr.mxu0 0.0
      %437 = vmatpush1.msra.mxu0 0.0
      %438 = vmatprep.subr.mxu0 0.0
      %439 = vmatpush1.msra.mxu0 0.0
      %440 = vmatprep.subr.mxu0 0.0
      %441 = vmatpush1.msra.mxu0 0.0
      %442 = vmatprep.subr.mxu0 0.0
      %443 = vmatpush1.msra.mxu0 0.0
      %444 = vmatprep.subr.mxu0 0.0
      %445 = vmatpush1.msra.mxu0 0.0
      %446 = vmatprep.subr.mxu0 0.0
      %447 = vmatpush1.msra.mxu0 0.0
      %448 = vmatprep.subr.mxu0 0.0
      %449 = vmatpush1.msra.mxu0 0.0
      %450 = vmatprep.subr.mxu0 0.0
      %451 = vmatpush1.msra.mxu0 0.0
      %452 = vmatprep.subr.mxu0 0.0
      %453 = vmatpush1.msra.mxu0 0.0
      %454 = vmatprep.subr.mxu0 0.0
      %455 = vmatpush1.msra.mxu0 0.0
      %456 = vmatprep.subr.mxu0 0.0
      %457 = vmatpush1.msra.mxu0 0.0
      %458 = vmatprep.subr.mxu0 0.0
      %459 = vmatpush1.msra.mxu0 0.0
      %460 = vmatprep.subr.mxu0 0.0
      %461 = vmatpush1.msra.mxu0 0.0
      %462 = vmatprep.subr.mxu0 0.0
      %463 = vmatpush1.msra.mxu0 0.0
      %464 = vmatprep.subr.mxu0 0.0
      %465 = vmatpush1.msra.mxu0 0.0
      %466 = vmatprep.subr.mxu0 0.0
      %467 = vmatpush1.msra.mxu0 0.0
      %468 = vmatprep.subr.mxu0 0.0
      %469 = vmatpush1.msra.mxu0 0.0
      %470 = vmatprep.subr.mxu0 0.0
      %471 = vmatpush1.msra.mxu0 0.0
      %472 = vmatprep.subr.mxu0 0.0
      %473 = vmatpush1.msra.mxu0 0.0
      %474 = vmatprep.subr.mxu0 0.0
      %475 = vmatpush1.msra.mxu0 0.0
      %476 = vmatprep.mubr.f32.mxu0 0.0
      %477 = vmatmul.mubr.f32.gmra.mrb[0].mxu0 %v339
      %v478 = vpop.f32.mrb[0].mxu0
      %v479 = vadd.f32 0.0, %v478
      %v480 = vpop.f32.mrb[0].mxu0
      %v481 = vadd.f32 0.0, %v480
      %482 = vdwg.mxu0
      %483 = vmatprep.subr.mxu0 %v334
      %484 = vmatpush1.msra.mxu0 %v333
      %485 = vmatprep.subr.mxu0 0.0
      %486 = vmatpush1.msra.mxu0 0.0
      %487 = vmatprep.subr.mxu0 0.0
      %488 = vmatpush1.msra.mxu0 0.0
      %489 = vmatprep.subr.mxu0 0.0
      %490 = vmatpush1.msra.mxu0 0.0
      %491 = vmatprep.subr.mxu0 0.0
      %492 = vmatpush1.msra.mxu0 0.0
      %493 = vmatprep.subr.mxu0 0.0
      %494 = vmatpush1.msra.mxu0 0.0
      %495 = vmatprep.subr.mxu0 0.0
      %496 = vmatpush1.msra.mxu0 0.0
      %497 = vmatprep.subr.mxu0 0.0
      %498 = vmatpush1.msra.mxu0 0.0
      %499 = vmatprep.subr.mxu0 0.0
      %500 = vmatpush1.msra.mxu0 0.0
      %501 = vmatprep.subr.mxu0 0.0
      %502 = vmatpush1.msra.mxu0 0.0
      %503 = vmatprep.subr.mxu0 0.0
      %504 = vmatpush1.msra.mxu0 0.0
      %505 = vmatprep.subr.mxu0 0.0
      %506 = vmatpush1.msra.mxu0 0.0
      %507 = vmatprep.subr.mxu0 0.0
      %508 = vmatpush1.msra.mxu0 0.0
      %509 = vmatprep.subr.mxu0 0.0
      %510 = vmatpush1.msra.mxu0 0.0
      %511 = vmatprep.subr.mxu0 0.0
      %512 = vmatpush1.msra.mxu0 0.0
      %513 = vmatprep.subr.mxu0 0.0
      %514 = vmatpush1.msra.mxu0 0.0
      %515 = vmatprep.subr.mxu0 0.0
      %516 = vmatpush1.msra.mxu0 0.0
      %517 = vmatprep.subr.mxu0 0.0
      %518 = vmatpush1.msra.mxu0 0.0
      %519 = vmatprep.subr.mxu0 0.0
      %520 = vmatpush1.msra.mxu0 0.0
      %521 = vmatprep.subr.mxu0 0.0
      %522 = vmatpush1.msra.mxu0 0.0
      %523 = vmatprep.subr.mxu0 0.0
      %524 = vmatpush1.msra.mxu0 0.0
      %525 = vmatprep.subr.mxu0 0.0
      %526 = vmatpush1.msra.mxu0 0.0
      %527 = vmatprep.subr.mxu0 0.0
      %528 = vmatpush1.msra.mxu0 0.0
      %529 = vmatprep.subr.mxu0 0.0
      %530 = vmatpush1.msra.mxu0 0.0
      %531 = vmatprep.subr.mxu0 0.0
      %532 = vmatpush1.msra.mxu0 0.0
      %533 = vmatprep.subr.mxu0 0.0
      %534 = vmatpush1.msra.mxu0 0.0
      %535 = vmatprep.subr.mxu0 0.0
      %536 = vmatpush1.msra.mxu0 0.0
      %537 = vmatprep.subr.mxu0 0.0
      %538 = vmatpush1.msra.mxu0 0.0
      %539 = vmatprep.subr.mxu0 0.0
      %540 = vmatpush1.msra.mxu0 0.0
      %541 = vmatprep.subr.mxu0 0.0
      %542 = vmatpush1.msra.mxu0 0.0
      %543 = vmatprep.subr.mxu0 0.0
      %544 = vmatpush1.msra.mxu0 0.0
      %545 = vmatprep.subr.mxu0 0.0
      %546 = vmatpush1.msra.mxu0 0.0
      %547 = vmatprep.mubr.f32.mxu0 0.0
      %548 = vmatmul.mubr.f32.gmra.mrb[0].mxu0 %v339
      %v549 = vpop.f32.mrb[0].mxu0
      %v550 = vadd.f32 0.0, %v549
      %v551 = vpop.f32.mrb[0].mxu0
      %v552 = vadd.f32 0.0, %v551
      %553 = vdwg.mxu0
      %554 = vmatprep.subr.mxu0 %v336
      %555 = vmatpush1.msra.mxu0 %v335
      %556 = vmatprep.subr.mxu0 0.0
      %557 = vmatpush1.msra.mxu0 0.0
      %558 = vmatprep.subr.mxu0 0.0
      %559 = vmatpush1.msra.mxu0 0.0
      %560 = vmatprep.subr.mxu0 0.0
      %561 = vmatpush1.msra.mxu0 0.0
      %562 = vmatprep.subr.mxu0 0.0
      %563 = vmatpush1.msra.mxu0 0.0
      %564 = vmatprep.subr.mxu0 0.0
      %565 = vmatpush1.msra.mxu0 0.0
      %566 = vmatprep.subr.mxu0 0.0
      %567 = vmatpush1.msra.mxu0 0.0
      %568 = vmatprep.subr.mxu0 0.0
      %569 = vmatpush1.msra.mxu0 0.0
      %570 = vmatprep.subr.mxu0 0.0
      %571 = vmatpush1.msra.mxu0 0.0
      %572 = vmatprep.subr.mxu0 0.0
      %573 = vmatpush1.msra.mxu0 0.0
      %574 = vmatprep.subr.mxu0 0.0
      %575 = vmatpush1.msra.mxu0 0.0
      %576 = vmatprep.subr.mxu0 0.0
      %577 = vmatpush1.msra.mxu0 0.0
      %578 = vmatprep.subr.mxu0 0.0
      %579 = vmatpush1.msra.mxu0 0.0
      %580 = vmatprep.subr.mxu0 0.0
      %581 = vmatpush1.msra.mxu0 0.0
      %582 = vmatprep.subr.mxu0 0.0
      %583 = vmatpush1.msra.mxu0 0.0
      %584 = vmatprep.subr.mxu0 0.0
      %585 = vmatpush1.msra.mxu0 0.0
      %586 = vmatprep.subr.mxu0 0.0
      %587 = vmatpush1.msra.mxu0 0.0
      %588 = vmatprep.subr.mxu0 0.0
      %589 = vmatpush1.msra.mxu0 0.0
      %590 = vmatprep.subr.mxu0 0.0
      %591 = vmatpush1.msra.mxu0 0.0
      %592 = vmatprep.subr.mxu0 0.0
      %593 = vmatpush1.msra.mxu0 0.0
      %594 = vmatprep.subr.mxu0 0.0
      %595 = vmatpush1.msra.mxu0 0.0
      %596 = vmatprep.subr.mxu0 0.0
      %597 = vmatpush1.msra.mxu0 0.0
      %598 = vmatprep.subr.mxu0 0.0
      %599 = vmatpush1.msra.mxu0 0.0
      %600 = vmatprep.subr.mxu0 0.0
      %601 = vmatpush1.msra.mxu0 0.0
      %602 = vmatprep.subr.mxu0 0.0
      %603 = vmatpush1.msra.mxu0 0.0
      %604 = vmatprep.subr.mxu0 0.0
      %605 = vmatpush1.msra.mxu0 0.0
      %606 = vmatprep.subr.mxu0 0.0
      %607 = vmatpush1.msra.mxu0 0.0
      %608 = vmatprep.subr.mxu0 0.0
      %609 = vmatpush1.msra.mxu0 0.0
      %610 = vmatprep.subr.mxu0 0.0
      %611 = vmatpush1.msra.mxu0 0.0
      %612 = vmatprep.subr.mxu0 0.0
      %613 = vmatpush1.msra.mxu0 0.0
      %614 = vmatprep.subr.mxu0 0.0
      %615 = vmatpush1.msra.mxu0 0.0
      %616 = vmatprep.subr.mxu0 0.0
      %617 = vmatpush1.msra.mxu0 0.0
      %618 = vmatprep.mubr.f32.mxu0 0.0
      %619 = vmatmul.mubr.f32.gmra.mrb[0].mxu0 %v339
      %v620 = vpop.f32.mrb[0].mxu0
      %v621 = vadd.f32 0.0, %v620
      %v622 = vpop.f32.mrb[0].mxu0
      %v623 = vadd.f32 0.0, %v622
      %624 = vdwg.mxu0
      %626 = vset.pattern.permute.xlu0 0
      %627 = vperm.xlu0 %626, %v327
      %v628 = vpop.permute.xlu0 %627
      %v630 = vadd.f32 %v628, %v408
      %v631 = vadd.f32 %v628, %v410
      %v632 = vadd.f32 %v628, %v479
      %v633 = vadd.f32 %v628, %v481
      %v634 = vadd.f32 %v628, %v550
      %v635 = vadd.f32 %v628, %v552
      %v636 = vadd.f32 %v628, %v621
      %v637 = vadd.f32 %v628, %v623
      %s638 = scalar_lea.vmem %s2, 8
      %v639 = vld [vmem:[%s638] sm:$0xff]
      %v640 = vld [vmem:[#allocation2] sm:$0xff]
      %v641 = vld [vmem:[#allocation2 + $0x8] sm:$0xff]
      %v642 = vld [vmem:[#allocation2 + $0x10] sm:$0xff]
      %v643 = vld [vmem:[#allocation2 + $0x18] sm:$0xff]
      %v644 = vld [vmem:[#allocation2 + $0x20] sm:$0xff]
      %v645 = vld [vmem:[#allocation2 + $0x28] sm:$0xff]
      %v646 = vld [vmem:[#allocation2 + $0x30] sm:$0xff]
      %v647 = vld [vmem:[#allocation2 + $0x38] sm:$0xff]
      %v648 = vld [vmem:[#allocation2 + $0x40] sm:$0xff]
      %658 = vrot.lane.b32.xlu0 %v640, 127
      %v659 = vpop.permute.xlu0 %658
      %660 = vrot.lane.b32.xlu0 %v641, 127
      %v661 = vpop.permute.xlu0 %660
      %662 = vrot.lane.b32.xlu0 %v642, 127
      %v663 = vpop.permute.xlu0 %662
      %664 = vrot.lane.b32.xlu0 %v643, 127
      %v665 = vpop.permute.xlu0 %664
      %666 = vrot.lane.b32.xlu0 %v644, 127
      %v667 = vpop.permute.xlu0 %666
      %668 = vrot.lane.b32.xlu0 %v645, 127
      %v669 = vpop.permute.xlu0 %668
      %670 = vrot.lane.b32.xlu0 %v646, 127
      %v671 = vpop.permute.xlu0 %670
      %672 = vrot.lane.b32.xlu0 %v647, 127
      %v673 = vpop.permute.xlu0 %672
      %674 = vrot.lane.b32.xlu0 %v648, 127
      %v675 = vpop.permute.xlu0 %674
      %vm676 = vcmask 1039360
      %v677 = vsel %vm676, %v659, %v661
      %v678 = vsel %vm676, %v661, %v663
      %v679 = vsel %vm676, %v663, %v665
      %v680 = vsel %vm676, %v665, %v667
      %v681 = vsel %vm676, %v667, %v669
      %v682 = vsel %vm676, %v669, %v671
      %v683 = vsel %vm676, %v671, %v673
      %v684 = vsel %vm676, %v673, %v675
      %v694 = vsel %vm337, %v639, 0
      %696 = vmatprep.subr.mxu0 %v678
      %697 = vmatpush1.msra.mxu0 %v677
      %698 = vmatprep.subr.mxu0 0.0
      %699 = vmatpush1.msra.mxu0 0.0
      %700 = vmatprep.subr.mxu0 0.0
      %701 = vmatpush1.msra.mxu0 0.0
      %702 = vmatprep.subr.mxu0 0.0
      %703 = vmatpush1.msra.mxu0 0.0
      %704 = vmatprep.subr.mxu0 0.0
      %705 = vmatpush1.msra.mxu0 0.0
      %706 = vmatprep.subr.mxu0 0.0
      %707 = vmatpush1.msra.mxu0 0.0
      %708 = vmatprep.subr.mxu0 0.0
      %709 = vmatpush1.msra.mxu0 0.0
      %710 = vmatprep.subr.mxu0 0.0
      %711 = vmatpush1.msra.mxu0 0.0
      %712 = vmatprep.subr.mxu0 0.0
      %713 = vmatpush1.msra.mxu0 0.0
      %714 = vmatprep.subr.mxu0 0.0
      %715 = vmatpush1.msra.mxu0 0.0
      %716 = vmatprep.subr.mxu0 0.0
      %717 = vmatpush1.msra.mxu0 0.0
      %718 = vmatprep.subr.mxu0 0.0
      %719 = vmatpush1.msra.mxu0 0.0
      %720 = vmatprep.subr.mxu0 0.0
      %721 = vmatpush1.msra.mxu0 0.0
      %722 = vmatprep.subr.mxu0 0.0
      %723 = vmatpush1.msra.mxu0 0.0
      %724 = vmatprep.subr.mxu0 0.0
      %725 = vmatpush1.msra.mxu0 0.0
      %726 = vmatprep.subr.mxu0 0.0
      %727 = vmatpush1.msra.mxu0 0.0
      %728 = vmatprep.subr.mxu0 0.0
      %729 = vmatpush1.msra.mxu0 0.0
      %730 = vmatprep.subr.mxu0 0.0
      %731 = vmatpush1.msra.mxu0 0.0
      %732 = vmatprep.subr.mxu0 0.0
      %733 = vmatpush1.msra.mxu0 0.0
      %734 = vmatprep.subr.mxu0 0.0
      %735 = vmatpush1.msra.mxu0 0.0
      %736 = vmatprep.subr.mxu0 0.0
      %737 = vmatpush1.msra.mxu0 0.0
      %738 = vmatprep.subr.mxu0 0.0
      %739 = vmatpush1.msra.mxu0 0.0
      %740 = vmatprep.subr.mxu0 0.0
      %741 = vmatpush1.msra.mxu0 0.0
      %742 = vmatprep.subr.mxu0 0.0
      %743 = vmatpush1.msra.mxu0 0.0
      %744 = vmatprep.subr.mxu0 0.0
      %745 = vmatpush1.msra.mxu0 0.0
      %746 = vmatprep.subr.mxu0 0.0
      %747 = vmatpush1.msra.mxu0 0.0
      %748 = vmatprep.subr.mxu0 0.0
      %749 = vmatpush1.msra.mxu0 0.0
      %750 = vmatprep.subr.mxu0 0.0
      %751 = vmatpush1.msra.mxu0 0.0
      %752 = vmatprep.subr.mxu0 0.0
      %753 = vmatpush1.msra.mxu0 0.0
      %754 = vmatprep.subr.mxu0 0.0
      %755 = vmatpush1.msra.mxu0 0.0
      %756 = vmatprep.subr.mxu0 0.0
      %757 = vmatpush1.msra.mxu0 0.0
      %758 = vmatprep.subr.mxu0 0.0
      %759 = vmatpush1.msra.mxu0 0.0
      %760 = vmatprep.mubr.f32.mxu0 0.0
      %761 = vmatmul.mubr.f32.gmra.mrb[0].mxu0 %v694
      %v762 = vpop.f32.mrb[0].mxu0
      %v763 = vadd.f32 0.0, %v762
      %v764 = vpop.f32.mrb[0].mxu0
      %v765 = vadd.f32 0.0, %v764
      %766 = vdwg.mxu0
      %767 = vmatprep.subr.mxu0 %v680
      %768 = vmatpush1.msra.mxu0 %v679
      %769 = vmatprep.subr.mxu0 0.0
      %770 = vmatpush1.msra.mxu0 0.0
      %771 = vmatprep.subr.mxu0 0.0
      %772 = vmatpush1.msra.mxu0 0.0
      %773 = vmatprep.subr.mxu0 0.0
      %774 = vmatpush1.msra.mxu0 0.0
      %775 = vmatprep.subr.mxu0 0.0
      %776 = vmatpush1.msra.mxu0 0.0
      %777 = vmatprep.subr.mxu0 0.0
      %778 = vmatpush1.msra.mxu0 0.0
      %779 = vmatprep.subr.mxu0 0.0
      %780 = vmatpush1.msra.mxu0 0.0
      %781 = vmatprep.subr.mxu0 0.0
      %782 = vmatpush1.msra.mxu0 0.0
      %783 = vmatprep.subr.mxu0 0.0
      %784 = vmatpush1.msra.mxu0 0.0
      %785 = vmatprep.subr.mxu0 0.0
      %786 = vmatpush1.msra.mxu0 0.0
      %787 = vmatprep.subr.mxu0 0.0
      %788 = vmatpush1.msra.mxu0 0.0
      %789 = vmatprep.subr.mxu0 0.0
      %790 = vmatpush1.msra.mxu0 0.0
      %791 = vmatprep.subr.mxu0 0.0
      %792 = vmatpush1.msra.mxu0 0.0
      %793 = vmatprep.subr.mxu0 0.0
      %794 = vmatpush1.msra.mxu0 0.0
      %795 = vmatprep.subr.mxu0 0.0
      %796 = vmatpush1.msra.mxu0 0.0
      %797 = vmatprep.subr.mxu0 0.0
      %798 = vmatpush1.msra.mxu0 0.0
      %799 = vmatprep.subr.mxu0 0.0
      %800 = vmatpush1.msra.mxu0 0.0
      %801 = vmatprep.subr.mxu0 0.0
      %802 = vmatpush1.msra.mxu0 0.0
      %803 = vmatprep.subr.mxu0 0.0
      %804 = vmatpush1.msra.mxu0 0.0
      %805 = vmatprep.subr.mxu0 0.0
      %806 = vmatpush1.msra.mxu0 0.0
      %807 = vmatprep.subr.mxu0 0.0
      %808 = vmatpush1.msra.mxu0 0.0
      %809 = vmatprep.subr.mxu0 0.0
      %810 = vmatpush1.msra.mxu0 0.0
      %811 = vmatprep.subr.mxu0 0.0
      %812 = vmatpush1.msra.mxu0 0.0
      %813 = vmatprep.subr.mxu0 0.0
      %814 = vmatpush1.msra.mxu0 0.0
      %815 = vmatprep.subr.mxu0 0.0
      %816 = vmatpush1.msra.mxu0 0.0
      %817 = vmatprep.subr.mxu0 0.0
      %818 = vmatpush1.msra.mxu0 0.0
      %819 = vmatprep.subr.mxu0 0.0
      %820 = vmatpush1.msra.mxu0 0.0
      %821 = vmatprep.subr.mxu0 0.0
      %822 = vmatpush1.msra.mxu0 0.0
      %823 = vmatprep.subr.mxu0 0.0
      %824 = vmatpush1.msra.mxu0 0.0
      %825 = vmatprep.subr.mxu0 0.0
      %826 = vmatpush1.msra.mxu0 0.0
      %827 = vmatprep.subr.mxu0 0.0
      %828 = vmatpush1.msra.mxu0 0.0
      %829 = vmatprep.subr.mxu0 0.0
      %830 = vmatpush1.msra.mxu0 0.0
      %831 = vmatprep.mubr.f32.mxu0 0.0
      %832 = vmatmul.mubr.f32.gmra.mrb[0].mxu0 %v694
      %v833 = vpop.f32.mrb[0].mxu0
      %v834 = vadd.f32 0.0, %v833
      %v835 = vpop.f32.mrb[0].mxu0
      %v836 = vadd.f32 0.0, %v835
      %837 = vdwg.mxu0
      %838 = vmatprep.subr.mxu0 %v682
      %839 = vmatpush1.msra.mxu0 %v681
      %840 = vmatprep.subr.mxu0 0.0
      %841 = vmatpush1.msra.mxu0 0.0
      %842 = vmatprep.subr.mxu0 0.0
      %843 = vmatpush1.msra.mxu0 0.0
      %844 = vmatprep.subr.mxu0 0.0
      %845 = vmatpush1.msra.mxu0 0.0
      %846 = vmatprep.subr.mxu0 0.0
      %847 = vmatpush1.msra.mxu0 0.0
      %848 = vmatprep.subr.mxu0 0.0
      %849 = vmatpush1.msra.mxu0 0.0
      %850 = vmatprep.subr.mxu0 0.0
      %851 = vmatpush1.msra.mxu0 0.0
      %852 = vmatprep.subr.mxu0 0.0
      %853 = vmatpush1.msra.mxu0 0.0
      %854 = vmatprep.subr.mxu0 0.0
      %855 = vmatpush1.msra.mxu0 0.0
      %856 = vmatprep.subr.mxu0 0.0
      %857 = vmatpush1.msra.mxu0 0.0
      %858 = vmatprep.subr.mxu0 0.0
      %859 = vmatpush1.msra.mxu0 0.0
      %860 = vmatprep.subr.mxu0 0.0
      %861 = vmatpush1.msra.mxu0 0.0
      %862 = vmatprep.subr.mxu0 0.0
      %863 = vmatpush1.msra.mxu0 0.0
      %864 = vmatprep.subr.mxu0 0.0
      %865 = vmatpush1.msra.mxu0 0.0
      %866 = vmatprep.subr.mxu0 0.0
      %867 = vmatpush1.msra.mxu0 0.0
      %868 = vmatprep.subr.mxu0 0.0
      %869 = vmatpush1.msra.mxu0 0.0
      %870 = vmatprep.subr.mxu0 0.0
      %871 = vmatpush1.msra.mxu0 0.0
      %872 = vmatprep.subr.mxu0 0.0
      %873 = vmatpush1.msra.mxu0 0.0
      %874 = vmatprep.subr.mxu0 0.0
      %875 = vmatpush1.msra.mxu0 0.0
      %876 = vmatprep.subr.mxu0 0.0
      %877 = vmatpush1.msra.mxu0 0.0
      %878 = vmatprep.subr.mxu0 0.0
      %879 = vmatpush1.msra.mxu0 0.0
      %880 = vmatprep.subr.mxu0 0.0
      %881 = vmatpush1.msra.mxu0 0.0
      %882 = vmatprep.subr.mxu0 0.0
      %883 = vmatpush1.msra.mxu0 0.0
      %884 = vmatprep.subr.mxu0 0.0
      %885 = vmatpush1.msra.mxu0 0.0
      %886 = vmatprep.subr.mxu0 0.0
      %887 = vmatpush1.msra.mxu0 0.0
      %888 = vmatprep.subr.mxu0 0.0
      %889 = vmatpush1.msra.mxu0 0.0
      %890 = vmatprep.subr.mxu0 0.0
      %891 = vmatpush1.msra.mxu0 0.0
      %892 = vmatprep.subr.mxu0 0.0
      %893 = vmatpush1.msra.mxu0 0.0
      %894 = vmatprep.subr.mxu0 0.0
      %895 = vmatpush1.msra.mxu0 0.0
      %896 = vmatprep.subr.mxu0 0.0
      %897 = vmatpush1.msra.mxu0 0.0
      %898 = vmatprep.subr.mxu0 0.0
      %899 = vmatpush1.msra.mxu0 0.0
      %900 = vmatprep.subr.mxu0 0.0
      %901 = vmatpush1.msra.mxu0 0.0
      %902 = vmatprep.mubr.f32.mxu0 0.0
      %903 = vmatmul.mubr.f32.gmra.mrb[0].mxu0 %v694
      %v904 = vpop.f32.mrb[0].mxu0
      %v905 = vadd.f32 0.0, %v904
      %v906 = vpop.f32.mrb[0].mxu0
      %v907 = vadd.f32 0.0, %v906
      %908 = vdwg.mxu0
      %909 = vmatprep.subr.mxu0 %v684
      %910 = vmatpush1.msra.mxu0 %v683
      %911 = vmatprep.subr.mxu0 0.0
      %912 = vmatpush1.msra.mxu0 0.0
      %913 = vmatprep.subr.mxu0 0.0
      %914 = vmatpush1.msra.mxu0 0.0
      %915 = vmatprep.subr.mxu0 0.0
      %916 = vmatpush1.msra.mxu0 0.0
      %917 = vmatprep.subr.mxu0 0.0
      %918 = vmatpush1.msra.mxu0 0.0
      %919 = vmatprep.subr.mxu0 0.0
      %920 = vmatpush1.msra.mxu0 0.0
      %921 = vmatprep.subr.mxu0 0.0
      %922 = vmatpush1.msra.mxu0 0.0
      %923 = vmatprep.subr.mxu0 0.0
      %924 = vmatpush1.msra.mxu0 0.0
      %925 = vmatprep.subr.mxu0 0.0
      %926 = vmatpush1.msra.mxu0 0.0
      %927 = vmatprep.subr.mxu0 0.0
      %928 = vmatpush1.msra.mxu0 0.0
      %929 = vmatprep.subr.mxu0 0.0
      %930 = vmatpush1.msra.mxu0 0.0
      %931 = vmatprep.subr.mxu0 0.0
      %932 = vmatpush1.msra.mxu0 0.0
      %933 = vmatprep.subr.mxu0 0.0
      %934 = vmatpush1.msra.mxu0 0.0
      %935 = vmatprep.subr.mxu0 0.0
      %936 = vmatpush1.msra.mxu0 0.0
      %937 = vmatprep.subr.mxu0 0.0
      %938 = vmatpush1.msra.mxu0 0.0
      %939 = vmatprep.subr.mxu0 0.0
      %940 = vmatpush1.msra.mxu0 0.0
      %941 = vmatprep.subr.mxu0 0.0
      %942 = vmatpush1.msra.mxu0 0.0
      %943 = vmatprep.subr.mxu0 0.0
      %944 = vmatpush1.msra.mxu0 0.0
      %945 = vmatprep.subr.mxu0 0.0
      %946 = vmatpush1.msra.mxu0 0.0
      %947 = vmatprep.subr.mxu0 0.0
      %948 = vmatpush1.msra.mxu0 0.0
      %949 = vmatprep.subr.mxu0 0.0
      %950 = vmatpush1.msra.mxu0 0.0
      %951 = vmatprep.subr.mxu0 0.0
      %952 = vmatpush1.msra.mxu0 0.0
      %953 = vmatprep.subr.mxu0 0.0
      %954 = vmatpush1.msra.mxu0 0.0
      %955 = vmatprep.subr.mxu0 0.0
      %956 = vmatpush1.msra.mxu0 0.0
      %957 = vmatprep.subr.mxu0 0.0
      %958 = vmatpush1.msra.mxu0 0.0
      %959 = vmatprep.subr.mxu0 0.0
      %960 = vmatpush1.msra.mxu0 0.0
      %961 = vmatprep.subr.mxu0 0.0
      %962 = vmatpush1.msra.mxu0 0.0
      %963 = vmatprep.subr.mxu0 0.0
      %964 = vmatpush1.msra.mxu0 0.0
      %965 = vmatprep.subr.mxu0 0.0
      %966 = vmatpush1.msra.mxu0 0.0
      %967 = vmatprep.subr.mxu0 0.0
      %968 = vmatpush1.msra.mxu0 0.0
      %969 = vmatprep.subr.mxu0 0.0
      %970 = vmatpush1.msra.mxu0 0.0
      %971 = vmatprep.subr.mxu0 0.0
      %972 = vmatpush1.msra.mxu0 0.0
      %973 = vmatprep.mubr.f32.mxu0 0.0
      %974 = vmatmul.mubr.f32.gmra.mrb[0].mxu0 %v694
      %v975 = vpop.f32.mrb[0].mxu0
      %v976 = vadd.f32 0.0, %v975
      %v977 = vpop.f32.mrb[0].mxu0
      %v978 = vadd.f32 0.0, %v977
      %979 = vdwg.mxu0
      %v980 = vadd.f32 %v630, %v763
      %v981 = vadd.f32 %v631, %v765
      %v982 = vadd.f32 %v632, %v834
      %v983 = vadd.f32 %v633, %v836
      %v984 = vadd.f32 %v634, %v905
      %v985 = vadd.f32 %v635, %v907
      %v986 = vadd.f32 %v636, %v976
      %v987 = vadd.f32 %v637, %v978
      %s988 = scalar_lea.vmem %s2, 16
      %v989 = vld [vmem:[%s988] sm:$0xff]
      %990 = vrot.lane.b32.xlu0 %v640, 126
      %v991 = vpop.permute.xlu0 %990
      %992 = vrot.lane.b32.xlu0 %v641, 126
      %v993 = vpop.permute.xlu0 %992
      %994 = vrot.lane.b32.xlu0 %v642, 126
      %v995 = vpop.permute.xlu0 %994
      %996 = vrot.lane.b32.xlu0 %v643, 126
      %v997 = vpop.permute.xlu0 %996
      %998 = vrot.lane.b32.xlu0 %v644, 126
      %v999 = vpop.permute.xlu0 %998
      %1000 = vrot.lane.b32.xlu0 %v645, 126
      %v1001 = vpop.permute.xlu0 %1000
      %1002 = vrot.lane.b32.xlu0 %v646, 126
      %v1003 = vpop.permute.xlu0 %1002
      %1004 = vrot.lane.b32.xlu0 %v647, 126
      %v1005 = vpop.permute.xlu0 %1004
      %1006 = vrot.lane.b32.xlu0 %v648, 126
      %v1007 = vpop.permute.xlu0 %1006
      %vm1008 = vcmask 1031168
      %v1009 = vsel %vm1008, %v991, %v993
      %v1010 = vsel %vm1008, %v993, %v995
      %v1011 = vsel %vm1008, %v995, %v997
      %v1012 = vsel %vm1008, %v997, %v999
      %v1013 = vsel %vm1008, %v999, %v1001
      %v1014 = vsel %vm1008, %v1001, %v1003
      %v1015 = vsel %vm1008, %v1003, %v1005
      %v1016 = vsel %vm1008, %v1005, %v1007
      %v1026 = vsel %vm337, %v989, 0
      %1028 = vmatprep.subr.mxu0 %v1010
      %1029 = vmatpush1.msra.mxu0 %v1009
      %1030 = vmatprep.subr.mxu0 0.0
      %1031 = vmatpush1.msra.mxu0 0.0
      %1032 = vmatprep.subr.mxu0 0.0
      %1033 = vmatpush1.msra.mxu0 0.0
      %1034 = vmatprep.subr.mxu0 0.0
      %1035 = vmatpush1.msra.mxu0 0.0
      %1036 = vmatprep.subr.mxu0 0.0
      %1037 = vmatpush1.msra.mxu0 0.0
      %1038 = vmatprep.subr.mxu0 0.0
      %1039 = vmatpush1.msra.mxu0 0.0
      %1040 = vmatprep.subr.mxu0 0.0
      %1041 = vmatpush1.msra.mxu0 0.0
      %1042 = vmatprep.subr.mxu0 0.0
      %1043 = vmatpush1.msra.mxu0 0.0
      %1044 = vmatprep.subr.mxu0 0.0
      %1045 = vmatpush1.msra.mxu0 0.0
      %1046 = vmatprep.subr.mxu0 0.0
      %1047 = vmatpush1.msra.mxu0 0.0
      %1048 = vmatprep.subr.mxu0 0.0
      %1049 = vmatpush1.msra.mxu0 0.0
      %1050 = vmatprep.subr.mxu0 0.0
      %1051 = vmatpush1.msra.mxu0 0.0
      %1052 = vmatprep.subr.mxu0 0.0
      %1053 = vmatpush1.msra.mxu0 0.0
      %1054 = vmatprep.subr.mxu0 0.0
      %1055 = vmatpush1.msra.mxu0 0.0
      %1056 = vmatprep.subr.mxu0 0.0
      %1057 = vmatpush1.msra.mxu0 0.0
      %1058 = vmatprep.subr.mxu0 0.0
      %1059 = vmatpush1.msra.mxu0 0.0
      %1060 = vmatprep.subr.mxu0 0.0
      %1061 = vmatpush1.msra.mxu0 0.0
      %1062 = vmatprep.subr.mxu0 0.0
      %1063 = vmatpush1.msra.mxu0 0.0
      %1064 = vmatprep.subr.mxu0 0.0
      %1065 = vmatpush1.msra.mxu0 0.0
      %1066 = vmatprep.subr.mxu0 0.0
      %1067 = vmatpush1.msra.mxu0 0.0
      %1068 = vmatprep.subr.mxu0 0.0
      %1069 = vmatpush1.msra.mxu0 0.0
      %1070 = vmatprep.subr.mxu0 0.0
      %1071 = vmatpush1.msra.mxu0 0.0
      %1072 = vmatprep.subr.mxu0 0.0
      %1073 = vmatpush1.msra.mxu0 0.0
      %1074 = vmatprep.subr.mxu0 0.0
      %1075 = vmatpush1.msra.mxu0 0.0
      %1076 = vmatprep.subr.mxu0 0.0
      %1077 = vmatpush1.msra.mxu0 0.0
      %1078 = vmatprep.subr.mxu0 0.0
      %1079 = vmatpush1.msra.mxu0 0.0
      %1080 = vmatprep.subr.mxu0 0.0
      %1081 = vmatpush1.msra.mxu0 0.0
      %1082 = vmatprep.subr.mxu0 0.0
      %1083 = vmatpush1.msra.mxu0 0.0
      %1084 = vmatprep.subr.mxu0 0.0
      %1085 = vmatpush1.msra.mxu0 0.0
      %1086 = vmatprep.subr.mxu0 0.0
      %1087 = vmatpush1.msra.mxu0 0.0
      %1088 = vmatprep.subr.mxu0 0.0
      %1089 = vmatpush1.msra.mxu0 0.0
      %1090 = vmatprep.subr.mxu0 0.0
      %1091 = vmatpush1.msra.mxu0 0.0
      %1092 = vmatprep.mubr.f32.mxu0 0.0
      %1093 = vmatmul.mubr.f32.gmra.mrb[0].mxu0 %v1026
      %v1094 = vpop.f32.mrb[0].mxu0
      %v1095 = vadd.f32 0.0, %v1094
      %v1096 = vpop.f32.mrb[0].mxu0
      %v1097 = vadd.f32 0.0, %v1096
      %1098 = vdwg.mxu0
      %1099 = vmatprep.subr.mxu0 %v1012
      %1100 = vmatpush1.msra.mxu0 %v1011
      %1101 = vmatprep.subr.mxu0 0.0
      %1102 = vmatpush1.msra.mxu0 0.0
      %1103 = vmatprep.subr.mxu0 0.0
      %1104 = vmatpush1.msra.mxu0 0.0
      %1105 = vmatprep.subr.mxu0 0.0
      %1106 = vmatpush1.msra.mxu0 0.0
      %1107 = vmatprep.subr.mxu0 0.0
      %1108 = vmatpush1.msra.mxu0 0.0
      %1109 = vmatprep.subr.mxu0 0.0
      %1110 = vmatpush1.msra.mxu0 0.0
      %1111 = vmatprep.subr.mxu0 0.0
      %1112 = vmatpush1.msra.mxu0 0.0
      %1113 = vmatprep.subr.mxu0 0.0
      %1114 = vmatpush1.msra.mxu0 0.0
      %1115 = vmatprep.subr.mxu0 0.0
      %1116 = vmatpush1.msra.mxu0 0.0
      %1117 = vmatprep.subr.mxu0 0.0
      %1118 = vmatpush1.msra.mxu0 0.0
      %1119 = vmatprep.subr.mxu0 0.0
      %1120 = vmatpush1.msra.mxu0 0.0
      %1121 = vmatprep.subr.mxu0 0.0
      %1122 = vmatpush1.msra.mxu0 0.0
      %1123 = vmatprep.subr.mxu0 0.0
      %1124 = vmatpush1.msra.mxu0 0.0
      %1125 = vmatprep.subr.mxu0 0.0
      %1126 = vmatpush1.msra.mxu0 0.0
      %1127 = vmatprep.subr.mxu0 0.0
      %1128 = vmatpush1.msra.mxu0 0.0
      %1129 = vmatprep.subr.mxu0 0.0
      %1130 = vmatpush1.msra.mxu0 0.0
      %1131 = vmatprep.subr.mxu0 0.0
      %1132 = vmatpush1.msra.mxu0 0.0
      %1133 = vmatprep.subr.mxu0 0.0
      %1134 = vmatpush1.msra.mxu0 0.0
      %1135 = vmatprep.subr.mxu0 0.0
      %1136 = vmatpush1.msra.mxu0 0.0
      %1137 = vmatprep.subr.mxu0 0.0
      %1138 = vmatpush1.msra.mxu0 0.0
      %1139 = vmatprep.subr.mxu0 0.0
      %1140 = vmatpush1.msra.mxu0 0.0
      %1141 = vmatprep.subr.mxu0 0.0
      %1142 = vmatpush1.msra.mxu0 0.0
      %1143 = vmatprep.subr.mxu0 0.0
      %1144 = vmatpush1.msra.mxu0 0.0
      %1145 = vmatprep.subr.mxu0 0.0
      %1146 = vmatpush1.msra.mxu0 0.0
      %1147 = vmatprep.subr.mxu0 0.0
      %1148 = vmatpush1.msra.mxu0 0.0
      %1149 = vmatprep.subr.mxu0 0.0
      %1150 = vmatpush1.msra.mxu0 0.0
      %1151 = vmatprep.subr.mxu0 0.0
      %1152 = vmatpush1.msra.mxu0 0.0
      %1153 = vmatprep.subr.mxu0 0.0
      %1154 = vmatpush1.msra.mxu0 0.0
      %1155 = vmatprep.subr.mxu0 0.0
      %1156 = vmatpush1.msra.mxu0 0.0
      %1157 = vmatprep.subr.mxu0 0.0
      %1158 = vmatpush1.msra.mxu0 0.0
      %1159 = vmatprep.subr.mxu0 0.0
      %1160 = vmatpush1.msra.mxu0 0.0
      %1161 = vmatprep.subr.mxu0 0.0
      %1162 = vmatpush1.msra.mxu0 0.0
      %1163 = vmatprep.mubr.f32.mxu0 0.0
      %1164 = vmatmul.mubr.f32.gmra.mrb[0].mxu0 %v1026
      %v1165 = vpop.f32.mrb[0].mxu0
      %v1166 = vadd.f32 0.0, %v1165
      %v1167 = vpop.f32.mrb[0].mxu0
      %v1168 = vadd.f32 0.0, %v1167
      %1169 = vdwg.mxu0
      %1170 = vmatprep.subr.mxu0 %v1014
      %1171 = vmatpush1.msra.mxu0 %v1013
      %1172 = vmatprep.subr.mxu0 0.0
      %1173 = vmatpush1.msra.mxu0 0.0
      %1174 = vmatprep.subr.mxu0 0.0
      %1175 = vmatpush1.msra.mxu0 0.0
      %1176 = vmatprep.subr.mxu0 0.0
      %1177 = vmatpush1.msra.mxu0 0.0
      %1178 = vmatprep.subr.mxu0 0.0
      %1179 = vmatpush1.msra.mxu0 0.0
      %1180 = vmatprep.subr.mxu0 0.0
      %1181 = vmatpush1.msra.mxu0 0.0
      %1182 = vmatprep.subr.mxu0 0.0
      %1183 = vmatpush1.msra.mxu0 0.0
      %1184 = vmatprep.subr.mxu0 0.0
      %1185 = vmatpush1.msra.mxu0 0.0
      %1186 = vmatprep.subr.mxu0 0.0
      %1187 = vmatpush1.msra.mxu0 0.0
      %1188 = vmatprep.subr.mxu0 0.0
      %1189 = vmatpush1.msra.mxu0 0.0
      %1190 = vmatprep.subr.mxu0 0.0
      %1191 = vmatpush1.msra.mxu0 0.0
      %1192 = vmatprep.subr.mxu0 0.0
      %1193 = vmatpush1.msra.mxu0 0.0
      %1194 = vmatprep.subr.mxu0 0.0
      %1195 = vmatpush1.msra.mxu0 0.0
      %1196 = vmatprep.subr.mxu0 0.0
      %1197 = vmatpush1.msra.mxu0 0.0
      %1198 = vmatprep.subr.mxu0 0.0
      %1199 = vmatpush1.msra.mxu0 0.0
      %1200 = vmatprep.subr.mxu0 0.0
      %1201 = vmatpush1.msra.mxu0 0.0
      %1202 = vmatprep.subr.mxu0 0.0
      %1203 = vmatpush1.msra.mxu0 0.0
      %1204 = vmatprep.subr.mxu0 0.0
      %1205 = vmatpush1.msra.mxu0 0.0
      %1206 = vmatprep.subr.mxu0 0.0
      %1207 = vmatpush1.msra.mxu0 0.0
      %1208 = vmatprep.subr.mxu0 0.0
      %1209 = vmatpush1.msra.mxu0 0.0
      %1210 = vmatprep.subr.mxu0 0.0
      %1211 = vmatpush1.msra.mxu0 0.0
      %1212 = vmatprep.subr.mxu0 0.0
      %1213 = vmatpush1.msra.mxu0 0.0
      %1214 = vmatprep.subr.mxu0 0.0
      %1215 = vmatpush1.msra.mxu0 0.0
      %1216 = vmatprep.subr.mxu0 0.0
      %1217 = vmatpush1.msra.mxu0 0.0
      %1218 = vmatprep.subr.mxu0 0.0
      %1219 = vmatpush1.msra.mxu0 0.0
      %1220 = vmatprep.subr.mxu0 0.0
      %1221 = vmatpush1.msra.mxu0 0.0
      %1222 = vmatprep.subr.mxu0 0.0
      %1223 = vmatpush1.msra.mxu0 0.0
      %1224 = vmatprep.subr.mxu0 0.0
      %1225 = vmatpush1.msra.mxu0 0.0
      %1226 = vmatprep.subr.mxu0 0.0
      %1227 = vmatpush1.msra.mxu0 0.0
      %1228 = vmatprep.subr.mxu0 0.0
      %1229 = vmatpush1.msra.mxu0 0.0
      %1230 = vmatprep.subr.mxu0 0.0
      %1231 = vmatpush1.msra.mxu0 0.0
      %1232 = vmatprep.subr.mxu0 0.0
      %1233 = vmatpush1.msra.mxu0 0.0
      %1234 = vmatprep.mubr.f32.mxu0 0.0
      %1235 = vmatmul.mubr.f32.gmra.mrb[0].mxu0 %v1026
      %v1236 = vpop.f32.mrb[0].mxu0
      %v1237 = vadd.f32 0.0, %v1236
      %v1238 = vpop.f32.mrb[0].mxu0
      %v1239 = vadd.f32 0.0, %v1238
      %1240 = vdwg.mxu0
      %1241 = vmatprep.subr.mxu0 %v1016
      %1242 = vmatpush1.msra.mxu0 %v1015
      %1243 = vmatprep.subr.mxu0 0.0
      %1244 = vmatpush1.msra.mxu0 0.0
      %1245 = vmatprep.subr.mxu0 0.0
      %1246 = vmatpush1.msra.mxu0 0.0
      %1247 = vmatprep.subr.mxu0 0.0
      %1248 = vmatpush1.msra.mxu0 0.0
      %1249 = vmatprep.subr.mxu0 0.0
      %1250 = vmatpush1.msra.mxu0 0.0
      %1251 = vmatprep.subr.mxu0 0.0
      %1252 = vmatpush1.msra.mxu0 0.0
      %1253 = vmatprep.subr.mxu0 0.0
      %1254 = vmatpush1.msra.mxu0 0.0
      %1255 = vmatprep.subr.mxu0 0.0
      %1256 = vmatpush1.msra.mxu0 0.0
      %1257 = vmatprep.subr.mxu0 0.0
      %1258 = vmatpush1.msra.mxu0 0.0
      %1259 = vmatprep.subr.mxu0 0.0
      %1260 = vmatpush1.msra.mxu0 0.0
      %1261 = vmatprep.subr.mxu0 0.0
      %1262 = vmatpush1.msra.mxu0 0.0
      %1263 = vmatprep.subr.mxu0 0.0
      %1264 = vmatpush1.msra.mxu0 0.0
      %1265 = vmatprep.subr.mxu0 0.0
      %1266 = vmatpush1.msra.mxu0 0.0
      %1267 = vmatprep.subr.mxu0 0.0
      %1268 = vmatpush1.msra.mxu0 0.0
      %1269 = vmatprep.subr.mxu0 0.0
      %1270 = vmatpush1.msra.mxu0 0.0
      %1271 = vmatprep.subr.mxu0 0.0
      %1272 = vmatpush1.msra.mxu0 0.0
      %1273 = vmatprep.subr.mxu0 0.0
      %1274 = vmatpush1.msra.mxu0 0.0
      %1275 = vmatprep.subr.mxu0 0.0
      %1276 = vmatpush1.msra.mxu0 0.0
      %1277 = vmatprep.subr.mxu0 0.0
      %1278 = vmatpush1.msra.mxu0 0.0
      %1279 = vmatprep.subr.mxu0 0.0
      %1280 = vmatpush1.msra.mxu0 0.0
      %1281 = vmatprep.subr.mxu0 0.0
      %1282 = vmatpush1.msra.mxu0 0.0
      %1283 = vmatprep.subr.mxu0 0.0
      %1284 = vmatpush1.msra.mxu0 0.0
      %1285 = vmatprep.subr.mxu0 0.0
      %1286 = vmatpush1.msra.mxu0 0.0
      %1287 = vmatprep.subr.mxu0 0.0
      %1288 = vmatpush1.msra.mxu0 0.0
      %1289 = vmatprep.subr.mxu0 0.0
      %1290 = vmatpush1.msra.mxu0 0.0
      %1291 = vmatprep.subr.mxu0 0.0
      %1292 = vmatpush1.msra.mxu0 0.0
      %1293 = vmatprep.subr.mxu0 0.0
      %1294 = vmatpush1.msra.mxu0 0.0
      %1295 = vmatprep.subr.mxu0 0.0
      %1296 = vmatpush1.msra.mxu0 0.0
      %1297 = vmatprep.subr.mxu0 0.0
      %1298 = vmatpush1.msra.mxu0 0.0
      %1299 = vmatprep.subr.mxu0 0.0
      %1300 = vmatpush1.msra.mxu0 0.0
      %1301 = vmatprep.subr.mxu0 0.0
      %1302 = vmatpush1.msra.mxu0 0.0
      %1303 = vmatprep.subr.mxu0 0.0
      %1304 = vmatpush1.msra.mxu0 0.0
      %1305 = vmatprep.mubr.f32.mxu0 0.0
      %1306 = vmatmul.mubr.f32.gmra.mrb[0].mxu0 %v1026
      %v1307 = vpop.f32.mrb[0].mxu0
      %v1308 = vadd.f32 0.0, %v1307
      %v1309 = vpop.f32.mrb[0].mxu0
      %v1310 = vadd.f32 0.0, %v1309
      %1311 = vdwg.mxu0
      %v1312 = vadd.f32 %v980, %v1095
      %v1313 = vadd.f32 %v981, %v1097
      %v1314 = vadd.f32 %v982, %v1166
      %v1315 = vadd.f32 %v983, %v1168
      %v1316 = vadd.f32 %v984, %v1237
      %v1317 = vadd.f32 %v985, %v1239
      %v1318 = vadd.f32 %v986, %v1308
      %v1319 = vadd.f32 %v987, %v1310
      %s1320 = scalar_lea.vmem %s2, 24
      %v1321 = vld [vmem:[%s1320] sm:$0xff]
      %1322 = vrot.lane.b32.xlu0 %v640, 118
      %v1323 = vpop.permute.xlu0 %1322
      %1324 = vrot.lane.b32.xlu0 %v641, 118
      %v1325 = vpop.permute.xlu0 %1324
      %1326 = vrot.lane.b32.xlu0 %v642, 118
      %v1327 = vpop.permute.xlu0 %1326
      %1328 = vrot.lane.b32.xlu0 %v643, 118
      %v1329 = vpop.permute.xlu0 %1328
      %1330 = vrot.lane.b32.xlu0 %v644, 118
      %v1331 = vpop.permute.xlu0 %1330
      %1332 = vrot.lane.b32.xlu0 %v645, 118
      %v1333 = vpop.permute.xlu0 %1332
      %1334 = vrot.lane.b32.xlu0 %v646, 118
      %v1335 = vpop.permute.xlu0 %1334
      %1336 = vrot.lane.b32.xlu0 %v647, 118
      %v1337 = vpop.permute.xlu0 %1336
      %1338 = vrot.lane.b32.xlu0 %v648, 118
      %v1339 = vpop.permute.xlu0 %1338
      %vm1340 = vcmask 965632
      %v1341 = vsel %vm1340, %v1323, %v1325
      %v1342 = vsel %vm1340, %v1325, %v1327
      %v1343 = vsel %vm1340, %v1327, %v1329
      %v1344 = vsel %vm1340, %v1329, %v1331
      %v1345 = vsel %vm1340, %v1331, %v1333
      %v1346 = vsel %vm1340, %v1333, %v1335
      %v1347 = vsel %vm1340, %v1335, %v1337
      %v1348 = vsel %vm1340, %v1337, %v1339
      %v1358 = vsel %vm337, %v1321, 0
      %1360 = vmatprep.subr.mxu0 %v1342
      %1361 = vmatpush1.msra.mxu0 %v1341
      %1362 = vmatprep.subr.mxu0 0.0
      %1363 = vmatpush1.msra.mxu0 0.0
      %1364 = vmatprep.subr.mxu0 0.0
      %1365 = vmatpush1.msra.mxu0 0.0
      %1366 = vmatprep.subr.mxu0 0.0
      %1367 = vmatpush1.msra.mxu0 0.0
      %1368 = vmatprep.subr.mxu0 0.0
      %1369 = vmatpush1.msra.mxu0 0.0
      %1370 = vmatprep.subr.mxu0 0.0
      %1371 = vmatpush1.msra.mxu0 0.0
      %1372 = vmatprep.subr.mxu0 0.0
      %1373 = vmatpush1.msra.mxu0 0.0
      %1374 = vmatprep.subr.mxu0 0.0
      %1375 = vmatpush1.msra.mxu0 0.0
      %1376 = vmatprep.subr.mxu0 0.0
      %1377 = vmatpush1.msra.mxu0 0.0
      %1378 = vmatprep.subr.mxu0 0.0
      %1379 = vmatpush1.msra.mxu0 0.0
      %1380 = vmatprep.subr.mxu0 0.0
      %1381 = vmatpush1.msra.mxu0 0.0
      %1382 = vmatprep.subr.mxu0 0.0
      %1383 = vmatpush1.msra.mxu0 0.0
      %1384 = vmatprep.subr.mxu0 0.0
      %1385 = vmatpush1.msra.mxu0 0.0
      %1386 = vmatprep.subr.mxu0 0.0
      %1387 = vmatpush1.msra.mxu0 0.0
      %1388 = vmatprep.subr.mxu0 0.0
      %1389 = vmatpush1.msra.mxu0 0.0
      %1390 = vmatprep.subr.mxu0 0.0
      %1391 = vmatpush1.msra.mxu0 0.0
      %1392 = vmatprep.subr.mxu0 0.0
      %1393 = vmatpush1.msra.mxu0 0.0
      %1394 = vmatprep.subr.mxu0 0.0
      %1395 = vmatpush1.msra.mxu0 0.0
      %1396 = vmatprep.subr.mxu0 0.0
      %1397 = vmatpush1.msra.mxu0 0.0
      %1398 = vmatprep.subr.mxu0 0.0
      %1399 = vmatpush1.msra.mxu0 0.0
      %1400 = vmatprep.subr.mxu0 0.0
      %1401 = vmatpush1.msra.mxu0 0.0
      %1402 = vmatprep.subr.mxu0 0.0
      %1403 = vmatpush1.msra.mxu0 0.0
      %1404 = vmatprep.subr.mxu0 0.0
      %1405 = vmatpush1.msra.mxu0 0.0
      %1406 = vmatprep.subr.mxu0 0.0
      %1407 = vmatpush1.msra.mxu0 0.0
      %1408 = vmatprep.subr.mxu0 0.0
      %1409 = vmatpush1.msra.mxu0 0.0
      %1410 = vmatprep.subr.mxu0 0.0
      %1411 = vmatpush1.msra.mxu0 0.0
      %1412 = vmatprep.subr.mxu0 0.0
      %1413 = vmatpush1.msra.mxu0 0.0
      %1414 = vmatprep.subr.mxu0 0.0
      %1415 = vmatpush1.msra.mxu0 0.0
      %1416 = vmatprep.subr.mxu0 0.0
      %1417 = vmatpush1.msra.mxu0 0.0
      %1418 = vmatprep.subr.mxu0 0.0
      %1419 = vmatpush1.msra.mxu0 0.0
      %1420 = vmatprep.subr.mxu0 0.0
      %1421 = vmatpush1.msra.mxu0 0.0
      %1422 = vmatprep.subr.mxu0 0.0
      %1423 = vmatpush1.msra.mxu0 0.0
      %1424 = vmatprep.mubr.f32.mxu0 0.0
      %1425 = vmatmul.mubr.f32.gmra.mrb[0].mxu0 %v1358
      %v1426 = vpop.f32.mrb[0].mxu0
      %v1427 = vadd.f32 0.0, %v1426
      %v1428 = vpop.f32.mrb[0].mxu0
      %v1429 = vadd.f32 0.0, %v1428
      %1430 = vdwg.mxu0
      %1431 = vmatprep.subr.mxu0 %v1344
      %1432 = vmatpush1.msra.mxu0 %v1343
      %1433 = vmatprep.subr.mxu0 0.0
      %1434 = vmatpush1.msra.mxu0 0.0
      %1435 = vmatprep.subr.mxu0 0.0
      %1436 = vmatpush1.msra.mxu0 0.0
      %1437 = vmatprep.subr.mxu0 0.0
      %1438 = vmatpush1.msra.mxu0 0.0
      %1439 = vmatprep.subr.mxu0 0.0
      %1440 = vmatpush1.msra.mxu0 0.0
      %1441 = vmatprep.subr.mxu0 0.0
      %1442 = vmatpush1.msra.mxu0 0.0
      %1443 = vmatprep.subr.mxu0 0.0
      %1444 = vmatpush1.msra.mxu0 0.0
      %1445 = vmatprep.subr.mxu0 0.0
      %1446 = vmatpush1.msra.mxu0 0.0
      %1447 = vmatprep.subr.mxu0 0.0
      %1448 = vmatpush1.msra.mxu0 0.0
      %1449 = vmatprep.subr.mxu0 0.0
      %1450 = vmatpush1.msra.mxu0 0.0
      %1451 = vmatprep.subr.mxu0 0.0
      %1452 = vmatpush1.msra.mxu0 0.0
      %1453 = vmatprep.subr.mxu0 0.0
      %1454 = vmatpush1.msra.mxu0 0.0
      %1455 = vmatprep.subr.mxu0 0.0
      %1456 = vmatpush1.msra.mxu0 0.0
      %1457 = vmatprep.subr.mxu0 0.0
      %1458 = vmatpush1.msra.mxu0 0.0
      %1459 = vmatprep.subr.mxu0 0.0
      %1460 = vmatpush1.msra.mxu0 0.0
      %1461 = vmatprep.subr.mxu0 0.0
      %1462 = vmatpush1.msra.mxu0 0.0
      %1463 = vmatprep.subr.mxu0 0.0
      %1464 = vmatpush1.msra.mxu0 0.0
      %1465 = vmatprep.subr.mxu0 0.0
      %1466 = vmatpush1.msra.mxu0 0.0
      %1467 = vmatprep.subr.mxu0 0.0
      %1468 = vmatpush1.msra.mxu0 0.0
      %1469 = vmatprep.subr.mxu0 0.0
      %1470 = vmatpush1.msra.mxu0 0.0
      %1471 = vmatprep.subr.mxu0 0.0
      %1472 = vmatpush1.msra.mxu0 0.0
      %1473 = vmatprep.subr.mxu0 0.0
      %1474 = vmatpush1.msra.mxu0 0.0
      %1475 = vmatprep.subr.mxu0 0.0
      %1476 = vmatpush1.msra.mxu0 0.0
      %1477 = vmatprep.subr.mxu0 0.0
      %1478 = vmatpush1.msra.mxu0 0.0
      %1479 = vmatprep.subr.mxu0 0.0
      %1480 = vmatpush1.msra.mxu0 0.0
      %1481 = vmatprep.subr.mxu0 0.0
      %1482 = vmatpush1.msra.mxu0 0.0
      %1483 = vmatprep.subr.mxu0 0.0
      %1484 = vmatpush1.msra.mxu0 0.0
      %1485 = vmatprep.subr.mxu0 0.0
      %1486 = vmatpush1.msra.mxu0 0.0
      %1487 = vmatprep.subr.mxu0 0.0
      %1488 = vmatpush1.msra.mxu0 0.0
      %1489 = vmatprep.subr.mxu0 0.0
      %1490 = vmatpush1.msra.mxu0 0.0
      %1491 = vmatprep.subr.mxu0 0.0
      %1492 = vmatpush1.msra.mxu0 0.0
      %1493 = vmatprep.subr.mxu0 0.0
      %1494 = vmatpush1.msra.mxu0 0.0
      %1495 = vmatprep.mubr.f32.mxu0 0.0
      %1496 = vmatmul.mubr.f32.gmra.mrb[0].mxu0 %v1358
      %v1497 = vpop.f32.mrb[0].mxu0
      %v1498 = vadd.f32 0.0, %v1497
      %v1499 = vpop.f32.mrb[0].mxu0
      %v1500 = vadd.f32 0.0, %v1499
      %1501 = vdwg.mxu0
      %1502 = vmatprep.subr.mxu0 %v1346
      %1503 = vmatpush1.msra.mxu0 %v1345
      %1504 = vmatprep.subr.mxu0 0.0
      %1505 = vmatpush1.msra.mxu0 0.0
      %1506 = vmatprep.subr.mxu0 0.0
      %1507 = vmatpush1.msra.mxu0 0.0
      %1508 = vmatprep.subr.mxu0 0.0
      %1509 = vmatpush1.msra.mxu0 0.0
      %1510 = vmatprep.subr.mxu0 0.0
      %1511 = vmatpush1.msra.mxu0 0.0
      %1512 = vmatprep.subr.mxu0 0.0
      %1513 = vmatpush1.msra.mxu0 0.0
      %1514 = vmatprep.subr.mxu0 0.0
      %1515 = vmatpush1.msra.mxu0 0.0
      %1516 = vmatprep.subr.mxu0 0.0
      %1517 = vmatpush1.msra.mxu0 0.0
      %1518 = vmatprep.subr.mxu0 0.0
      %1519 = vmatpush1.msra.mxu0 0.0
      %1520 = vmatprep.subr.mxu0 0.0
      %1521 = vmatpush1.msra.mxu0 0.0
      %1522 = vmatprep.subr.mxu0 0.0
      %1523 = vmatpush1.msra.mxu0 0.0
      %1524 = vmatprep.subr.mxu0 0.0
      %1525 = vmatpush1.msra.mxu0 0.0
      %1526 = vmatprep.subr.mxu0 0.0
      %1527 = vmatpush1.msra.mxu0 0.0
      %1528 = vmatprep.subr.mxu0 0.0
      %1529 = vmatpush1.msra.mxu0 0.0
      %1530 = vmatprep.subr.mxu0 0.0
      %1531 = vmatpush1.msra.mxu0 0.0
      %1532 = vmatprep.subr.mxu0 0.0
      %1533 = vmatpush1.msra.mxu0 0.0
      %1534 = vmatprep.subr.mxu0 0.0
      %1535 = vmatpush1.msra.mxu0 0.0
      %1536 = vmatprep.subr.mxu0 0.0
      %1537 = vmatpush1.msra.mxu0 0.0
      %1538 = vmatprep.subr.mxu0 0.0
      %1539 = vmatpush1.msra.mxu0 0.0
      %1540 = vmatprep.subr.mxu0 0.0
      %1541 = vmatpush1.msra.mxu0 0.0
      %1542 = vmatprep.subr.mxu0 0.0
      %1543 = vmatpush1.msra.mxu0 0.0
      %1544 = vmatprep.subr.mxu0 0.0
      %1545 = vmatpush1.msra.mxu0 0.0
      %1546 = vmatprep.subr.mxu0 0.0
      %1547 = vmatpush1.msra.mxu0 0.0
      %1548 = vmatprep.subr.mxu0 0.0
      %1549 = vmatpush1.msra.mxu0 0.0
      %1550 = vmatprep.subr.mxu0 0.0
      %1551 = vmatpush1.msra.mxu0 0.0
      %1552 = vmatprep.subr.mxu0 0.0
      %1553 = vmatpush1.msra.mxu0 0.0
      %1554 = vmatprep.subr.mxu0 0.0
      %1555 = vmatpush1.msra.mxu0 0.0
      %1556 = vmatprep.subr.mxu0 0.0
      %1557 = vmatpush1.msra.mxu0 0.0
      %1558 = vmatprep.subr.mxu0 0.0
      %1559 = vmatpush1.msra.mxu0 0.0
      %1560 = vmatprep.subr.mxu0 0.0
      %1561 = vmatpush1.msra.mxu0 0.0
      %1562 = vmatprep.subr.mxu0 0.0
      %1563 = vmatpush1.msra.mxu0 0.0
      %1564 = vmatprep.subr.mxu0 0.0
      %1565 = vmatpush1.msra.mxu0 0.0
      %1566 = vmatprep.mubr.f32.mxu0 0.0
      %1567 = vmatmul.mubr.f32.gmra.mrb[0].mxu0 %v1358
      %v1568 = vpop.f32.mrb[0].mxu0
      %v1569 = vadd.f32 0.0, %v1568
      %v1570 = vpop.f32.mrb[0].mxu0
      %v1571 = vadd.f32 0.0, %v1570
      %1572 = vdwg.mxu0
      %1573 = vmatprep.subr.mxu0 %v1348
      %1574 = vmatpush1.msra.mxu0 %v1347
      %1575 = vmatprep.subr.mxu0 0.0
      %1576 = vmatpush1.msra.mxu0 0.0
      %1577 = vmatprep.subr.mxu0 0.0
      %1578 = vmatpush1.msra.mxu0 0.0
      %1579 = vmatprep.subr.mxu0 0.0
      %1580 = vmatpush1.msra.mxu0 0.0
      %1581 = vmatprep.subr.mxu0 0.0
      %1582 = vmatpush1.msra.mxu0 0.0
      %1583 = vmatprep.subr.mxu0 0.0
      %1584 = vmatpush1.msra.mxu0 0.0
      %1585 = vmatprep.subr.mxu0 0.0
      %1586 = vmatpush1.msra.mxu0 0.0
      %1587 = vmatprep.subr.mxu0 0.0
      %1588 = vmatpush1.msra.mxu0 0.0
      %1589 = vmatprep.subr.mxu0 0.0
      %1590 = vmatpush1.msra.mxu0 0.0
      %1591 = vmatprep.subr.mxu0 0.0
      %1592 = vmatpush1.msra.mxu0 0.0
      %1593 = vmatprep.subr.mxu0 0.0
      %1594 = vmatpush1.msra.mxu0 0.0
      %1595 = vmatprep.subr.mxu0 0.0
      %1596 = vmatpush1.msra.mxu0 0.0
      %1597 = vmatprep.subr.mxu0 0.0
      %1598 = vmatpush1.msra.mxu0 0.0
      %1599 = vmatprep.subr.mxu0 0.0
      %1600 = vmatpush1.msra.mxu0 0.0
      %1601 = vmatprep.subr.mxu0 0.0
      %1602 = vmatpush1.msra.mxu0 0.0
      %1603 = vmatprep.subr.mxu0 0.0
      %1604 = vmatpush1.msra.mxu0 0.0
      %1605 = vmatprep.subr.mxu0 0.0
      %1606 = vmatpush1.msra.mxu0 0.0
      %1607 = vmatprep.subr.mxu0 0.0
      %1608 = vmatpush1.msra.mxu0 0.0
      %1609 = vmatprep.subr.mxu0 0.0
      %1610 = vmatpush1.msra.mxu0 0.0
      %1611 = vmatprep.subr.mxu0 0.0
      %1612 = vmatpush1.msra.mxu0 0.0
      %1613 = vmatprep.subr.mxu0 0.0
      %1614 = vmatpush1.msra.mxu0 0.0
      %1615 = vmatprep.subr.mxu0 0.0
      %1616 = vmatpush1.msra.mxu0 0.0
      %1617 = vmatprep.subr.mxu0 0.0
      %1618 = vmatpush1.msra.mxu0 0.0
      %1619 = vmatprep.subr.mxu0 0.0
      %1620 = vmatpush1.msra.mxu0 0.0
      %1621 = vmatprep.subr.mxu0 0.0
      %1622 = vmatpush1.msra.mxu0 0.0
      %1623 = vmatprep.subr.mxu0 0.0
      %1624 = vmatpush1.msra.mxu0 0.0
      %1625 = vmatprep.subr.mxu0 0.0
      %1626 = vmatpush1.msra.mxu0 0.0
      %1627 = vmatprep.subr.mxu0 0.0
      %1628 = vmatpush1.msra.mxu0 0.0
      %1629 = vmatprep.subr.mxu0 0.0
      %1630 = vmatpush1.msra.mxu0 0.0
      %1631 = vmatprep.subr.mxu0 0.0
      %1632 = vmatpush1.msra.mxu0 0.0
      %1633 = vmatprep.subr.mxu0 0.0
      %1634 = vmatpush1.msra.mxu0 0.0
      %1635 = vmatprep.subr.mxu0 0.0
      %1636 = vmatpush1.msra.mxu0 0.0
      %1637 = vmatprep.mubr.f32.mxu0 0.0
      %1638 = vmatmul.mubr.f32.gmra.mrb[0].mxu0 %v1358
      %v1639 = vpop.f32.mrb[0].mxu0
      %v1640 = vadd.f32 0.0, %v1639
      %v1641 = vpop.f32.mrb[0].mxu0
      %v1642 = vadd.f32 0.0, %v1641
      %1643 = vdwg.mxu0
      %v1644 = vadd.f32 %v1312, %v1427
      %v1645 = vadd.f32 %v1313, %v1429
      %v1646 = vadd.f32 %v1314, %v1498
      %v1647 = vadd.f32 %v1315, %v1500
      %v1648 = vadd.f32 %v1316, %v1569
      %v1649 = vadd.f32 %v1317, %v1571
      %v1650 = vadd.f32 %v1318, %v1640
      %v1651 = vadd.f32 %v1319, %v1642
      %s1652 = scalar_lea.vmem %s2, 32
      %v1653 = vld [vmem:[%s1652] sm:$0xff]
      %1654 = vrot.lane.b32.xlu0 %v640, 117
      %v1655 = vpop.permute.xlu0 %1654
      %1656 = vrot.lane.b32.xlu0 %v641, 117
      %v1657 = vpop.permute.xlu0 %1656
      %1658 = vrot.lane.b32.xlu0 %v642, 117
      %v1659 = vpop.permute.xlu0 %1658
      %1660 = vrot.lane.b32.xlu0 %v643, 117
      %v1661 = vpop.permute.xlu0 %1660
      %1662 = vrot.lane.b32.xlu0 %v644, 117
      %v1663 = vpop.permute.xlu0 %1662
      %1664 = vrot.lane.b32.xlu0 %v645, 117
      %v1665 = vpop.permute.xlu0 %1664
      %1666 = vrot.lane.b32.xlu0 %v646, 117
      %v1667 = vpop.permute.xlu0 %1666
      %1668 = vrot.lane.b32.xlu0 %v647, 117
      %v1669 = vpop.permute.xlu0 %1668
      %1670 = vrot.lane.b32.xlu0 %v648, 117
      %v1671 = vpop.permute.xlu0 %1670
      %vm1672 = vcmask 957440
      %v1673 = vsel %vm1672, %v1655, %v1657
      %v1674 = vsel %vm1672, %v1657, %v1659
      %v1675 = vsel %vm1672, %v1659, %v1661
      %v1676 = vsel %vm1672, %v1661, %v1663
      %v1677 = vsel %vm1672, %v1663, %v1665
      %v1678 = vsel %vm1672, %v1665, %v1667
      %v1679 = vsel %vm1672, %v1667, %v1669
      %v1680 = vsel %vm1672, %v1669, %v1671
      %v1690 = vsel %vm337, %v1653, 0
      %1692 = vmatprep.subr.mxu0 %v1674
      %1693 = vmatpush1.msra.mxu0 %v1673
      %1694 = vmatprep.subr.mxu0 0.0
      %1695 = vmatpush1.msra.mxu0 0.0
      %1696 = vmatprep.subr.mxu0 0.0
      %1697 = vmatpush1.msra.mxu0 0.0
      %1698 = vmatprep.subr.mxu0 0.0
      %1699 = vmatpush1.msra.mxu0 0.0
      %1700 = vmatprep.subr.mxu0 0.0
      %1701 = vmatpush1.msra.mxu0 0.0
      %1702 = vmatprep.subr.mxu0 0.0
      %1703 = vmatpush1.msra.mxu0 0.0
      %1704 = vmatprep.subr.mxu0 0.0
      %1705 = vmatpush1.msra.mxu0 0.0
      %1706 = vmatprep.subr.mxu0 0.0
      %1707 = vmatpush1.msra.mxu0 0.0
      %1708 = vmatprep.subr.mxu0 0.0
      %1709 = vmatpush1.msra.mxu0 0.0
      %1710 = vmatprep.subr.mxu0 0.0
      %1711 = vmatpush1.msra.mxu0 0.0
      %1712 = vmatprep.subr.mxu0 0.0
      %1713 = vmatpush1.msra.mxu0 0.0
      %1714 = vmatprep.subr.mxu0 0.0
      %1715 = vmatpush1.msra.mxu0 0.0
      %1716 = vmatprep.subr.mxu0 0.0
      %1717 = vmatpush1.msra.mxu0 0.0
      %1718 = vmatprep.subr.mxu0 0.0
      %1719 = vmatpush1.msra.mxu0 0.0
      %1720 = vmatprep.subr.mxu0 0.0
      %1721 = vmatpush1.msra.mxu0 0.0
      %1722 = vmatprep.subr.mxu0 0.0
      %1723 = vmatpush1.msra.mxu0 0.0
      %1724 = vmatprep.subr.mxu0 0.0
      %1725 = vmatpush1.msra.mxu0 0.0
      %1726 = vmatprep.subr.mxu0 0.0
      %1727 = vmatpush1.msra.mxu0 0.0
      %1728 = vmatprep.subr.mxu0 0.0
      %1729 = vmatpush1.msra.mxu0 0.0
      %1730 = vmatprep.subr.mxu0 0.0
      %1731 = vmatpush1.msra.mxu0 0.0
      %1732 = vmatprep.subr.mxu0 0.0
      %1733 = vmatpush1.msra.mxu0 0.0
      %1734 = vmatprep.subr.mxu0 0.0
      %1735 = vmatpush1.msra.mxu0 0.0
      %1736 = vmatprep.subr.mxu0 0.0
      %1737 = vmatpush1.msra.mxu0 0.0
      %1738 = vmatprep.subr.mxu0 0.0
      %1739 = vmatpush1.msra.mxu0 0.0
      %1740 = vmatprep.subr.mxu0 0.0
      %1741 = vmatpush1.msra.mxu0 0.0
      %1742 = vmatprep.subr.mxu0 0.0
      %1743 = vmatpush1.msra.mxu0 0.0
      %1744 = vmatprep.subr.mxu0 0.0
      %1745 = vmatpush1.msra.mxu0 0.0
      %1746 = vmatprep.subr.mxu0 0.0
      %1747 = vmatpush1.msra.mxu0 0.0
      %1748 = vmatprep.subr.mxu0 0.0
      %1749 = vmatpush1.msra.mxu0 0.0
      %1750 = vmatprep.subr.mxu0 0.0
      %1751 = vmatpush1.msra.mxu0 0.0
      %1752 = vmatprep.subr.mxu0 0.0
      %1753 = vmatpush1.msra.mxu0 0.0
      %1754 = vmatprep.subr.mxu0 0.0
      %1755 = vmatpush1.msra.mxu0 0.0
      %1756 = vmatprep.mubr.f32.mxu0 0.0
      %1757 = vmatmul.mubr.f32.gmra.mrb[0].mxu0 %v1690
      %v1758 = vpop.f32.mrb[0].mxu0
      %v1759 = vadd.f32 0.0, %v1758
      %v1760 = vpop.f32.mrb[0].mxu0
      %v1761 = vadd.f32 0.0, %v1760
      %1762 = vdwg.mxu0
      %1763 = vmatprep.subr.mxu0 %v1676
      %1764 = vmatpush1.msra.mxu0 %v1675
      %1765 = vmatprep.subr.mxu0 0.0
      %1766 = vmatpush1.msra.mxu0 0.0
      %1767 = vmatprep.subr.mxu0 0.0
      %1768 = vmatpush1.msra.mxu0 0.0
      %1769 = vmatprep.subr.mxu0 0.0
      %1770 = vmatpush1.msra.mxu0 0.0
      %1771 = vmatprep.subr.mxu0 0.0
      %1772 = vmatpush1.msra.mxu0 0.0
      %1773 = vmatprep.subr.mxu0 0.0
      %1774 = vmatpush1.msra.mxu0 0.0
      %1775 = vmatprep.subr.mxu0 0.0
      %1776 = vmatpush1.msra.mxu0 0.0
      %1777 = vmatprep.subr.mxu0 0.0
      %1778 = vmatpush1.msra.mxu0 0.0
      %1779 = vmatprep.subr.mxu0 0.0
      %1780 = vmatpush1.msra.mxu0 0.0
      %1781 = vmatprep.subr.mxu0 0.0
      %1782 = vmatpush1.msra.mxu0 0.0
      %1783 = vmatprep.subr.mxu0 0.0
      %1784 = vmatpush1.msra.mxu0 0.0
      %1785 = vmatprep.subr.mxu0 0.0
      %1786 = vmatpush1.msra.mxu0 0.0
      %1787 = vmatprep.subr.mxu0 0.0
      %1788 = vmatpush1.msra.mxu0 0.0
      %1789 = vmatprep.subr.mxu0 0.0
      %1790 = vmatpush1.msra.mxu0 0.0
      %1791 = vmatprep.subr.mxu0 0.0
      %1792 = vmatpush1.msra.mxu0 0.0
      %1793 = vmatprep.subr.mxu0 0.0
      %1794 = vmatpush1.msra.mxu0 0.0
      %1795 = vmatprep.subr.mxu0 0.0
      %1796 = vmatpush1.msra.mxu0 0.0
      %1797 = vmatprep.subr.mxu0 0.0
      %1798 = vmatpush1.msra.mxu0 0.0
      %1799 = vmatprep.subr.mxu0 0.0
      %1800 = vmatpush1.msra.mxu0 0.0
      %1801 = vmatprep.subr.mxu0 0.0
      %1802 = vmatpush1.msra.mxu0 0.0
      %1803 = vmatprep.subr.mxu0 0.0
      %1804 = vmatpush1.msra.mxu0 0.0
      %1805 = vmatprep.subr.mxu0 0.0
      %1806 = vmatpush1.msra.mxu0 0.0
      %1807 = vmatprep.subr.mxu0 0.0
      %1808 = vmatpush1.msra.mxu0 0.0
      %1809 = vmatprep.subr.mxu0 0.0
      %1810 = vmatpush1.msra.mxu0 0.0
      %1811 = vmatprep.subr.mxu0 0.0
      %1812 = vmatpush1.msra.mxu0 0.0
      %1813 = vmatprep.subr.mxu0 0.0
      %1814 = vmatpush1.msra.mxu0 0.0
      %1815 = vmatprep.subr.mxu0 0.0
      %1816 = vmatpush1.msra.mxu0 0.0
      %1817 = vmatprep.subr.mxu0 0.0
      %1818 = vmatpush1.msra.mxu0 0.0
      %1819 = vmatprep.subr.mxu0 0.0
      %1820 = vmatpush1.msra.mxu0 0.0
      %1821 = vmatprep.subr.mxu0 0.0
      %1822 = vmatpush1.msra.mxu0 0.0
      %1823 = vmatprep.subr.mxu0 0.0
      %1824 = vmatpush1.msra.mxu0 0.0
      %1825 = vmatprep.subr.mxu0 0.0
      %1826 = vmatpush1.msra.mxu0 0.0
      %1827 = vmatprep.mubr.f32.mxu0 0.0
      %1828 = vmatmul.mubr.f32.gmra.mrb[0].mxu0 %v1690
      %v1829 = vpop.f32.mrb[0].mxu0
      %v1830 = vadd.f32 0.0, %v1829
      %v1831 = vpop.f32.mrb[0].mxu0
      %v1832 = vadd.f32 0.0, %v1831
      %1833 = vdwg.mxu0
      %1834 = vmatprep.subr.mxu0 %v1678
      %1835 = vmatpush1.msra.mxu0 %v1677
      %1836 = vmatprep.subr.mxu0 0.0
      %1837 = vmatpush1.msra.mxu0 0.0
      %1838 = vmatprep.subr.mxu0 0.0
      %1839 = vmatpush1.msra.mxu0 0.0
      %1840 = vmatprep.subr.mxu0 0.0
      %1841 = vmatpush1.msra.mxu0 0.0
      %1842 = vmatprep.subr.mxu0 0.0
      %1843 = vmatpush1.msra.mxu0 0.0
      %1844 = vmatprep.subr.mxu0 0.0
      %1845 = vmatpush1.msra.mxu0 0.0
      %1846 = vmatprep.subr.mxu0 0.0
      %1847 = vmatpush1.msra.mxu0 0.0
      %1848 = vmatprep.subr.mxu0 0.0
      %1849 = vmatpush1.msra.mxu0 0.0
      %1850 = vmatprep.subr.mxu0 0.0
      %1851 = vmatpush1.msra.mxu0 0.0
      %1852 = vmatprep.subr.mxu0 0.0
      %1853 = vmatpush1.msra.mxu0 0.0
      %1854 = vmatprep.subr.mxu0 0.0
      %1855 = vmatpush1.msra.mxu0 0.0
      %1856 = vmatprep.subr.mxu0 0.0
      %1857 = vmatpush1.msra.mxu0 0.0
      %1858 = vmatprep.subr.mxu0 0.0
      %1859 = vmatpush1.msra.mxu0 0.0
      %1860 = vmatprep.subr.mxu0 0.0
      %1861 = vmatpush1.msra.mxu0 0.0
      %1862 = vmatprep.subr.mxu0 0.0
      %1863 = vmatpush1.msra.mxu0 0.0
      %1864 = vmatprep.subr.mxu0 0.0
      %1865 = vmatpush1.msra.mxu0 0.0
      %1866 = vmatprep.subr.mxu0 0.0
      %1867 = vmatpush1.msra.mxu0 0.0
      %1868 = vmatprep.subr.mxu0 0.0
      %1869 = vmatpush1.msra.mxu0 0.0
      %1870 = vmatprep.subr.mxu0 0.0
      %1871 = vmatpush1.msra.mxu0 0.0
      %1872 = vmatprep.subr.mxu0 0.0
      %1873 = vmatpush1.msra.mxu0 0.0
      %1874 = vmatprep.subr.mxu0 0.0
      %1875 = vmatpush1.msra.mxu0 0.0
      %1876 = vmatprep.subr.mxu0 0.0
      %1877 = vmatpush1.msra.mxu0 0.0
      %1878 = vmatprep.subr.mxu0 0.0
      %1879 = vmatpush1.msra.mxu0 0.0
      %1880 = vmatprep.subr.mxu0 0.0
      %1881 = vmatpush1.msra.mxu0 0.0
      %1882 = vmatprep.subr.mxu0 0.0
      %1883 = vmatpush1.msra.mxu0 0.0
      %1884 = vmatprep.subr.mxu0 0.0
      %1885 = vmatpush1.msra.mxu0 0.0
      %1886 = vmatprep.subr.mxu0 0.0
      %1887 = vmatpush1.msra.mxu0 0.0
      %1888 = vmatprep.subr.mxu0 0.0
      %1889 = vmatpush1.msra.mxu0 0.0
      %1890 = vmatprep.subr.mxu0 0.0
      %1891 = vmatpush1.msra.mxu0 0.0
      %1892 = vmatprep.subr.mxu0 0.0
      %1893 = vmatpush1.msra.mxu0 0.0
      %1894 = vmatprep.subr.mxu0 0.0
      %1895 = vmatpush1.msra.mxu0 0.0
      %1896 = vmatprep.subr.mxu0 0.0
      %1897 = vmatpush1.msra.mxu0 0.0
      %1898 = vmatprep.mubr.f32.mxu0 0.0
      %1899 = vmatmul.mubr.f32.gmra.mrb[0].mxu0 %v1690
      %v1900 = vpop.f32.mrb[0].mxu0
      %v1901 = vadd.f32 0.0, %v1900
      %v1902 = vpop.f32.mrb[0].mxu0
      %v1903 = vadd.f32 0.0, %v1902
      %1904 = vdwg.mxu0
      %1905 = vmatprep.subr.mxu0 %v1680
      %1906 = vmatpush1.msra.mxu0 %v1679
      %1907 = vmatprep.subr.mxu0 0.0
      %1908 = vmatpush1.msra.mxu0 0.0
      %1909 = vmatprep.subr.mxu0 0.0
      %1910 = vmatpush1.msra.mxu0 0.0
      %1911 = vmatprep.subr.mxu0 0.0
      %1912 = vmatpush1.msra.mxu0 0.0
      %1913 = vmatprep.subr.mxu0 0.0
      %1914 = vmatpush1.msra.mxu0 0.0
      %1915 = vmatprep.subr.mxu0 0.0
      %1916 = vmatpush1.msra.mxu0 0.0
      %1917 = vmatprep.subr.mxu0 0.0
      %1918 = vmatpush1.msra.mxu0 0.0
      %1919 = vmatprep.subr.mxu0 0.0
      %1920 = vmatpush1.msra.mxu0 0.0
      %1921 = vmatprep.subr.mxu0 0.0
      %1922 = vmatpush1.msra.mxu0 0.0
      %1923 = vmatprep.subr.mxu0 0.0
      %1924 = vmatpush1.msra.mxu0 0.0
      %1925 = vmatprep.subr.mxu0 0.0
      %1926 = vmatpush1.msra.mxu0 0.0
      %1927 = vmatprep.subr.mxu0 0.0
      %1928 = vmatpush1.msra.mxu0 0.0
      %1929 = vmatprep.subr.mxu0 0.0
      %1930 = vmatpush1.msra.mxu0 0.0
      %1931 = vmatprep.subr.mxu0 0.0
      %1932 = vmatpush1.msra.mxu0 0.0
      %1933 = vmatprep.subr.mxu0 0.0
      %1934 = vmatpush1.msra.mxu0 0.0
      %1935 = vmatprep.subr.mxu0 0.0
      %1936 = vmatpush1.msra.mxu0 0.0
      %1937 = vmatprep.subr.mxu0 0.0
      %1938 = vmatpush1.msra.mxu0 0.0
      %1939 = vmatprep.subr.mxu0 0.0
      %1940 = vmatpush1.msra.mxu0 0.0
      %1941 = vmatprep.subr.mxu0 0.0
      %1942 = vmatpush1.msra.mxu0 0.0
      %1943 = vmatprep.subr.mxu0 0.0
      %1944 = vmatpush1.msra.mxu0 0.0
      %1945 = vmatprep.subr.mxu0 0.0
      %1946 = vmatpush1.msra.mxu0 0.0
      %1947 = vmatprep.subr.mxu0 0.0
      %1948 = vmatpush1.msra.mxu0 0.0
      %1949 = vmatprep.subr.mxu0 0.0
      %1950 = vmatpush1.msra.mxu0 0.0
      %1951 = vmatprep.subr.mxu0 0.0
      %1952 = vmatpush1.msra.mxu0 0.0
      %1953 = vmatprep.subr.mxu0 0.0
      %1954 = vmatpush1.msra.mxu0 0.0
      %1955 = vmatprep.subr.mxu0 0.0
      %1956 = vmatpush1.msra.mxu0 0.0
      %1957 = vmatprep.subr.mxu0 0.0
      %1958 = vmatpush1.msra.mxu0 0.0
      %1959 = vmatprep.subr.mxu0 0.0
      %1960 = vmatpush1.msra.mxu0 0.0
      %1961 = vmatprep.subr.mxu0 0.0
      %1962 = vmatpush1.msra.mxu0 0.0
      %1963 = vmatprep.subr.mxu0 0.0
      %1964 = vmatpush1.msra.mxu0 0.0
      %1965 = vmatprep.subr.mxu0 0.0
      %1966 = vmatpush1.msra.mxu0 0.0
      %1967 = vmatprep.subr.mxu0 0.0
      %1968 = vmatpush1.msra.mxu0 0.0
      %1969 = vmatprep.mubr.f32.mxu0 0.0
      %1970 = vmatmul.mubr.f32.gmra.mrb[0].mxu0 %v1690
      %v1971 = vpop.f32.mrb[0].mxu0
      %v1972 = vadd.f32 0.0, %v1971
      %v1973 = vpop.f32.mrb[0].mxu0
      %v1974 = vadd.f32 0.0, %v1973
      %1975 = vdwg.mxu0
      %v1976 = vadd.f32 %v1644, %v1759
      %v1977 = vadd.f32 %v1645, %v1761
      %v1978 = vadd.f32 %v1646, %v1830
      %v1979 = vadd.f32 %v1647, %v1832
      %v1980 = vadd.f32 %v1648, %v1901
      %v1981 = vadd.f32 %v1649, %v1903
      %v1982 = vadd.f32 %v1650, %v1972
      %v1983 = vadd.f32 %v1651, %v1974
      %s1984 = scalar_lea.vmem %s2, 40
      %v1985 = vld [vmem:[%s1984] sm:$0xff]
      %1986 = vrot.lane.b32.xlu0 %v640, 116
      %v1987 = vpop.permute.xlu0 %1986
      %1988 = vrot.lane.b32.xlu0 %v641, 116
      %v1989 = vpop.permute.xlu0 %1988
      %1990 = vrot.lane.b32.xlu0 %v642, 116
      %v1991 = vpop.permute.xlu0 %1990
      %1992 = vrot.lane.b32.xlu0 %v643, 116
      %v1993 = vpop.permute.xlu0 %1992
      %1994 = vrot.lane.b32.xlu0 %v644, 116
      %v1995 = vpop.permute.xlu0 %1994
      %1996 = vrot.lane.b32.xlu0 %v645, 116
      %v1997 = vpop.permute.xlu0 %1996
      %1998 = vrot.lane.b32.xlu0 %v646, 116
      %v1999 = vpop.permute.xlu0 %1998
      %2000 = vrot.lane.b32.xlu0 %v647, 116
      %v2001 = vpop.permute.xlu0 %2000
      %2002 = vrot.lane.b32.xlu0 %v648, 116
      %v2003 = vpop.permute.xlu0 %2002
      %vm2004 = vcmask 949248
      %v2005 = vsel %vm2004, %v1987, %v1989
      %v2006 = vsel %vm2004, %v1989, %v1991
      %v2007 = vsel %vm2004, %v1991, %v1993
      %v2008 = vsel %vm2004, %v1993, %v1995
      %v2009 = vsel %vm2004, %v1995, %v1997
      %v2010 = vsel %vm2004, %v1997, %v1999
      %v2011 = vsel %vm2004, %v1999, %v2001
      %v2012 = vsel %vm2004, %v2001, %v2003
      %v2022 = vsel %vm337, %v1985, 0
      %2024 = vmatprep.subr.mxu0 %v2006
      %2025 = vmatpush1.msra.mxu0 %v2005
      %2026 = vmatprep.subr.mxu0 0.0
      %2027 = vmatpush1.msra.mxu0 0.0
      %2028 = vmatprep.subr.mxu0 0.0
      %2029 = vmatpush1.msra.mxu0 0.0
      %2030 = vmatprep.subr.mxu0 0.0
      %2031 = vmatpush1.msra.mxu0 0.0
      %2032 = vmatprep.subr.mxu0 0.0
      %2033 = vmatpush1.msra.mxu0 0.0
      %2034 = vmatprep.subr.mxu0 0.0
      %2035 = vmatpush1.msra.mxu0 0.0
      %2036 = vmatprep.subr.mxu0 0.0
      %2037 = vmatpush1.msra.mxu0 0.0
      %2038 = vmatprep.subr.mxu0 0.0
      %2039 = vmatpush1.msra.mxu0 0.0
      %2040 = vmatprep.subr.mxu0 0.0
      %2041 = vmatpush1.msra.mxu0 0.0
      %2042 = vmatprep.subr.mxu0 0.0
      %2043 = vmatpush1.msra.mxu0 0.0
      %2044 = vmatprep.subr.mxu0 0.0
      %2045 = vmatpush1.msra.mxu0 0.0
      %2046 = vmatprep.subr.mxu0 0.0
      %2047 = vmatpush1.msra.mxu0 0.0
      %2048 = vmatprep.subr.mxu0 0.0
      %2049 = vmatpush1.msra.mxu0 0.0
      %2050 = vmatprep.subr.mxu0 0.0
      %2051 = vmatpush1.msra.mxu0 0.0
      %2052 = vmatprep.subr.mxu0 0.0
      %2053 = vmatpush1.msra.mxu0 0.0
      %2054 = vmatprep.subr.mxu0 0.0
      %2055 = vmatpush1.msra.mxu0 0.0
      %2056 = vmatprep.subr.mxu0 0.0
      %2057 = vmatpush1.msra.mxu0 0.0
      %2058 = vmatprep.subr.mxu0 0.0
      %2059 = vmatpush1.msra.mxu0 0.0
      %2060 = vmatprep.subr.mxu0 0.0
      %2061 = vmatpush1.msra.mxu0 0.0
      %2062 = vmatprep.subr.mxu0 0.0
      %2063 = vmatpush1.msra.mxu0 0.0
      %2064 = vmatprep.subr.mxu0 0.0
      %2065 = vmatpush1.msra.mxu0 0.0
      %2066 = vmatprep.subr.mxu0 0.0
      %2067 = vmatpush1.msra.mxu0 0.0
      %2068 = vmatprep.subr.mxu0 0.0
      %2069 = vmatpush1.msra.mxu0 0.0
      %2070 = vmatprep.subr.mxu0 0.0
      %2071 = vmatpush1.msra.mxu0 0.0
      %2072 = vmatprep.subr.mxu0 0.0
      %2073 = vmatpush1.msra.mxu0 0.0
      %2074 = vmatprep.subr.mxu0 0.0
      %2075 = vmatpush1.msra.mxu0 0.0
      %2076 = vmatprep.subr.mxu0 0.0
      %2077 = vmatpush1.msra.mxu0 0.0
      %2078 = vmatprep.subr.mxu0 0.0
      %2079 = vmatpush1.msra.mxu0 0.0
      %2080 = vmatprep.subr.mxu0 0.0
      %2081 = vmatpush1.msra.mxu0 0.0
      %2082 = vmatprep.subr.mxu0 0.0
      %2083 = vmatpush1.msra.mxu0 0.0
      %2084 = vmatprep.subr.mxu0 0.0
      %2085 = vmatpush1.msra.mxu0 0.0
      %2086 = vmatprep.subr.mxu0 0.0
      %2087 = vmatpush1.msra.mxu0 0.0
      %2088 = vmatprep.mubr.f32.mxu0 0.0
      %2089 = vmatmul.mubr.f32.gmra.mrb[0].mxu0 %v2022
      %v2090 = vpop.f32.mrb[0].mxu0
      %v2091 = vadd.f32 0.0, %v2090
      %v2092 = vpop.f32.mrb[0].mxu0
      %v2093 = vadd.f32 0.0, %v2092
      %2094 = vdwg.mxu0
      %2095 = vmatprep.subr.mxu0 %v2008
      %2096 = vmatpush1.msra.mxu0 %v2007
      %2097 = vmatprep.subr.mxu0 0.0
      %2098 = vmatpush1.msra.mxu0 0.0
      %2099 = vmatprep.subr.mxu0 0.0
      %2100 = vmatpush1.msra.mxu0 0.0
      %2101 = vmatprep.subr.mxu0 0.0
      %2102 = vmatpush1.msra.mxu0 0.0
      %2103 = vmatprep.subr.mxu0 0.0
      %2104 = vmatpush1.msra.mxu0 0.0
      %2105 = vmatprep.subr.mxu0 0.0
      %2106 = vmatpush1.msra.mxu0 0.0
      %2107 = vmatprep.subr.mxu0 0.0
      %2108 = vmatpush1.msra.mxu0 0.0
      %2109 = vmatprep.subr.mxu0 0.0
      %2110 = vmatpush1.msra.mxu0 0.0
      %2111 = vmatprep.subr.mxu0 0.0
      %2112 = vmatpush1.msra.mxu0 0.0
      %2113 = vmatprep.subr.mxu0 0.0
      %2114 = vmatpush1.msra.mxu0 0.0
      %2115 = vmatprep.subr.mxu0 0.0
      %2116 = vmatpush1.msra.mxu0 0.0
      %2117 = vmatprep.subr.mxu0 0.0
      %2118 = vmatpush1.msra.mxu0 0.0
      %2119 = vmatprep.subr.mxu0 0.0
      %2120 = vmatpush1.msra.mxu0 0.0
      %2121 = vmatprep.subr.mxu0 0.0
      %2122 = vmatpush1.msra.mxu0 0.0
      %2123 = vmatprep.subr.mxu0 0.0
      %2124 = vmatpush1.msra.mxu0 0.0
      %2125 = vmatprep.subr.mxu0 0.0
      %2126 = vmatpush1.msra.mxu0 0.0
      %2127 = vmatprep.subr.mxu0 0.0
      %2128 = vmatpush1.msra.mxu0 0.0
      %2129 = vmatprep.subr.mxu0 0.0
      %2130 = vmatpush1.msra.mxu0 0.0
      %2131 = vmatprep.subr.mxu0 0.0
      %2132 = vmatpush1.msra.mxu0 0.0
      %2133 = vmatprep.subr.mxu0 0.0
      %2134 = vmatpush1.msra.mxu0 0.0
      %2135 = vmatprep.subr.mxu0 0.0
      %2136 = vmatpush1.msra.mxu0 0.0
      %2137 = vmatprep.subr.mxu0 0.0
      %2138 = vmatpush1.msra.mxu0 0.0
      %2139 = vmatprep.subr.mxu0 0.0
      %2140 = vmatpush1.msra.mxu0 0.0
      %2141 = vmatprep.subr.mxu0 0.0
      %2142 = vmatpush1.msra.mxu0 0.0
      %2143 = vmatprep.subr.mxu0 0.0
      %2144 = vmatpush1.msra.mxu0 0.0
      %2145 = vmatprep.subr.mxu0 0.0
      %2146 = vmatpush1.msra.mxu0 0.0
      %2147 = vmatprep.subr.mxu0 0.0
      %2148 = vmatpush1.msra.mxu0 0.0
      %2149 = vmatprep.subr.mxu0 0.0
      %2150 = vmatpush1.msra.mxu0 0.0
      %2151 = vmatprep.subr.mxu0 0.0
      %2152 = vmatpush1.msra.mxu0 0.0
      %2153 = vmatprep.subr.mxu0 0.0
      %2154 = vmatpush1.msra.mxu0 0.0
      %2155 = vmatprep.subr.mxu0 0.0
      %2156 = vmatpush1.msra.mxu0 0.0
      %2157 = vmatprep.subr.mxu0 0.0
      %2158 = vmatpush1.msra.mxu0 0.0
      %2159 = vmatprep.mubr.f32.mxu0 0.0
      %2160 = vmatmul.mubr.f32.gmra.mrb[0].mxu0 %v2022
      %v2161 = vpop.f32.mrb[0].mxu0
      %v2162 = vadd.f32 0.0, %v2161
      %v2163 = vpop.f32.mrb[0].mxu0
      %v2164 = vadd.f32 0.0, %v2163
      %2165 = vdwg.mxu0
      %2166 = vmatprep.subr.mxu0 %v2010
      %2167 = vmatpush1.msra.mxu0 %v2009
      %2168 = vmatprep.subr.mxu0 0.0
      %2169 = vmatpush1.msra.mxu0 0.0
      %2170 = vmatprep.subr.mxu0 0.0
      %2171 = vmatpush1.msra.mxu0 0.0
      %2172 = vmatprep.subr.mxu0 0.0
      %2173 = vmatpush1.msra.mxu0 0.0
      %2174 = vmatprep.subr.mxu0 0.0
      %2175 = vmatpush1.msra.mxu0 0.0
      %2176 = vmatprep.subr.mxu0 0.0
      %2177 = vmatpush1.msra.mxu0 0.0
      %2178 = vmatprep.subr.mxu0 0.0
      %2179 = vmatpush1.msra.mxu0 0.0
      %2180 = vmatprep.subr.mxu0 0.0
      %2181 = vmatpush1.msra.mxu0 0.0
      %2182 = vmatprep.subr.mxu0 0.0
      %2183 = vmatpush1.msra.mxu0 0.0
      %2184 = vmatprep.subr.mxu0 0.0
      %2185 = vmatpush1.msra.mxu0 0.0
      %2186 = vmatprep.subr.mxu0 0.0
      %2187 = vmatpush1.msra.mxu0 0.0
      %2188 = vmatprep.subr.mxu0 0.0
      %2189 = vmatpush1.msra.mxu0 0.0
      %2190 = vmatprep.subr.mxu0 0.0
      %2191 = vmatpush1.msra.mxu0 0.0
      %2192 = vmatprep.subr.mxu0 0.0
      %2193 = vmatpush1.msra.mxu0 0.0
      %2194 = vmatprep.subr.mxu0 0.0
      %2195 = vmatpush1.msra.mxu0 0.0
      %2196 = vmatprep.subr.mxu0 0.0
      %2197 = vmatpush1.msra.mxu0 0.0
      %2198 = vmatprep.subr.mxu0 0.0
      %2199 = vmatpush1.msra.mxu0 0.0
      %2200 = vmatprep.subr.mxu0 0.0
      %2201 = vmatpush1.msra.mxu0 0.0
      %2202 = vmatprep.subr.mxu0 0.0
      %2203 = vmatpush1.msra.mxu0 0.0
      %2204 = vmatprep.subr.mxu0 0.0
      %2205 = vmatpush1.msra.mxu0 0.0
      %2206 = vmatprep.subr.mxu0 0.0
      %2207 = vmatpush1.msra.mxu0 0.0
      %2208 = vmatprep.subr.mxu0 0.0
      %2209 = vmatpush1.msra.mxu0 0.0
      %2210 = vmatprep.subr.mxu0 0.0
      %2211 = vmatpush1.msra.mxu0 0.0
      %2212 = vmatprep.subr.mxu0 0.0
      %2213 = vmatpush1.msra.mxu0 0.0
      %2214 = vmatprep.subr.mxu0 0.0
      %2215 = vmatpush1.msra.mxu0 0.0
      %2216 = vmatprep.subr.mxu0 0.0
      %2217 = vmatpush1.msra.mxu0 0.0
      %2218 = vmatprep.subr.mxu0 0.0
      %2219 = vmatpush1.msra.mxu0 0.0
      %2220 = vmatprep.subr.mxu0 0.0
      %2221 = vmatpush1.msra.mxu0 0.0
      %2222 = vmatprep.subr.mxu0 0.0
      %2223 = vmatpush1.msra.mxu0 0.0
      %2224 = vmatprep.subr.mxu0 0.0
      %2225 = vmatpush1.msra.mxu0 0.0
      %2226 = vmatprep.subr.mxu0 0.0
      %2227 = vmatpush1.msra.mxu0 0.0
      %2228 = vmatprep.subr.mxu0 0.0
      %2229 = vmatpush1.msra.mxu0 0.0
      %2230 = vmatprep.mubr.f32.mxu0 0.0
      %2231 = vmatmul.mubr.f32.gmra.mrb[0].mxu0 %v2022
      %v2232 = vpop.f32.mrb[0].mxu0
      %v2233 = vadd.f32 0.0, %v2232
      %v2234 = vpop.f32.mrb[0].mxu0
      %v2235 = vadd.f32 0.0, %v2234
      %2236 = vdwg.mxu0
      %2237 = vmatprep.subr.mxu0 %v2012
      %2238 = vmatpush1.msra.mxu0 %v2011
      %2239 = vmatprep.subr.mxu0 0.0
      %2240 = vmatpush1.msra.mxu0 0.0
      %2241 = vmatprep.subr.mxu0 0.0
      %2242 = vmatpush1.msra.mxu0 0.0
      %2243 = vmatprep.subr.mxu0 0.0
      %2244 = vmatpush1.msra.mxu0 0.0
      %2245 = vmatprep.subr.mxu0 0.0
      %2246 = vmatpush1.msra.mxu0 0.0
      %2247 = vmatprep.subr.mxu0 0.0
      %2248 = vmatpush1.msra.mxu0 0.0
      %2249 = vmatprep.subr.mxu0 0.0
      %2250 = vmatpush1.msra.mxu0 0.0
      %2251 = vmatprep.subr.mxu0 0.0
      %2252 = vmatpush1.msra.mxu0 0.0
      %2253 = vmatprep.subr.mxu0 0.0
      %2254 = vmatpush1.msra.mxu0 0.0
      %2255 = vmatprep.subr.mxu0 0.0
      %2256 = vmatpush1.msra.mxu0 0.0
      %2257 = vmatprep.subr.mxu0 0.0
      %2258 = vmatpush1.msra.mxu0 0.0
      %2259 = vmatprep.subr.mxu0 0.0
      %2260 = vmatpush1.msra.mxu0 0.0
      %2261 = vmatprep.subr.mxu0 0.0
      %2262 = vmatpush1.msra.mxu0 0.0
      %2263 = vmatprep.subr.mxu0 0.0
      %2264 = vmatpush1.msra.mxu0 0.0
      %2265 = vmatprep.subr.mxu0 0.0
      %2266 = vmatpush1.msra.mxu0 0.0
      %2267 = vmatprep.subr.mxu0 0.0
      %2268 = vmatpush1.msra.mxu0 0.0
      %2269 = vmatprep.subr.mxu0 0.0
      %2270 = vmatpush1.msra.mxu0 0.0
      %2271 = vmatprep.subr.mxu0 0.0
      %2272 = vmatpush1.msra.mxu0 0.0
      %2273 = vmatprep.subr.mxu0 0.0
      %2274 = vmatpush1.msra.mxu0 0.0
      %2275 = vmatprep.subr.mxu0 0.0
      %2276 = vmatpush1.msra.mxu0 0.0
      %2277 = vmatprep.subr.mxu0 0.0
      %2278 = vmatpush1.msra.mxu0 0.0
      %2279 = vmatprep.subr.mxu0 0.0
      %2280 = vmatpush1.msra.mxu0 0.0
      %2281 = vmatprep.subr.mxu0 0.0
      %2282 = vmatpush1.msra.mxu0 0.0
      %2283 = vmatprep.subr.mxu0 0.0
      %2284 = vmatpush1.msra.mxu0 0.0
      %2285 = vmatprep.subr.mxu0 0.0
      %2286 = vmatpush1.msra.mxu0 0.0
      %2287 = vmatprep.subr.mxu0 0.0
      %2288 = vmatpush1.msra.mxu0 0.0
      %2289 = vmatprep.subr.mxu0 0.0
      %2290 = vmatpush1.msra.mxu0 0.0
      %2291 = vmatprep.subr.mxu0 0.0
      %2292 = vmatpush1.msra.mxu0 0.0
      %2293 = vmatprep.subr.mxu0 0.0
      %2294 = vmatpush1.msra.mxu0 0.0
      %2295 = vmatprep.subr.mxu0 0.0
      %2296 = vmatpush1.msra.mxu0 0.0
      %2297 = vmatprep.subr.mxu0 0.0
      %2298 = vmatpush1.msra.mxu0 0.0
      %2299 = vmatprep.subr.mxu0 0.0
      %2300 = vmatpush1.msra.mxu0 0.0
      %2301 = vmatprep.mubr.f32.mxu0 0.0
      %2302 = vmatmul.mubr.f32.gmra.mrb[0].mxu0 %v2022
      %v2303 = vpop.f32.mrb[0].mxu0
      %v2304 = vadd.f32 0.0, %v2303
      %v2305 = vpop.f32.mrb[0].mxu0
      %v2306 = vadd.f32 0.0, %v2305
      %2307 = vdwg.mxu0
      %v2308 = vadd.f32 %v1976, %v2091
      %v2309 = vadd.f32 %v1977, %v2093
      %v2310 = vadd.f32 %v1978, %v2162
      %v2311 = vadd.f32 %v1979, %v2164
      %v2312 = vadd.f32 %v1980, %v2233
      %v2313 = vadd.f32 %v1981, %v2235
      %v2314 = vadd.f32 %v1982, %v2304
      %v2315 = vadd.f32 %v1983, %v2306
      %s2316 = scalar_lea.vmem %s2, 48
      %v2317 = vld [vmem:[%s2316] sm:$0xff]
      %2318 = vrot.lane.b32.xlu0 %v640, 108
      %v2319 = vpop.permute.xlu0 %2318
      %2320 = vrot.lane.b32.xlu0 %v641, 108
      %v2321 = vpop.permute.xlu0 %2320
      %2322 = vrot.lane.b32.xlu0 %v642, 108
      %v2323 = vpop.permute.xlu0 %2322
      %2324 = vrot.lane.b32.xlu0 %v643, 108
      %v2325 = vpop.permute.xlu0 %2324
      %2326 = vrot.lane.b32.xlu0 %v644, 108
      %v2327 = vpop.permute.xlu0 %2326
      %2328 = vrot.lane.b32.xlu0 %v645, 108
      %v2329 = vpop.permute.xlu0 %2328
      %2330 = vrot.lane.b32.xlu0 %v646, 108
      %v2331 = vpop.permute.xlu0 %2330
      %2332 = vrot.lane.b32.xlu0 %v647, 108
      %v2333 = vpop.permute.xlu0 %2332
      %2334 = vrot.lane.b32.xlu0 %v648, 108
      %v2335 = vpop.permute.xlu0 %2334
      %vm2336 = vcmask 883712
      %v2337 = vsel %vm2336, %v2319, %v2321
      %v2338 = vsel %vm2336, %v2321, %v2323
      %v2339 = vsel %vm2336, %v2323, %v2325
      %v2340 = vsel %vm2336, %v2325, %v2327
      %v2341 = vsel %vm2336, %v2327, %v2329
      %v2342 = vsel %vm2336, %v2329, %v2331
      %v2343 = vsel %vm2336, %v2331, %v2333
      %v2344 = vsel %vm2336, %v2333, %v2335
      %v2354 = vsel %vm337, %v2317, 0
      %2356 = vmatprep.subr.mxu0 %v2338
      %2357 = vmatpush1.msra.mxu0 %v2337
      %2358 = vmatprep.subr.mxu0 0.0
      %2359 = vmatpush1.msra.mxu0 0.0
      %2360 = vmatprep.subr.mxu0 0.0
      %2361 = vmatpush1.msra.mxu0 0.0
      %2362 = vmatprep.subr.mxu0 0.0
      %2363 = vmatpush1.msra.mxu0 0.0
      %2364 = vmatprep.subr.mxu0 0.0
      %2365 = vmatpush1.msra.mxu0 0.0
      %2366 = vmatprep.subr.mxu0 0.0
      %2367 = vmatpush1.msra.mxu0 0.0
      %2368 = vmatprep.subr.mxu0 0.0
      %2369 = vmatpush1.msra.mxu0 0.0
      %2370 = vmatprep.subr.mxu0 0.0
      %2371 = vmatpush1.msra.mxu0 0.0
      %2372 = vmatprep.subr.mxu0 0.0
      %2373 = vmatpush1.msra.mxu0 0.0
      %2374 = vmatprep.subr.mxu0 0.0
      %2375 = vmatpush1.msra.mxu0 0.0
      %2376 = vmatprep.subr.mxu0 0.0
      %2377 = vmatpush1.msra.mxu0 0.0
      %2378 = vmatprep.subr.mxu0 0.0
      %2379 = vmatpush1.msra.mxu0 0.0
      %2380 = vmatprep.subr.mxu0 0.0
      %2381 = vmatpush1.msra.mxu0 0.0
      %2382 = vmatprep.subr.mxu0 0.0
      %2383 = vmatpush1.msra.mxu0 0.0
      %2384 = vmatprep.subr.mxu0 0.0
      %2385 = vmatpush1.msra.mxu0 0.0
      %2386 = vmatprep.subr.mxu0 0.0
      %2387 = vmatpush1.msra.mxu0 0.0
      %2388 = vmatprep.subr.mxu0 0.0
      %2389 = vmatpush1.msra.mxu0 0.0
      %2390 = vmatprep.subr.mxu0 0.0
      %2391 = vmatpush1.msra.mxu0 0.0
      %2392 = vmatprep.subr.mxu0 0.0
      %2393 = vmatpush1.msra.mxu0 0.0
      %2394 = vmatprep.subr.mxu0 0.0
      %2395 = vmatpush1.msra.mxu0 0.0
      %2396 = vmatprep.subr.mxu0 0.0
      %2397 = vmatpush1.msra.mxu0 0.0
      %2398 = vmatprep.subr.mxu0 0.0
      %2399 = vmatpush1.msra.mxu0 0.0
      %2400 = vmatprep.subr.mxu0 0.0
      %2401 = vmatpush1.msra.mxu0 0.0
      %2402 = vmatprep.subr.mxu0 0.0
      %2403 = vmatpush1.msra.mxu0 0.0
      %2404 = vmatprep.subr.mxu0 0.0
      %2405 = vmatpush1.msra.mxu0 0.0
      %2406 = vmatprep.subr.mxu0 0.0
      %2407 = vmatpush1.msra.mxu0 0.0
      %2408 = vmatprep.subr.mxu0 0.0
      %2409 = vmatpush1.msra.mxu0 0.0
      %2410 = vmatprep.subr.mxu0 0.0
      %2411 = vmatpush1.msra.mxu0 0.0
      %2412 = vmatprep.subr.mxu0 0.0
      %2413 = vmatpush1.msra.mxu0 0.0
      %2414 = vmatprep.subr.mxu0 0.0
      %2415 = vmatpush1.msra.mxu0 0.0
      %2416 = vmatprep.subr.mxu0 0.0
      %2417 = vmatpush1.msra.mxu0 0.0
      %2418 = vmatprep.subr.mxu0 0.0
      %2419 = vmatpush1.msra.mxu0 0.0
      %2420 = vmatprep.mubr.f32.mxu0 0.0
      %2421 = vmatmul.mubr.f32.gmra.mrb[0].mxu0 %v2354
      %v2422 = vpop.f32.mrb[0].mxu0
      %v2423 = vadd.f32 0.0, %v2422
      %v2424 = vpop.f32.mrb[0].mxu0
      %v2425 = vadd.f32 0.0, %v2424
      %2426 = vdwg.mxu0
      %2427 = vmatprep.subr.mxu0 %v2340
      %2428 = vmatpush1.msra.mxu0 %v2339
      %2429 = vmatprep.subr.mxu0 0.0
      %2430 = vmatpush1.msra.mxu0 0.0
      %2431 = vmatprep.subr.mxu0 0.0
      %2432 = vmatpush1.msra.mxu0 0.0
      %2433 = vmatprep.subr.mxu0 0.0
      %2434 = vmatpush1.msra.mxu0 0.0
      %2435 = vmatprep.subr.mxu0 0.0
      %2436 = vmatpush1.msra.mxu0 0.0
      %2437 = vmatprep.subr.mxu0 0.0
      %2438 = vmatpush1.msra.mxu0 0.0
      %2439 = vmatprep.subr.mxu0 0.0
      %2440 = vmatpush1.msra.mxu0 0.0
      %2441 = vmatprep.subr.mxu0 0.0
      %2442 = vmatpush1.msra.mxu0 0.0
      %2443 = vmatprep.subr.mxu0 0.0
      %2444 = vmatpush1.msra.mxu0 0.0
      %2445 = vmatprep.subr.mxu0 0.0
      %2446 = vmatpush1.msra.mxu0 0.0
      %2447 = vmatprep.subr.mxu0 0.0
      %2448 = vmatpush1.msra.mxu0 0.0
      %2449 = vmatprep.subr.mxu0 0.0
      %2450 = vmatpush1.msra.mxu0 0.0
      %2451 = vmatprep.subr.mxu0 0.0
      %2452 = vmatpush1.msra.mxu0 0.0
      %2453 = vmatprep.subr.mxu0 0.0
      %2454 = vmatpush1.msra.mxu0 0.0
      %2455 = vmatprep.subr.mxu0 0.0
      %2456 = vmatpush1.msra.mxu0 0.0
      %2457 = vmatprep.subr.mxu0 0.0
      %2458 = vmatpush1.msra.mxu0 0.0
      %2459 = vmatprep.subr.mxu0 0.0
      %2460 = vmatpush1.msra.mxu0 0.0
      %2461 = vmatprep.subr.mxu0 0.0
      %2462 = vmatpush1.msra.mxu0 0.0
      %2463 = vmatprep.subr.mxu0 0.0
      %2464 = vmatpush1.msra.mxu0 0.0
      %2465 = vmatprep.subr.mxu0 0.0
      %2466 = vmatpush1.msra.mxu0 0.0
      %2467 = vmatprep.subr.mxu0 0.0
      %2468 = vmatpush1.msra.mxu0 0.0
      %2469 = vmatprep.subr.mxu0 0.0
      %2470 = vmatpush1.msra.mxu0 0.0
      %2471 = vmatprep.subr.mxu0 0.0
      %2472 = vmatpush1.msra.mxu0 0.0
      %2473 = vmatprep.subr.mxu0 0.0
      %2474 = vmatpush1.msra.mxu0 0.0
      %2475 = vmatprep.subr.mxu0 0.0
      %2476 = vmatpush1.msra.mxu0 0.0
      %2477 = vmatprep.subr.mxu0 0.0
      %2478 = vmatpush1.msra.mxu0 0.0
      %2479 = vmatprep.subr.mxu0 0.0
      %2480 = vmatpush1.msra.mxu0 0.0
      %2481 = vmatprep.subr.mxu0 0.0
      %2482 = vmatpush1.msra.mxu0 0.0
      %2483 = vmatprep.subr.mxu0 0.0
      %2484 = vmatpush1.msra.mxu0 0.0
      %2485 = vmatprep.subr.mxu0 0.0
      %2486 = vmatpush1.msra.mxu0 0.0
      %2487 = vmatprep.subr.mxu0 0.0
      %2488 = vmatpush1.msra.mxu0 0.0
      %2489 = vmatprep.subr.mxu0 0.0
      %2490 = vmatpush1.msra.mxu0 0.0
      %2491 = vmatprep.mubr.f32.mxu0 0.0
      %2492 = vmatmul.mubr.f32.gmra.mrb[0].mxu0 %v2354
      %v2493 = vpop.f32.mrb[0].mxu0
      %v2494 = vadd.f32 0.0, %v2493
      %v2495 = vpop.f32.mrb[0].mxu0
      %v2496 = vadd.f32 0.0, %v2495
      %2497 = vdwg.mxu0
      %2498 = vmatprep.subr.mxu0 %v2342
      %2499 = vmatpush1.msra.mxu0 %v2341
      %2500 = vmatprep.subr.mxu0 0.0
      %2501 = vmatpush1.msra.mxu0 0.0
      %2502 = vmatprep.subr.mxu0 0.0
      %2503 = vmatpush1.msra.mxu0 0.0
      %2504 = vmatprep.subr.mxu0 0.0
      %2505 = vmatpush1.msra.mxu0 0.0
      %2506 = vmatprep.subr.mxu0 0.0
      %2507 = vmatpush1.msra.mxu0 0.0
      %2508 = vmatprep.subr.mxu0 0.0
      %2509 = vmatpush1.msra.mxu0 0.0
      %2510 = vmatprep.subr.mxu0 0.0
      %2511 = vmatpush1.msra.mxu0 0.0
      %2512 = vmatprep.subr.mxu0 0.0
      %2513 = vmatpush1.msra.mxu0 0.0
      %2514 = vmatprep.subr.mxu0 0.0
      %2515 = vmatpush1.msra.mxu0 0.0
      %2516 = vmatprep.subr.mxu0 0.0
      %2517 = vmatpush1.msra.mxu0 0.0
      %2518 = vmatprep.subr.mxu0 0.0
      %2519 = vmatpush1.msra.mxu0 0.0
      %2520 = vmatprep.subr.mxu0 0.0
      %2521 = vmatpush1.msra.mxu0 0.0
      %2522 = vmatprep.subr.mxu0 0.0
      %2523 = vmatpush1.msra.mxu0 0.0
      %2524 = vmatprep.subr.mxu0 0.0
      %2525 = vmatpush1.msra.mxu0 0.0
      %2526 = vmatprep.subr.mxu0 0.0
      %2527 = vmatpush1.msra.mxu0 0.0
      %2528 = vmatprep.subr.mxu0 0.0
      %2529 = vmatpush1.msra.mxu0 0.0
      %2530 = vmatprep.subr.mxu0 0.0
      %2531 = vmatpush1.msra.mxu0 0.0
      %2532 = vmatprep.subr.mxu0 0.0
      %2533 = vmatpush1.msra.mxu0 0.0
      %2534 = vmatprep.subr.mxu0 0.0
      %2535 = vmatpush1.msra.mxu0 0.0
      %2536 = vmatprep.subr.mxu0 0.0
      %2537 = vmatpush1.msra.mxu0 0.0
      %2538 = vmatprep.subr.mxu0 0.0
      %2539 = vmatpush1.msra.mxu0 0.0
      %2540 = vmatprep.subr.mxu0 0.0
      %2541 = vmatpush1.msra.mxu0 0.0
      %2542 = vmatprep.subr.mxu0 0.0
      %2543 = vmatpush1.msra.mxu0 0.0
      %2544 = vmatprep.subr.mxu0 0.0
      %2545 = vmatpush1.msra.mxu0 0.0
      %2546 = vmatprep.subr.mxu0 0.0
      %2547 = vmatpush1.msra.mxu0 0.0
      %2548 = vmatprep.subr.mxu0 0.0
      %2549 = vmatpush1.msra.mxu0 0.0
      %2550 = vmatprep.subr.mxu0 0.0
      %2551 = vmatpush1.msra.mxu0 0.0
      %2552 = vmatprep.subr.mxu0 0.0
      %2553 = vmatpush1.msra.mxu0 0.0
      %2554 = vmatprep.subr.mxu0 0.0
      %2555 = vmatpush1.msra.mxu0 0.0
      %2556 = vmatprep.subr.mxu0 0.0
      %2557 = vmatpush1.msra.mxu0 0.0
      %2558 = vmatprep.subr.mxu0 0.0
      %2559 = vmatpush1.msra.mxu0 0.0
      %2560 = vmatprep.subr.mxu0 0.0
      %2561 = vmatpush1.msra.mxu0 0.0
      %2562 = vmatprep.mubr.f32.mxu0 0.0
      %2563 = vmatmul.mubr.f32.gmra.mrb[0].mxu0 %v2354
      %v2564 = vpop.f32.mrb[0].mxu0
      %v2565 = vadd.f32 0.0, %v2564
      %v2566 = vpop.f32.mrb[0].mxu0
      %v2567 = vadd.f32 0.0, %v2566
      %2568 = vdwg.mxu0
      %2569 = vmatprep.subr.mxu0 %v2344
      %2570 = vmatpush1.msra.mxu0 %v2343
      %2571 = vmatprep.subr.mxu0 0.0
      %2572 = vmatpush1.msra.mxu0 0.0
      %2573 = vmatprep.subr.mxu0 0.0
      %2574 = vmatpush1.msra.mxu0 0.0
      %2575 = vmatprep.subr.mxu0 0.0
      %2576 = vmatpush1.msra.mxu0 0.0
      %2577 = vmatprep.subr.mxu0 0.0
      %2578 = vmatpush1.msra.mxu0 0.0
      %2579 = vmatprep.subr.mxu0 0.0
      %2580 = vmatpush1.msra.mxu0 0.0
      %2581 = vmatprep.subr.mxu0 0.0
      %2582 = vmatpush1.msra.mxu0 0.0
      %2583 = vmatprep.subr.mxu0 0.0
      %2584 = vmatpush1.msra.mxu0 0.0
      %2585 = vmatprep.subr.mxu0 0.0
      %2586 = vmatpush1.msra.mxu0 0.0
      %2587 = vmatprep.subr.mxu0 0.0
      %2588 = vmatpush1.msra.mxu0 0.0
      %2589 = vmatprep.subr.mxu0 0.0
      %2590 = vmatpush1.msra.mxu0 0.0
      %2591 = vmatprep.subr.mxu0 0.0
      %2592 = vmatpush1.msra.mxu0 0.0
      %2593 = vmatprep.subr.mxu0 0.0
      %2594 = vmatpush1.msra.mxu0 0.0
      %2595 = vmatprep.subr.mxu0 0.0
      %2596 = vmatpush1.msra.mxu0 0.0
      %2597 = vmatprep.subr.mxu0 0.0
      %2598 = vmatpush1.msra.mxu0 0.0
      %2599 = vmatprep.subr.mxu0 0.0
      %2600 = vmatpush1.msra.mxu0 0.0
      %2601 = vmatprep.subr.mxu0 0.0
      %2602 = vmatpush1.msra.mxu0 0.0
      %2603 = vmatprep.subr.mxu0 0.0
      %2604 = vmatpush1.msra.mxu0 0.0
      %2605 = vmatprep.subr.mxu0 0.0
      %2606 = vmatpush1.msra.mxu0 0.0
      %2607 = vmatprep.subr.mxu0 0.0
      %2608 = vmatpush1.msra.mxu0 0.0
      %2609 = vmatprep.subr.mxu0 0.0
      %2610 = vmatpush1.msra.mxu0 0.0
      %2611 = vmatprep.subr.mxu0 0.0
      %2612 = vmatpush1.msra.mxu0 0.0
      %2613 = vmatprep.subr.mxu0 0.0
      %2614 = vmatpush1.msra.mxu0 0.0
      %2615 = vmatprep.subr.mxu0 0.0
      %2616 = vmatpush1.msra.mxu0 0.0
      %2617 = vmatprep.subr.mxu0 0.0
      %2618 = vmatpush1.msra.mxu0 0.0
      %2619 = vmatprep.subr.mxu0 0.0
      %2620 = vmatpush1.msra.mxu0 0.0
      %2621 = vmatprep.subr.mxu0 0.0
      %2622 = vmatpush1.msra.mxu0 0.0
      %2623 = vmatprep.subr.mxu0 0.0
      %2624 = vmatpush1.msra.mxu0 0.0
      %2625 = vmatprep.subr.mxu0 0.0
      %2626 = vmatpush1.msra.mxu0 0.0
      %2627 = vmatprep.subr.mxu0 0.0
      %2628 = vmatpush1.msra.mxu0 0.0
      %2629 = vmatprep.subr.mxu0 0.0
      %2630 = vmatpush1.msra.mxu0 0.0
      %2631 = vmatprep.subr.mxu0 0.0
      %2632 = vmatpush1.msra.mxu0 0.0
      %2633 = vmatprep.mubr.f32.mxu0 0.0
      %2634 = vmatmul.mubr.f32.gmra.mrb[0].mxu0 %v2354
      %v2635 = vpop.f32.mrb[0].mxu0
      %v2636 = vadd.f32 0.0, %v2635
      %v2637 = vpop.f32.mrb[0].mxu0
      %v2638 = vadd.f32 0.0, %v2637
      %2639 = vdwg.mxu0
      %v2640 = vadd.f32 %v2308, %v2423
      %v2641 = vadd.f32 %v2309, %v2425
      %v2642 = vadd.f32 %v2310, %v2494
      %v2643 = vadd.f32 %v2311, %v2496
      %v2644 = vadd.f32 %v2312, %v2565
      %v2645 = vadd.f32 %v2313, %v2567
      %v2646 = vadd.f32 %v2314, %v2636
      %v2647 = vadd.f32 %v2315, %v2638
      %s2648 = scalar_lea.vmem %s2, 56
      %v2649 = vld [vmem:[%s2648] sm:$0xff]
      %2650 = vrot.lane.b32.xlu0 %v640, 107
      %v2651 = vpop.permute.xlu0 %2650
      %2652 = vrot.lane.b32.xlu0 %v641, 107
      %v2653 = vpop.permute.xlu0 %2652
      %2654 = vrot.lane.b32.xlu0 %v642, 107
      %v2655 = vpop.permute.xlu0 %2654
      %2656 = vrot.lane.b32.xlu0 %v643, 107
      %v2657 = vpop.permute.xlu0 %2656
      %2658 = vrot.lane.b32.xlu0 %v644, 107
      %v2659 = vpop.permute.xlu0 %2658
      %2660 = vrot.lane.b32.xlu0 %v645, 107
      %v2661 = vpop.permute.xlu0 %2660
      %2662 = vrot.lane.b32.xlu0 %v646, 107
      %v2663 = vpop.permute.xlu0 %2662
      %2664 = vrot.lane.b32.xlu0 %v647, 107
      %v2665 = vpop.permute.xlu0 %2664
      %2666 = vrot.lane.b32.xlu0 %v648, 107
      %v2667 = vpop.permute.xlu0 %2666
      %vm2668 = vcmask 875520
      %v2669 = vsel %vm2668, %v2651, %v2653
      %v2670 = vsel %vm2668, %v2653, %v2655
      %v2671 = vsel %vm2668, %v2655, %v2657
      %v2672 = vsel %vm2668, %v2657, %v2659
      %v2673 = vsel %vm2668, %v2659, %v2661
      %v2674 = vsel %vm2668, %v2661, %v2663
      %v2675 = vsel %vm2668, %v2663, %v2665
      %v2676 = vsel %vm2668, %v2665, %v2667
      %v2686 = vsel %vm337, %v2649, 0
      %2688 = vmatprep.subr.mxu0 %v2670
      %2689 = vmatpush1.msra.mxu0 %v2669
      %2690 = vmatprep.subr.mxu0 0.0
      %2691 = vmatpush1.msra.mxu0 0.0
      %2692 = vmatprep.subr.mxu0 0.0
      %2693 = vmatpush1.msra.mxu0 0.0
      %2694 = vmatprep.subr.mxu0 0.0
      %2695 = vmatpush1.msra.mxu0 0.0
      %2696 = vmatprep.subr.mxu0 0.0
      %2697 = vmatpush1.msra.mxu0 0.0
      %2698 = vmatprep.subr.mxu0 0.0
      %2699 = vmatpush1.msra.mxu0 0.0
      %2700 = vmatprep.subr.mxu0 0.0
      %2701 = vmatpush1.msra.mxu0 0.0
      %2702 = vmatprep.subr.mxu0 0.0
      %2703 = vmatpush1.msra.mxu0 0.0
      %2704 = vmatprep.subr.mxu0 0.0
      %2705 = vmatpush1.msra.mxu0 0.0
      %2706 = vmatprep.subr.mxu0 0.0
      %2707 = vmatpush1.msra.mxu0 0.0
      %2708 = vmatprep.subr.mxu0 0.0
      %2709 = vmatpush1.msra.mxu0 0.0
      %2710 = vmatprep.subr.mxu0 0.0
      %2711 = vmatpush1.msra.mxu0 0.0
      %2712 = vmatprep.subr.mxu0 0.0
      %2713 = vmatpush1.msra.mxu0 0.0
      %2714 = vmatprep.subr.mxu0 0.0
      %2715 = vmatpush1.msra.mxu0 0.0
      %2716 = vmatprep.subr.mxu0 0.0
      %2717 = vmatpush1.msra.mxu0 0.0
      %2718 = vmatprep.subr.mxu0 0.0
      %2719 = vmatpush1.msra.mxu0 0.0
      %2720 = vmatprep.subr.mxu0 0.0
      %2721 = vmatpush1.msra.mxu0 0.0
      %2722 = vmatprep.subr.mxu0 0.0
      %2723 = vmatpush1.msra.mxu0 0.0
      %2724 = vmatprep.subr.mxu0 0.0
      %2725 = vmatpush1.msra.mxu0 0.0
      %2726 = vmatprep.subr.mxu0 0.0
      %2727 = vmatpush1.msra.mxu0 0.0
      %2728 = vmatprep.subr.mxu0 0.0
      %2729 = vmatpush1.msra.mxu0 0.0
      %2730 = vmatprep.subr.mxu0 0.0
      %2731 = vmatpush1.msra.mxu0 0.0
      %2732 = vmatprep.subr.mxu0 0.0
      %2733 = vmatpush1.msra.mxu0 0.0
      %2734 = vmatprep.subr.mxu0 0.0
      %2735 = vmatpush1.msra.mxu0 0.0
      %2736 = vmatprep.subr.mxu0 0.0
      %2737 = vmatpush1.msra.mxu0 0.0
      %2738 = vmatprep.subr.mxu0 0.0
      %2739 = vmatpush1.msra.mxu0 0.0
      %2740 = vmatprep.subr.mxu0 0.0
      %2741 = vmatpush1.msra.mxu0 0.0
      %2742 = vmatprep.subr.mxu0 0.0
      %2743 = vmatpush1.msra.mxu0 0.0
      %2744 = vmatprep.subr.mxu0 0.0
      %2745 = vmatpush1.msra.mxu0 0.0
      %2746 = vmatprep.subr.mxu0 0.0
      %2747 = vmatpush1.msra.mxu0 0.0
      %2748 = vmatprep.subr.mxu0 0.0
      %2749 = vmatpush1.msra.mxu0 0.0
      %2750 = vmatprep.subr.mxu0 0.0
      %2751 = vmatpush1.msra.mxu0 0.0
      %2752 = vmatprep.mubr.f32.mxu0 0.0
      %2753 = vmatmul.mubr.f32.gmra.mrb[0].mxu0 %v2686
      %v2754 = vpop.f32.mrb[0].mxu0
      %v2755 = vadd.f32 0.0, %v2754
      %v2756 = vpop.f32.mrb[0].mxu0
      %v2757 = vadd.f32 0.0, %v2756
      %2758 = vdwg.mxu0
      %2759 = vmatprep.subr.mxu0 %v2672
      %2760 = vmatpush1.msra.mxu0 %v2671
      %2761 = vmatprep.subr.mxu0 0.0
      %2762 = vmatpush1.msra.mxu0 0.0
      %2763 = vmatprep.subr.mxu0 0.0
      %2764 = vmatpush1.msra.mxu0 0.0
      %2765 = vmatprep.subr.mxu0 0.0
      %2766 = vmatpush1.msra.mxu0 0.0
      %2767 = vmatprep.subr.mxu0 0.0
      %2768 = vmatpush1.msra.mxu0 0.0
      %2769 = vmatprep.subr.mxu0 0.0
      %2770 = vmatpush1.msra.mxu0 0.0
      %2771 = vmatprep.subr.mxu0 0.0
      %2772 = vmatpush1.msra.mxu0 0.0
      %2773 = vmatprep.subr.mxu0 0.0
      %2774 = vmatpush1.msra.mxu0 0.0
      %2775 = vmatprep.subr.mxu0 0.0
      %2776 = vmatpush1.msra.mxu0 0.0
      %2777 = vmatprep.subr.mxu0 0.0
      %2778 = vmatpush1.msra.mxu0 0.0
      %2779 = vmatprep.subr.mxu0 0.0
      %2780 = vmatpush1.msra.mxu0 0.0
      %2781 = vmatprep.subr.mxu0 0.0
      %2782 = vmatpush1.msra.mxu0 0.0
      %2783 = vmatprep.subr.mxu0 0.0
      %2784 = vmatpush1.msra.mxu0 0.0
      %2785 = vmatprep.subr.mxu0 0.0
      %2786 = vmatpush1.msra.mxu0 0.0
      %2787 = vmatprep.subr.mxu0 0.0
      %2788 = vmatpush1.msra.mxu0 0.0
      %2789 = vmatprep.subr.mxu0 0.0
      %2790 = vmatpush1.msra.mxu0 0.0
      %2791 = vmatprep.subr.mxu0 0.0
      %2792 = vmatpush1.msra.mxu0 0.0
      %2793 = vmatprep.subr.mxu0 0.0
      %2794 = vmatpush1.msra.mxu0 0.0
      %2795 = vmatprep.subr.mxu0 0.0
      %2796 = vmatpush1.msra.mxu0 0.0
      %2797 = vmatprep.subr.mxu0 0.0
      %2798 = vmatpush1.msra.mxu0 0.0
      %2799 = vmatprep.subr.mxu0 0.0
      %2800 = vmatpush1.msra.mxu0 0.0
      %2801 = vmatprep.subr.mxu0 0.0
      %2802 = vmatpush1.msra.mxu0 0.0
      %2803 = vmatprep.subr.mxu0 0.0
      %2804 = vmatpush1.msra.mxu0 0.0
      %2805 = vmatprep.subr.mxu0 0.0
      %2806 = vmatpush1.msra.mxu0 0.0
      %2807 = vmatprep.subr.mxu0 0.0
      %2808 = vmatpush1.msra.mxu0 0.0
      %2809 = vmatprep.subr.mxu0 0.0
      %2810 = vmatpush1.msra.mxu0 0.0
      %2811 = vmatprep.subr.mxu0 0.0
      %2812 = vmatpush1.msra.mxu0 0.0
      %2813 = vmatprep.subr.mxu0 0.0
      %2814 = vmatpush1.msra.mxu0 0.0
      %2815 = vmatprep.subr.mxu0 0.0
      %2816 = vmatpush1.msra.mxu0 0.0
      %2817 = vmatprep.subr.mxu0 0.0
      %2818 = vmatpush1.msra.mxu0 0.0
      %2819 = vmatprep.subr.mxu0 0.0
      %2820 = vmatpush1.msra.mxu0 0.0
      %2821 = vmatprep.subr.mxu0 0.0
      %2822 = vmatpush1.msra.mxu0 0.0
      %2823 = vmatprep.mubr.f32.mxu0 0.0
      %2824 = vmatmul.mubr.f32.gmra.mrb[0].mxu0 %v2686
      %v2825 = vpop.f32.mrb[0].mxu0
      %v2826 = vadd.f32 0.0, %v2825
      %v2827 = vpop.f32.mrb[0].mxu0
      %v2828 = vadd.f32 0.0, %v2827
      %2829 = vdwg.mxu0
      %2830 = vmatprep.subr.mxu0 %v2674
      %2831 = vmatpush1.msra.mxu0 %v2673
      %2832 = vmatprep.subr.mxu0 0.0
      %2833 = vmatpush1.msra.mxu0 0.0
      %2834 = vmatprep.subr.mxu0 0.0
      %2835 = vmatpush1.msra.mxu0 0.0
      %2836 = vmatprep.subr.mxu0 0.0
      %2837 = vmatpush1.msra.mxu0 0.0
      %2838 = vmatprep.subr.mxu0 0.0
      %2839 = vmatpush1.msra.mxu0 0.0
      %2840 = vmatprep.subr.mxu0 0.0
      %2841 = vmatpush1.msra.mxu0 0.0
      %2842 = vmatprep.subr.mxu0 0.0
      %2843 = vmatpush1.msra.mxu0 0.0
      %2844 = vmatprep.subr.mxu0 0.0
      %2845 = vmatpush1.msra.mxu0 0.0
      %2846 = vmatprep.subr.mxu0 0.0
      %2847 = vmatpush1.msra.mxu0 0.0
      %2848 = vmatprep.subr.mxu0 0.0
      %2849 = vmatpush1.msra.mxu0 0.0
      %2850 = vmatprep.subr.mxu0 0.0
      %2851 = vmatpush1.msra.mxu0 0.0
      %2852 = vmatprep.subr.mxu0 0.0
      %2853 = vmatpush1.msra.mxu0 0.0
      %2854 = vmatprep.subr.mxu0 0.0
      %2855 = vmatpush1.msra.mxu0 0.0
      %2856 = vmatprep.subr.mxu0 0.0
      %2857 = vmatpush1.msra.mxu0 0.0
      %2858 = vmatprep.subr.mxu0 0.0
      %2859 = vmatpush1.msra.mxu0 0.0
      %2860 = vmatprep.subr.mxu0 0.0
      %2861 = vmatpush1.msra.mxu0 0.0
      %2862 = vmatprep.subr.mxu0 0.0
      %2863 = vmatpush1.msra.mxu0 0.0
      %2864 = vmatprep.subr.mxu0 0.0
      %2865 = vmatpush1.msra.mxu0 0.0
      %2866 = vmatprep.subr.mxu0 0.0
      %2867 = vmatpush1.msra.mxu0 0.0
      %2868 = vmatprep.subr.mxu0 0.0
      %2869 = vmatpush1.msra.mxu0 0.0
      %2870 = vmatprep.subr.mxu0 0.0
      %2871 = vmatpush1.msra.mxu0 0.0
      %2872 = vmatprep.subr.mxu0 0.0
      %2873 = vmatpush1.msra.mxu0 0.0
      %2874 = vmatprep.subr.mxu0 0.0
      %2875 = vmatpush1.msra.mxu0 0.0
      %2876 = vmatprep.subr.mxu0 0.0
      %2877 = vmatpush1.msra.mxu0 0.0
      %2878 = vmatprep.subr.mxu0 0.0
      %2879 = vmatpush1.msra.mxu0 0.0
      %2880 = vmatprep.subr.mxu0 0.0
      %2881 = vmatpush1.msra.mxu0 0.0
      %2882 = vmatprep.subr.mxu0 0.0
      %2883 = vmatpush1.msra.mxu0 0.0
      %2884 = vmatprep.subr.mxu0 0.0
      %2885 = vmatpush1.msra.mxu0 0.0
      %2886 = vmatprep.subr.mxu0 0.0
      %2887 = vmatpush1.msra.mxu0 0.0
      %2888 = vmatprep.subr.mxu0 0.0
      %2889 = vmatpush1.msra.mxu0 0.0
      %2890 = vmatprep.subr.mxu0 0.0
      %2891 = vmatpush1.msra.mxu0 0.0
      %2892 = vmatprep.subr.mxu0 0.0
      %2893 = vmatpush1.msra.mxu0 0.0
      %2894 = vmatprep.mubr.f32.mxu0 0.0
      %2895 = vmatmul.mubr.f32.gmra.mrb[0].mxu0 %v2686
      %v2896 = vpop.f32.mrb[0].mxu0
      %v2897 = vadd.f32 0.0, %v2896
      %v2898 = vpop.f32.mrb[0].mxu0
      %v2899 = vadd.f32 0.0, %v2898
      %2900 = vdwg.mxu0
      %2901 = vmatprep.subr.mxu0 %v2676
      %2902 = vmatpush1.msra.mxu0 %v2675
      %2903 = vmatprep.subr.mxu0 0.0
      %2904 = vmatpush1.msra.mxu0 0.0
      %2905 = vmatprep.subr.mxu0 0.0
      %2906 = vmatpush1.msra.mxu0 0.0
      %2907 = vmatprep.subr.mxu0 0.0
      %2908 = vmatpush1.msra.mxu0 0.0
      %2909 = vmatprep.subr.mxu0 0.0
      %2910 = vmatpush1.msra.mxu0 0.0
      %2911 = vmatprep.subr.mxu0 0.0
      %2912 = vmatpush1.msra.mxu0 0.0
      %2913 = vmatprep.subr.mxu0 0.0
      %2914 = vmatpush1.msra.mxu0 0.0
      %2915 = vmatprep.subr.mxu0 0.0
      %2916 = vmatpush1.msra.mxu0 0.0
      %2917 = vmatprep.subr.mxu0 0.0
      %2918 = vmatpush1.msra.mxu0 0.0
      %2919 = vmatprep.subr.mxu0 0.0
      %2920 = vmatpush1.msra.mxu0 0.0
      %2921 = vmatprep.subr.mxu0 0.0
      %2922 = vmatpush1.msra.mxu0 0.0
      %2923 = vmatprep.subr.mxu0 0.0
      %2924 = vmatpush1.msra.mxu0 0.0
      %2925 = vmatprep.subr.mxu0 0.0
      %2926 = vmatpush1.msra.mxu0 0.0
      %2927 = vmatprep.subr.mxu0 0.0
      %2928 = vmatpush1.msra.mxu0 0.0
      %2929 = vmatprep.subr.mxu0 0.0
      %2930 = vmatpush1.msra.mxu0 0.0
      %2931 = vmatprep.subr.mxu0 0.0
      %2932 = vmatpush1.msra.mxu0 0.0
      %2933 = vmatprep.subr.mxu0 0.0
      %2934 = vmatpush1.msra.mxu0 0.0
      %2935 = vmatprep.subr.mxu0 0.0
      %2936 = vmatpush1.msra.mxu0 0.0
      %2937 = vmatprep.subr.mxu0 0.0
      %2938 = vmatpush1.msra.mxu0 0.0
      %2939 = vmatprep.subr.mxu0 0.0
      %2940 = vmatpush1.msra.mxu0 0.0
      %2941 = vmatprep.subr.mxu0 0.0
      %2942 = vmatpush1.msra.mxu0 0.0
      %2943 = vmatprep.subr.mxu0 0.0
      %2944 = vmatpush1.msra.mxu0 0.0
      %2945 = vmatprep.subr.mxu0 0.0
      %2946 = vmatpush1.msra.mxu0 0.0
      %2947 = vmatprep.subr.mxu0 0.0
      %2948 = vmatpush1.msra.mxu0 0.0
      %2949 = vmatprep.subr.mxu0 0.0
      %2950 = vmatpush1.msra.mxu0 0.0
      %2951 = vmatprep.subr.mxu0 0.0
      %2952 = vmatpush1.msra.mxu0 0.0
      %2953 = vmatprep.subr.mxu0 0.0
      %2954 = vmatpush1.msra.mxu0 0.0
      %2955 = vmatprep.subr.mxu0 0.0
      %2956 = vmatpush1.msra.mxu0 0.0
      %2957 = vmatprep.subr.mxu0 0.0
      %2958 = vmatpush1.msra.mxu0 0.0
      %2959 = vmatprep.subr.mxu0 0.0
      %2960 = vmatpush1.msra.mxu0 0.0
      %2961 = vmatprep.subr.mxu0 0.0
      %2962 = vmatpush1.msra.mxu0 0.0
      %2963 = vmatprep.subr.mxu0 0.0
      %2964 = vmatpush1.msra.mxu0 0.0
      %2965 = vmatprep.mubr.f32.mxu0 0.0
      %2966 = vmatmul.mubr.f32.gmra.mrb[0].mxu0 %v2686
      %v2967 = vpop.f32.mrb[0].mxu0
      %v2968 = vadd.f32 0.0, %v2967
      %v2969 = vpop.f32.mrb[0].mxu0
      %v2970 = vadd.f32 0.0, %v2969
      %2971 = vdwg.mxu0
      %v2972 = vadd.f32 %v2640, %v2755
      %v2973 = vadd.f32 %v2641, %v2757
      %v2974 = vadd.f32 %v2642, %v2826
      %v2975 = vadd.f32 %v2643, %v2828
      %v2976 = vadd.f32 %v2644, %v2897
      %v2977 = vadd.f32 %v2645, %v2899
      %v2978 = vadd.f32 %v2646, %v2968
      %v2979 = vadd.f32 %v2647, %v2970
      %s2980 = scalar_lea.vmem %s2, 64
      %v2981 = vld [vmem:[%s2980] sm:$0xff]
      %2982 = vrot.lane.b32.xlu0 %v640, 106
      %v2983 = vpop.permute.xlu0 %2982
      %2984 = vrot.lane.b32.xlu0 %v641, 106
      %v2985 = vpop.permute.xlu0 %2984
      %2986 = vrot.lane.b32.xlu0 %v642, 106
      %v2987 = vpop.permute.xlu0 %2986
      %2988 = vrot.lane.b32.xlu0 %v643, 106
      %v2989 = vpop.permute.xlu0 %2988
      %2990 = vrot.lane.b32.xlu0 %v644, 106
      %v2991 = vpop.permute.xlu0 %2990
      %2992 = vrot.lane.b32.xlu0 %v645, 106
      %v2993 = vpop.permute.xlu0 %2992
      %2994 = vrot.lane.b32.xlu0 %v646, 106
      %v2995 = vpop.permute.xlu0 %2994
      %2996 = vrot.lane.b32.xlu0 %v647, 106
      %v2997 = vpop.permute.xlu0 %2996
      %2998 = vrot.lane.b32.xlu0 %v648, 106
      %v2999 = vpop.permute.xlu0 %2998
      %vm3000 = vcmask 867328
      %v3001 = vsel %vm3000, %v2983, %v2985
      %v3002 = vsel %vm3000, %v2985, %v2987
      %v3003 = vsel %vm3000, %v2987, %v2989
      %v3004 = vsel %vm3000, %v2989, %v2991
      %v3005 = vsel %vm3000, %v2991, %v2993
      %v3006 = vsel %vm3000, %v2993, %v2995
      %v3007 = vsel %vm3000, %v2995, %v2997
      %v3008 = vsel %vm3000, %v2997, %v2999
      %v3018 = vsel %vm337, %v2981, 0
      %3020 = vmatprep.subr.mxu0 %v3002
      %3021 = vmatpush1.msra.mxu0 %v3001
      %3022 = vmatprep.subr.mxu0 0.0
      %3023 = vmatpush1.msra.mxu0 0.0
      %3024 = vmatprep.subr.mxu0 0.0
      %3025 = vmatpush1.msra.mxu0 0.0
      %3026 = vmatprep.subr.mxu0 0.0
      %3027 = vmatpush1.msra.mxu0 0.0
      %3028 = vmatprep.subr.mxu0 0.0
      %3029 = vmatpush1.msra.mxu0 0.0
      %3030 = vmatprep.subr.mxu0 0.0
      %3031 = vmatpush1.msra.mxu0 0.0
      %3032 = vmatprep.subr.mxu0 0.0
      %3033 = vmatpush1.msra.mxu0 0.0
      %3034 = vmatprep.subr.mxu0 0.0
      %3035 = vmatpush1.msra.mxu0 0.0
      %3036 = vmatprep.subr.mxu0 0.0
      %3037 = vmatpush1.msra.mxu0 0.0
      %3038 = vmatprep.subr.mxu0 0.0
      %3039 = vmatpush1.msra.mxu0 0.0
      %3040 = vmatprep.subr.mxu0 0.0
      %3041 = vmatpush1.msra.mxu0 0.0
      %3042 = vmatprep.subr.mxu0 0.0
      %3043 = vmatpush1.msra.mxu0 0.0
      %3044 = vmatprep.subr.mxu0 0.0
      %3045 = vmatpush1.msra.mxu0 0.0
      %3046 = vmatprep.subr.mxu0 0.0
      %3047 = vmatpush1.msra.mxu0 0.0
      %3048 = vmatprep.subr.mxu0 0.0
      %3049 = vmatpush1.msra.mxu0 0.0
      %3050 = vmatprep.subr.mxu0 0.0
      %3051 = vmatpush1.msra.mxu0 0.0
      %3052 = vmatprep.subr.mxu0 0.0
      %3053 = vmatpush1.msra.mxu0 0.0
      %3054 = vmatprep.subr.mxu0 0.0
      %3055 = vmatpush1.msra.mxu0 0.0
      %3056 = vmatprep.subr.mxu0 0.0
      %3057 = vmatpush1.msra.mxu0 0.0
      %3058 = vmatprep.subr.mxu0 0.0
      %3059 = vmatpush1.msra.mxu0 0.0
      %3060 = vmatprep.subr.mxu0 0.0
      %3061 = vmatpush1.msra.mxu0 0.0
      %3062 = vmatprep.subr.mxu0 0.0
      %3063 = vmatpush1.msra.mxu0 0.0
      %3064 = vmatprep.subr.mxu0 0.0
      %3065 = vmatpush1.msra.mxu0 0.0
      %3066 = vmatprep.subr.mxu0 0.0
      %3067 = vmatpush1.msra.mxu0 0.0
      %3068 = vmatprep.subr.mxu0 0.0
      %3069 = vmatpush1.msra.mxu0 0.0
      %3070 = vmatprep.subr.mxu0 0.0
      %3071 = vmatpush1.msra.mxu0 0.0
      %3072 = vmatprep.subr.mxu0 0.0
      %3073 = vmatpush1.msra.mxu0 0.0
      %3074 = vmatprep.subr.mxu0 0.0
      %3075 = vmatpush1.msra.mxu0 0.0
      %3076 = vmatprep.subr.mxu0 0.0
      %3077 = vmatpush1.msra.mxu0 0.0
      %3078 = vmatprep.subr.mxu0 0.0
      %3079 = vmatpush1.msra.mxu0 0.0
      %3080 = vmatprep.subr.mxu0 0.0
      %3081 = vmatpush1.msra.mxu0 0.0
      %3082 = vmatprep.subr.mxu0 0.0
      %3083 = vmatpush1.msra.mxu0 0.0
      %3084 = vmatprep.mubr.f32.mxu0 0.0
      %3085 = vmatmul.mubr.f32.gmra.mrb[0].mxu0 %v3018
      %v3086 = vpop.f32.mrb[0].mxu0
      %v3087 = vadd.f32 0.0, %v3086
      %v3088 = vpop.f32.mrb[0].mxu0
      %v3089 = vadd.f32 0.0, %v3088
      %3090 = vdwg.mxu0
      %3091 = vmatprep.subr.mxu0 %v3004
      %3092 = vmatpush1.msra.mxu0 %v3003
      %3093 = vmatprep.subr.mxu0 0.0
      %3094 = vmatpush1.msra.mxu0 0.0
      %3095 = vmatprep.subr.mxu0 0.0
      %3096 = vmatpush1.msra.mxu0 0.0
      %3097 = vmatprep.subr.mxu0 0.0
      %3098 = vmatpush1.msra.mxu0 0.0
      %3099 = vmatprep.subr.mxu0 0.0
      %3100 = vmatpush1.msra.mxu0 0.0
      %3101 = vmatprep.subr.mxu0 0.0
      %3102 = vmatpush1.msra.mxu0 0.0
      %3103 = vmatprep.subr.mxu0 0.0
      %3104 = vmatpush1.msra.mxu0 0.0
      %3105 = vmatprep.subr.mxu0 0.0
      %3106 = vmatpush1.msra.mxu0 0.0
      %3107 = vmatprep.subr.mxu0 0.0
      %3108 = vmatpush1.msra.mxu0 0.0
      %3109 = vmatprep.subr.mxu0 0.0
      %3110 = vmatpush1.msra.mxu0 0.0
      %3111 = vmatprep.subr.mxu0 0.0
      %3112 = vmatpush1.msra.mxu0 0.0
      %3113 = vmatprep.subr.mxu0 0.0
      %3114 = vmatpush1.msra.mxu0 0.0
      %3115 = vmatprep.subr.mxu0 0.0
      %3116 = vmatpush1.msra.mxu0 0.0
      %3117 = vmatprep.subr.mxu0 0.0
      %3118 = vmatpush1.msra.mxu0 0.0
      %3119 = vmatprep.subr.mxu0 0.0
      %3120 = vmatpush1.msra.mxu0 0.0
      %3121 = vmatprep.subr.mxu0 0.0
      %3122 = vmatpush1.msra.mxu0 0.0
      %3123 = vmatprep.subr.mxu0 0.0
      %3124 = vmatpush1.msra.mxu0 0.0
      %3125 = vmatprep.subr.mxu0 0.0
      %3126 = vmatpush1.msra.mxu0 0.0
      %3127 = vmatprep.subr.mxu0 0.0
      %3128 = vmatpush1.msra.mxu0 0.0
      %3129 = vmatprep.subr.mxu0 0.0
      %3130 = vmatpush1.msra.mxu0 0.0
      %3131 = vmatprep.subr.mxu0 0.0
      %3132 = vmatpush1.msra.mxu0 0.0
      %3133 = vmatprep.subr.mxu0 0.0
      %3134 = vmatpush1.msra.mxu0 0.0
      %3135 = vmatprep.subr.mxu0 0.0
      %3136 = vmatpush1.msra.mxu0 0.0
      %3137 = vmatprep.subr.mxu0 0.0
      %3138 = vmatpush1.msra.mxu0 0.0
      %3139 = vmatprep.subr.mxu0 0.0
      %3140 = vmatpush1.msra.mxu0 0.0
      %3141 = vmatprep.subr.mxu0 0.0
      %3142 = vmatpush1.msra.mxu0 0.0
      %3143 = vmatprep.subr.mxu0 0.0
      %3144 = vmatpush1.msra.mxu0 0.0
      %3145 = vmatprep.subr.mxu0 0.0
      %3146 = vmatpush1.msra.mxu0 0.0
      %3147 = vmatprep.subr.mxu0 0.0
      %3148 = vmatpush1.msra.mxu0 0.0
      %3149 = vmatprep.subr.mxu0 0.0
      %3150 = vmatpush1.msra.mxu0 0.0
      %3151 = vmatprep.subr.mxu0 0.0
      %3152 = vmatpush1.msra.mxu0 0.0
      %3153 = vmatprep.subr.mxu0 0.0
      %3154 = vmatpush1.msra.mxu0 0.0
      %3155 = vmatprep.mubr.f32.mxu0 0.0
      %3156 = vmatmul.mubr.f32.gmra.mrb[0].mxu0 %v3018
      %v3157 = vpop.f32.mrb[0].mxu0
      %v3158 = vadd.f32 0.0, %v3157
      %v3159 = vpop.f32.mrb[0].mxu0
      %v3160 = vadd.f32 0.0, %v3159
      %3161 = vdwg.mxu0
      %3162 = vmatprep.subr.mxu0 %v3006
      %3163 = vmatpush1.msra.mxu0 %v3005
      %3164 = vmatprep.subr.mxu0 0.0
      %3165 = vmatpush1.msra.mxu0 0.0
      %3166 = vmatprep.subr.mxu0 0.0
      %3167 = vmatpush1.msra.mxu0 0.0
      %3168 = vmatprep.subr.mxu0 0.0
      %3169 = vmatpush1.msra.mxu0 0.0
      %3170 = vmatprep.subr.mxu0 0.0
      %3171 = vmatpush1.msra.mxu0 0.0
      %3172 = vmatprep.subr.mxu0 0.0
      %3173 = vmatpush1.msra.mxu0 0.0
      %3174 = vmatprep.subr.mxu0 0.0
      %3175 = vmatpush1.msra.mxu0 0.0
      %3176 = vmatprep.subr.mxu0 0.0
      %3177 = vmatpush1.msra.mxu0 0.0
      %3178 = vmatprep.subr.mxu0 0.0
      %3179 = vmatpush1.msra.mxu0 0.0
      %3180 = vmatprep.subr.mxu0 0.0
      %3181 = vmatpush1.msra.mxu0 0.0
      %3182 = vmatprep.subr.mxu0 0.0
      %3183 = vmatpush1.msra.mxu0 0.0
      %3184 = vmatprep.subr.mxu0 0.0
      %3185 = vmatpush1.msra.mxu0 0.0
      %3186 = vmatprep.subr.mxu0 0.0
      %3187 = vmatpush1.msra.mxu0 0.0
      %3188 = vmatprep.subr.mxu0 0.0
      %3189 = vmatpush1.msra.mxu0 0.0
      %3190 = vmatprep.subr.mxu0 0.0
      %3191 = vmatpush1.msra.mxu0 0.0
      %3192 = vmatprep.subr.mxu0 0.0
      %3193 = vmatpush1.msra.mxu0 0.0
      %3194 = vmatprep.subr.mxu0 0.0
      %3195 = vmatpush1.msra.mxu0 0.0
      %3196 = vmatprep.subr.mxu0 0.0
      %3197 = vmatpush1.msra.mxu0 0.0
      %3198 = vmatprep.subr.mxu0 0.0
      %3199 = vmatpush1.msra.mxu0 0.0
      %3200 = vmatprep.subr.mxu0 0.0
      %3201 = vmatpush1.msra.mxu0 0.0
      %3202 = vmatprep.subr.mxu0 0.0
      %3203 = vmatpush1.msra.mxu0 0.0
      %3204 = vmatprep.subr.mxu0 0.0
      %3205 = vmatpush1.msra.mxu0 0.0
      %3206 = vmatprep.subr.mxu0 0.0
      %3207 = vmatpush1.msra.mxu0 0.0
      %3208 = vmatprep.subr.mxu0 0.0
      %3209 = vmatpush1.msra.mxu0 0.0
      %3210 = vmatprep.subr.mxu0 0.0
      %3211 = vmatpush1.msra.mxu0 0.0
      %3212 = vmatprep.subr.mxu0 0.0
      %3213 = vmatpush1.msra.mxu0 0.0
      %3214 = vmatprep.subr.mxu0 0.0
      %3215 = vmatpush1.msra.mxu0 0.0
      %3216 = vmatprep.subr.mxu0 0.0
      %3217 = vmatpush1.msra.mxu0 0.0
      %3218 = vmatprep.subr.mxu0 0.0
      %3219 = vmatpush1.msra.mxu0 0.0
      %3220 = vmatprep.subr.mxu0 0.0
      %3221 = vmatpush1.msra.mxu0 0.0
      %3222 = vmatprep.subr.mxu0 0.0
      %3223 = vmatpush1.msra.mxu0 0.0
      %3224 = vmatprep.subr.mxu0 0.0
      %3225 = vmatpush1.msra.mxu0 0.0
      %3226 = vmatprep.mubr.f32.mxu0 0.0
      %3227 = vmatmul.mubr.f32.gmra.mrb[0].mxu0 %v3018
      %v3228 = vpop.f32.mrb[0].mxu0
      %v3229 = vadd.f32 0.0, %v3228
      %v3230 = vpop.f32.mrb[0].mxu0
      %v3231 = vadd.f32 0.0, %v3230
      %3232 = vdwg.mxu0
      %3233 = vmatprep.subr.mxu0 %v3008
      %3234 = vmatpush1.msra.mxu0 %v3007
      %3235 = vmatprep.subr.mxu0 0.0
      %3236 = vmatpush1.msra.mxu0 0.0
      %3237 = vmatprep.subr.mxu0 0.0
      %3238 = vmatpush1.msra.mxu0 0.0
      %3239 = vmatprep.subr.mxu0 0.0
      %3240 = vmatpush1.msra.mxu0 0.0
      %3241 = vmatprep.subr.mxu0 0.0
      %3242 = vmatpush1.msra.mxu0 0.0
      %3243 = vmatprep.subr.mxu0 0.0
      %3244 = vmatpush1.msra.mxu0 0.0
      %3245 = vmatprep.subr.mxu0 0.0
      %3246 = vmatpush1.msra.mxu0 0.0
      %3247 = vmatprep.subr.mxu0 0.0
      %3248 = vmatpush1.msra.mxu0 0.0
      %3249 = vmatprep.subr.mxu0 0.0
      %3250 = vmatpush1.msra.mxu0 0.0
      %3251 = vmatprep.subr.mxu0 0.0
      %3252 = vmatpush1.msra.mxu0 0.0
      %3253 = vmatprep.subr.mxu0 0.0
      %3254 = vmatpush1.msra.mxu0 0.0
      %3255 = vmatprep.subr.mxu0 0.0
      %3256 = vmatpush1.msra.mxu0 0.0
      %3257 = vmatprep.subr.mxu0 0.0
      %3258 = vmatpush1.msra.mxu0 0.0
      %3259 = vmatprep.subr.mxu0 0.0
      %3260 = vmatpush1.msra.mxu0 0.0
      %3261 = vmatprep.subr.mxu0 0.0
      %3262 = vmatpush1.msra.mxu0 0.0
      %3263 = vmatprep.subr.mxu0 0.0
      %3264 = vmatpush1.msra.mxu0 0.0
      %3265 = vmatprep.subr.mxu0 0.0
      %3266 = vmatpush1.msra.mxu0 0.0
      %3267 = vmatprep.subr.mxu0 0.0
      %3268 = vmatpush1.msra.mxu0 0.0
      %3269 = vmatprep.subr.mxu0 0.0
      %3270 = vmatpush1.msra.mxu0 0.0
      %3271 = vmatprep.subr.mxu0 0.0
      %3272 = vmatpush1.msra.mxu0 0.0
      %3273 = vmatprep.subr.mxu0 0.0
      %3274 = vmatpush1.msra.mxu0 0.0
      %3275 = vmatprep.subr.mxu0 0.0
      %3276 = vmatpush1.msra.mxu0 0.0
      %3277 = vmatprep.subr.mxu0 0.0
      %3278 = vmatpush1.msra.mxu0 0.0
      %3279 = vmatprep.subr.mxu0 0.0
      %3280 = vmatpush1.msra.mxu0 0.0
      %3281 = vmatprep.subr.mxu0 0.0
      %3282 = vmatpush1.msra.mxu0 0.0
      %3283 = vmatprep.subr.mxu0 0.0
      %3284 = vmatpush1.msra.mxu0 0.0
      %3285 = vmatprep.subr.mxu0 0.0
      %3286 = vmatpush1.msra.mxu0 0.0
      %3287 = vmatprep.subr.mxu0 0.0
      %3288 = vmatpush1.msra.mxu0 0.0
      %3289 = vmatprep.subr.mxu0 0.0
      %3290 = vmatpush1.msra.mxu0 0.0
      %3291 = vmatprep.subr.mxu0 0.0
      %3292 = vmatpush1.msra.mxu0 0.0
      %3293 = vmatprep.subr.mxu0 0.0
      %3294 = vmatpush1.msra.mxu0 0.0
      %3295 = vmatprep.subr.mxu0 0.0
      %3296 = vmatpush1.msra.mxu0 0.0
      %3297 = vmatprep.mubr.f32.mxu0 0.0
      %3298 = vmatmul.mubr.f32.gmra.mrb[0].mxu0 %v3018
      %v3299 = vpop.f32.mrb[0].mxu0
      %v3300 = vadd.f32 0.0, %v3299
      %v3301 = vpop.f32.mrb[0].mxu0
      %v3302 = vadd.f32 0.0, %v3301
      %3303 = vdwg.mxu0
      %v3304 = vadd.f32 %v2972, %v3087
      %v3305 = vadd.f32 %v2973, %v3089
      %v3306 = vadd.f32 %v2974, %v3158
      %v3307 = vadd.f32 %v2975, %v3160
      %v3308 = vadd.f32 %v2976, %v3229
      %v3309 = vadd.f32 %v2977, %v3231
      %v3310 = vadd.f32 %v2978, %v3300
      %v3311 = vadd.f32 %v2979, %v3302
      %s3312 = scalar_lea.vmem %s2, 72
      %v3313 = vld [vmem:[%s3312] sm:$0xff]
      %3314 = vrot.lane.b32.xlu0 %v640, 28
      %v3315 = vpop.permute.xlu0 %3314
      %3316 = vrot.lane.b32.xlu0 %v641, 28
      %v3317 = vpop.permute.xlu0 %3316
      %3318 = vrot.lane.b32.xlu0 %v642, 28
      %v3319 = vpop.permute.xlu0 %3318
      %3320 = vrot.lane.b32.xlu0 %v643, 28
      %v3321 = vpop.permute.xlu0 %3320
      %3322 = vrot.lane.b32.xlu0 %v644, 28
      %v3323 = vpop.permute.xlu0 %3322
      %3324 = vrot.lane.b32.xlu0 %v645, 28
      %v3325 = vpop.permute.xlu0 %3324
      %3326 = vrot.lane.b32.xlu0 %v646, 28
      %v3327 = vpop.permute.xlu0 %3326
      %3328 = vrot.lane.b32.xlu0 %v647, 28
      %v3329 = vpop.permute.xlu0 %3328
      %3330 = vrot.lane.b32.xlu0 %v648, 28
      %v3331 = vpop.permute.xlu0 %3330
      %vm3332 = vcmask 228352
      %v3333 = vsel %vm3332, %v3315, %v3317
      %v3334 = vsel %vm3332, %v3317, %v3319
      %v3335 = vsel %vm3332, %v3319, %v3321
      %v3336 = vsel %vm3332, %v3321, %v3323
      %v3337 = vsel %vm3332, %v3323, %v3325
      %v3338 = vsel %vm3332, %v3325, %v3327
      %v3339 = vsel %vm3332, %v3327, %v3329
      %v3340 = vsel %vm3332, %v3329, %v3331
      %v3350 = vsel %vm337, %v3313, 0
      %3352 = vmatprep.subr.mxu0 %v3334
      %3353 = vmatpush1.msra.mxu0 %v3333
      %3354 = vmatprep.subr.mxu0 0.0
      %3355 = vmatpush1.msra.mxu0 0.0
      %3356 = vmatprep.subr.mxu0 0.0
      %3357 = vmatpush1.msra.mxu0 0.0
      %3358 = vmatprep.subr.mxu0 0.0
      %3359 = vmatpush1.msra.mxu0 0.0
      %3360 = vmatprep.subr.mxu0 0.0
      %3361 = vmatpush1.msra.mxu0 0.0
      %3362 = vmatprep.subr.mxu0 0.0
      %3363 = vmatpush1.msra.mxu0 0.0
      %3364 = vmatprep.subr.mxu0 0.0
      %3365 = vmatpush1.msra.mxu0 0.0
      %3366 = vmatprep.subr.mxu0 0.0
      %3367 = vmatpush1.msra.mxu0 0.0
      %3368 = vmatprep.subr.mxu0 0.0
      %3369 = vmatpush1.msra.mxu0 0.0
      %3370 = vmatprep.subr.mxu0 0.0
      %3371 = vmatpush1.msra.mxu0 0.0
      %3372 = vmatprep.subr.mxu0 0.0
      %3373 = vmatpush1.msra.mxu0 0.0
      %3374 = vmatprep.subr.mxu0 0.0
      %3375 = vmatpush1.msra.mxu0 0.0
      %3376 = vmatprep.subr.mxu0 0.0
      %3377 = vmatpush1.msra.mxu0 0.0
      %3378 = vmatprep.subr.mxu0 0.0
      %3379 = vmatpush1.msra.mxu0 0.0
      %3380 = vmatprep.subr.mxu0 0.0
      %3381 = vmatpush1.msra.mxu0 0.0
      %3382 = vmatprep.subr.mxu0 0.0
      %3383 = vmatpush1.msra.mxu0 0.0
      %3384 = vmatprep.subr.mxu0 0.0
      %3385 = vmatpush1.msra.mxu0 0.0
      %3386 = vmatprep.subr.mxu0 0.0
      %3387 = vmatpush1.msra.mxu0 0.0
      %3388 = vmatprep.subr.mxu0 0.0
      %3389 = vmatpush1.msra.mxu0 0.0
      %3390 = vmatprep.subr.mxu0 0.0
      %3391 = vmatpush1.msra.mxu0 0.0
      %3392 = vmatprep.subr.mxu0 0.0
      %3393 = vmatpush1.msra.mxu0 0.0
      %3394 = vmatprep.subr.mxu0 0.0
      %3395 = vmatpush1.msra.mxu0 0.0
      %3396 = vmatprep.subr.mxu0 0.0
      %3397 = vmatpush1.msra.mxu0 0.0
      %3398 = vmatprep.subr.mxu0 0.0
      %3399 = vmatpush1.msra.mxu0 0.0
      %3400 = vmatprep.subr.mxu0 0.0
      %3401 = vmatpush1.msra.mxu0 0.0
      %3402 = vmatprep.subr.mxu0 0.0
      %3403 = vmatpush1.msra.mxu0 0.0
      %3404 = vmatprep.subr.mxu0 0.0
      %3405 = vmatpush1.msra.mxu0 0.0
      %3406 = vmatprep.subr.mxu0 0.0
      %3407 = vmatpush1.msra.mxu0 0.0
      %3408 = vmatprep.subr.mxu0 0.0
      %3409 = vmatpush1.msra.mxu0 0.0
      %3410 = vmatprep.subr.mxu0 0.0
      %3411 = vmatpush1.msra.mxu0 0.0
      %3412 = vmatprep.subr.mxu0 0.0
      %3413 = vmatpush1.msra.mxu0 0.0
      %3414 = vmatprep.subr.mxu0 0.0
      %3415 = vmatpush1.msra.mxu0 0.0
      %3416 = vmatprep.mubr.f32.mxu0 0.0
      %3417 = vmatmul.mubr.f32.gmra.mrb[0].mxu0 %v3350
      %v3418 = vpop.f32.mrb[0].mxu0
      %v3419 = vadd.f32 0.0, %v3418
      %v3420 = vpop.f32.mrb[0].mxu0
      %v3421 = vadd.f32 0.0, %v3420
      %3422 = vdwg.mxu0
      %3423 = vmatprep.subr.mxu0 %v3336
      %3424 = vmatpush1.msra.mxu0 %v3335
      %3425 = vmatprep.subr.mxu0 0.0
      %3426 = vmatpush1.msra.mxu0 0.0
      %3427 = vmatprep.subr.mxu0 0.0
      %3428 = vmatpush1.msra.mxu0 0.0
      %3429 = vmatprep.subr.mxu0 0.0
      %3430 = vmatpush1.msra.mxu0 0.0
      %3431 = vmatprep.subr.mxu0 0.0
      %3432 = vmatpush1.msra.mxu0 0.0
      %3433 = vmatprep.subr.mxu0 0.0
      %3434 = vmatpush1.msra.mxu0 0.0
      %3435 = vmatprep.subr.mxu0 0.0
      %3436 = vmatpush1.msra.mxu0 0.0
      %3437 = vmatprep.subr.mxu0 0.0
      %3438 = vmatpush1.msra.mxu0 0.0
      %3439 = vmatprep.subr.mxu0 0.0
      %3440 = vmatpush1.msra.mxu0 0.0
      %3441 = vmatprep.subr.mxu0 0.0
      %3442 = vmatpush1.msra.mxu0 0.0
      %3443 = vmatprep.subr.mxu0 0.0
      %3444 = vmatpush1.msra.mxu0 0.0
      %3445 = vmatprep.subr.mxu0 0.0
      %3446 = vmatpush1.msra.mxu0 0.0
      %3447 = vmatprep.subr.mxu0 0.0
      %3448 = vmatpush1.msra.mxu0 0.0
      %3449 = vmatprep.subr.mxu0 0.0
      %3450 = vmatpush1.msra.mxu0 0.0
      %3451 = vmatprep.subr.mxu0 0.0
      %3452 = vmatpush1.msra.mxu0 0.0
      %3453 = vmatprep.subr.mxu0 0.0
      %3454 = vmatpush1.msra.mxu0 0.0
      %3455 = vmatprep.subr.mxu0 0.0
      %3456 = vmatpush1.msra.mxu0 0.0
      %3457 = vmatprep.subr.mxu0 0.0
      %3458 = vmatpush1.msra.mxu0 0.0
      %3459 = vmatprep.subr.mxu0 0.0
      %3460 = vmatpush1.msra.mxu0 0.0
      %3461 = vmatprep.subr.mxu0 0.0
      %3462 = vmatpush1.msra.mxu0 0.0
      %3463 = vmatprep.subr.mxu0 0.0
      %3464 = vmatpush1.msra.mxu0 0.0
      %3465 = vmatprep.subr.mxu0 0.0
      %3466 = vmatpush1.msra.mxu0 0.0
      %3467 = vmatprep.subr.mxu0 0.0
      %3468 = vmatpush1.msra.mxu0 0.0
      %3469 = vmatprep.subr.mxu0 0.0
      %3470 = vmatpush1.msra.mxu0 0.0
      %3471 = vmatprep.subr.mxu0 0.0
      %3472 = vmatpush1.msra.mxu0 0.0
      %3473 = vmatprep.subr.mxu0 0.0
      %3474 = vmatpush1.msra.mxu0 0.0
      %3475 = vmatprep.subr.mxu0 0.0
      %3476 = vmatpush1.msra.mxu0 0.0
      %3477 = vmatprep.subr.mxu0 0.0
      %3478 = vmatpush1.msra.mxu0 0.0
      %3479 = vmatprep.subr.mxu0 0.0
      %3480 = vmatpush1.msra.mxu0 0.0
      %3481 = vmatprep.subr.mxu0 0.0
      %3482 = vmatpush1.msra.mxu0 0.0
      %3483 = vmatprep.subr.mxu0 0.0
      %3484 = vmatpush1.msra.mxu0 0.0
      %3485 = vmatprep.subr.mxu0 0.0
      %3486 = vmatpush1.msra.mxu0 0.0
      %3487 = vmatprep.mubr.f32.mxu0 0.0
      %3488 = vmatmul.mubr.f32.gmra.mrb[0].mxu0 %v3350
      %v3489 = vpop.f32.mrb[0].mxu0
      %v3490 = vadd.f32 0.0, %v3489
      %v3491 = vpop.f32.mrb[0].mxu0
      %v3492 = vadd.f32 0.0, %v3491
      %3493 = vdwg.mxu0
      %3494 = vmatprep.subr.mxu0 %v3338
      %3495 = vmatpush1.msra.mxu0 %v3337
      %3496 = vmatprep.subr.mxu0 0.0
      %3497 = vmatpush1.msra.mxu0 0.0
      %3498 = vmatprep.subr.mxu0 0.0
      %3499 = vmatpush1.msra.mxu0 0.0
      %3500 = vmatprep.subr.mxu0 0.0
      %3501 = vmatpush1.msra.mxu0 0.0
      %3502 = vmatprep.subr.mxu0 0.0
      %3503 = vmatpush1.msra.mxu0 0.0
      %3504 = vmatprep.subr.mxu0 0.0
      %3505 = vmatpush1.msra.mxu0 0.0
      %3506 = vmatprep.subr.mxu0 0.0
      %3507 = vmatpush1.msra.mxu0 0.0
      %3508 = vmatprep.subr.mxu0 0.0
      %3509 = vmatpush1.msra.mxu0 0.0
      %3510 = vmatprep.subr.mxu0 0.0
      %3511 = vmatpush1.msra.mxu0 0.0
      %3512 = vmatprep.subr.mxu0 0.0
      %3513 = vmatpush1.msra.mxu0 0.0
      %3514 = vmatprep.subr.mxu0 0.0
      %3515 = vmatpush1.msra.mxu0 0.0
      %3516 = vmatprep.subr.mxu0 0.0
      %3517 = vmatpush1.msra.mxu0 0.0
      %3518 = vmatprep.subr.mxu0 0.0
      %3519 = vmatpush1.msra.mxu0 0.0
      %3520 = vmatprep.subr.mxu0 0.0
      %3521 = vmatpush1.msra.mxu0 0.0
      %3522 = vmatprep.subr.mxu0 0.0
      %3523 = vmatpush1.msra.mxu0 0.0
      %3524 = vmatprep.subr.mxu0 0.0
      %3525 = vmatpush1.msra.mxu0 0.0
      %3526 = vmatprep.subr.mxu0 0.0
      %3527 = vmatpush1.msra.mxu0 0.0
      %3528 = vmatprep.subr.mxu0 0.0
      %3529 = vmatpush1.msra.mxu0 0.0
      %3530 = vmatprep.subr.mxu0 0.0
      %3531 = vmatpush1.msra.mxu0 0.0
      %3532 = vmatprep.subr.mxu0 0.0
      %3533 = vmatpush1.msra.mxu0 0.0
      %3534 = vmatprep.subr.mxu0 0.0
      %3535 = vmatpush1.msra.mxu0 0.0
      %3536 = vmatprep.subr.mxu0 0.0
      %3537 = vmatpush1.msra.mxu0 0.0
      %3538 = vmatprep.subr.mxu0 0.0
      %3539 = vmatpush1.msra.mxu0 0.0
      %3540 = vmatprep.subr.mxu0 0.0
      %3541 = vmatpush1.msra.mxu0 0.0
      %3542 = vmatprep.subr.mxu0 0.0
      %3543 = vmatpush1.msra.mxu0 0.0
      %3544 = vmatprep.subr.mxu0 0.0
      %3545 = vmatpush1.msra.mxu0 0.0
      %3546 = vmatprep.subr.mxu0 0.0
      %3547 = vmatpush1.msra.mxu0 0.0
      %3548 = vmatprep.subr.mxu0 0.0
      %3549 = vmatpush1.msra.mxu0 0.0
      %3550 = vmatprep.subr.mxu0 0.0
      %3551 = vmatpush1.msra.mxu0 0.0
      %3552 = vmatprep.subr.mxu0 0.0
      %3553 = vmatpush1.msra.mxu0 0.0
      %3554 = vmatprep.subr.mxu0 0.0
      %3555 = vmatpush1.msra.mxu0 0.0
      %3556 = vmatprep.subr.mxu0 0.0
      %3557 = vmatpush1.msra.mxu0 0.0
      %3558 = vmatprep.mubr.f32.mxu0 0.0
      %3559 = vmatmul.mubr.f32.gmra.mrb[0].mxu0 %v3350
      %v3560 = vpop.f32.mrb[0].mxu0
      %v3561 = vadd.f32 0.0, %v3560
      %v3562 = vpop.f32.mrb[0].mxu0
      %v3563 = vadd.f32 0.0, %v3562
      %3564 = vdwg.mxu0
      %3565 = vmatprep.subr.mxu0 %v3340
      %3566 = vmatpush1.msra.mxu0 %v3339
      %3567 = vmatprep.subr.mxu0 0.0
      %3568 = vmatpush1.msra.mxu0 0.0
      %3569 = vmatprep.subr.mxu0 0.0
      %3570 = vmatpush1.msra.mxu0 0.0
      %3571 = vmatprep.subr.mxu0 0.0
      %3572 = vmatpush1.msra.mxu0 0.0
      %3573 = vmatprep.subr.mxu0 0.0
      %3574 = vmatpush1.msra.mxu0 0.0
      %3575 = vmatprep.subr.mxu0 0.0
      %3576 = vmatpush1.msra.mxu0 0.0
      %3577 = vmatprep.subr.mxu0 0.0
      %3578 = vmatpush1.msra.mxu0 0.0
      %3579 = vmatprep.subr.mxu0 0.0
      %3580 = vmatpush1.msra.mxu0 0.0
      %3581 = vmatprep.subr.mxu0 0.0
      %3582 = vmatpush1.msra.mxu0 0.0
      %3583 = vmatprep.subr.mxu0 0.0
      %3584 = vmatpush1.msra.mxu0 0.0
      %3585 = vmatprep.subr.mxu0 0.0
      %3586 = vmatpush1.msra.mxu0 0.0
      %3587 = vmatprep.subr.mxu0 0.0
      %3588 = vmatpush1.msra.mxu0 0.0
      %3589 = vmatprep.subr.mxu0 0.0
      %3590 = vmatpush1.msra.mxu0 0.0
      %3591 = vmatprep.subr.mxu0 0.0
      %3592 = vmatpush1.msra.mxu0 0.0
      %3593 = vmatprep.subr.mxu0 0.0
      %3594 = vmatpush1.msra.mxu0 0.0
      %3595 = vmatprep.subr.mxu0 0.0
      %3596 = vmatpush1.msra.mxu0 0.0
      %3597 = vmatprep.subr.mxu0 0.0
      %3598 = vmatpush1.msra.mxu0 0.0
      %3599 = vmatprep.subr.mxu0 0.0
      %3600 = vmatpush1.msra.mxu0 0.0
      %3601 = vmatprep.subr.mxu0 0.0
      %3602 = vmatpush1.msra.mxu0 0.0
      %3603 = vmatprep.subr.mxu0 0.0
      %3604 = vmatpush1.msra.mxu0 0.0
      %3605 = vmatprep.subr.mxu0 0.0
      %3606 = vmatpush1.msra.mxu0 0.0
      %3607 = vmatprep.subr.mxu0 0.0
      %3608 = vmatpush1.msra.mxu0 0.0
      %3609 = vmatprep.subr.mxu0 0.0
      %3610 = vmatpush1.msra.mxu0 0.0
      %3611 = vmatprep.subr.mxu0 0.0
      %3612 = vmatpush1.msra.mxu0 0.0
      %3613 = vmatprep.subr.mxu0 0.0
      %3614 = vmatpush1.msra.mxu0 0.0
      %3615 = vmatprep.subr.mxu0 0.0
      %3616 = vmatpush1.msra.mxu0 0.0
      %3617 = vmatprep.subr.mxu0 0.0
      %3618 = vmatpush1.msra.mxu0 0.0
      %3619 = vmatprep.subr.mxu0 0.0
      %3620 = vmatpush1.msra.mxu0 0.0
      %3621 = vmatprep.subr.mxu0 0.0
      %3622 = vmatpush1.msra.mxu0 0.0
      %3623 = vmatprep.subr.mxu0 0.0
      %3624 = vmatpush1.msra.mxu0 0.0
      %3625 = vmatprep.subr.mxu0 0.0
      %3626 = vmatpush1.msra.mxu0 0.0
      %3627 = vmatprep.subr.mxu0 0.0
      %3628 = vmatpush1.msra.mxu0 0.0
      %3629 = vmatprep.mubr.f32.mxu0 0.0
      %3630 = vmatmul.mubr.f32.gmra.mrb[0].mxu0 %v3350
      %v3631 = vpop.f32.mrb[0].mxu0
      %v3632 = vadd.f32 0.0, %v3631
      %v3633 = vpop.f32.mrb[0].mxu0
      %v3634 = vadd.f32 0.0, %v3633
      %3635 = vdwg.mxu0
      %v3636 = vadd.f32 %v3304, %v3419
      %v3637 = vadd.f32 %v3305, %v3421
      %v3638 = vadd.f32 %v3306, %v3490
      %v3639 = vadd.f32 %v3307, %v3492
      %v3640 = vadd.f32 %v3308, %v3561
      %v3641 = vadd.f32 %v3309, %v3563
      %v3642 = vadd.f32 %v3310, %v3632
      %v3643 = vadd.f32 %v3311, %v3634
      %s3644 = scalar_lea.vmem %s2, 80
      %v3645 = vld [vmem:[%s3644] sm:$0xff]
      %3646 = vrot.lane.b32.xlu0 %v640, 27
      %v3647 = vpop.permute.xlu0 %3646
      %3648 = vrot.lane.b32.xlu0 %v641, 27
      %v3649 = vpop.permute.xlu0 %3648
      %3650 = vrot.lane.b32.xlu0 %v642, 27
      %v3651 = vpop.permute.xlu0 %3650
      %3652 = vrot.lane.b32.xlu0 %v643, 27
      %v3653 = vpop.permute.xlu0 %3652
      %3654 = vrot.lane.b32.xlu0 %v644, 27
      %v3655 = vpop.permute.xlu0 %3654
      %3656 = vrot.lane.b32.xlu0 %v645, 27
      %v3657 = vpop.permute.xlu0 %3656
      %3658 = vrot.lane.b32.xlu0 %v646, 27
      %v3659 = vpop.permute.xlu0 %3658
      %3660 = vrot.lane.b32.xlu0 %v647, 27
      %v3661 = vpop.permute.xlu0 %3660
      %3662 = vrot.lane.b32.xlu0 %v648, 27
      %v3663 = vpop.permute.xlu0 %3662
      %vm3664 = vcmask 220160
      %v3665 = vsel %vm3664, %v3647, %v3649
      %v3666 = vsel %vm3664, %v3649, %v3651
      %v3667 = vsel %vm3664, %v3651, %v3653
      %v3668 = vsel %vm3664, %v3653, %v3655
      %v3669 = vsel %vm3664, %v3655, %v3657
      %v3670 = vsel %vm3664, %v3657, %v3659
      %v3671 = vsel %vm3664, %v3659, %v3661
      %v3672 = vsel %vm3664, %v3661, %v3663
      %v3682 = vsel %vm337, %v3645, 0
      %3684 = vmatprep.subr.mxu0 %v3666
      %3685 = vmatpush1.msra.mxu0 %v3665
      %3686 = vmatprep.subr.mxu0 0.0
      %3687 = vmatpush1.msra.mxu0 0.0
      %3688 = vmatprep.subr.mxu0 0.0
      %3689 = vmatpush1.msra.mxu0 0.0
      %3690 = vmatprep.subr.mxu0 0.0
      %3691 = vmatpush1.msra.mxu0 0.0
      %3692 = vmatprep.subr.mxu0 0.0
      %3693 = vmatpush1.msra.mxu0 0.0
      %3694 = vmatprep.subr.mxu0 0.0
      %3695 = vmatpush1.msra.mxu0 0.0
      %3696 = vmatprep.subr.mxu0 0.0
      %3697 = vmatpush1.msra.mxu0 0.0
      %3698 = vmatprep.subr.mxu0 0.0
      %3699 = vmatpush1.msra.mxu0 0.0
      %3700 = vmatprep.subr.mxu0 0.0
      %3701 = vmatpush1.msra.mxu0 0.0
      %3702 = vmatprep.subr.mxu0 0.0
      %3703 = vmatpush1.msra.mxu0 0.0
      %3704 = vmatprep.subr.mxu0 0.0
      %3705 = vmatpush1.msra.mxu0 0.0
      %3706 = vmatprep.subr.mxu0 0.0
      %3707 = vmatpush1.msra.mxu0 0.0
      %3708 = vmatprep.subr.mxu0 0.0
      %3709 = vmatpush1.msra.mxu0 0.0
      %3710 = vmatprep.subr.mxu0 0.0
      %3711 = vmatpush1.msra.mxu0 0.0
      %3712 = vmatprep.subr.mxu0 0.0
      %3713 = vmatpush1.msra.mxu0 0.0
      %3714 = vmatprep.subr.mxu0 0.0
      %3715 = vmatpush1.msra.mxu0 0.0
      %3716 = vmatprep.subr.mxu0 0.0
      %3717 = vmatpush1.msra.mxu0 0.0
      %3718 = vmatprep.subr.mxu0 0.0
      %3719 = vmatpush1.msra.mxu0 0.0
      %3720 = vmatprep.subr.mxu0 0.0
      %3721 = vmatpush1.msra.mxu0 0.0
      %3722 = vmatprep.subr.mxu0 0.0
      %3723 = vmatpush1.msra.mxu0 0.0
      %3724 = vmatprep.subr.mxu0 0.0
      %3725 = vmatpush1.msra.mxu0 0.0
      %3726 = vmatprep.subr.mxu0 0.0
      %3727 = vmatpush1.msra.mxu0 0.0
      %3728 = vmatprep.subr.mxu0 0.0
      %3729 = vmatpush1.msra.mxu0 0.0
      %3730 = vmatprep.subr.mxu0 0.0
      %3731 = vmatpush1.msra.mxu0 0.0
      %3732 = vmatprep.subr.mxu0 0.0
      %3733 = vmatpush1.msra.mxu0 0.0
      %3734 = vmatprep.subr.mxu0 0.0
      %3735 = vmatpush1.msra.mxu0 0.0
      %3736 = vmatprep.subr.mxu0 0.0
      %3737 = vmatpush1.msra.mxu0 0.0
      %3738 = vmatprep.subr.mxu0 0.0
      %3739 = vmatpush1.msra.mxu0 0.0
      %3740 = vmatprep.subr.mxu0 0.0
      %3741 = vmatpush1.msra.mxu0 0.0
      %3742 = vmatprep.subr.mxu0 0.0
      %3743 = vmatpush1.msra.mxu0 0.0
      %3744 = vmatprep.subr.mxu0 0.0
      %3745 = vmatpush1.msra.mxu0 0.0
      %3746 = vmatprep.subr.mxu0 0.0
      %3747 = vmatpush1.msra.mxu0 0.0
      %3748 = vmatprep.mubr.f32.mxu0 0.0
      %3749 = vmatmul.mubr.f32.gmra.mrb[0].mxu0 %v3682
      %v3750 = vpop.f32.mrb[0].mxu0
      %v3751 = vadd.f32 0.0, %v3750
      %v3752 = vpop.f32.mrb[0].mxu0
      %v3753 = vadd.f32 0.0, %v3752
      %3754 = vdwg.mxu0
      %3755 = vmatprep.subr.mxu0 %v3668
      %3756 = vmatpush1.msra.mxu0 %v3667
      %3757 = vmatprep.subr.mxu0 0.0
      %3758 = vmatpush1.msra.mxu0 0.0
      %3759 = vmatprep.subr.mxu0 0.0
      %3760 = vmatpush1.msra.mxu0 0.0
      %3761 = vmatprep.subr.mxu0 0.0
      %3762 = vmatpush1.msra.mxu0 0.0
      %3763 = vmatprep.subr.mxu0 0.0
      %3764 = vmatpush1.msra.mxu0 0.0
      %3765 = vmatprep.subr.mxu0 0.0
      %3766 = vmatpush1.msra.mxu0 0.0
      %3767 = vmatprep.subr.mxu0 0.0
      %3768 = vmatpush1.msra.mxu0 0.0
      %3769 = vmatprep.subr.mxu0 0.0
      %3770 = vmatpush1.msra.mxu0 0.0
      %3771 = vmatprep.subr.mxu0 0.0
      %3772 = vmatpush1.msra.mxu0 0.0
      %3773 = vmatprep.subr.mxu0 0.0
      %3774 = vmatpush1.msra.mxu0 0.0
      %3775 = vmatprep.subr.mxu0 0.0
      %3776 = vmatpush1.msra.mxu0 0.0
      %3777 = vmatprep.subr.mxu0 0.0
      %3778 = vmatpush1.msra.mxu0 0.0
      %3779 = vmatprep.subr.mxu0 0.0
      %3780 = vmatpush1.msra.mxu0 0.0
      %3781 = vmatprep.subr.mxu0 0.0
      %3782 = vmatpush1.msra.mxu0 0.0
      %3783 = vmatprep.subr.mxu0 0.0
      %3784 = vmatpush1.msra.mxu0 0.0
      %3785 = vmatprep.subr.mxu0 0.0
      %3786 = vmatpush1.msra.mxu0 0.0
      %3787 = vmatprep.subr.mxu0 0.0
      %3788 = vmatpush1.msra.mxu0 0.0
      %3789 = vmatprep.subr.mxu0 0.0
      %3790 = vmatpush1.msra.mxu0 0.0
      %3791 = vmatprep.subr.mxu0 0.0
      %3792 = vmatpush1.msra.mxu0 0.0
      %3793 = vmatprep.subr.mxu0 0.0
      %3794 = vmatpush1.msra.mxu0 0.0
      %3795 = vmatprep.subr.mxu0 0.0
      %3796 = vmatpush1.msra.mxu0 0.0
      %3797 = vmatprep.subr.mxu0 0.0
      %3798 = vmatpush1.msra.mxu0 0.0
      %3799 = vmatprep.subr.mxu0 0.0
      %3800 = vmatpush1.msra.mxu0 0.0
      %3801 = vmatprep.subr.mxu0 0.0
      %3802 = vmatpush1.msra.mxu0 0.0
      %3803 = vmatprep.subr.mxu0 0.0
      %3804 = vmatpush1.msra.mxu0 0.0
      %3805 = vmatprep.subr.mxu0 0.0
      %3806 = vmatpush1.msra.mxu0 0.0
      %3807 = vmatprep.subr.mxu0 0.0
      %3808 = vmatpush1.msra.mxu0 0.0
      %3809 = vmatprep.subr.mxu0 0.0
      %3810 = vmatpush1.msra.mxu0 0.0
      %3811 = vmatprep.subr.mxu0 0.0
      %3812 = vmatpush1.msra.mxu0 0.0
      %3813 = vmatprep.subr.mxu0 0.0
      %3814 = vmatpush1.msra.mxu0 0.0
      %3815 = vmatprep.subr.mxu0 0.0
      %3816 = vmatpush1.msra.mxu0 0.0
      %3817 = vmatprep.subr.mxu0 0.0
      %3818 = vmatpush1.msra.mxu0 0.0
      %3819 = vmatprep.mubr.f32.mxu0 0.0
      %3820 = vmatmul.mubr.f32.gmra.mrb[0].mxu0 %v3682
      %v3821 = vpop.f32.mrb[0].mxu0
      %v3822 = vadd.f32 0.0, %v3821
      %v3823 = vpop.f32.mrb[0].mxu0
      %v3824 = vadd.f32 0.0, %v3823
      %3825 = vdwg.mxu0
      %3826 = vmatprep.subr.mxu0 %v3670
      %3827 = vmatpush1.msra.mxu0 %v3669
      %3828 = vmatprep.subr.mxu0 0.0
      %3829 = vmatpush1.msra.mxu0 0.0
      %3830 = vmatprep.subr.mxu0 0.0
      %3831 = vmatpush1.msra.mxu0 0.0
      %3832 = vmatprep.subr.mxu0 0.0
      %3833 = vmatpush1.msra.mxu0 0.0
      %3834 = vmatprep.subr.mxu0 0.0
      %3835 = vmatpush1.msra.mxu0 0.0
      %3836 = vmatprep.subr.mxu0 0.0
      %3837 = vmatpush1.msra.mxu0 0.0
      %3838 = vmatprep.subr.mxu0 0.0
      %3839 = vmatpush1.msra.mxu0 0.0
      %3840 = vmatprep.subr.mxu0 0.0
      %3841 = vmatpush1.msra.mxu0 0.0
      %3842 = vmatprep.subr.mxu0 0.0
      %3843 = vmatpush1.msra.mxu0 0.0
      %3844 = vmatprep.subr.mxu0 0.0
      %3845 = vmatpush1.msra.mxu0 0.0
      %3846 = vmatprep.subr.mxu0 0.0
      %3847 = vmatpush1.msra.mxu0 0.0
      %3848 = vmatprep.subr.mxu0 0.0
      %3849 = vmatpush1.msra.mxu0 0.0
      %3850 = vmatprep.subr.mxu0 0.0
      %3851 = vmatpush1.msra.mxu0 0.0
      %3852 = vmatprep.subr.mxu0 0.0
      %3853 = vmatpush1.msra.mxu0 0.0
      %3854 = vmatprep.subr.mxu0 0.0
      %3855 = vmatpush1.msra.mxu0 0.0
      %3856 = vmatprep.subr.mxu0 0.0
      %3857 = vmatpush1.msra.mxu0 0.0
      %3858 = vmatprep.subr.mxu0 0.0
      %3859 = vmatpush1.msra.mxu0 0.0
      %3860 = vmatprep.subr.mxu0 0.0
      %3861 = vmatpush1.msra.mxu0 0.0
      %3862 = vmatprep.subr.mxu0 0.0
      %3863 = vmatpush1.msra.mxu0 0.0
      %3864 = vmatprep.subr.mxu0 0.0
      %3865 = vmatpush1.msra.mxu0 0.0
      %3866 = vmatprep.subr.mxu0 0.0
      %3867 = vmatpush1.msra.mxu0 0.0
      %3868 = vmatprep.subr.mxu0 0.0
      %3869 = vmatpush1.msra.mxu0 0.0
      %3870 = vmatprep.subr.mxu0 0.0
      %3871 = vmatpush1.msra.mxu0 0.0
      %3872 = vmatprep.subr.mxu0 0.0
      %3873 = vmatpush1.msra.mxu0 0.0
      %3874 = vmatprep.subr.mxu0 0.0
      %3875 = vmatpush1.msra.mxu0 0.0
      %3876 = vmatprep.subr.mxu0 0.0
      %3877 = vmatpush1.msra.mxu0 0.0
      %3878 = vmatprep.subr.mxu0 0.0
      %3879 = vmatpush1.msra.mxu0 0.0
      %3880 = vmatprep.subr.mxu0 0.0
      %3881 = vmatpush1.msra.mxu0 0.0
      %3882 = vmatprep.subr.mxu0 0.0
      %3883 = vmatpush1.msra.mxu0 0.0
      %3884 = vmatprep.subr.mxu0 0.0
      %3885 = vmatpush1.msra.mxu0 0.0
      %3886 = vmatprep.subr.mxu0 0.0
      %3887 = vmatpush1.msra.mxu0 0.0
      %3888 = vmatprep.subr.mxu0 0.0
      %3889 = vmatpush1.msra.mxu0 0.0
      %3890 = vmatprep.mubr.f32.mxu0 0.0
      %3891 = vmatmul.mubr.f32.gmra.mrb[0].mxu0 %v3682
      %v3892 = vpop.f32.mrb[0].mxu0
      %v3893 = vadd.f32 0.0, %v3892
      %v3894 = vpop.f32.mrb[0].mxu0
      %v3895 = vadd.f32 0.0, %v3894
      %3896 = vdwg.mxu0
      %3897 = vmatprep.subr.mxu0 %v3672
      %3898 = vmatpush1.msra.mxu0 %v3671
      %3899 = vmatprep.subr.mxu0 0.0
      %3900 = vmatpush1.msra.mxu0 0.0
      %3901 = vmatprep.subr.mxu0 0.0
      %3902 = vmatpush1.msra.mxu0 0.0
      %3903 = vmatprep.subr.mxu0 0.0
      %3904 = vmatpush1.msra.mxu0 0.0
      %3905 = vmatprep.subr.mxu0 0.0
      %3906 = vmatpush1.msra.mxu0 0.0
      %3907 = vmatprep.subr.mxu0 0.0
      %3908 = vmatpush1.msra.mxu0 0.0
      %3909 = vmatprep.subr.mxu0 0.0
      %3910 = vmatpush1.msra.mxu0 0.0
      %3911 = vmatprep.subr.mxu0 0.0
      %3912 = vmatpush1.msra.mxu0 0.0
      %3913 = vmatprep.subr.mxu0 0.0
      %3914 = vmatpush1.msra.mxu0 0.0
      %3915 = vmatprep.subr.mxu0 0.0
      %3916 = vmatpush1.msra.mxu0 0.0
      %3917 = vmatprep.subr.mxu0 0.0
      %3918 = vmatpush1.msra.mxu0 0.0
      %3919 = vmatprep.subr.mxu0 0.0
      %3920 = vmatpush1.msra.mxu0 0.0
      %3921 = vmatprep.subr.mxu0 0.0
      %3922 = vmatpush1.msra.mxu0 0.0
      %3923 = vmatprep.subr.mxu0 0.0
      %3924 = vmatpush1.msra.mxu0 0.0
      %3925 = vmatprep.subr.mxu0 0.0
      %3926 = vmatpush1.msra.mxu0 0.0
      %3927 = vmatprep.subr.mxu0 0.0
      %3928 = vmatpush1.msra.mxu0 0.0
      %3929 = vmatprep.subr.mxu0 0.0
      %3930 = vmatpush1.msra.mxu0 0.0
      %3931 = vmatprep.subr.mxu0 0.0
      %3932 = vmatpush1.msra.mxu0 0.0
      %3933 = vmatprep.subr.mxu0 0.0
      %3934 = vmatpush1.msra.mxu0 0.0
      %3935 = vmatprep.subr.mxu0 0.0
      %3936 = vmatpush1.msra.mxu0 0.0
      %3937 = vmatprep.subr.mxu0 0.0
      %3938 = vmatpush1.msra.mxu0 0.0
      %3939 = vmatprep.subr.mxu0 0.0
      %3940 = vmatpush1.msra.mxu0 0.0
      %3941 = vmatprep.subr.mxu0 0.0
      %3942 = vmatpush1.msra.mxu0 0.0
      %3943 = vmatprep.subr.mxu0 0.0
      %3944 = vmatpush1.msra.mxu0 0.0
      %3945 = vmatprep.subr.mxu0 0.0
      %3946 = vmatpush1.msra.mxu0 0.0
      %3947 = vmatprep.subr.mxu0 0.0
      %3948 = vmatpush1.msra.mxu0 0.0
      %3949 = vmatprep.subr.mxu0 0.0
      %3950 = vmatpush1.msra.mxu0 0.0
      %3951 = vmatprep.subr.mxu0 0.0
      %3952 = vmatpush1.msra.mxu0 0.0
      %3953 = vmatprep.subr.mxu0 0.0
      %3954 = vmatpush1.msra.mxu0 0.0
      %3955 = vmatprep.subr.mxu0 0.0
      %3956 = vmatpush1.msra.mxu0 0.0
      %3957 = vmatprep.subr.mxu0 0.0
      %3958 = vmatpush1.msra.mxu0 0.0
      %3959 = vmatprep.subr.mxu0 0.0
      %3960 = vmatpush1.msra.mxu0 0.0
      %3961 = vmatprep.mubr.f32.mxu0 0.0
      %3962 = vmatmul.mubr.f32.gmra.mrb[0].mxu0 %v3682
      %v3963 = vpop.f32.mrb[0].mxu0
      %v3964 = vadd.f32 0.0, %v3963
      %v3965 = vpop.f32.mrb[0].mxu0
      %v3966 = vadd.f32 0.0, %v3965
      %3967 = vdwg.mxu0
      %v3968 = vadd.f32 %v3636, %v3751
      %v3969 = vadd.f32 %v3637, %v3753
      %v3970 = vadd.f32 %v3638, %v3822
      %v3971 = vadd.f32 %v3639, %v3824
      %v3972 = vadd.f32 %v3640, %v3893
      %v3973 = vadd.f32 %v3641, %v3895
      %v3974 = vadd.f32 %v3642, %v3964
      %v3975 = vadd.f32 %v3643, %v3966
      %s3976 = scalar_lea.vmem %s2, 88
      %v3977 = vld [vmem:[%s3976] sm:$0xff]
      %3978 = vrot.lane.b32.xlu0 %v640, 26
      %v3979 = vpop.permute.xlu0 %3978
      %3980 = vrot.lane.b32.xlu0 %v641, 26
      %v3981 = vpop.permute.xlu0 %3980
      %3982 = vrot.lane.b32.xlu0 %v642, 26
      %v3983 = vpop.permute.xlu0 %3982
      %3984 = vrot.lane.b32.xlu0 %v643, 26
      %v3985 = vpop.permute.xlu0 %3984
      %3986 = vrot.lane.b32.xlu0 %v644, 26
      %v3987 = vpop.permute.xlu0 %3986
      %3988 = vrot.lane.b32.xlu0 %v645, 26
      %v3989 = vpop.permute.xlu0 %3988
      %3990 = vrot.lane.b32.xlu0 %v646, 26
      %v3991 = vpop.permute.xlu0 %3990
      %3992 = vrot.lane.b32.xlu0 %v647, 26
      %v3993 = vpop.permute.xlu0 %3992
      %3994 = vrot.lane.b32.xlu0 %v648, 26
      %v3995 = vpop.permute.xlu0 %3994
      %vm3996 = vcmask 211968
      %v3997 = vsel %vm3996, %v3979, %v3981
      %v3998 = vsel %vm3996, %v3981, %v3983
      %v3999 = vsel %vm3996, %v3983, %v3985
      %v4000 = vsel %vm3996, %v3985, %v3987
      %v4001 = vsel %vm3996, %v3987, %v3989
      %v4002 = vsel %vm3996, %v3989, %v3991
      %v4003 = vsel %vm3996, %v3991, %v3993
      %v4004 = vsel %vm3996, %v3993, %v3995
      %v4014 = vsel %vm337, %v3977, 0
      %4016 = vmatprep.subr.mxu0 %v3998
      %4017 = vmatpush1.msra.mxu0 %v3997
      %4018 = vmatprep.subr.mxu0 0.0
      %4019 = vmatpush1.msra.mxu0 0.0
      %4020 = vmatprep.subr.mxu0 0.0
      %4021 = vmatpush1.msra.mxu0 0.0
      %4022 = vmatprep.subr.mxu0 0.0
      %4023 = vmatpush1.msra.mxu0 0.0
      %4024 = vmatprep.subr.mxu0 0.0
      %4025 = vmatpush1.msra.mxu0 0.0
      %4026 = vmatprep.subr.mxu0 0.0
      %4027 = vmatpush1.msra.mxu0 0.0
      %4028 = vmatprep.subr.mxu0 0.0
      %4029 = vmatpush1.msra.mxu0 0.0
      %4030 = vmatprep.subr.mxu0 0.0
      %4031 = vmatpush1.msra.mxu0 0.0
      %4032 = vmatprep.subr.mxu0 0.0
      %4033 = vmatpush1.msra.mxu0 0.0
      %4034 = vmatprep.subr.mxu0 0.0
      %4035 = vmatpush1.msra.mxu0 0.0
      %4036 = vmatprep.subr.mxu0 0.0
      %4037 = vmatpush1.msra.mxu0 0.0
      %4038 = vmatprep.subr.mxu0 0.0
      %4039 = vmatpush1.msra.mxu0 0.0
      %4040 = vmatprep.subr.mxu0 0.0
      %4041 = vmatpush1.msra.mxu0 0.0
      %4042 = vmatprep.subr.mxu0 0.0
      %4043 = vmatpush1.msra.mxu0 0.0
      %4044 = vmatprep.subr.mxu0 0.0
      %4045 = vmatpush1.msra.mxu0 0.0
      %4046 = vmatprep.subr.mxu0 0.0
      %4047 = vmatpush1.msra.mxu0 0.0
      %4048 = vmatprep.subr.mxu0 0.0
      %4049 = vmatpush1.msra.mxu0 0.0
      %4050 = vmatprep.subr.mxu0 0.0
      %4051 = vmatpush1.msra.mxu0 0.0
      %4052 = vmatprep.subr.mxu0 0.0
      %4053 = vmatpush1.msra.mxu0 0.0
      %4054 = vmatprep.subr.mxu0 0.0
      %4055 = vmatpush1.msra.mxu0 0.0
      %4056 = vmatprep.subr.mxu0 0.0
      %4057 = vmatpush1.msra.mxu0 0.0
      %4058 = vmatprep.subr.mxu0 0.0
      %4059 = vmatpush1.msra.mxu0 0.0
      %4060 = vmatprep.subr.mxu0 0.0
      %4061 = vmatpush1.msra.mxu0 0.0
      %4062 = vmatprep.subr.mxu0 0.0
      %4063 = vmatpush1.msra.mxu0 0.0
      %4064 = vmatprep.subr.mxu0 0.0
      %4065 = vmatpush1.msra.mxu0 0.0
      %4066 = vmatprep.subr.mxu0 0.0
      %4067 = vmatpush1.msra.mxu0 0.0
      %4068 = vmatprep.subr.mxu0 0.0
      %4069 = vmatpush1.msra.mxu0 0.0
      %4070 = vmatprep.subr.mxu0 0.0
      %4071 = vmatpush1.msra.mxu0 0.0
      %4072 = vmatprep.subr.mxu0 0.0
      %4073 = vmatpush1.msra.mxu0 0.0
      %4074 = vmatprep.subr.mxu0 0.0
      %4075 = vmatpush1.msra.mxu0 0.0
      %4076 = vmatprep.subr.mxu0 0.0
      %4077 = vmatpush1.msra.mxu0 0.0
      %4078 = vmatprep.subr.mxu0 0.0
      %4079 = vmatpush1.msra.mxu0 0.0
      %4080 = vmatprep.mubr.f32.mxu0 0.0
      %4081 = vmatmul.mubr.f32.gmra.mrb[0].mxu0 %v4014
      %v4082 = vpop.f32.mrb[0].mxu0
      %v4083 = vadd.f32 0.0, %v4082
      %v4084 = vpop.f32.mrb[0].mxu0
      %v4085 = vadd.f32 0.0, %v4084
      %4086 = vdwg.mxu0
      %4087 = vmatprep.subr.mxu0 %v4000
      %4088 = vmatpush1.msra.mxu0 %v3999
      %4089 = vmatprep.subr.mxu0 0.0
      %4090 = vmatpush1.msra.mxu0 0.0
      %4091 = vmatprep.subr.mxu0 0.0
      %4092 = vmatpush1.msra.mxu0 0.0
      %4093 = vmatprep.subr.mxu0 0.0
      %4094 = vmatpush1.msra.mxu0 0.0
      %4095 = vmatprep.subr.mxu0 0.0
      %4096 = vmatpush1.msra.mxu0 0.0
      %4097 = vmatprep.subr.mxu0 0.0
      %4098 = vmatpush1.msra.mxu0 0.0
      %4099 = vmatprep.subr.mxu0 0.0
      %4100 = vmatpush1.msra.mxu0 0.0
      %4101 = vmatprep.subr.mxu0 0.0
      %4102 = vmatpush1.msra.mxu0 0.0
      %4103 = vmatprep.subr.mxu0 0.0
      %4104 = vmatpush1.msra.mxu0 0.0
      %4105 = vmatprep.subr.mxu0 0.0
      %4106 = vmatpush1.msra.mxu0 0.0
      %4107 = vmatprep.subr.mxu0 0.0
      %4108 = vmatpush1.msra.mxu0 0.0
      %4109 = vmatprep.subr.mxu0 0.0
      %4110 = vmatpush1.msra.mxu0 0.0
      %4111 = vmatprep.subr.mxu0 0.0
      %4112 = vmatpush1.msra.mxu0 0.0
      %4113 = vmatprep.subr.mxu0 0.0
      %4114 = vmatpush1.msra.mxu0 0.0
      %4115 = vmatprep.subr.mxu0 0.0
      %4116 = vmatpush1.msra.mxu0 0.0
      %4117 = vmatprep.subr.mxu0 0.0
      %4118 = vmatpush1.msra.mxu0 0.0
      %4119 = vmatprep.subr.mxu0 0.0
      %4120 = vmatpush1.msra.mxu0 0.0
      %4121 = vmatprep.subr.mxu0 0.0
      %4122 = vmatpush1.msra.mxu0 0.0
      %4123 = vmatprep.subr.mxu0 0.0
      %4124 = vmatpush1.msra.mxu0 0.0
      %4125 = vmatprep.subr.mxu0 0.0
      %4126 = vmatpush1.msra.mxu0 0.0
      %4127 = vmatprep.subr.mxu0 0.0
      %4128 = vmatpush1.msra.mxu0 0.0
      %4129 = vmatprep.subr.mxu0 0.0
      %4130 = vmatpush1.msra.mxu0 0.0
      %4131 = vmatprep.subr.mxu0 0.0
      %4132 = vmatpush1.msra.mxu0 0.0
      %4133 = vmatprep.subr.mxu0 0.0
      %4134 = vmatpush1.msra.mxu0 0.0
      %4135 = vmatprep.subr.mxu0 0.0
      %4136 = vmatpush1.msra.mxu0 0.0
      %4137 = vmatprep.subr.mxu0 0.0
      %4138 = vmatpush1.msra.mxu0 0.0
      %4139 = vmatprep.subr.mxu0 0.0
      %4140 = vmatpush1.msra.mxu0 0.0
      %4141 = vmatprep.subr.mxu0 0.0
      %4142 = vmatpush1.msra.mxu0 0.0
      %4143 = vmatprep.subr.mxu0 0.0
      %4144 = vmatpush1.msra.mxu0 0.0
      %4145 = vmatprep.subr.mxu0 0.0
      %4146 = vmatpush1.msra.mxu0 0.0
      %4147 = vmatprep.subr.mxu0 0.0
      %4148 = vmatpush1.msra.mxu0 0.0
      %4149 = vmatprep.subr.mxu0 0.0
      %4150 = vmatpush1.msra.mxu0 0.0
      %4151 = vmatprep.mubr.f32.mxu0 0.0
      %4152 = vmatmul.mubr.f32.gmra.mrb[0].mxu0 %v4014
      %v4153 = vpop.f32.mrb[0].mxu0
      %v4154 = vadd.f32 0.0, %v4153
      %v4155 = vpop.f32.mrb[0].mxu0
      %v4156 = vadd.f32 0.0, %v4155
      %4157 = vdwg.mxu0
      %4158 = vmatprep.subr.mxu0 %v4002
      %4159 = vmatpush1.msra.mxu0 %v4001
      %4160 = vmatprep.subr.mxu0 0.0
      %4161 = vmatpush1.msra.mxu0 0.0
      %4162 = vmatprep.subr.mxu0 0.0
      %4163 = vmatpush1.msra.mxu0 0.0
      %4164 = vmatprep.subr.mxu0 0.0
      %4165 = vmatpush1.msra.mxu0 0.0
      %4166 = vmatprep.subr.mxu0 0.0
      %4167 = vmatpush1.msra.mxu0 0.0
      %4168 = vmatprep.subr.mxu0 0.0
      %4169 = vmatpush1.msra.mxu0 0.0
      %4170 = vmatprep.subr.mxu0 0.0
      %4171 = vmatpush1.msra.mxu0 0.0
      %4172 = vmatprep.subr.mxu0 0.0
      %4173 = vmatpush1.msra.mxu0 0.0
      %4174 = vmatprep.subr.mxu0 0.0
      %4175 = vmatpush1.msra.mxu0 0.0
      %4176 = vmatprep.subr.mxu0 0.0
      %4177 = vmatpush1.msra.mxu0 0.0
      %4178 = vmatprep.subr.mxu0 0.0
      %4179 = vmatpush1.msra.mxu0 0.0
      %4180 = vmatprep.subr.mxu0 0.0
      %4181 = vmatpush1.msra.mxu0 0.0
      %4182 = vmatprep.subr.mxu0 0.0
      %4183 = vmatpush1.msra.mxu0 0.0
      %4184 = vmatprep.subr.mxu0 0.0
      %4185 = vmatpush1.msra.mxu0 0.0
      %4186 = vmatprep.subr.mxu0 0.0
      %4187 = vmatpush1.msra.mxu0 0.0
      %4188 = vmatprep.subr.mxu0 0.0
      %4189 = vmatpush1.msra.mxu0 0.0
      %4190 = vmatprep.subr.mxu0 0.0
      %4191 = vmatpush1.msra.mxu0 0.0
      %4192 = vmatprep.subr.mxu0 0.0
      %4193 = vmatpush1.msra.mxu0 0.0
      %4194 = vmatprep.subr.mxu0 0.0
      %4195 = vmatpush1.msra.mxu0 0.0
      %4196 = vmatprep.subr.mxu0 0.0
      %4197 = vmatpush1.msra.mxu0 0.0
      %4198 = vmatprep.subr.mxu0 0.0
      %4199 = vmatpush1.msra.mxu0 0.0
      %4200 = vmatprep.subr.mxu0 0.0
      %4201 = vmatpush1.msra.mxu0 0.0
      %4202 = vmatprep.subr.mxu0 0.0
      %4203 = vmatpush1.msra.mxu0 0.0
      %4204 = vmatprep.subr.mxu0 0.0
      %4205 = vmatpush1.msra.mxu0 0.0
      %4206 = vmatprep.subr.mxu0 0.0
      %4207 = vmatpush1.msra.mxu0 0.0
      %4208 = vmatprep.subr.mxu0 0.0
      %4209 = vmatpush1.msra.mxu0 0.0
      %4210 = vmatprep.subr.mxu0 0.0
      %4211 = vmatpush1.msra.mxu0 0.0
      %4212 = vmatprep.subr.mxu0 0.0
      %4213 = vmatpush1.msra.mxu0 0.0
      %4214 = vmatprep.subr.mxu0 0.0
      %4215 = vmatpush1.msra.mxu0 0.0
      %4216 = vmatprep.subr.mxu0 0.0
      %4217 = vmatpush1.msra.mxu0 0.0
      %4218 = vmatprep.subr.mxu0 0.0
      %4219 = vmatpush1.msra.mxu0 0.0
      %4220 = vmatprep.subr.mxu0 0.0
      %4221 = vmatpush1.msra.mxu0 0.0
      %4222 = vmatprep.mubr.f32.mxu0 0.0
      %4223 = vmatmul.mubr.f32.gmra.mrb[0].mxu0 %v4014
      %v4224 = vpop.f32.mrb[0].mxu0
      %v4225 = vadd.f32 0.0, %v4224
      %v4226 = vpop.f32.mrb[0].mxu0
      %v4227 = vadd.f32 0.0, %v4226
      %4228 = vdwg.mxu0
      %4229 = vmatprep.subr.mxu0 %v4004
      %4230 = vmatpush1.msra.mxu0 %v4003
      %4231 = vmatprep.subr.mxu0 0.0
      %4232 = vmatpush1.msra.mxu0 0.0
      %4233 = vmatprep.subr.mxu0 0.0
      %4234 = vmatpush1.msra.mxu0 0.0
      %4235 = vmatprep.subr.mxu0 0.0
      %4236 = vmatpush1.msra.mxu0 0.0
      %4237 = vmatprep.subr.mxu0 0.0
      %4238 = vmatpush1.msra.mxu0 0.0
      %4239 = vmatprep.subr.mxu0 0.0
      %4240 = vmatpush1.msra.mxu0 0.0
      %4241 = vmatprep.subr.mxu0 0.0
      %4242 = vmatpush1.msra.mxu0 0.0
      %4243 = vmatprep.subr.mxu0 0.0
      %4244 = vmatpush1.msra.mxu0 0.0
      %4245 = vmatprep.subr.mxu0 0.0
      %4246 = vmatpush1.msra.mxu0 0.0
      %4247 = vmatprep.subr.mxu0 0.0
      %4248 = vmatpush1.msra.mxu0 0.0
      %4249 = vmatprep.subr.mxu0 0.0
      %4250 = vmatpush1.msra.mxu0 0.0
      %4251 = vmatprep.subr.mxu0 0.0
      %4252 = vmatpush1.msra.mxu0 0.0
      %4253 = vmatprep.subr.mxu0 0.0
      %4254 = vmatpush1.msra.mxu0 0.0
      %4255 = vmatprep.subr.mxu0 0.0
      %4256 = vmatpush1.msra.mxu0 0.0
      %4257 = vmatprep.subr.mxu0 0.0
      %4258 = vmatpush1.msra.mxu0 0.0
      %4259 = vmatprep.subr.mxu0 0.0
      %4260 = vmatpush1.msra.mxu0 0.0
      %4261 = vmatprep.subr.mxu0 0.0
      %4262 = vmatpush1.msra.mxu0 0.0
      %4263 = vmatprep.subr.mxu0 0.0
      %4264 = vmatpush1.msra.mxu0 0.0
      %4265 = vmatprep.subr.mxu0 0.0
      %4266 = vmatpush1.msra.mxu0 0.0
      %4267 = vmatprep.subr.mxu0 0.0
      %4268 = vmatpush1.msra.mxu0 0.0
      %4269 = vmatprep.subr.mxu0 0.0
      %4270 = vmatpush1.msra.mxu0 0.0
      %4271 = vmatprep.subr.mxu0 0.0
      %4272 = vmatpush1.msra.mxu0 0.0
      %4273 = vmatprep.subr.mxu0 0.0
      %4274 = vmatpush1.msra.mxu0 0.0
      %4275 = vmatprep.subr.mxu0 0.0
      %4276 = vmatpush1.msra.mxu0 0.0
      %4277 = vmatprep.subr.mxu0 0.0
      %4278 = vmatpush1.msra.mxu0 0.0
      %4279 = vmatprep.subr.mxu0 0.0
      %4280 = vmatpush1.msra.mxu0 0.0
      %4281 = vmatprep.subr.mxu0 0.0
      %4282 = vmatpush1.msra.mxu0 0.0
      %4283 = vmatprep.subr.mxu0 0.0
      %4284 = vmatpush1.msra.mxu0 0.0
      %4285 = vmatprep.subr.mxu0 0.0
      %4286 = vmatpush1.msra.mxu0 0.0
      %4287 = vmatprep.subr.mxu0 0.0
      %4288 = vmatpush1.msra.mxu0 0.0
      %4289 = vmatprep.subr.mxu0 0.0
      %4290 = vmatpush1.msra.mxu0 0.0
      %4291 = vmatprep.subr.mxu0 0.0
      %4292 = vmatpush1.msra.mxu0 0.0
      %4293 = vmatprep.mubr.f32.mxu0 0.0
      %4294 = vmatmul.mubr.f32.gmra.mrb[0].mxu0 %v4014
      %v4295 = vpop.f32.mrb[0].mxu0
      %v4296 = vadd.f32 0.0, %v4295
      %v4297 = vpop.f32.mrb[0].mxu0
      %v4298 = vadd.f32 0.0, %v4297
      %4299 = vdwg.mxu0
      %v4300 = vadd.f32 %v3968, %v4083
      %v4301 = vadd.f32 %v3969, %v4085
      %v4302 = vadd.f32 %v3970, %v4154
      %v4303 = vadd.f32 %v3971, %v4156
      %v4304 = vadd.f32 %v3972, %v4225
      %v4305 = vadd.f32 %v3973, %v4227
      %v4306 = vadd.f32 %v3974, %v4296
      %v4307 = vadd.f32 %v3975, %v4298
      %s4308 = scalar_lea.vmem %s2, 96
      %v4309 = vld [vmem:[%s4308] sm:$0xff]
      %4310 = vrot.lane.b32.xlu0 %v640, 18
      %v4311 = vpop.permute.xlu0 %4310
      %4312 = vrot.lane.b32.xlu0 %v641, 18
      %v4313 = vpop.permute.xlu0 %4312
      %4314 = vrot.lane.b32.xlu0 %v642, 18
      %v4315 = vpop.permute.xlu0 %4314
      %4316 = vrot.lane.b32.xlu0 %v643, 18
      %v4317 = vpop.permute.xlu0 %4316
      %4318 = vrot.lane.b32.xlu0 %v644, 18
      %v4319 = vpop.permute.xlu0 %4318
      %4320 = vrot.lane.b32.xlu0 %v645, 18
      %v4321 = vpop.permute.xlu0 %4320
      %4322 = vrot.lane.b32.xlu0 %v646, 18
      %v4323 = vpop.permute.xlu0 %4322
      %4324 = vrot.lane.b32.xlu0 %v647, 18
      %v4325 = vpop.permute.xlu0 %4324
      %4326 = vrot.lane.b32.xlu0 %v648, 18
      %v4327 = vpop.permute.xlu0 %4326
      %vm4328 = vcmask 146432
      %v4329 = vsel %vm4328, %v4311, %v4313
      %v4330 = vsel %vm4328, %v4313, %v4315
      %v4331 = vsel %vm4328, %v4315, %v4317
      %v4332 = vsel %vm4328, %v4317, %v4319
      %v4333 = vsel %vm4328, %v4319, %v4321
      %v4334 = vsel %vm4328, %v4321, %v4323
      %v4335 = vsel %vm4328, %v4323, %v4325
      %v4336 = vsel %vm4328, %v4325, %v4327
      %v4346 = vsel %vm337, %v4309, 0
      %4348 = vmatprep.subr.mxu0 %v4330
      %4349 = vmatpush1.msra.mxu0 %v4329
      %4350 = vmatprep.subr.mxu0 0.0
      %4351 = vmatpush1.msra.mxu0 0.0
      %4352 = vmatprep.subr.mxu0 0.0
      %4353 = vmatpush1.msra.mxu0 0.0
      %4354 = vmatprep.subr.mxu0 0.0
      %4355 = vmatpush1.msra.mxu0 0.0
      %4356 = vmatprep.subr.mxu0 0.0
      %4357 = vmatpush1.msra.mxu0 0.0
      %4358 = vmatprep.subr.mxu0 0.0
      %4359 = vmatpush1.msra.mxu0 0.0
      %4360 = vmatprep.subr.mxu0 0.0
      %4361 = vmatpush1.msra.mxu0 0.0
      %4362 = vmatprep.subr.mxu0 0.0
      %4363 = vmatpush1.msra.mxu0 0.0
      %4364 = vmatprep.subr.mxu0 0.0
      %4365 = vmatpush1.msra.mxu0 0.0
      %4366 = vmatprep.subr.mxu0 0.0
      %4367 = vmatpush1.msra.mxu0 0.0
      %4368 = vmatprep.subr.mxu0 0.0
      %4369 = vmatpush1.msra.mxu0 0.0
      %4370 = vmatprep.subr.mxu0 0.0
      %4371 = vmatpush1.msra.mxu0 0.0
      %4372 = vmatprep.subr.mxu0 0.0
      %4373 = vmatpush1.msra.mxu0 0.0
      %4374 = vmatprep.subr.mxu0 0.0
      %4375 = vmatpush1.msra.mxu0 0.0
      %4376 = vmatprep.subr.mxu0 0.0
      %4377 = vmatpush1.msra.mxu0 0.0
      %4378 = vmatprep.subr.mxu0 0.0
      %4379 = vmatpush1.msra.mxu0 0.0
      %4380 = vmatprep.subr.mxu0 0.0
      %4381 = vmatpush1.msra.mxu0 0.0
      %4382 = vmatprep.subr.mxu0 0.0
      %4383 = vmatpush1.msra.mxu0 0.0
      %4384 = vmatprep.subr.mxu0 0.0
      %4385 = vmatpush1.msra.mxu0 0.0
      %4386 = vmatprep.subr.mxu0 0.0
      %4387 = vmatpush1.msra.mxu0 0.0
      %4388 = vmatprep.subr.mxu0 0.0
      %4389 = vmatpush1.msra.mxu0 0.0
      %4390 = vmatprep.subr.mxu0 0.0
      %4391 = vmatpush1.msra.mxu0 0.0
      %4392 = vmatprep.subr.mxu0 0.0
      %4393 = vmatpush1.msra.mxu0 0.0
      %4394 = vmatprep.subr.mxu0 0.0
      %4395 = vmatpush1.msra.mxu0 0.0
      %4396 = vmatprep.subr.mxu0 0.0
      %4397 = vmatpush1.msra.mxu0 0.0
      %4398 = vmatprep.subr.mxu0 0.0
      %4399 = vmatpush1.msra.mxu0 0.0
      %4400 = vmatprep.subr.mxu0 0.0
      %4401 = vmatpush1.msra.mxu0 0.0
      %4402 = vmatprep.subr.mxu0 0.0
      %4403 = vmatpush1.msra.mxu0 0.0
      %4404 = vmatprep.subr.mxu0 0.0
      %4405 = vmatpush1.msra.mxu0 0.0
      %4406 = vmatprep.subr.mxu0 0.0
      %4407 = vmatpush1.msra.mxu0 0.0
      %4408 = vmatprep.subr.mxu0 0.0
      %4409 = vmatpush1.msra.mxu0 0.0
      %4410 = vmatprep.subr.mxu0 0.0
      %4411 = vmatpush1.msra.mxu0 0.0
      %4412 = vmatprep.mubr.f32.mxu0 0.0
      %4413 = vmatmul.mubr.f32.gmra.mrb[0].mxu0 %v4346
      %v4414 = vpop.f32.mrb[0].mxu0
      %v4415 = vadd.f32 0.0, %v4414
      %v4416 = vpop.f32.mrb[0].mxu0
      %v4417 = vadd.f32 0.0, %v4416
      %4418 = vdwg.mxu0
      %4419 = vmatprep.subr.mxu0 %v4332
      %4420 = vmatpush1.msra.mxu0 %v4331
      %4421 = vmatprep.subr.mxu0 0.0
      %4422 = vmatpush1.msra.mxu0 0.0
      %4423 = vmatprep.subr.mxu0 0.0
      %4424 = vmatpush1.msra.mxu0 0.0
      %4425 = vmatprep.subr.mxu0 0.0
      %4426 = vmatpush1.msra.mxu0 0.0
      %4427 = vmatprep.subr.mxu0 0.0
      %4428 = vmatpush1.msra.mxu0 0.0
      %4429 = vmatprep.subr.mxu0 0.0
      %4430 = vmatpush1.msra.mxu0 0.0
      %4431 = vmatprep.subr.mxu0 0.0
      %4432 = vmatpush1.msra.mxu0 0.0
      %4433 = vmatprep.subr.mxu0 0.0
      %4434 = vmatpush1.msra.mxu0 0.0
      %4435 = vmatprep.subr.mxu0 0.0
      %4436 = vmatpush1.msra.mxu0 0.0
      %4437 = vmatprep.subr.mxu0 0.0
      %4438 = vmatpush1.msra.mxu0 0.0
      %4439 = vmatprep.subr.mxu0 0.0
      %4440 = vmatpush1.msra.mxu0 0.0
      %4441 = vmatprep.subr.mxu0 0.0
      %4442 = vmatpush1.msra.mxu0 0.0
      %4443 = vmatprep.subr.mxu0 0.0
      %4444 = vmatpush1.msra.mxu0 0.0
      %4445 = vmatprep.subr.mxu0 0.0
      %4446 = vmatpush1.msra.mxu0 0.0
      %4447 = vmatprep.subr.mxu0 0.0
      %4448 = vmatpush1.msra.mxu0 0.0
      %4449 = vmatprep.subr.mxu0 0.0
      %4450 = vmatpush1.msra.mxu0 0.0
      %4451 = vmatprep.subr.mxu0 0.0
      %4452 = vmatpush1.msra.mxu0 0.0
      %4453 = vmatprep.subr.mxu0 0.0
      %4454 = vmatpush1.msra.mxu0 0.0
      %4455 = vmatprep.subr.mxu0 0.0
      %4456 = vmatpush1.msra.mxu0 0.0
      %4457 = vmatprep.subr.mxu0 0.0
      %4458 = vmatpush1.msra.mxu0 0.0
      %4459 = vmatprep.subr.mxu0 0.0
      %4460 = vmatpush1.msra.mxu0 0.0
      %4461 = vmatprep.subr.mxu0 0.0
      %4462 = vmatpush1.msra.mxu0 0.0
      %4463 = vmatprep.subr.mxu0 0.0
      %4464 = vmatpush1.msra.mxu0 0.0
      %4465 = vmatprep.subr.mxu0 0.0
      %4466 = vmatpush1.msra.mxu0 0.0
      %4467 = vmatprep.subr.mxu0 0.0
      %4468 = vmatpush1.msra.mxu0 0.0
      %4469 = vmatprep.subr.mxu0 0.0
      %4470 = vmatpush1.msra.mxu0 0.0
      %4471 = vmatprep.subr.mxu0 0.0
      %4472 = vmatpush1.msra.mxu0 0.0
      %4473 = vmatprep.subr.mxu0 0.0
      %4474 = vmatpush1.msra.mxu0 0.0
      %4475 = vmatprep.subr.mxu0 0.0
      %4476 = vmatpush1.msra.mxu0 0.0
      %4477 = vmatprep.subr.mxu0 0.0
      %4478 = vmatpush1.msra.mxu0 0.0
      %4479 = vmatprep.subr.mxu0 0.0
      %4480 = vmatpush1.msra.mxu0 0.0
      %4481 = vmatprep.subr.mxu0 0.0
      %4482 = vmatpush1.msra.mxu0 0.0
      %4483 = vmatprep.mubr.f32.mxu0 0.0
      %4484 = vmatmul.mubr.f32.gmra.mrb[0].mxu0 %v4346
      %v4485 = vpop.f32.mrb[0].mxu0
      %v4486 = vadd.f32 0.0, %v4485
      %v4487 = vpop.f32.mrb[0].mxu0
      %v4488 = vadd.f32 0.0, %v4487
      %4489 = vdwg.mxu0
      %4490 = vmatprep.subr.mxu0 %v4334
      %4491 = vmatpush1.msra.mxu0 %v4333
      %4492 = vmatprep.subr.mxu0 0.0
      %4493 = vmatpush1.msra.mxu0 0.0
      %4494 = vmatprep.subr.mxu0 0.0
      %4495 = vmatpush1.msra.mxu0 0.0
      %4496 = vmatprep.subr.mxu0 0.0
      %4497 = vmatpush1.msra.mxu0 0.0
      %4498 = vmatprep.subr.mxu0 0.0
      %4499 = vmatpush1.msra.mxu0 0.0
      %4500 = vmatprep.subr.mxu0 0.0
      %4501 = vmatpush1.msra.mxu0 0.0
      %4502 = vmatprep.subr.mxu0 0.0
      %4503 = vmatpush1.msra.mxu0 0.0
      %4504 = vmatprep.subr.mxu0 0.0
      %4505 = vmatpush1.msra.mxu0 0.0
      %4506 = vmatprep.subr.mxu0 0.0
      %4507 = vmatpush1.msra.mxu0 0.0
      %4508 = vmatprep.subr.mxu0 0.0
      %4509 = vmatpush1.msra.mxu0 0.0
      %4510 = vmatprep.subr.mxu0 0.0
      %4511 = vmatpush1.msra.mxu0 0.0
      %4512 = vmatprep.subr.mxu0 0.0
      %4513 = vmatpush1.msra.mxu0 0.0
      %4514 = vmatprep.subr.mxu0 0.0
      %4515 = vmatpush1.msra.mxu0 0.0
      %4516 = vmatprep.subr.mxu0 0.0
      %4517 = vmatpush1.msra.mxu0 0.0
      %4518 = vmatprep.subr.mxu0 0.0
      %4519 = vmatpush1.msra.mxu0 0.0
      %4520 = vmatprep.subr.mxu0 0.0
      %4521 = vmatpush1.msra.mxu0 0.0
      %4522 = vmatprep.subr.mxu0 0.0
      %4523 = vmatpush1.msra.mxu0 0.0
      %4524 = vmatprep.subr.mxu0 0.0
      %4525 = vmatpush1.msra.mxu0 0.0
      %4526 = vmatprep.subr.mxu0 0.0
      %4527 = vmatpush1.msra.mxu0 0.0
      %4528 = vmatprep.subr.mxu0 0.0
      %4529 = vmatpush1.msra.mxu0 0.0
      %4530 = vmatprep.subr.mxu0 0.0
      %4531 = vmatpush1.msra.mxu0 0.0
      %4532 = vmatprep.subr.mxu0 0.0
      %4533 = vmatpush1.msra.mxu0 0.0
      %4534 = vmatprep.subr.mxu0 0.0
      %4535 = vmatpush1.msra.mxu0 0.0
      %4536 = vmatprep.subr.mxu0 0.0
      %4537 = vmatpush1.msra.mxu0 0.0
      %4538 = vmatprep.subr.mxu0 0.0
      %4539 = vmatpush1.msra.mxu0 0.0
      %4540 = vmatprep.subr.mxu0 0.0
      %4541 = vmatpush1.msra.mxu0 0.0
      %4542 = vmatprep.subr.mxu0 0.0
      %4543 = vmatpush1.msra.mxu0 0.0
      %4544 = vmatprep.subr.mxu0 0.0
      %4545 = vmatpush1.msra.mxu0 0.0
      %4546 = vmatprep.subr.mxu0 0.0
      %4547 = vmatpush1.msra.mxu0 0.0
      %4548 = vmatprep.subr.mxu0 0.0
      %4549 = vmatpush1.msra.mxu0 0.0
      %4550 = vmatprep.subr.mxu0 0.0
      %4551 = vmatpush1.msra.mxu0 0.0
      %4552 = vmatprep.subr.mxu0 0.0
      %4553 = vmatpush1.msra.mxu0 0.0
      %4554 = vmatprep.mubr.f32.mxu0 0.0
      %4555 = vmatmul.mubr.f32.gmra.mrb[0].mxu0 %v4346
      %v4556 = vpop.f32.mrb[0].mxu0
      %v4557 = vadd.f32 0.0, %v4556
      %v4558 = vpop.f32.mrb[0].mxu0
      %v4559 = vadd.f32 0.0, %v4558
      %4560 = vdwg.mxu0
      %4561 = vmatprep.subr.mxu0 %v4336
      %4562 = vmatpush1.msra.mxu0 %v4335
      %4563 = vmatprep.subr.mxu0 0.0
      %4564 = vmatpush1.msra.mxu0 0.0
      %4565 = vmatprep.subr.mxu0 0.0
      %4566 = vmatpush1.msra.mxu0 0.0
      %4567 = vmatprep.subr.mxu0 0.0
      %4568 = vmatpush1.msra.mxu0 0.0
      %4569 = vmatprep.subr.mxu0 0.0
      %4570 = vmatpush1.msra.mxu0 0.0
      %4571 = vmatprep.subr.mxu0 0.0
      %4572 = vmatpush1.msra.mxu0 0.0
      %4573 = vmatprep.subr.mxu0 0.0
      %4574 = vmatpush1.msra.mxu0 0.0
      %4575 = vmatprep.subr.mxu0 0.0
      %4576 = vmatpush1.msra.mxu0 0.0
      %4577 = vmatprep.subr.mxu0 0.0
      %4578 = vmatpush1.msra.mxu0 0.0
      %4579 = vmatprep.subr.mxu0 0.0
      %4580 = vmatpush1.msra.mxu0 0.0
      %4581 = vmatprep.subr.mxu0 0.0
      %4582 = vmatpush1.msra.mxu0 0.0
      %4583 = vmatprep.subr.mxu0 0.0
      %4584 = vmatpush1.msra.mxu0 0.0
      %4585 = vmatprep.subr.mxu0 0.0
      %4586 = vmatpush1.msra.mxu0 0.0
      %4587 = vmatprep.subr.mxu0 0.0
      %4588 = vmatpush1.msra.mxu0 0.0
      %4589 = vmatprep.subr.mxu0 0.0
      %4590 = vmatpush1.msra.mxu0 0.0
      %4591 = vmatprep.subr.mxu0 0.0
      %4592 = vmatpush1.msra.mxu0 0.0
      %4593 = vmatprep.subr.mxu0 0.0
      %4594 = vmatpush1.msra.mxu0 0.0
      %4595 = vmatprep.subr.mxu0 0.0
      %4596 = vmatpush1.msra.mxu0 0.0
      %4597 = vmatprep.subr.mxu0 0.0
      %4598 = vmatpush1.msra.mxu0 0.0
      %4599 = vmatprep.subr.mxu0 0.0
      %4600 = vmatpush1.msra.mxu0 0.0
      %4601 = vmatprep.subr.mxu0 0.0
      %4602 = vmatpush1.msra.mxu0 0.0
      %4603 = vmatprep.subr.mxu0 0.0
      %4604 = vmatpush1.msra.mxu0 0.0
      %4605 = vmatprep.subr.mxu0 0.0
      %4606 = vmatpush1.msra.mxu0 0.0
      %4607 = vmatprep.subr.mxu0 0.0
      %4608 = vmatpush1.msra.mxu0 0.0
      %4609 = vmatprep.subr.mxu0 0.0
      %4610 = vmatpush1.msra.mxu0 0.0
      %4611 = vmatprep.subr.mxu0 0.0
      %4612 = vmatpush1.msra.mxu0 0.0
      %4613 = vmatprep.subr.mxu0 0.0
      %4614 = vmatpush1.msra.mxu0 0.0
      %4615 = vmatprep.subr.mxu0 0.0
      %4616 = vmatpush1.msra.mxu0 0.0
      %4617 = vmatprep.subr.mxu0 0.0
      %4618 = vmatpush1.msra.mxu0 0.0
      %4619 = vmatprep.subr.mxu0 0.0
      %4620 = vmatpush1.msra.mxu0 0.0
      %4621 = vmatprep.subr.mxu0 0.0
      %4622 = vmatpush1.msra.mxu0 0.0
      %4623 = vmatprep.subr.mxu0 0.0
      %4624 = vmatpush1.msra.mxu0 0.0
      %4625 = vmatprep.mubr.f32.mxu0 0.0
      %4626 = vmatmul.mubr.f32.gmra.mrb[0].mxu0 %v4346
      %v4627 = vpop.f32.mrb[0].mxu0
      %v4628 = vadd.f32 0.0, %v4627
      %v4629 = vpop.f32.mrb[0].mxu0
      %v4630 = vadd.f32 0.0, %v4629
      %4631 = vdwg.mxu0
      %v4632 = vadd.f32 %v4300, %v4415
      %v4633 = vadd.f32 %v4301, %v4417
      %v4634 = vadd.f32 %v4302, %v4486
      %v4635 = vadd.f32 %v4303, %v4488
      %v4636 = vadd.f32 %v4304, %v4557
      %v4637 = vadd.f32 %v4305, %v4559
      %v4638 = vadd.f32 %v4306, %v4628
      %v4639 = vadd.f32 %v4307, %v4630
      %s4640 = scalar_lea.vmem %s2, 104
      %v4641 = vld [vmem:[%s4640] sm:$0xff]
      %4642 = vrot.lane.b32.xlu0 %v640, 17
      %v4643 = vpop.permute.xlu0 %4642
      %4644 = vrot.lane.b32.xlu0 %v641, 17
      %v4645 = vpop.permute.xlu0 %4644
      %4646 = vrot.lane.b32.xlu0 %v642, 17
      %v4647 = vpop.permute.xlu0 %4646
      %4648 = vrot.lane.b32.xlu0 %v643, 17
      %v4649 = vpop.permute.xlu0 %4648
      %4650 = vrot.lane.b32.xlu0 %v644, 17
      %v4651 = vpop.permute.xlu0 %4650
      %4652 = vrot.lane.b32.xlu0 %v645, 17
      %v4653 = vpop.permute.xlu0 %4652
      %4654 = vrot.lane.b32.xlu0 %v646, 17
      %v4655 = vpop.permute.xlu0 %4654
      %4656 = vrot.lane.b32.xlu0 %v647, 17
      %v4657 = vpop.permute.xlu0 %4656
      %4658 = vrot.lane.b32.xlu0 %v648, 17
      %v4659 = vpop.permute.xlu0 %4658
      %vm4660 = vcmask 138240
      %v4661 = vsel %vm4660, %v4643, %v4645
      %v4662 = vsel %vm4660, %v4645, %v4647
      %v4663 = vsel %vm4660, %v4647, %v4649
      %v4664 = vsel %vm4660, %v4649, %v4651
      %v4665 = vsel %vm4660, %v4651, %v4653
      %v4666 = vsel %vm4660, %v4653, %v4655
      %v4667 = vsel %vm4660, %v4655, %v4657
      %v4668 = vsel %vm4660, %v4657, %v4659
      %v4678 = vsel %vm337, %v4641, 0
      %4680 = vmatprep.subr.mxu0 %v4662
      %4681 = vmatpush1.msra.mxu0 %v4661
      %4682 = vmatprep.subr.mxu0 0.0
      %4683 = vmatpush1.msra.mxu0 0.0
      %4684 = vmatprep.subr.mxu0 0.0
      %4685 = vmatpush1.msra.mxu0 0.0
      %4686 = vmatprep.subr.mxu0 0.0
      %4687 = vmatpush1.msra.mxu0 0.0
      %4688 = vmatprep.subr.mxu0 0.0
      %4689 = vmatpush1.msra.mxu0 0.0
      %4690 = vmatprep.subr.mxu0 0.0
      %4691 = vmatpush1.msra.mxu0 0.0
      %4692 = vmatprep.subr.mxu0 0.0
      %4693 = vmatpush1.msra.mxu0 0.0
      %4694 = vmatprep.subr.mxu0 0.0
      %4695 = vmatpush1.msra.mxu0 0.0
      %4696 = vmatprep.subr.mxu0 0.0
      %4697 = vmatpush1.msra.mxu0 0.0
      %4698 = vmatprep.subr.mxu0 0.0
      %4699 = vmatpush1.msra.mxu0 0.0
      %4700 = vmatprep.subr.mxu0 0.0
      %4701 = vmatpush1.msra.mxu0 0.0
      %4702 = vmatprep.subr.mxu0 0.0
      %4703 = vmatpush1.msra.mxu0 0.0
      %4704 = vmatprep.subr.mxu0 0.0
      %4705 = vmatpush1.msra.mxu0 0.0
      %4706 = vmatprep.subr.mxu0 0.0
      %4707 = vmatpush1.msra.mxu0 0.0
      %4708 = vmatprep.subr.mxu0 0.0
      %4709 = vmatpush1.msra.mxu0 0.0
      %4710 = vmatprep.subr.mxu0 0.0
      %4711 = vmatpush1.msra.mxu0 0.0
      %4712 = vmatprep.subr.mxu0 0.0
      %4713 = vmatpush1.msra.mxu0 0.0
      %4714 = vmatprep.subr.mxu0 0.0
      %4715 = vmatpush1.msra.mxu0 0.0
      %4716 = vmatprep.subr.mxu0 0.0
      %4717 = vmatpush1.msra.mxu0 0.0
      %4718 = vmatprep.subr.mxu0 0.0
      %4719 = vmatpush1.msra.mxu0 0.0
      %4720 = vmatprep.subr.mxu0 0.0
      %4721 = vmatpush1.msra.mxu0 0.0
      %4722 = vmatprep.subr.mxu0 0.0
      %4723 = vmatpush1.msra.mxu0 0.0
      %4724 = vmatprep.subr.mxu0 0.0
      %4725 = vmatpush1.msra.mxu0 0.0
      %4726 = vmatprep.subr.mxu0 0.0
      %4727 = vmatpush1.msra.mxu0 0.0
      %4728 = vmatprep.subr.mxu0 0.0
      %4729 = vmatpush1.msra.mxu0 0.0
      %4730 = vmatprep.subr.mxu0 0.0
      %4731 = vmatpush1.msra.mxu0 0.0
      %4732 = vmatprep.subr.mxu0 0.0
      %4733 = vmatpush1.msra.mxu0 0.0
      %4734 = vmatprep.subr.mxu0 0.0
      %4735 = vmatpush1.msra.mxu0 0.0
      %4736 = vmatprep.subr.mxu0 0.0
      %4737 = vmatpush1.msra.mxu0 0.0
      %4738 = vmatprep.subr.mxu0 0.0
      %4739 = vmatpush1.msra.mxu0 0.0
      %4740 = vmatprep.subr.mxu0 0.0
      %4741 = vmatpush1.msra.mxu0 0.0
      %4742 = vmatprep.subr.mxu0 0.0
      %4743 = vmatpush1.msra.mxu0 0.0
      %4744 = vmatprep.mubr.f32.mxu0 0.0
      %4745 = vmatmul.mubr.f32.gmra.mrb[0].mxu0 %v4678
      %v4746 = vpop.f32.mrb[0].mxu0
      %v4747 = vadd.f32 0.0, %v4746
      %v4748 = vpop.f32.mrb[0].mxu0
      %v4749 = vadd.f32 0.0, %v4748
      %4750 = vdwg.mxu0
      %4751 = vmatprep.subr.mxu0 %v4664
      %4752 = vmatpush1.msra.mxu0 %v4663
      %4753 = vmatprep.subr.mxu0 0.0
      %4754 = vmatpush1.msra.mxu0 0.0
      %4755 = vmatprep.subr.mxu0 0.0
      %4756 = vmatpush1.msra.mxu0 0.0
      %4757 = vmatprep.subr.mxu0 0.0
      %4758 = vmatpush1.msra.mxu0 0.0
      %4759 = vmatprep.subr.mxu0 0.0
      %4760 = vmatpush1.msra.mxu0 0.0
      %4761 = vmatprep.subr.mxu0 0.0
      %4762 = vmatpush1.msra.mxu0 0.0
      %4763 = vmatprep.subr.mxu0 0.0
      %4764 = vmatpush1.msra.mxu0 0.0
      %4765 = vmatprep.subr.mxu0 0.0
      %4766 = vmatpush1.msra.mxu0 0.0
      %4767 = vmatprep.subr.mxu0 0.0
      %4768 = vmatpush1.msra.mxu0 0.0
      %4769 = vmatprep.subr.mxu0 0.0
      %4770 = vmatpush1.msra.mxu0 0.0
      %4771 = vmatprep.subr.mxu0 0.0
      %4772 = vmatpush1.msra.mxu0 0.0
      %4773 = vmatprep.subr.mxu0 0.0
      %4774 = vmatpush1.msra.mxu0 0.0
      %4775 = vmatprep.subr.mxu0 0.0
      %4776 = vmatpush1.msra.mxu0 0.0
      %4777 = vmatprep.subr.mxu0 0.0
      %4778 = vmatpush1.msra.mxu0 0.0
      %4779 = vmatprep.subr.mxu0 0.0
      %4780 = vmatpush1.msra.mxu0 0.0
      %4781 = vmatprep.subr.mxu0 0.0
      %4782 = vmatpush1.msra.mxu0 0.0
      %4783 = vmatprep.subr.mxu0 0.0
      %4784 = vmatpush1.msra.mxu0 0.0
      %4785 = vmatprep.subr.mxu0 0.0
      %4786 = vmatpush1.msra.mxu0 0.0
      %4787 = vmatprep.subr.mxu0 0.0
      %4788 = vmatpush1.msra.mxu0 0.0
      %4789 = vmatprep.subr.mxu0 0.0
      %4790 = vmatpush1.msra.mxu0 0.0
      %4791 = vmatprep.subr.mxu0 0.0
      %4792 = vmatpush1.msra.mxu0 0.0
      %4793 = vmatprep.subr.mxu0 0.0
      %4794 = vmatpush1.msra.mxu0 0.0
      %4795 = vmatprep.subr.mxu0 0.0
      %4796 = vmatpush1.msra.mxu0 0.0
      %4797 = vmatprep.subr.mxu0 0.0
      %4798 = vmatpush1.msra.mxu0 0.0
      %4799 = vmatprep.subr.mxu0 0.0
      %4800 = vmatpush1.msra.mxu0 0.0
      %4801 = vmatprep.subr.mxu0 0.0
      %4802 = vmatpush1.msra.mxu0 0.0
      %4803 = vmatprep.subr.mxu0 0.0
      %4804 = vmatpush1.msra.mxu0 0.0
      %4805 = vmatprep.subr.mxu0 0.0
      %4806 = vmatpush1.msra.mxu0 0.0
      %4807 = vmatprep.subr.mxu0 0.0
      %4808 = vmatpush1.msra.mxu0 0.0
      %4809 = vmatprep.subr.mxu0 0.0
      %4810 = vmatpush1.msra.mxu0 0.0
      %4811 = vmatprep.subr.mxu0 0.0
      %4812 = vmatpush1.msra.mxu0 0.0
      %4813 = vmatprep.subr.mxu0 0.0
      %4814 = vmatpush1.msra.mxu0 0.0
      %4815 = vmatprep.mubr.f32.mxu0 0.0
      %4816 = vmatmul.mubr.f32.gmra.mrb[0].mxu0 %v4678
      %v4817 = vpop.f32.mrb[0].mxu0
      %v4818 = vadd.f32 0.0, %v4817
      %v4819 = vpop.f32.mrb[0].mxu0
      %v4820 = vadd.f32 0.0, %v4819
      %4821 = vdwg.mxu0
      %4822 = vmatprep.subr.mxu0 %v4666
      %4823 = vmatpush1.msra.mxu0 %v4665
      %4824 = vmatprep.subr.mxu0 0.0
      %4825 = vmatpush1.msra.mxu0 0.0
      %4826 = vmatprep.subr.mxu0 0.0
      %4827 = vmatpush1.msra.mxu0 0.0
      %4828 = vmatprep.subr.mxu0 0.0
      %4829 = vmatpush1.msra.mxu0 0.0
      %4830 = vmatprep.subr.mxu0 0.0
      %4831 = vmatpush1.msra.mxu0 0.0
      %4832 = vmatprep.subr.mxu0 0.0
      %4833 = vmatpush1.msra.mxu0 0.0
      %4834 = vmatprep.subr.mxu0 0.0
      %4835 = vmatpush1.msra.mxu0 0.0
      %4836 = vmatprep.subr.mxu0 0.0
      %4837 = vmatpush1.msra.mxu0 0.0
      %4838 = vmatprep.subr.mxu0 0.0
      %4839 = vmatpush1.msra.mxu0 0.0
      %4840 = vmatprep.subr.mxu0 0.0
      %4841 = vmatpush1.msra.mxu0 0.0
      %4842 = vmatprep.subr.mxu0 0.0
      %4843 = vmatpush1.msra.mxu0 0.0
      %4844 = vmatprep.subr.mxu0 0.0
      %4845 = vmatpush1.msra.mxu0 0.0
      %4846 = vmatprep.subr.mxu0 0.0
      %4847 = vmatpush1.msra.mxu0 0.0
      %4848 = vmatprep.subr.mxu0 0.0
      %4849 = vmatpush1.msra.mxu0 0.0
      %4850 = vmatprep.subr.mxu0 0.0
      %4851 = vmatpush1.msra.mxu0 0.0
      %4852 = vmatprep.subr.mxu0 0.0
      %4853 = vmatpush1.msra.mxu0 0.0
      %4854 = vmatprep.subr.mxu0 0.0
      %4855 = vmatpush1.msra.mxu0 0.0
      %4856 = vmatprep.subr.mxu0 0.0
      %4857 = vmatpush1.msra.mxu0 0.0
      %4858 = vmatprep.subr.mxu0 0.0
      %4859 = vmatpush1.msra.mxu0 0.0
      %4860 = vmatprep.subr.mxu0 0.0
      %4861 = vmatpush1.msra.mxu0 0.0
      %4862 = vmatprep.subr.mxu0 0.0
      %4863 = vmatpush1.msra.mxu0 0.0
      %4864 = vmatprep.subr.mxu0 0.0
      %4865 = vmatpush1.msra.mxu0 0.0
      %4866 = vmatprep.subr.mxu0 0.0
      %4867 = vmatpush1.msra.mxu0 0.0
      %4868 = vmatprep.subr.mxu0 0.0
      %4869 = vmatpush1.msra.mxu0 0.0
      %4870 = vmatprep.subr.mxu0 0.0
      %4871 = vmatpush1.msra.mxu0 0.0
      %4872 = vmatprep.subr.mxu0 0.0
      %4873 = vmatpush1.msra.mxu0 0.0
      %4874 = vmatprep.subr.mxu0 0.0
      %4875 = vmatpush1.msra.mxu0 0.0
      %4876 = vmatprep.subr.mxu0 0.0
      %4877 = vmatpush1.msra.mxu0 0.0
      %4878 = vmatprep.subr.mxu0 0.0
      %4879 = vmatpush1.msra.mxu0 0.0
      %4880 = vmatprep.subr.mxu0 0.0
      %4881 = vmatpush1.msra.mxu0 0.0
      %4882 = vmatprep.subr.mxu0 0.0
      %4883 = vmatpush1.msra.mxu0 0.0
      %4884 = vmatprep.subr.mxu0 0.0
      %4885 = vmatpush1.msra.mxu0 0.0
      %4886 = vmatprep.mubr.f32.mxu0 0.0
      %4887 = vmatmul.mubr.f32.gmra.mrb[0].mxu0 %v4678
      %v4888 = vpop.f32.mrb[0].mxu0
      %v4889 = vadd.f32 0.0, %v4888
      %v4890 = vpop.f32.mrb[0].mxu0
      %v4891 = vadd.f32 0.0, %v4890
      %4892 = vdwg.mxu0
      %4893 = vmatprep.subr.mxu0 %v4668
      %4894 = vmatpush1.msra.mxu0 %v4667
      %4895 = vmatprep.subr.mxu0 0.0
      %4896 = vmatpush1.msra.mxu0 0.0
      %4897 = vmatprep.subr.mxu0 0.0
      %4898 = vmatpush1.msra.mxu0 0.0
      %4899 = vmatprep.subr.mxu0 0.0
      %4900 = vmatpush1.msra.mxu0 0.0
      %4901 = vmatprep.subr.mxu0 0.0
      %4902 = vmatpush1.msra.mxu0 0.0
      %4903 = vmatprep.subr.mxu0 0.0
      %4904 = vmatpush1.msra.mxu0 0.0
      %4905 = vmatprep.subr.mxu0 0.0
      %4906 = vmatpush1.msra.mxu0 0.0
      %4907 = vmatprep.subr.mxu0 0.0
      %4908 = vmatpush1.msra.mxu0 0.0
      %4909 = vmatprep.subr.mxu0 0.0
      %4910 = vmatpush1.msra.mxu0 0.0
      %4911 = vmatprep.subr.mxu0 0.0
      %4912 = vmatpush1.msra.mxu0 0.0
      %4913 = vmatprep.subr.mxu0 0.0
      %4914 = vmatpush1.msra.mxu0 0.0
      %4915 = vmatprep.subr.mxu0 0.0
      %4916 = vmatpush1.msra.mxu0 0.0
      %4917 = vmatprep.subr.mxu0 0.0
      %4918 = vmatpush1.msra.mxu0 0.0
      %4919 = vmatprep.subr.mxu0 0.0
      %4920 = vmatpush1.msra.mxu0 0.0
      %4921 = vmatprep.subr.mxu0 0.0
      %4922 = vmatpush1.msra.mxu0 0.0
      %4923 = vmatprep.subr.mxu0 0.0
      %4924 = vmatpush1.msra.mxu0 0.0
      %4925 = vmatprep.subr.mxu0 0.0
      %4926 = vmatpush1.msra.mxu0 0.0
      %4927 = vmatprep.subr.mxu0 0.0
      %4928 = vmatpush1.msra.mxu0 0.0
      %4929 = vmatprep.subr.mxu0 0.0
      %4930 = vmatpush1.msra.mxu0 0.0
      %4931 = vmatprep.subr.mxu0 0.0
      %4932 = vmatpush1.msra.mxu0 0.0
      %4933 = vmatprep.subr.mxu0 0.0
      %4934 = vmatpush1.msra.mxu0 0.0
      %4935 = vmatprep.subr.mxu0 0.0
      %4936 = vmatpush1.msra.mxu0 0.0
      %4937 = vmatprep.subr.mxu0 0.0
      %4938 = vmatpush1.msra.mxu0 0.0
      %4939 = vmatprep.subr.mxu0 0.0
      %4940 = vmatpush1.msra.mxu0 0.0
      %4941 = vmatprep.subr.mxu0 0.0
      %4942 = vmatpush1.msra.mxu0 0.0
      %4943 = vmatprep.subr.mxu0 0.0
      %4944 = vmatpush1.msra.mxu0 0.0
      %4945 = vmatprep.subr.mxu0 0.0
      %4946 = vmatpush1.msra.mxu0 0.0
      %4947 = vmatprep.subr.mxu0 0.0
      %4948 = vmatpush1.msra.mxu0 0.0
      %4949 = vmatprep.subr.mxu0 0.0
      %4950 = vmatpush1.msra.mxu0 0.0
      %4951 = vmatprep.subr.mxu0 0.0
      %4952 = vmatpush1.msra.mxu0 0.0
      %4953 = vmatprep.subr.mxu0 0.0
      %4954 = vmatpush1.msra.mxu0 0.0
      %4955 = vmatprep.subr.mxu0 0.0
      %4956 = vmatpush1.msra.mxu0 0.0
      %4957 = vmatprep.mubr.f32.mxu0 0.0
      %4958 = vmatmul.mubr.f32.gmra.mrb[0].mxu0 %v4678
      %v4959 = vpop.f32.mrb[0].mxu0
      %v4960 = vadd.f32 0.0, %v4959
      %v4961 = vpop.f32.mrb[0].mxu0
      %v4962 = vadd.f32 0.0, %v4961
      %4963 = vdwg.mxu0
      %v4964 = vadd.f32 %v4632, %v4747
      %v4965 = vadd.f32 %v4633, %v4749
      %v4966 = vadd.f32 %v4634, %v4818
      %v4967 = vadd.f32 %v4635, %v4820
      %v4968 = vadd.f32 %v4636, %v4889
      %v4969 = vadd.f32 %v4637, %v4891
      %v4970 = vadd.f32 %v4638, %v4960
      %v4971 = vadd.f32 %v4639, %v4962
      %s4972 = scalar_lea.vmem %s2, 112
      %v4973 = vld [vmem:[%s4972] sm:$0xff]
      %4974 = vrot.lane.b32.xlu0 %v640, 16
      %v4975 = vpop.permute.xlu0 %4974
      %4976 = vrot.lane.b32.xlu0 %v641, 16
      %v4977 = vpop.permute.xlu0 %4976
      %4978 = vrot.lane.b32.xlu0 %v642, 16
      %v4979 = vpop.permute.xlu0 %4978
      %4980 = vrot.lane.b32.xlu0 %v643, 16
      %v4981 = vpop.permute.xlu0 %4980
      %4982 = vrot.lane.b32.xlu0 %v644, 16
      %v4983 = vpop.permute.xlu0 %4982
      %4984 = vrot.lane.b32.xlu0 %v645, 16
      %v4985 = vpop.permute.xlu0 %4984
      %4986 = vrot.lane.b32.xlu0 %v646, 16
      %v4987 = vpop.permute.xlu0 %4986
      %4988 = vrot.lane.b32.xlu0 %v647, 16
      %v4989 = vpop.permute.xlu0 %4988
      %4990 = vrot.lane.b32.xlu0 %v648, 16
      %v4991 = vpop.permute.xlu0 %4990
      %vm4992 = vcmask 130048
      %v4993 = vsel %vm4992, %v4975, %v4977
      %v4994 = vsel %vm4992, %v4977, %v4979
      %v4995 = vsel %vm4992, %v4979, %v4981
      %v4996 = vsel %vm4992, %v4981, %v4983
      %v4997 = vsel %vm4992, %v4983, %v4985
      %v4998 = vsel %vm4992, %v4985, %v4987
      %v4999 = vsel %vm4992, %v4987, %v4989
      %v5000 = vsel %vm4992, %v4989, %v4991
      %v5010 = vsel %vm337, %v4973, 0
      %5012 = vmatprep.subr.mxu0 %v4994
      %5013 = vmatpush1.msra.mxu0 %v4993
      %5014 = vmatprep.subr.mxu0 0.0
      %5015 = vmatpush1.msra.mxu0 0.0
      %5016 = vmatprep.subr.mxu0 0.0
      %5017 = vmatpush1.msra.mxu0 0.0
      %5018 = vmatprep.subr.mxu0 0.0
      %5019 = vmatpush1.msra.mxu0 0.0
      %5020 = vmatprep.subr.mxu0 0.0
      %5021 = vmatpush1.msra.mxu0 0.0
      %5022 = vmatprep.subr.mxu0 0.0
      %5023 = vmatpush1.msra.mxu0 0.0
      %5024 = vmatprep.subr.mxu0 0.0
      %5025 = vmatpush1.msra.mxu0 0.0
      %5026 = vmatprep.subr.mxu0 0.0
      %5027 = vmatpush1.msra.mxu0 0.0
      %5028 = vmatprep.subr.mxu0 0.0
      %5029 = vmatpush1.msra.mxu0 0.0
      %5030 = vmatprep.subr.mxu0 0.0
      %5031 = vmatpush1.msra.mxu0 0.0
      %5032 = vmatprep.subr.mxu0 0.0
      %5033 = vmatpush1.msra.mxu0 0.0
      %5034 = vmatprep.subr.mxu0 0.0
      %5035 = vmatpush1.msra.mxu0 0.0
      %5036 = vmatprep.subr.mxu0 0.0
      %5037 = vmatpush1.msra.mxu0 0.0
      %5038 = vmatprep.subr.mxu0 0.0
      %5039 = vmatpush1.msra.mxu0 0.0
      %5040 = vmatprep.subr.mxu0 0.0
      %5041 = vmatpush1.msra.mxu0 0.0
      %5042 = vmatprep.subr.mxu0 0.0
      %5043 = vmatpush1.msra.mxu0 0.0
      %5044 = vmatprep.subr.mxu0 0.0
      %5045 = vmatpush1.msra.mxu0 0.0
      %5046 = vmatprep.subr.mxu0 0.0
      %5047 = vmatpush1.msra.mxu0 0.0
      %5048 = vmatprep.subr.mxu0 0.0
      %5049 = vmatpush1.msra.mxu0 0.0
      %5050 = vmatprep.subr.mxu0 0.0
      %5051 = vmatpush1.msra.mxu0 0.0
      %5052 = vmatprep.subr.mxu0 0.0
      %5053 = vmatpush1.msra.mxu0 0.0
      %5054 = vmatprep.subr.mxu0 0.0
      %5055 = vmatpush1.msra.mxu0 0.0
      %5056 = vmatprep.subr.mxu0 0.0
      %5057 = vmatpush1.msra.mxu0 0.0
      %5058 = vmatprep.subr.mxu0 0.0
      %5059 = vmatpush1.msra.mxu0 0.0
      %5060 = vmatprep.subr.mxu0 0.0
      %5061 = vmatpush1.msra.mxu0 0.0
      %5062 = vmatprep.subr.mxu0 0.0
      %5063 = vmatpush1.msra.mxu0 0.0
      %5064 = vmatprep.subr.mxu0 0.0
      %5065 = vmatpush1.msra.mxu0 0.0
      %5066 = vmatprep.subr.mxu0 0.0
      %5067 = vmatpush1.msra.mxu0 0.0
      %5068 = vmatprep.subr.mxu0 0.0
      %5069 = vmatpush1.msra.mxu0 0.0
      %5070 = vmatprep.subr.mxu0 0.0
      %5071 = vmatpush1.msra.mxu0 0.0
      %5072 = vmatprep.subr.mxu0 0.0
      %5073 = vmatpush1.msra.mxu0 0.0
      %5074 = vmatprep.subr.mxu0 0.0
      %5075 = vmatpush1.msra.mxu0 0.0
      %5076 = vmatprep.mubr.f32.mxu0 0.0
      %5077 = vmatmul.mubr.f32.gmra.mrb[0].mxu0 %v5010
      %v5078 = vpop.f32.mrb[0].mxu0
      %v5079 = vadd.f32 0.0, %v5078
      %v5080 = vpop.f32.mrb[0].mxu0
      %v5081 = vadd.f32 0.0, %v5080
      %5082 = vdwg.mxu0
      %5083 = vmatprep.subr.mxu0 %v4996
      %5084 = vmatpush1.msra.mxu0 %v4995
      %5085 = vmatprep.subr.mxu0 0.0
      %5086 = vmatpush1.msra.mxu0 0.0
      %5087 = vmatprep.subr.mxu0 0.0
      %5088 = vmatpush1.msra.mxu0 0.0
      %5089 = vmatprep.subr.mxu0 0.0
      %5090 = vmatpush1.msra.mxu0 0.0
      %5091 = vmatprep.subr.mxu0 0.0
      %5092 = vmatpush1.msra.mxu0 0.0
      %5093 = vmatprep.subr.mxu0 0.0
      %5094 = vmatpush1.msra.mxu0 0.0
      %5095 = vmatprep.subr.mxu0 0.0
      %5096 = vmatpush1.msra.mxu0 0.0
      %5097 = vmatprep.subr.mxu0 0.0
      %5098 = vmatpush1.msra.mxu0 0.0
      %5099 = vmatprep.subr.mxu0 0.0
      %5100 = vmatpush1.msra.mxu0 0.0
      %5101 = vmatprep.subr.mxu0 0.0
      %5102 = vmatpush1.msra.mxu0 0.0
      %5103 = vmatprep.subr.mxu0 0.0
      %5104 = vmatpush1.msra.mxu0 0.0
      %5105 = vmatprep.subr.mxu0 0.0
      %5106 = vmatpush1.msra.mxu0 0.0
      %5107 = vmatprep.subr.mxu0 0.0
      %5108 = vmatpush1.msra.mxu0 0.0
      %5109 = vmatprep.subr.mxu0 0.0
      %5110 = vmatpush1.msra.mxu0 0.0
      %5111 = vmatprep.subr.mxu0 0.0
      %5112 = vmatpush1.msra.mxu0 0.0
      %5113 = vmatprep.subr.mxu0 0.0
      %5114 = vmatpush1.msra.mxu0 0.0
      %5115 = vmatprep.subr.mxu0 0.0
      %5116 = vmatpush1.msra.mxu0 0.0
      %5117 = vmatprep.subr.mxu0 0.0
      %5118 = vmatpush1.msra.mxu0 0.0
      %5119 = vmatprep.subr.mxu0 0.0
      %5120 = vmatpush1.msra.mxu0 0.0
      %5121 = vmatprep.subr.mxu0 0.0
      %5122 = vmatpush1.msra.mxu0 0.0
      %5123 = vmatprep.subr.mxu0 0.0
      %5124 = vmatpush1.msra.mxu0 0.0
      %5125 = vmatprep.subr.mxu0 0.0
      %5126 = vmatpush1.msra.mxu0 0.0
      %5127 = vmatprep.subr.mxu0 0.0
      %5128 = vmatpush1.msra.mxu0 0.0
      %5129 = vmatprep.subr.mxu0 0.0
      %5130 = vmatpush1.msra.mxu0 0.0
      %5131 = vmatprep.subr.mxu0 0.0
      %5132 = vmatpush1.msra.mxu0 0.0
      %5133 = vmatprep.subr.mxu0 0.0
      %5134 = vmatpush1.msra.mxu0 0.0
      %5135 = vmatprep.subr.mxu0 0.0
      %5136 = vmatpush1.msra.mxu0 0.0
      %5137 = vmatprep.subr.mxu0 0.0
      %5138 = vmatpush1.msra.mxu0 0.0
      %5139 = vmatprep.subr.mxu0 0.0
      %5140 = vmatpush1.msra.mxu0 0.0
      %5141 = vmatprep.subr.mxu0 0.0
      %5142 = vmatpush1.msra.mxu0 0.0
      %5143 = vmatprep.subr.mxu0 0.0
      %5144 = vmatpush1.msra.mxu0 0.0
      %5145 = vmatprep.subr.mxu0 0.0
      %5146 = vmatpush1.msra.mxu0 0.0
      %5147 = vmatprep.mubr.f32.mxu0 0.0
      %5148 = vmatmul.mubr.f32.gmra.mrb[0].mxu0 %v5010
      %v5149 = vpop.f32.mrb[0].mxu0
      %v5150 = vadd.f32 0.0, %v5149
      %v5151 = vpop.f32.mrb[0].mxu0
      %v5152 = vadd.f32 0.0, %v5151
      %5153 = vdwg.mxu0
      %5154 = vmatprep.subr.mxu0 %v4998
      %5155 = vmatpush1.msra.mxu0 %v4997
      %5156 = vmatprep.subr.mxu0 0.0
      %5157 = vmatpush1.msra.mxu0 0.0
      %5158 = vmatprep.subr.mxu0 0.0
      %5159 = vmatpush1.msra.mxu0 0.0
      %5160 = vmatprep.subr.mxu0 0.0
      %5161 = vmatpush1.msra.mxu0 0.0
      %5162 = vmatprep.subr.mxu0 0.0
      %5163 = vmatpush1.msra.mxu0 0.0
      %5164 = vmatprep.subr.mxu0 0.0
      %5165 = vmatpush1.msra.mxu0 0.0
      %5166 = vmatprep.subr.mxu0 0.0
      %5167 = vmatpush1.msra.mxu0 0.0
      %5168 = vmatprep.subr.mxu0 0.0
      %5169 = vmatpush1.msra.mxu0 0.0
      %5170 = vmatprep.subr.mxu0 0.0
      %5171 = vmatpush1.msra.mxu0 0.0
      %5172 = vmatprep.subr.mxu0 0.0
      %5173 = vmatpush1.msra.mxu0 0.0
      %5174 = vmatprep.subr.mxu0 0.0
      %5175 = vmatpush1.msra.mxu0 0.0
      %5176 = vmatprep.subr.mxu0 0.0
      %5177 = vmatpush1.msra.mxu0 0.0
      %5178 = vmatprep.subr.mxu0 0.0
      %5179 = vmatpush1.msra.mxu0 0.0
      %5180 = vmatprep.subr.mxu0 0.0
      %5181 = vmatpush1.msra.mxu0 0.0
      %5182 = vmatprep.subr.mxu0 0.0
      %5183 = vmatpush1.msra.mxu0 0.0
      %5184 = vmatprep.subr.mxu0 0.0
      %5185 = vmatpush1.msra.mxu0 0.0
      %5186 = vmatprep.subr.mxu0 0.0
      %5187 = vmatpush1.msra.mxu0 0.0
      %5188 = vmatprep.subr.mxu0 0.0
      %5189 = vmatpush1.msra.mxu0 0.0
      %5190 = vmatprep.subr.mxu0 0.0
      %5191 = vmatpush1.msra.mxu0 0.0
      %5192 = vmatprep.subr.mxu0 0.0
      %5193 = vmatpush1.msra.mxu0 0.0
      %5194 = vmatprep.subr.mxu0 0.0
      %5195 = vmatpush1.msra.mxu0 0.0
      %5196 = vmatprep.subr.mxu0 0.0
      %5197 = vmatpush1.msra.mxu0 0.0
      %5198 = vmatprep.subr.mxu0 0.0
      %5199 = vmatpush1.msra.mxu0 0.0
      %5200 = vmatprep.subr.mxu0 0.0
      %5201 = vmatpush1.msra.mxu0 0.0
      %5202 = vmatprep.subr.mxu0 0.0
      %5203 = vmatpush1.msra.mxu0 0.0
      %5204 = vmatprep.subr.mxu0 0.0
      %5205 = vmatpush1.msra.mxu0 0.0
      %5206 = vmatprep.subr.mxu0 0.0
      %5207 = vmatpush1.msra.mxu0 0.0
      %5208 = vmatprep.subr.mxu0 0.0
      %5209 = vmatpush1.msra.mxu0 0.0
      %5210 = vmatprep.subr.mxu0 0.0
      %5211 = vmatpush1.msra.mxu0 0.0
      %5212 = vmatprep.subr.mxu0 0.0
      %5213 = vmatpush1.msra.mxu0 0.0
      %5214 = vmatprep.subr.mxu0 0.0
      %5215 = vmatpush1.msra.mxu0 0.0
      %5216 = vmatprep.subr.mxu0 0.0
      %5217 = vmatpush1.msra.mxu0 0.0
      %5218 = vmatprep.mubr.f32.mxu0 0.0
      %5219 = vmatmul.mubr.f32.gmra.mrb[0].mxu0 %v5010
      %v5220 = vpop.f32.mrb[0].mxu0
      %v5221 = vadd.f32 0.0, %v5220
      %v5222 = vpop.f32.mrb[0].mxu0
      %v5223 = vadd.f32 0.0, %v5222
      %5224 = vdwg.mxu0
      %5225 = vmatprep.subr.mxu0 %v5000
      %5226 = vmatpush1.msra.mxu0 %v4999
      %5227 = vmatprep.subr.mxu0 0.0
      %5228 = vmatpush1.msra.mxu0 0.0
      %5229 = vmatprep.subr.mxu0 0.0
      %5230 = vmatpush1.msra.mxu0 0.0
      %5231 = vmatprep.subr.mxu0 0.0
      %5232 = vmatpush1.msra.mxu0 0.0
      %5233 = vmatprep.subr.mxu0 0.0
      %5234 = vmatpush1.msra.mxu0 0.0
      %5235 = vmatprep.subr.mxu0 0.0
      %5236 = vmatpush1.msra.mxu0 0.0
      %5237 = vmatprep.subr.mxu0 0.0
      %5238 = vmatpush1.msra.mxu0 0.0
      %5239 = vmatprep.subr.mxu0 0.0
      %5240 = vmatpush1.msra.mxu0 0.0
      %5241 = vmatprep.subr.mxu0 0.0
      %5242 = vmatpush1.msra.mxu0 0.0
      %5243 = vmatprep.subr.mxu0 0.0
      %5244 = vmatpush1.msra.mxu0 0.0
      %5245 = vmatprep.subr.mxu0 0.0
      %5246 = vmatpush1.msra.mxu0 0.0
      %5247 = vmatprep.subr.mxu0 0.0
      %5248 = vmatpush1.msra.mxu0 0.0
      %5249 = vmatprep.subr.mxu0 0.0
      %5250 = vmatpush1.msra.mxu0 0.0
      %5251 = vmatprep.subr.mxu0 0.0
      %5252 = vmatpush1.msra.mxu0 0.0
      %5253 = vmatprep.subr.mxu0 0.0
      %5254 = vmatpush1.msra.mxu0 0.0
      %5255 = vmatprep.subr.mxu0 0.0
      %5256 = vmatpush1.msra.mxu0 0.0
      %5257 = vmatprep.subr.mxu0 0.0
      %5258 = vmatpush1.msra.mxu0 0.0
      %5259 = vmatprep.subr.mxu0 0.0
      %5260 = vmatpush1.msra.mxu0 0.0
      %5261 = vmatprep.subr.mxu0 0.0
      %5262 = vmatpush1.msra.mxu0 0.0
      %5263 = vmatprep.subr.mxu0 0.0
      %5264 = vmatpush1.msra.mxu0 0.0
      %5265 = vmatprep.subr.mxu0 0.0
      %5266 = vmatpush1.msra.mxu0 0.0
      %5267 = vmatprep.subr.mxu0 0.0
      %5268 = vmatpush1.msra.mxu0 0.0
      %5269 = vmatprep.subr.mxu0 0.0
      %5270 = vmatpush1.msra.mxu0 0.0
      %5271 = vmatprep.subr.mxu0 0.0
      %5272 = vmatpush1.msra.mxu0 0.0
      %5273 = vmatprep.subr.mxu0 0.0
      %5274 = vmatpush1.msra.mxu0 0.0
      %5275 = vmatprep.subr.mxu0 0.0
      %5276 = vmatpush1.msra.mxu0 0.0
      %5277 = vmatprep.subr.mxu0 0.0
      %5278 = vmatpush1.msra.mxu0 0.0
      %5279 = vmatprep.subr.mxu0 0.0
      %5280 = vmatpush1.msra.mxu0 0.0
      %5281 = vmatprep.subr.mxu0 0.0
      %5282 = vmatpush1.msra.mxu0 0.0
      %5283 = vmatprep.subr.mxu0 0.0
      %5284 = vmatpush1.msra.mxu0 0.0
      %5285 = vmatprep.subr.mxu0 0.0
      %5286 = vmatpush1.msra.mxu0 0.0
      %5287 = vmatprep.subr.mxu0 0.0
      %5288 = vmatpush1.msra.mxu0 0.0
      %5289 = vmatprep.mubr.f32.mxu0 0.0
      %5290 = vmatmul.mubr.f32.gmra.mrb[0].mxu0 %v5010
      %v5291 = vpop.f32.mrb[0].mxu0
      %v5292 = vadd.f32 0.0, %v5291
      %v5293 = vpop.f32.mrb[0].mxu0
      %v5294 = vadd.f32 0.0, %v5293
      %5295 = vdwg.mxu0
      %v5296 = vadd.f32 %v4964, %v5079
      %v5297 = vadd.f32 %v4965, %v5081
      %v5298 = vadd.f32 %v4966, %v5150
      %v5299 = vadd.f32 %v4967, %v5152
      %v5300 = vadd.f32 %v4968, %v5221
      %v5301 = vadd.f32 %v4969, %v5223
      %v5302 = vadd.f32 %v4970, %v5292
      %v5303 = vadd.f32 %v4971, %v5294
      %s5304 = scalar_lea.vmem %s2, 120
      %v5305 = vld [vmem:[%s5304] sm:$0xff]
      %5306 = vrot.lane.b32.xlu0 %v640, 8
      %v5307 = vpop.permute.xlu0 %5306
      %5308 = vrot.lane.b32.xlu0 %v641, 8
      %v5309 = vpop.permute.xlu0 %5308
      %5310 = vrot.lane.b32.xlu0 %v642, 8
      %v5311 = vpop.permute.xlu0 %5310
      %5312 = vrot.lane.b32.xlu0 %v643, 8
      %v5313 = vpop.permute.xlu0 %5312
      %5314 = vrot.lane.b32.xlu0 %v644, 8
      %v5315 = vpop.permute.xlu0 %5314
      %5316 = vrot.lane.b32.xlu0 %v645, 8
      %v5317 = vpop.permute.xlu0 %5316
      %5318 = vrot.lane.b32.xlu0 %v646, 8
      %v5319 = vpop.permute.xlu0 %5318
      %5320 = vrot.lane.b32.xlu0 %v647, 8
      %v5321 = vpop.permute.xlu0 %5320
      %5322 = vrot.lane.b32.xlu0 %v648, 8
      %v5323 = vpop.permute.xlu0 %5322
      %v5324 = vsel %vm337, %v5307, %v5309
      %v5325 = vsel %vm337, %v5309, %v5311
      %v5326 = vsel %vm337, %v5311, %v5313
      %v5327 = vsel %vm337, %v5313, %v5315
      %v5328 = vsel %vm337, %v5315, %v5317
      %v5329 = vsel %vm337, %v5317, %v5319
      %v5330 = vsel %vm337, %v5319, %v5321
      %v5331 = vsel %vm337, %v5321, %v5323
      %v5341 = vsel %vm337, %v5305, 0
      %5343 = vmatprep.subr.mxu0 %v5325
      %5344 = vmatpush1.msra.mxu0 %v5324
      %5345 = vmatprep.subr.mxu0 0.0
      %5346 = vmatpush1.msra.mxu0 0.0
      %5347 = vmatprep.subr.mxu0 0.0
      %5348 = vmatpush1.msra.mxu0 0.0
      %5349 = vmatprep.subr.mxu0 0.0
      %5350 = vmatpush1.msra.mxu0 0.0
      %5351 = vmatprep.subr.mxu0 0.0
      %5352 = vmatpush1.msra.mxu0 0.0
      %5353 = vmatprep.subr.mxu0 0.0
      %5354 = vmatpush1.msra.mxu0 0.0
      %5355 = vmatprep.subr.mxu0 0.0
      %5356 = vmatpush1.msra.mxu0 0.0
      %5357 = vmatprep.subr.mxu0 0.0
      %5358 = vmatpush1.msra.mxu0 0.0
      %5359 = vmatprep.subr.mxu0 0.0
      %5360 = vmatpush1.msra.mxu0 0.0
      %5361 = vmatprep.subr.mxu0 0.0
      %5362 = vmatpush1.msra.mxu0 0.0
      %5363 = vmatprep.subr.mxu0 0.0
      %5364 = vmatpush1.msra.mxu0 0.0
      %5365 = vmatprep.subr.mxu0 0.0
      %5366 = vmatpush1.msra.mxu0 0.0
      %5367 = vmatprep.subr.mxu0 0.0
      %5368 = vmatpush1.msra.mxu0 0.0
      %5369 = vmatprep.subr.mxu0 0.0
      %5370 = vmatpush1.msra.mxu0 0.0
      %5371 = vmatprep.subr.mxu0 0.0
      %5372 = vmatpush1.msra.mxu0 0.0
      %5373 = vmatprep.subr.mxu0 0.0
      %5374 = vmatpush1.msra.mxu0 0.0
      %5375 = vmatprep.subr.mxu0 0.0
      %5376 = vmatpush1.msra.mxu0 0.0
      %5377 = vmatprep.subr.mxu0 0.0
      %5378 = vmatpush1.msra.mxu0 0.0
      %5379 = vmatprep.subr.mxu0 0.0
      %5380 = vmatpush1.msra.mxu0 0.0
      %5381 = vmatprep.subr.mxu0 0.0
      %5382 = vmatpush1.msra.mxu0 0.0
      %5383 = vmatprep.subr.mxu0 0.0
      %5384 = vmatpush1.msra.mxu0 0.0
      %5385 = vmatprep.subr.mxu0 0.0
      %5386 = vmatpush1.msra.mxu0 0.0
      %5387 = vmatprep.subr.mxu0 0.0
      %5388 = vmatpush1.msra.mxu0 0.0
      %5389 = vmatprep.subr.mxu0 0.0
      %5390 = vmatpush1.msra.mxu0 0.0
      %5391 = vmatprep.subr.mxu0 0.0
      %5392 = vmatpush1.msra.mxu0 0.0
      %5393 = vmatprep.subr.mxu0 0.0
      %5394 = vmatpush1.msra.mxu0 0.0
      %5395 = vmatprep.subr.mxu0 0.0
      %5396 = vmatpush1.msra.mxu0 0.0
      %5397 = vmatprep.subr.mxu0 0.0
      %5398 = vmatpush1.msra.mxu0 0.0
      %5399 = vmatprep.subr.mxu0 0.0
      %5400 = vmatpush1.msra.mxu0 0.0
      %5401 = vmatprep.subr.mxu0 0.0
      %5402 = vmatpush1.msra.mxu0 0.0
      %5403 = vmatprep.subr.mxu0 0.0
      %5404 = vmatpush1.msra.mxu0 0.0
      %5405 = vmatprep.subr.mxu0 0.0
      %5406 = vmatpush1.msra.mxu0 0.0
      %5407 = vmatprep.mubr.f32.mxu0 0.0
      %5408 = vmatmul.mubr.f32.gmra.mrb[0].mxu0 %v5341
      %v5409 = vpop.f32.mrb[0].mxu0
      %v5410 = vadd.f32 0.0, %v5409
      %v5411 = vpop.f32.mrb[0].mxu0
      %v5412 = vadd.f32 0.0, %v5411
      %5413 = vdwg.mxu0
      %5414 = vmatprep.subr.mxu0 %v5327
      %5415 = vmatpush1.msra.mxu0 %v5326
      %5416 = vmatprep.subr.mxu0 0.0
      %5417 = vmatpush1.msra.mxu0 0.0
      %5418 = vmatprep.subr.mxu0 0.0
      %5419 = vmatpush1.msra.mxu0 0.0
      %5420 = vmatprep.subr.mxu0 0.0
      %5421 = vmatpush1.msra.mxu0 0.0
      %5422 = vmatprep.subr.mxu0 0.0
      %5423 = vmatpush1.msra.mxu0 0.0
      %5424 = vmatprep.subr.mxu0 0.0
      %5425 = vmatpush1.msra.mxu0 0.0
      %5426 = vmatprep.subr.mxu0 0.0
      %5427 = vmatpush1.msra.mxu0 0.0
      %5428 = vmatprep.subr.mxu0 0.0
      %5429 = vmatpush1.msra.mxu0 0.0
      %5430 = vmatprep.subr.mxu0 0.0
      %5431 = vmatpush1.msra.mxu0 0.0
      %5432 = vmatprep.subr.mxu0 0.0
      %5433 = vmatpush1.msra.mxu0 0.0
      %5434 = vmatprep.subr.mxu0 0.0
      %5435 = vmatpush1.msra.mxu0 0.0
      %5436 = vmatprep.subr.mxu0 0.0
      %5437 = vmatpush1.msra.mxu0 0.0
      %5438 = vmatprep.subr.mxu0 0.0
      %5439 = vmatpush1.msra.mxu0 0.0
      %5440 = vmatprep.subr.mxu0 0.0
      %5441 = vmatpush1.msra.mxu0 0.0
      %5442 = vmatprep.subr.mxu0 0.0
      %5443 = vmatpush1.msra.mxu0 0.0
      %5444 = vmatprep.subr.mxu0 0.0
      %5445 = vmatpush1.msra.mxu0 0.0
      %5446 = vmatprep.subr.mxu0 0.0
      %5447 = vmatpush1.msra.mxu0 0.0
      %5448 = vmatprep.subr.mxu0 0.0
      %5449 = vmatpush1.msra.mxu0 0.0
      %5450 = vmatprep.subr.mxu0 0.0
      %5451 = vmatpush1.msra.mxu0 0.0
      %5452 = vmatprep.subr.mxu0 0.0
      %5453 = vmatpush1.msra.mxu0 0.0
      %5454 = vmatprep.subr.mxu0 0.0
      %5455 = vmatpush1.msra.mxu0 0.0
      %5456 = vmatprep.subr.mxu0 0.0
      %5457 = vmatpush1.msra.mxu0 0.0
      %5458 = vmatprep.subr.mxu0 0.0
      %5459 = vmatpush1.msra.mxu0 0.0
      %5460 = vmatprep.subr.mxu0 0.0
      %5461 = vmatpush1.msra.mxu0 0.0
      %5462 = vmatprep.subr.mxu0 0.0
      %5463 = vmatpush1.msra.mxu0 0.0
      %5464 = vmatprep.subr.mxu0 0.0
      %5465 = vmatpush1.msra.mxu0 0.0
      %5466 = vmatprep.subr.mxu0 0.0
      %5467 = vmatpush1.msra.mxu0 0.0
      %5468 = vmatprep.subr.mxu0 0.0
      %5469 = vmatpush1.msra.mxu0 0.0
      %5470 = vmatprep.subr.mxu0 0.0
      %5471 = vmatpush1.msra.mxu0 0.0
      %5472 = vmatprep.subr.mxu0 0.0
      %5473 = vmatpush1.msra.mxu0 0.0
      %5474 = vmatprep.subr.mxu0 0.0
      %5475 = vmatpush1.msra.mxu0 0.0
      %5476 = vmatprep.subr.mxu0 0.0
      %5477 = vmatpush1.msra.mxu0 0.0
      %5478 = vmatprep.mubr.f32.mxu0 0.0
      %5479 = vmatmul.mubr.f32.gmra.mrb[0].mxu0 %v5341
      %v5480 = vpop.f32.mrb[0].mxu0
      %v5481 = vadd.f32 0.0, %v5480
      %v5482 = vpop.f32.mrb[0].mxu0
      %v5483 = vadd.f32 0.0, %v5482
      %5484 = vdwg.mxu0
      %5485 = vmatprep.subr.mxu0 %v5329
      %5486 = vmatpush1.msra.mxu0 %v5328
      %5487 = vmatprep.subr.mxu0 0.0
      %5488 = vmatpush1.msra.mxu0 0.0
      %5489 = vmatprep.subr.mxu0 0.0
      %5490 = vmatpush1.msra.mxu0 0.0
      %5491 = vmatprep.subr.mxu0 0.0
      %5492 = vmatpush1.msra.mxu0 0.0
      %5493 = vmatprep.subr.mxu0 0.0
      %5494 = vmatpush1.msra.mxu0 0.0
      %5495 = vmatprep.subr.mxu0 0.0
      %5496 = vmatpush1.msra.mxu0 0.0
      %5497 = vmatprep.subr.mxu0 0.0
      %5498 = vmatpush1.msra.mxu0 0.0
      %5499 = vmatprep.subr.mxu0 0.0
      %5500 = vmatpush1.msra.mxu0 0.0
      %5501 = vmatprep.subr.mxu0 0.0
      %5502 = vmatpush1.msra.mxu0 0.0
      %5503 = vmatprep.subr.mxu0 0.0
      %5504 = vmatpush1.msra.mxu0 0.0
      %5505 = vmatprep.subr.mxu0 0.0
      %5506 = vmatpush1.msra.mxu0 0.0
      %5507 = vmatprep.subr.mxu0 0.0
      %5508 = vmatpush1.msra.mxu0 0.0
      %5509 = vmatprep.subr.mxu0 0.0
      %5510 = vmatpush1.msra.mxu0 0.0
      %5511 = vmatprep.subr.mxu0 0.0
      %5512 = vmatpush1.msra.mxu0 0.0
      %5513 = vmatprep.subr.mxu0 0.0
      %5514 = vmatpush1.msra.mxu0 0.0
      %5515 = vmatprep.subr.mxu0 0.0
      %5516 = vmatpush1.msra.mxu0 0.0
      %5517 = vmatprep.subr.mxu0 0.0
      %5518 = vmatpush1.msra.mxu0 0.0
      %5519 = vmatprep.subr.mxu0 0.0
      %5520 = vmatpush1.msra.mxu0 0.0
      %5521 = vmatprep.subr.mxu0 0.0
      %5522 = vmatpush1.msra.mxu0 0.0
      %5523 = vmatprep.subr.mxu0 0.0
      %5524 = vmatpush1.msra.mxu0 0.0
      %5525 = vmatprep.subr.mxu0 0.0
      %5526 = vmatpush1.msra.mxu0 0.0
      %5527 = vmatprep.subr.mxu0 0.0
      %5528 = vmatpush1.msra.mxu0 0.0
      %5529 = vmatprep.subr.mxu0 0.0
      %5530 = vmatpush1.msra.mxu0 0.0
      %5531 = vmatprep.subr.mxu0 0.0
      %5532 = vmatpush1.msra.mxu0 0.0
      %5533 = vmatprep.subr.mxu0 0.0
      %5534 = vmatpush1.msra.mxu0 0.0
      %5535 = vmatprep.subr.mxu0 0.0
      %5536 = vmatpush1.msra.mxu0 0.0
      %5537 = vmatprep.subr.mxu0 0.0
      %5538 = vmatpush1.msra.mxu0 0.0
      %5539 = vmatprep.subr.mxu0 0.0
      %5540 = vmatpush1.msra.mxu0 0.0
      %5541 = vmatprep.subr.mxu0 0.0
      %5542 = vmatpush1.msra.mxu0 0.0
      %5543 = vmatprep.subr.mxu0 0.0
      %5544 = vmatpush1.msra.mxu0 0.0
      %5545 = vmatprep.subr.mxu0 0.0
      %5546 = vmatpush1.msra.mxu0 0.0
      %5547 = vmatprep.subr.mxu0 0.0
      %5548 = vmatpush1.msra.mxu0 0.0
      %5549 = vmatprep.mubr.f32.mxu0 0.0
      %5550 = vmatmul.mubr.f32.gmra.mrb[0].mxu0 %v5341
      %v5551 = vpop.f32.mrb[0].mxu0
      %v5552 = vadd.f32 0.0, %v5551
      %v5553 = vpop.f32.mrb[0].mxu0
      %v5554 = vadd.f32 0.0, %v5553
      %5555 = vdwg.mxu0
      %5556 = vmatprep.subr.mxu0 %v5331
      %5557 = vmatpush1.msra.mxu0 %v5330
      %5558 = vmatprep.subr.mxu0 0.0
      %5559 = vmatpush1.msra.mxu0 0.0
      %5560 = vmatprep.subr.mxu0 0.0
      %5561 = vmatpush1.msra.mxu0 0.0
      %5562 = vmatprep.subr.mxu0 0.0
      %5563 = vmatpush1.msra.mxu0 0.0
      %5564 = vmatprep.subr.mxu0 0.0
      %5565 = vmatpush1.msra.mxu0 0.0
      %5566 = vmatprep.subr.mxu0 0.0
      %5567 = vmatpush1.msra.mxu0 0.0
      %5568 = vmatprep.subr.mxu0 0.0
      %5569 = vmatpush1.msra.mxu0 0.0
      %5570 = vmatprep.subr.mxu0 0.0
      %5571 = vmatpush1.msra.mxu0 0.0
      %5572 = vmatprep.subr.mxu0 0.0
      %5573 = vmatpush1.msra.mxu0 0.0
      %5574 = vmatprep.subr.mxu0 0.0
      %5575 = vmatpush1.msra.mxu0 0.0
      %5576 = vmatprep.subr.mxu0 0.0
      %5577 = vmatpush1.msra.mxu0 0.0
      %5578 = vmatprep.subr.mxu0 0.0
      %5579 = vmatpush1.msra.mxu0 0.0
      %5580 = vmatprep.subr.mxu0 0.0
      %5581 = vmatpush1.msra.mxu0 0.0
      %5582 = vmatprep.subr.mxu0 0.0
      %5583 = vmatpush1.msra.mxu0 0.0
      %5584 = vmatprep.subr.mxu0 0.0
      %5585 = vmatpush1.msra.mxu0 0.0
      %5586 = vmatprep.subr.mxu0 0.0
      %5587 = vmatpush1.msra.mxu0 0.0
      %5588 = vmatprep.subr.mxu0 0.0
      %5589 = vmatpush1.msra.mxu0 0.0
      %5590 = vmatprep.subr.mxu0 0.0
      %5591 = vmatpush1.msra.mxu0 0.0
      %5592 = vmatprep.subr.mxu0 0.0
      %5593 = vmatpush1.msra.mxu0 0.0
      %5594 = vmatprep.subr.mxu0 0.0
      %5595 = vmatpush1.msra.mxu0 0.0
      %5596 = vmatprep.subr.mxu0 0.0
      %5597 = vmatpush1.msra.mxu0 0.0
      %5598 = vmatprep.subr.mxu0 0.0
      %5599 = vmatpush1.msra.mxu0 0.0
      %5600 = vmatprep.subr.mxu0 0.0
      %5601 = vmatpush1.msra.mxu0 0.0
      %5602 = vmatprep.subr.mxu0 0.0
      %5603 = vmatpush1.msra.mxu0 0.0
      %5604 = vmatprep.subr.mxu0 0.0
      %5605 = vmatpush1.msra.mxu0 0.0
      %5606 = vmatprep.subr.mxu0 0.0
      %5607 = vmatpush1.msra.mxu0 0.0
      %5608 = vmatprep.subr.mxu0 0.0
      %5609 = vmatpush1.msra.mxu0 0.0
      %5610 = vmatprep.subr.mxu0 0.0
      %5611 = vmatpush1.msra.mxu0 0.0
      %5612 = vmatprep.subr.mxu0 0.0
      %5613 = vmatpush1.msra.mxu0 0.0
      %5614 = vmatprep.subr.mxu0 0.0
      %5615 = vmatpush1.msra.mxu0 0.0
      %5616 = vmatprep.subr.mxu0 0.0
      %5617 = vmatpush1.msra.mxu0 0.0
      %5618 = vmatprep.subr.mxu0 0.0
      %5619 = vmatpush1.msra.mxu0 0.0
      %5620 = vmatprep.mubr.f32.mxu0 0.0
      %5621 = vmatmul.mubr.f32.gmra.mrb[0].mxu0 %v5341
      %v5622 = vpop.f32.mrb[0].mxu0
      %v5623 = vadd.f32 0.0, %v5622
      %v5624 = vpop.f32.mrb[0].mxu0
      %v5625 = vadd.f32 0.0, %v5624
      %5626 = vdwg.mxu0
      %v5627 = vadd.f32 %v5296, %v5410
      %v5628 = vadd.f32 %v5297, %v5412
      %v5629 = vadd.f32 %v5298, %v5481
      %v5630 = vadd.f32 %v5299, %v5483
      %v5631 = vadd.f32 %v5300, %v5552
      %v5632 = vadd.f32 %v5301, %v5554
      %v5633 = vadd.f32 %v5302, %v5623
      %v5634 = vadd.f32 %v5303, %v5625
      %s5635 = scalar_lea.vmem %s2, 128
      %v5636 = vld [vmem:[%s5635] sm:$0xff]
      %5637 = vrot.lane.b32.xlu0 %v640, 7
      %v5638 = vpop.permute.xlu0 %5637
      %5639 = vrot.lane.b32.xlu0 %v641, 7
      %v5640 = vpop.permute.xlu0 %5639
      %5641 = vrot.lane.b32.xlu0 %v642, 7
      %v5642 = vpop.permute.xlu0 %5641
      %5643 = vrot.lane.b32.xlu0 %v643, 7
      %v5644 = vpop.permute.xlu0 %5643
      %5645 = vrot.lane.b32.xlu0 %v644, 7
      %v5646 = vpop.permute.xlu0 %5645
      %5647 = vrot.lane.b32.xlu0 %v645, 7
      %v5648 = vpop.permute.xlu0 %5647
      %5649 = vrot.lane.b32.xlu0 %v646, 7
      %v5650 = vpop.permute.xlu0 %5649
      %5651 = vrot.lane.b32.xlu0 %v647, 7
      %v5652 = vpop.permute.xlu0 %5651
      %5653 = vrot.lane.b32.xlu0 %v648, 7
      %v5654 = vpop.permute.xlu0 %5653
      %vm5655 = vcmask 56320
      %v5656 = vsel %vm5655, %v5638, %v5640
      %v5657 = vsel %vm5655, %v5640, %v5642
      %v5658 = vsel %vm5655, %v5642, %v5644
      %v5659 = vsel %vm5655, %v5644, %v5646
      %v5660 = vsel %vm5655, %v5646, %v5648
      %v5661 = vsel %vm5655, %v5648, %v5650
      %v5662 = vsel %vm5655, %v5650, %v5652
      %v5663 = vsel %vm5655, %v5652, %v5654
      %v5673 = vsel %vm337, %v5636, 0
      %5675 = vmatprep.subr.mxu0 %v5657
      %5676 = vmatpush1.msra.mxu0 %v5656
      %5677 = vmatprep.subr.mxu0 0.0
      %5678 = vmatpush1.msra.mxu0 0.0
      %5679 = vmatprep.subr.mxu0 0.0
      %5680 = vmatpush1.msra.mxu0 0.0
      %5681 = vmatprep.subr.mxu0 0.0
      %5682 = vmatpush1.msra.mxu0 0.0
      %5683 = vmatprep.subr.mxu0 0.0
      %5684 = vmatpush1.msra.mxu0 0.0
      %5685 = vmatprep.subr.mxu0 0.0
      %5686 = vmatpush1.msra.mxu0 0.0
      %5687 = vmatprep.subr.mxu0 0.0
      %5688 = vmatpush1.msra.mxu0 0.0
      %5689 = vmatprep.subr.mxu0 0.0
      %5690 = vmatpush1.msra.mxu0 0.0
      %5691 = vmatprep.subr.mxu0 0.0
      %5692 = vmatpush1.msra.mxu0 0.0
      %5693 = vmatprep.subr.mxu0 0.0
      %5694 = vmatpush1.msra.mxu0 0.0
      %5695 = vmatprep.subr.mxu0 0.0
      %5696 = vmatpush1.msra.mxu0 0.0
      %5697 = vmatprep.subr.mxu0 0.0
      %5698 = vmatpush1.msra.mxu0 0.0
      %5699 = vmatprep.subr.mxu0 0.0
      %5700 = vmatpush1.msra.mxu0 0.0
      %5701 = vmatprep.subr.mxu0 0.0
      %5702 = vmatpush1.msra.mxu0 0.0
      %5703 = vmatprep.subr.mxu0 0.0
      %5704 = vmatpush1.msra.mxu0 0.0
      %5705 = vmatprep.subr.mxu0 0.0
      %5706 = vmatpush1.msra.mxu0 0.0
      %5707 = vmatprep.subr.mxu0 0.0
      %5708 = vmatpush1.msra.mxu0 0.0
      %5709 = vmatprep.subr.mxu0 0.0
      %5710 = vmatpush1.msra.mxu0 0.0
      %5711 = vmatprep.subr.mxu0 0.0
      %5712 = vmatpush1.msra.mxu0 0.0
      %5713 = vmatprep.subr.mxu0 0.0
      %5714 = vmatpush1.msra.mxu0 0.0
      %5715 = vmatprep.subr.mxu0 0.0
      %5716 = vmatpush1.msra.mxu0 0.0
      %5717 = vmatprep.subr.mxu0 0.0
      %5718 = vmatpush1.msra.mxu0 0.0
      %5719 = vmatprep.subr.mxu0 0.0
      %5720 = vmatpush1.msra.mxu0 0.0
      %5721 = vmatprep.subr.mxu0 0.0
      %5722 = vmatpush1.msra.mxu0 0.0
      %5723 = vmatprep.subr.mxu0 0.0
      %5724 = vmatpush1.msra.mxu0 0.0
      %5725 = vmatprep.subr.mxu0 0.0
      %5726 = vmatpush1.msra.mxu0 0.0
      %5727 = vmatprep.subr.mxu0 0.0
      %5728 = vmatpush1.msra.mxu0 0.0
      %5729 = vmatprep.subr.mxu0 0.0
      %5730 = vmatpush1.msra.mxu0 0.0
      %5731 = vmatprep.subr.mxu0 0.0
      %5732 = vmatpush1.msra.mxu0 0.0
      %5733 = vmatprep.subr.mxu0 0.0
      %5734 = vmatpush1.msra.mxu0 0.0
      %5735 = vmatprep.subr.mxu0 0.0
      %5736 = vmatpush1.msra.mxu0 0.0
      %5737 = vmatprep.subr.mxu0 0.0
      %5738 = vmatpush1.msra.mxu0 0.0
      %5739 = vmatprep.mubr.f32.mxu0 0.0
      %5740 = vmatmul.mubr.f32.gmra.mrb[0].mxu0 %v5673
      %v5741 = vpop.f32.mrb[0].mxu0
      %v5742 = vadd.f32 0.0, %v5741
      %v5743 = vpop.f32.mrb[0].mxu0
      %v5744 = vadd.f32 0.0, %v5743
      %5745 = vdwg.mxu0
      %5746 = vmatprep.subr.mxu0 %v5659
      %5747 = vmatpush1.msra.mxu0 %v5658
      %5748 = vmatprep.subr.mxu0 0.0
      %5749 = vmatpush1.msra.mxu0 0.0
      %5750 = vmatprep.subr.mxu0 0.0
      %5751 = vmatpush1.msra.mxu0 0.0
      %5752 = vmatprep.subr.mxu0 0.0
      %5753 = vmatpush1.msra.mxu0 0.0
      %5754 = vmatprep.subr.mxu0 0.0
      %5755 = vmatpush1.msra.mxu0 0.0
      %5756 = vmatprep.subr.mxu0 0.0
      %5757 = vmatpush1.msra.mxu0 0.0
      %5758 = vmatprep.subr.mxu0 0.0
      %5759 = vmatpush1.msra.mxu0 0.0
      %5760 = vmatprep.subr.mxu0 0.0
      %5761 = vmatpush1.msra.mxu0 0.0
      %5762 = vmatprep.subr.mxu0 0.0
      %5763 = vmatpush1.msra.mxu0 0.0
      %5764 = vmatprep.subr.mxu0 0.0
      %5765 = vmatpush1.msra.mxu0 0.0
      %5766 = vmatprep.subr.mxu0 0.0
      %5767 = vmatpush1.msra.mxu0 0.0
      %5768 = vmatprep.subr.mxu0 0.0
      %5769 = vmatpush1.msra.mxu0 0.0
      %5770 = vmatprep.subr.mxu0 0.0
      %5771 = vmatpush1.msra.mxu0 0.0
      %5772 = vmatprep.subr.mxu0 0.0
      %5773 = vmatpush1.msra.mxu0 0.0
      %5774 = vmatprep.subr.mxu0 0.0
      %5775 = vmatpush1.msra.mxu0 0.0
      %5776 = vmatprep.subr.mxu0 0.0
      %5777 = vmatpush1.msra.mxu0 0.0
      %5778 = vmatprep.subr.mxu0 0.0
      %5779 = vmatpush1.msra.mxu0 0.0
      %5780 = vmatprep.subr.mxu0 0.0
      %5781 = vmatpush1.msra.mxu0 0.0
      %5782 = vmatprep.subr.mxu0 0.0
      %5783 = vmatpush1.msra.mxu0 0.0
      %5784 = vmatprep.subr.mxu0 0.0
      %5785 = vmatpush1.msra.mxu0 0.0
      %5786 = vmatprep.subr.mxu0 0.0
      %5787 = vmatpush1.msra.mxu0 0.0
      %5788 = vmatprep.subr.mxu0 0.0
      %5789 = vmatpush1.msra.mxu0 0.0
      %5790 = vmatprep.subr.mxu0 0.0
      %5791 = vmatpush1.msra.mxu0 0.0
      %5792 = vmatprep.subr.mxu0 0.0
      %5793 = vmatpush1.msra.mxu0 0.0
      %5794 = vmatprep.subr.mxu0 0.0
      %5795 = vmatpush1.msra.mxu0 0.0
      %5796 = vmatprep.subr.mxu0 0.0
      %5797 = vmatpush1.msra.mxu0 0.0
      %5798 = vmatprep.subr.mxu0 0.0
      %5799 = vmatpush1.msra.mxu0 0.0
      %5800 = vmatprep.subr.mxu0 0.0
      %5801 = vmatpush1.msra.mxu0 0.0
      %5802 = vmatprep.subr.mxu0 0.0
      %5803 = vmatpush1.msra.mxu0 0.0
      %5804 = vmatprep.subr.mxu0 0.0
      %5805 = vmatpush1.msra.mxu0 0.0
      %5806 = vmatprep.subr.mxu0 0.0
      %5807 = vmatpush1.msra.mxu0 0.0
      %5808 = vmatprep.subr.mxu0 0.0
      %5809 = vmatpush1.msra.mxu0 0.0
      %5810 = vmatprep.mubr.f32.mxu0 0.0
      %5811 = vmatmul.mubr.f32.gmra.mrb[0].mxu0 %v5673
      %v5812 = vpop.f32.mrb[0].mxu0
      %v5813 = vadd.f32 0.0, %v5812
      %v5814 = vpop.f32.mrb[0].mxu0
      %v5815 = vadd.f32 0.0, %v5814
      %5816 = vdwg.mxu0
      %5817 = vmatprep.subr.mxu0 %v5661
      %5818 = vmatpush1.msra.mxu0 %v5660
      %5819 = vmatprep.subr.mxu0 0.0
      %5820 = vmatpush1.msra.mxu0 0.0
      %5821 = vmatprep.subr.mxu0 0.0
      %5822 = vmatpush1.msra.mxu0 0.0
      %5823 = vmatprep.subr.mxu0 0.0
      %5824 = vmatpush1.msra.mxu0 0.0
      %5825 = vmatprep.subr.mxu0 0.0
      %5826 = vmatpush1.msra.mxu0 0.0
      %5827 = vmatprep.subr.mxu0 0.0
      %5828 = vmatpush1.msra.mxu0 0.0
      %5829 = vmatprep.subr.mxu0 0.0
      %5830 = vmatpush1.msra.mxu0 0.0
      %5831 = vmatprep.subr.mxu0 0.0
      %5832 = vmatpush1.msra.mxu0 0.0
      %5833 = vmatprep.subr.mxu0 0.0
      %5834 = vmatpush1.msra.mxu0 0.0
      %5835 = vmatprep.subr.mxu0 0.0
      %5836 = vmatpush1.msra.mxu0 0.0
      %5837 = vmatprep.subr.mxu0 0.0
      %5838 = vmatpush1.msra.mxu0 0.0
      %5839 = vmatprep.subr.mxu0 0.0
      %5840 = vmatpush1.msra.mxu0 0.0
      %5841 = vmatprep.subr.mxu0 0.0
      %5842 = vmatpush1.msra.mxu0 0.0
      %5843 = vmatprep.subr.mxu0 0.0
      %5844 = vmatpush1.msra.mxu0 0.0
      %5845 = vmatprep.subr.mxu0 0.0
      %5846 = vmatpush1.msra.mxu0 0.0
      %5847 = vmatprep.subr.mxu0 0.0
      %5848 = vmatpush1.msra.mxu0 0.0
      %5849 = vmatprep.subr.mxu0 0.0
      %5850 = vmatpush1.msra.mxu0 0.0
      %5851 = vmatprep.subr.mxu0 0.0
      %5852 = vmatpush1.msra.mxu0 0.0
      %5853 = vmatprep.subr.mxu0 0.0
      %5854 = vmatpush1.msra.mxu0 0.0
      %5855 = vmatprep.subr.mxu0 0.0
      %5856 = vmatpush1.msra.mxu0 0.0
      %5857 = vmatprep.subr.mxu0 0.0
      %5858 = vmatpush1.msra.mxu0 0.0
      %5859 = vmatprep.subr.mxu0 0.0
      %5860 = vmatpush1.msra.mxu0 0.0
      %5861 = vmatprep.subr.mxu0 0.0
      %5862 = vmatpush1.msra.mxu0 0.0
      %5863 = vmatprep.subr.mxu0 0.0
      %5864 = vmatpush1.msra.mxu0 0.0
      %5865 = vmatprep.subr.mxu0 0.0
      %5866 = vmatpush1.msra.mxu0 0.0
      %5867 = vmatprep.subr.mxu0 0.0
      %5868 = vmatpush1.msra.mxu0 0.0
      %5869 = vmatprep.subr.mxu0 0.0
      %5870 = vmatpush1.msra.mxu0 0.0
      %5871 = vmatprep.subr.mxu0 0.0
      %5872 = vmatpush1.msra.mxu0 0.0
      %5873 = vmatprep.subr.mxu0 0.0
      %5874 = vmatpush1.msra.mxu0 0.0
      %5875 = vmatprep.subr.mxu0 0.0
      %5876 = vmatpush1.msra.mxu0 0.0
      %5877 = vmatprep.subr.mxu0 0.0
      %5878 = vmatpush1.msra.mxu0 0.0
      %5879 = vmatprep.subr.mxu0 0.0
      %5880 = vmatpush1.msra.mxu0 0.0
      %5881 = vmatprep.mubr.f32.mxu0 0.0
      %5882 = vmatmul.mubr.f32.gmra.mrb[0].mxu0 %v5673
      %v5883 = vpop.f32.mrb[0].mxu0
      %v5884 = vadd.f32 0.0, %v5883
      %v5885 = vpop.f32.mrb[0].mxu0
      %v5886 = vadd.f32 0.0, %v5885
      %5887 = vdwg.mxu0
      %5888 = vmatprep.subr.mxu0 %v5663
      %5889 = vmatpush1.msra.mxu0 %v5662
      %5890 = vmatprep.subr.mxu0 0.0
      %5891 = vmatpush1.msra.mxu0 0.0
      %5892 = vmatprep.subr.mxu0 0.0
      %5893 = vmatpush1.msra.mxu0 0.0
      %5894 = vmatprep.subr.mxu0 0.0
      %5895 = vmatpush1.msra.mxu0 0.0
      %5896 = vmatprep.subr.mxu0 0.0
      %5897 = vmatpush1.msra.mxu0 0.0
      %5898 = vmatprep.subr.mxu0 0.0
      %5899 = vmatpush1.msra.mxu0 0.0
      %5900 = vmatprep.subr.mxu0 0.0
      %5901 = vmatpush1.msra.mxu0 0.0
      %5902 = vmatprep.subr.mxu0 0.0
      %5903 = vmatpush1.msra.mxu0 0.0
      %5904 = vmatprep.subr.mxu0 0.0
      %5905 = vmatpush1.msra.mxu0 0.0
      %5906 = vmatprep.subr.mxu0 0.0
      %5907 = vmatpush1.msra.mxu0 0.0
      %5908 = vmatprep.subr.mxu0 0.0
      %5909 = vmatpush1.msra.mxu0 0.0
      %5910 = vmatprep.subr.mxu0 0.0
      %5911 = vmatpush1.msra.mxu0 0.0
      %5912 = vmatprep.subr.mxu0 0.0
      %5913 = vmatpush1.msra.mxu0 0.0
      %5914 = vmatprep.subr.mxu0 0.0
      %5915 = vmatpush1.msra.mxu0 0.0
      %5916 = vmatprep.subr.mxu0 0.0
      %5917 = vmatpush1.msra.mxu0 0.0
      %5918 = vmatprep.subr.mxu0 0.0
      %5919 = vmatpush1.msra.mxu0 0.0
      %5920 = vmatprep.subr.mxu0 0.0
      %5921 = vmatpush1.msra.mxu0 0.0
      %5922 = vmatprep.subr.mxu0 0.0
      %5923 = vmatpush1.msra.mxu0 0.0
      %5924 = vmatprep.subr.mxu0 0.0
      %5925 = vmatpush1.msra.mxu0 0.0
      %5926 = vmatprep.subr.mxu0 0.0
      %5927 = vmatpush1.msra.mxu0 0.0
      %5928 = vmatprep.subr.mxu0 0.0
      %5929 = vmatpush1.msra.mxu0 0.0
      %5930 = vmatprep.subr.mxu0 0.0
      %5931 = vmatpush1.msra.mxu0 0.0
      %5932 = vmatprep.subr.mxu0 0.0
      %5933 = vmatpush1.msra.mxu0 0.0
      %5934 = vmatprep.subr.mxu0 0.0
      %5935 = vmatpush1.msra.mxu0 0.0
      %5936 = vmatprep.subr.mxu0 0.0
      %5937 = vmatpush1.msra.mxu0 0.0
      %5938 = vmatprep.subr.mxu0 0.0
      %5939 = vmatpush1.msra.mxu0 0.0
      %5940 = vmatprep.subr.mxu0 0.0
      %5941 = vmatpush1.msra.mxu0 0.0
      %5942 = vmatprep.subr.mxu0 0.0
      %5943 = vmatpush1.msra.mxu0 0.0
      %5944 = vmatprep.subr.mxu0 0.0
      %5945 = vmatpush1.msra.mxu0 0.0
      %5946 = vmatprep.subr.mxu0 0.0
      %5947 = vmatpush1.msra.mxu0 0.0
      %5948 = vmatprep.subr.mxu0 0.0
      %5949 = vmatpush1.msra.mxu0 0.0
      %5950 = vmatprep.subr.mxu0 0.0
      %5951 = vmatpush1.msra.mxu0 0.0
      %5952 = vmatprep.mubr.f32.mxu0 0.0
      %5953 = vmatmul.mubr.f32.gmra.mrb[0].mxu0 %v5673
      %v5954 = vpop.f32.mrb[0].mxu0
      %v5955 = vadd.f32 0.0, %v5954
      %v5956 = vpop.f32.mrb[0].mxu0
      %v5957 = vadd.f32 0.0, %v5956
      %5958 = vdwg.mxu0
      %v5959 = vadd.f32 %v5627, %v5742
      %v5960 = vadd.f32 %v5628, %v5744
      %v5961 = vadd.f32 %v5629, %v5813
      %v5962 = vadd.f32 %v5630, %v5815
      %v5963 = vadd.f32 %v5631, %v5884
      %v5964 = vadd.f32 %v5632, %v5886
      %v5965 = vadd.f32 %v5633, %v5955
      %v5966 = vadd.f32 %v5634, %v5957
      %s5967 = scalar_lea.vmem %s2, 136
      %v5968 = vld [vmem:[%s5967] sm:$0xff]
      %5969 = vrot.lane.b32.xlu0 %v640, 6
      %v5970 = vpop.permute.xlu0 %5969
      %5971 = vrot.lane.b32.xlu0 %v641, 6
      %v5972 = vpop.permute.xlu0 %5971
      %5973 = vrot.lane.b32.xlu0 %v642, 6
      %v5974 = vpop.permute.xlu0 %5973
      %5975 = vrot.lane.b32.xlu0 %v643, 6
      %v5976 = vpop.permute.xlu0 %5975
      %5977 = vrot.lane.b32.xlu0 %v644, 6
      %v5978 = vpop.permute.xlu0 %5977
      %5979 = vrot.lane.b32.xlu0 %v645, 6
      %v5980 = vpop.permute.xlu0 %5979
      %5981 = vrot.lane.b32.xlu0 %v646, 6
      %v5982 = vpop.permute.xlu0 %5981
      %5983 = vrot.lane.b32.xlu0 %v647, 6
      %v5984 = vpop.permute.xlu0 %5983
      %5985 = vrot.lane.b32.xlu0 %v648, 6
      %v5986 = vpop.permute.xlu0 %5985
      %vm5987 = vcmask 48128
      %v5988 = vsel %vm5987, %v5970, %v5972
      %v5989 = vsel %vm5987, %v5972, %v5974
      %v5990 = vsel %vm5987, %v5974, %v5976
      %v5991 = vsel %vm5987, %v5976, %v5978
      %v5992 = vsel %vm5987, %v5978, %v5980
      %v5993 = vsel %vm5987, %v5980, %v5982
      %v5994 = vsel %vm5987, %v5982, %v5984
      %v5995 = vsel %vm5987, %v5984, %v5986
      %v6005 = vsel %vm337, %v5968, 0
      %6007 = vmatprep.subr.mxu0 %v5989
      %6008 = vmatpush1.msra.mxu0 %v5988
      %6009 = vmatprep.subr.mxu0 0.0
      %6010 = vmatpush1.msra.mxu0 0.0
      %6011 = vmatprep.subr.mxu0 0.0
      %6012 = vmatpush1.msra.mxu0 0.0
      %6013 = vmatprep.subr.mxu0 0.0
      %6014 = vmatpush1.msra.mxu0 0.0
      %6015 = vmatprep.subr.mxu0 0.0
      %6016 = vmatpush1.msra.mxu0 0.0
      %6017 = vmatprep.subr.mxu0 0.0
      %6018 = vmatpush1.msra.mxu0 0.0
      %6019 = vmatprep.subr.mxu0 0.0
      %6020 = vmatpush1.msra.mxu0 0.0
      %6021 = vmatprep.subr.mxu0 0.0
      %6022 = vmatpush1.msra.mxu0 0.0
      %6023 = vmatprep.subr.mxu0 0.0
      %6024 = vmatpush1.msra.mxu0 0.0
      %6025 = vmatprep.subr.mxu0 0.0
      %6026 = vmatpush1.msra.mxu0 0.0
      %6027 = vmatprep.subr.mxu0 0.0
      %6028 = vmatpush1.msra.mxu0 0.0
      %6029 = vmatprep.subr.mxu0 0.0
      %6030 = vmatpush1.msra.mxu0 0.0
      %6031 = vmatprep.subr.mxu0 0.0
      %6032 = vmatpush1.msra.mxu0 0.0
      %6033 = vmatprep.subr.mxu0 0.0
      %6034 = vmatpush1.msra.mxu0 0.0
      %6035 = vmatprep.subr.mxu0 0.0
      %6036 = vmatpush1.msra.mxu0 0.0
      %6037 = vmatprep.subr.mxu0 0.0
      %6038 = vmatpush1.msra.mxu0 0.0
      %6039 = vmatprep.subr.mxu0 0.0
      %6040 = vmatpush1.msra.mxu0 0.0
      %6041 = vmatprep.subr.mxu0 0.0
      %6042 = vmatpush1.msra.mxu0 0.0
      %6043 = vmatprep.subr.mxu0 0.0
      %6044 = vmatpush1.msra.mxu0 0.0
      %6045 = vmatprep.subr.mxu0 0.0
      %6046 = vmatpush1.msra.mxu0 0.0
      %6047 = vmatprep.subr.mxu0 0.0
      %6048 = vmatpush1.msra.mxu0 0.0
      %6049 = vmatprep.subr.mxu0 0.0
      %6050 = vmatpush1.msra.mxu0 0.0
      %6051 = vmatprep.subr.mxu0 0.0
      %6052 = vmatpush1.msra.mxu0 0.0
      %6053 = vmatprep.subr.mxu0 0.0
      %6054 = vmatpush1.msra.mxu0 0.0
      %6055 = vmatprep.subr.mxu0 0.0
      %6056 = vmatpush1.msra.mxu0 0.0
      %6057 = vmatprep.subr.mxu0 0.0
      %6058 = vmatpush1.msra.mxu0 0.0
      %6059 = vmatprep.subr.mxu0 0.0
      %6060 = vmatpush1.msra.mxu0 0.0
      %6061 = vmatprep.subr.mxu0 0.0
      %6062 = vmatpush1.msra.mxu0 0.0
      %6063 = vmatprep.subr.mxu0 0.0
      %6064 = vmatpush1.msra.mxu0 0.0
      %6065 = vmatprep.subr.mxu0 0.0
      %6066 = vmatpush1.msra.mxu0 0.0
      %6067 = vmatprep.subr.mxu0 0.0
      %6068 = vmatpush1.msra.mxu0 0.0
      %6069 = vmatprep.subr.mxu0 0.0
      %6070 = vmatpush1.msra.mxu0 0.0
      %6071 = vmatprep.mubr.f32.mxu0 0.0
      %6072 = vmatmul.mubr.f32.gmra.mrb[0].mxu0 %v6005
      %v6073 = vpop.f32.mrb[0].mxu0
      %v6074 = vadd.f32 0.0, %v6073
      %v6075 = vpop.f32.mrb[0].mxu0
      %v6076 = vadd.f32 0.0, %v6075
      %6077 = vdwg.mxu0
      %6078 = vmatprep.subr.mxu0 %v5991
      %6079 = vmatpush1.msra.mxu0 %v5990
      %6080 = vmatprep.subr.mxu0 0.0
      %6081 = vmatpush1.msra.mxu0 0.0
      %6082 = vmatprep.subr.mxu0 0.0
      %6083 = vmatpush1.msra.mxu0 0.0
      %6084 = vmatprep.subr.mxu0 0.0
      %6085 = vmatpush1.msra.mxu0 0.0
      %6086 = vmatprep.subr.mxu0 0.0
      %6087 = vmatpush1.msra.mxu0 0.0
      %6088 = vmatprep.subr.mxu0 0.0
      %6089 = vmatpush1.msra.mxu0 0.0
      %6090 = vmatprep.subr.mxu0 0.0
      %6091 = vmatpush1.msra.mxu0 0.0
      %6092 = vmatprep.subr.mxu0 0.0
      %6093 = vmatpush1.msra.mxu0 0.0
      %6094 = vmatprep.subr.mxu0 0.0
      %6095 = vmatpush1.msra.mxu0 0.0
      %6096 = vmatprep.subr.mxu0 0.0
      %6097 = vmatpush1.msra.mxu0 0.0
      %6098 = vmatprep.subr.mxu0 0.0
      %6099 = vmatpush1.msra.mxu0 0.0
      %6100 = vmatprep.subr.mxu0 0.0
      %6101 = vmatpush1.msra.mxu0 0.0
      %6102 = vmatprep.subr.mxu0 0.0
      %6103 = vmatpush1.msra.mxu0 0.0
      %6104 = vmatprep.subr.mxu0 0.0
      %6105 = vmatpush1.msra.mxu0 0.0
      %6106 = vmatprep.subr.mxu0 0.0
      %6107 = vmatpush1.msra.mxu0 0.0
      %6108 = vmatprep.subr.mxu0 0.0
      %6109 = vmatpush1.msra.mxu0 0.0
      %6110 = vmatprep.subr.mxu0 0.0
      %6111 = vmatpush1.msra.mxu0 0.0
      %6112 = vmatprep.subr.mxu0 0.0
      %6113 = vmatpush1.msra.mxu0 0.0
      %6114 = vmatprep.subr.mxu0 0.0
      %6115 = vmatpush1.msra.mxu0 0.0
      %6116 = vmatprep.subr.mxu0 0.0
      %6117 = vmatpush1.msra.mxu0 0.0
      %6118 = vmatprep.subr.mxu0 0.0
      %6119 = vmatpush1.msra.mxu0 0.0
      %6120 = vmatprep.subr.mxu0 0.0
      %6121 = vmatpush1.msra.mxu0 0.0
      %6122 = vmatprep.subr.mxu0 0.0
      %6123 = vmatpush1.msra.mxu0 0.0
      %6124 = vmatprep.subr.mxu0 0.0
      %6125 = vmatpush1.msra.mxu0 0.0
      %6126 = vmatprep.subr.mxu0 0.0
      %6127 = vmatpush1.msra.mxu0 0.0
      %6128 = vmatprep.subr.mxu0 0.0
      %6129 = vmatpush1.msra.mxu0 0.0
      %6130 = vmatprep.subr.mxu0 0.0
      %6131 = vmatpush1.msra.mxu0 0.0
      %6132 = vmatprep.subr.mxu0 0.0
      %6133 = vmatpush1.msra.mxu0 0.0
      %6134 = vmatprep.subr.mxu0 0.0
      %6135 = vmatpush1.msra.mxu0 0.0
      %6136 = vmatprep.subr.mxu0 0.0
      %6137 = vmatpush1.msra.mxu0 0.0
      %6138 = vmatprep.subr.mxu0 0.0
      %6139 = vmatpush1.msra.mxu0 0.0
      %6140 = vmatprep.subr.mxu0 0.0
      %6141 = vmatpush1.msra.mxu0 0.0
      %6142 = vmatprep.mubr.f32.mxu0 0.0
      %6143 = vmatmul.mubr.f32.gmra.mrb[0].mxu0 %v6005
      %v6144 = vpop.f32.mrb[0].mxu0
      %v6145 = vadd.f32 0.0, %v6144
      %v6146 = vpop.f32.mrb[0].mxu0
      %v6147 = vadd.f32 0.0, %v6146
      %6148 = vdwg.mxu0
      %6149 = vmatprep.subr.mxu0 %v5993
      %6150 = vmatpush1.msra.mxu0 %v5992
      %6151 = vmatprep.subr.mxu0 0.0
      %6152 = vmatpush1.msra.mxu0 0.0
      %6153 = vmatprep.subr.mxu0 0.0
      %6154 = vmatpush1.msra.mxu0 0.0
      %6155 = vmatprep.subr.mxu0 0.0
      %6156 = vmatpush1.msra.mxu0 0.0
      %6157 = vmatprep.subr.mxu0 0.0
      %6158 = vmatpush1.msra.mxu0 0.0
      %6159 = vmatprep.subr.mxu0 0.0
      %6160 = vmatpush1.msra.mxu0 0.0
      %6161 = vmatprep.subr.mxu0 0.0
      %6162 = vmatpush1.msra.mxu0 0.0
      %6163 = vmatprep.subr.mxu0 0.0
      %6164 = vmatpush1.msra.mxu0 0.0
      %6165 = vmatprep.subr.mxu0 0.0
      %6166 = vmatpush1.msra.mxu0 0.0
      %6167 = vmatprep.subr.mxu0 0.0
      %6168 = vmatpush1.msra.mxu0 0.0
      %6169 = vmatprep.subr.mxu0 0.0
      %6170 = vmatpush1.msra.mxu0 0.0
      %6171 = vmatprep.subr.mxu0 0.0
      %6172 = vmatpush1.msra.mxu0 0.0
      %6173 = vmatprep.subr.mxu0 0.0
      %6174 = vmatpush1.msra.mxu0 0.0
      %6175 = vmatprep.subr.mxu0 0.0
      %6176 = vmatpush1.msra.mxu0 0.0
      %6177 = vmatprep.subr.mxu0 0.0
      %6178 = vmatpush1.msra.mxu0 0.0
      %6179 = vmatprep.subr.mxu0 0.0
      %6180 = vmatpush1.msra.mxu0 0.0
      %6181 = vmatprep.subr.mxu0 0.0
      %6182 = vmatpush1.msra.mxu0 0.0
      %6183 = vmatprep.subr.mxu0 0.0
      %6184 = vmatpush1.msra.mxu0 0.0
      %6185 = vmatprep.subr.mxu0 0.0
      %6186 = vmatpush1.msra.mxu0 0.0
      %6187 = vmatprep.subr.mxu0 0.0
      %6188 = vmatpush1.msra.mxu0 0.0
      %6189 = vmatprep.subr.mxu0 0.0
      %6190 = vmatpush1.msra.mxu0 0.0
      %6191 = vmatprep.subr.mxu0 0.0
      %6192 = vmatpush1.msra.mxu0 0.0
      %6193 = vmatprep.subr.mxu0 0.0
      %6194 = vmatpush1.msra.mxu0 0.0
      %6195 = vmatprep.subr.mxu0 0.0
      %6196 = vmatpush1.msra.mxu0 0.0
      %6197 = vmatprep.subr.mxu0 0.0
      %6198 = vmatpush1.msra.mxu0 0.0
      %6199 = vmatprep.subr.mxu0 0.0
      %6200 = vmatpush1.msra.mxu0 0.0
      %6201 = vmatprep.subr.mxu0 0.0
      %6202 = vmatpush1.msra.mxu0 0.0
      %6203 = vmatprep.subr.mxu0 0.0
      %6204 = vmatpush1.msra.mxu0 0.0
      %6205 = vmatprep.subr.mxu0 0.0
      %6206 = vmatpush1.msra.mxu0 0.0
      %6207 = vmatprep.subr.mxu0 0.0
      %6208 = vmatpush1.msra.mxu0 0.0
      %6209 = vmatprep.subr.mxu0 0.0
      %6210 = vmatpush1.msra.mxu0 0.0
      %6211 = vmatprep.subr.mxu0 0.0
      %6212 = vmatpush1.msra.mxu0 0.0
      %6213 = vmatprep.mubr.f32.mxu0 0.0
      %6214 = vmatmul.mubr.f32.gmra.mrb[0].mxu0 %v6005
      %v6215 = vpop.f32.mrb[0].mxu0
      %v6216 = vadd.f32 0.0, %v6215
      %v6217 = vpop.f32.mrb[0].mxu0
      %v6218 = vadd.f32 0.0, %v6217
      %6219 = vdwg.mxu0
      %6220 = vmatprep.subr.mxu0 %v5995
      %6221 = vmatpush1.msra.mxu0 %v5994
      %6222 = vmatprep.subr.mxu0 0.0
      %6223 = vmatpush1.msra.mxu0 0.0
      %6224 = vmatprep.subr.mxu0 0.0
      %6225 = vmatpush1.msra.mxu0 0.0
      %6226 = vmatprep.subr.mxu0 0.0
      %6227 = vmatpush1.msra.mxu0 0.0
      %6228 = vmatprep.subr.mxu0 0.0
      %6229 = vmatpush1.msra.mxu0 0.0
      %6230 = vmatprep.subr.mxu0 0.0
      %6231 = vmatpush1.msra.mxu0 0.0
      %6232 = vmatprep.subr.mxu0 0.0
      %6233 = vmatpush1.msra.mxu0 0.0
      %6234 = vmatprep.subr.mxu0 0.0
      %6235 = vmatpush1.msra.mxu0 0.0
      %6236 = vmatprep.subr.mxu0 0.0
      %6237 = vmatpush1.msra.mxu0 0.0
      %6238 = vmatprep.subr.mxu0 0.0
      %6239 = vmatpush1.msra.mxu0 0.0
      %6240 = vmatprep.subr.mxu0 0.0
      %6241 = vmatpush1.msra.mxu0 0.0
      %6242 = vmatprep.subr.mxu0 0.0
      %6243 = vmatpush1.msra.mxu0 0.0
      %6244 = vmatprep.subr.mxu0 0.0
      %6245 = vmatpush1.msra.mxu0 0.0
      %6246 = vmatprep.subr.mxu0 0.0
      %6247 = vmatpush1.msra.mxu0 0.0
      %6248 = vmatprep.subr.mxu0 0.0
      %6249 = vmatpush1.msra.mxu0 0.0
      %6250 = vmatprep.subr.mxu0 0.0
      %6251 = vmatpush1.msra.mxu0 0.0
      %6252 = vmatprep.subr.mxu0 0.0
      %6253 = vmatpush1.msra.mxu0 0.0
      %6254 = vmatprep.subr.mxu0 0.0
      %6255 = vmatpush1.msra.mxu0 0.0
      %6256 = vmatprep.subr.mxu0 0.0
      %6257 = vmatpush1.msra.mxu0 0.0
      %6258 = vmatprep.subr.mxu0 0.0
      %6259 = vmatpush1.msra.mxu0 0.0
      %6260 = vmatprep.subr.mxu0 0.0
      %6261 = vmatpush1.msra.mxu0 0.0
      %6262 = vmatprep.subr.mxu0 0.0
      %6263 = vmatpush1.msra.mxu0 0.0
      %6264 = vmatprep.subr.mxu0 0.0
      %6265 = vmatpush1.msra.mxu0 0.0
      %6266 = vmatprep.subr.mxu0 0.0
      %6267 = vmatpush1.msra.mxu0 0.0
      %6268 = vmatprep.subr.mxu0 0.0
      %6269 = vmatpush1.msra.mxu0 0.0
      %6270 = vmatprep.subr.mxu0 0.0
      %6271 = vmatpush1.msra.mxu0 0.0
      %6272 = vmatprep.subr.mxu0 0.0
      %6273 = vmatpush1.msra.mxu0 0.0
      %6274 = vmatprep.subr.mxu0 0.0
      %6275 = vmatpush1.msra.mxu0 0.0
      %6276 = vmatprep.subr.mxu0 0.0
      %6277 = vmatpush1.msra.mxu0 0.0
      %6278 = vmatprep.subr.mxu0 0.0
      %6279 = vmatpush1.msra.mxu0 0.0
      %6280 = vmatprep.subr.mxu0 0.0
      %6281 = vmatpush1.msra.mxu0 0.0
      %6282 = vmatprep.subr.mxu0 0.0
      %6283 = vmatpush1.msra.mxu0 0.0
      %6284 = vmatprep.mubr.f32.mxu0 0.0
      %6285 = vmatmul.mubr.f32.gmra.mrb[0].mxu0 %v6005
      %v6286 = vpop.f32.mrb[0].mxu0
      %v6287 = vadd.f32 0.0, %v6286
      %v6288 = vpop.f32.mrb[0].mxu0
      %v6289 = vadd.f32 0.0, %v6288
      %6290 = vdwg.mxu0
      %v6291 = vadd.f32 %v5959, %v6074
      %v6292 = vadd.f32 %v5960, %v6076
      %v6293 = vadd.f32 %v5961, %v6145
      %v6294 = vadd.f32 %v5962, %v6147
      %v6295 = vadd.f32 %v5963, %v6216
      %v6296 = vadd.f32 %v5964, %v6218
      %v6297 = vadd.f32 %v5965, %v6287
      %v6298 = vadd.f32 %v5966, %v6289
      %s6299 = scalar_lea.vmem %s2, 144
      %v6300 = vld [vmem:[%s6299] sm:$0xff]
      %v6301 = vld [vmem:[#allocation2 + $0x8] sm:$0xff]
      %v6302 = vld [vmem:[#allocation2 + $0x10] sm:$0xff]
      %v6303 = vld [vmem:[#allocation2 + $0x18] sm:$0xff]
      %v6304 = vld [vmem:[#allocation2 + $0x20] sm:$0xff]
      %v6305 = vld [vmem:[#allocation2 + $0x28] sm:$0xff]
      %v6306 = vld [vmem:[#allocation2 + $0x30] sm:$0xff]
      %v6307 = vld [vmem:[#allocation2 + $0x38] sm:$0xff]
      %v6308 = vld [vmem:[#allocation2 + $0x40] sm:$0xff]
      %v6309 = vld [vmem:[#allocation2 + $0x48] sm:$0xff]
      %6319 = vrot.lane.b32.xlu0 %v6301, 56
      %v6320 = vpop.permute.xlu0 %6319
      %6321 = vrot.lane.b32.xlu0 %v6302, 56
      %v6322 = vpop.permute.xlu0 %6321
      %6323 = vrot.lane.b32.xlu0 %v6303, 56
      %v6324 = vpop.permute.xlu0 %6323
      %6325 = vrot.lane.b32.xlu0 %v6304, 56
      %v6326 = vpop.permute.xlu0 %6325
      %6327 = vrot.lane.b32.xlu0 %v6305, 56
      %v6328 = vpop.permute.xlu0 %6327
      %6329 = vrot.lane.b32.xlu0 %v6306, 56
      %v6330 = vpop.permute.xlu0 %6329
      %6331 = vrot.lane.b32.xlu0 %v6307, 56
      %v6332 = vpop.permute.xlu0 %6331
      %6333 = vrot.lane.b32.xlu0 %v6308, 56
      %v6334 = vpop.permute.xlu0 %6333
      %6335 = vrot.lane.b32.xlu0 %v6309, 56
      %v6336 = vpop.permute.xlu0 %6335
      %vm6337 = vcmask 457728
      %v6338 = vsel %vm6337, %v6320, %v6322
      %v6339 = vsel %vm6337, %v6322, %v6324
      %v6340 = vsel %vm6337, %v6324, %v6326
      %v6341 = vsel %vm6337, %v6326, %v6328
      %v6342 = vsel %vm6337, %v6328, %v6330
      %v6343 = vsel %vm6337, %v6330, %v6332
      %v6344 = vsel %vm6337, %v6332, %v6334
      %v6345 = vsel %vm6337, %v6334, %v6336
      %v6355 = vsel %vm337, %v6300, 0
      %6357 = vmatprep.subr.mxu0 %v6339
      %6358 = vmatpush1.msra.mxu0 %v6338
      %6359 = vmatprep.subr.mxu0 0.0
      %6360 = vmatpush1.msra.mxu0 0.0
      %6361 = vmatprep.subr.mxu0 0.0
      %6362 = vmatpush1.msra.mxu0 0.0
      %6363 = vmatprep.subr.mxu0 0.0
      %6364 = vmatpush1.msra.mxu0 0.0
      %6365 = vmatprep.subr.mxu0 0.0
      %6366 = vmatpush1.msra.mxu0 0.0
      %6367 = vmatprep.subr.mxu0 0.0
      %6368 = vmatpush1.msra.mxu0 0.0
      %6369 = vmatprep.subr.mxu0 0.0
      %6370 = vmatpush1.msra.mxu0 0.0
      %6371 = vmatprep.subr.mxu0 0.0
      %6372 = vmatpush1.msra.mxu0 0.0
      %6373 = vmatprep.subr.mxu0 0.0
      %6374 = vmatpush1.msra.mxu0 0.0
      %6375 = vmatprep.subr.mxu0 0.0
      %6376 = vmatpush1.msra.mxu0 0.0
      %6377 = vmatprep.subr.mxu0 0.0
      %6378 = vmatpush1.msra.mxu0 0.0
      %6379 = vmatprep.subr.mxu0 0.0
      %6380 = vmatpush1.msra.mxu0 0.0
      %6381 = vmatprep.subr.mxu0 0.0
      %6382 = vmatpush1.msra.mxu0 0.0
      %6383 = vmatprep.subr.mxu0 0.0
      %6384 = vmatpush1.msra.mxu0 0.0
      %6385 = vmatprep.subr.mxu0 0.0
      %6386 = vmatpush1.msra.mxu0 0.0
      %6387 = vmatprep.subr.mxu0 0.0
      %6388 = vmatpush1.msra.mxu0 0.0
      %6389 = vmatprep.subr.mxu0 0.0
      %6390 = vmatpush1.msra.mxu0 0.0
      %6391 = vmatprep.subr.mxu0 0.0
      %6392 = vmatpush1.msra.mxu0 0.0
      %6393 = vmatprep.subr.mxu0 0.0
      %6394 = vmatpush1.msra.mxu0 0.0
      %6395 = vmatprep.subr.mxu0 0.0
      %6396 = vmatpush1.msra.mxu0 0.0
      %6397 = vmatprep.subr.mxu0 0.0
      %6398 = vmatpush1.msra.mxu0 0.0
      %6399 = vmatprep.subr.mxu0 0.0
      %6400 = vmatpush1.msra.mxu0 0.0
      %6401 = vmatprep.subr.mxu0 0.0
      %6402 = vmatpush1.msra.mxu0 0.0
      %6403 = vmatprep.subr.mxu0 0.0
      %6404 = vmatpush1.msra.mxu0 0.0
      %6405 = vmatprep.subr.mxu0 0.0
      %6406 = vmatpush1.msra.mxu0 0.0
      %6407 = vmatprep.subr.mxu0 0.0
      %6408 = vmatpush1.msra.mxu0 0.0
      %6409 = vmatprep.subr.mxu0 0.0
      %6410 = vmatpush1.msra.mxu0 0.0
      %6411 = vmatprep.subr.mxu0 0.0
      %6412 = vmatpush1.msra.mxu0 0.0
      %6413 = vmatprep.subr.mxu0 0.0
      %6414 = vmatpush1.msra.mxu0 0.0
      %6415 = vmatprep.subr.mxu0 0.0
      %6416 = vmatpush1.msra.mxu0 0.0
      %6417 = vmatprep.subr.mxu0 0.0
      %6418 = vmatpush1.msra.mxu0 0.0
      %6419 = vmatprep.subr.mxu0 0.0
      %6420 = vmatpush1.msra.mxu0 0.0
      %6421 = vmatprep.mubr.f32.mxu0 0.0
      %6422 = vmatmul.mubr.f32.gmra.mrb[0].mxu0 %v6355
      %v6423 = vpop.f32.mrb[0].mxu0
      %v6424 = vadd.f32 0.0, %v6423
      %v6425 = vpop.f32.mrb[0].mxu0
      %v6426 = vadd.f32 0.0, %v6425
      %6427 = vdwg.mxu0
      %6428 = vmatprep.subr.mxu0 %v6341
      %6429 = vmatpush1.msra.mxu0 %v6340
      %6430 = vmatprep.subr.mxu0 0.0
      %6431 = vmatpush1.msra.mxu0 0.0
      %6432 = vmatprep.subr.mxu0 0.0
      %6433 = vmatpush1.msra.mxu0 0.0
      %6434 = vmatprep.subr.mxu0 0.0
      %6435 = vmatpush1.msra.mxu0 0.0
      %6436 = vmatprep.subr.mxu0 0.0
      %6437 = vmatpush1.msra.mxu0 0.0
      %6438 = vmatprep.subr.mxu0 0.0
      %6439 = vmatpush1.msra.mxu0 0.0
      %6440 = vmatprep.subr.mxu0 0.0
      %6441 = vmatpush1.msra.mxu0 0.0
      %6442 = vmatprep.subr.mxu0 0.0
      %6443 = vmatpush1.msra.mxu0 0.0
      %6444 = vmatprep.subr.mxu0 0.0
      %6445 = vmatpush1.msra.mxu0 0.0
      %6446 = vmatprep.subr.mxu0 0.0
      %6447 = vmatpush1.msra.mxu0 0.0
      %6448 = vmatprep.subr.mxu0 0.0
      %6449 = vmatpush1.msra.mxu0 0.0
      %6450 = vmatprep.subr.mxu0 0.0
      %6451 = vmatpush1.msra.mxu0 0.0
      %6452 = vmatprep.subr.mxu0 0.0
      %6453 = vmatpush1.msra.mxu0 0.0
      %6454 = vmatprep.subr.mxu0 0.0
      %6455 = vmatpush1.msra.mxu0 0.0
      %6456 = vmatprep.subr.mxu0 0.0
      %6457 = vmatpush1.msra.mxu0 0.0
      %6458 = vmatprep.subr.mxu0 0.0
      %6459 = vmatpush1.msra.mxu0 0.0
      %6460 = vmatprep.subr.mxu0 0.0
      %6461 = vmatpush1.msra.mxu0 0.0
      %6462 = vmatprep.subr.mxu0 0.0
      %6463 = vmatpush1.msra.mxu0 0.0
      %6464 = vmatprep.subr.mxu0 0.0
      %6465 = vmatpush1.msra.mxu0 0.0
      %6466 = vmatprep.subr.mxu0 0.0
      %6467 = vmatpush1.msra.mxu0 0.0
      %6468 = vmatprep.subr.mxu0 0.0
      %6469 = vmatpush1.msra.mxu0 0.0
      %6470 = vmatprep.subr.mxu0 0.0
      %6471 = vmatpush1.msra.mxu0 0.0
      %6472 = vmatprep.subr.mxu0 0.0
      %6473 = vmatpush1.msra.mxu0 0.0
      %6474 = vmatprep.subr.mxu0 0.0
      %6475 = vmatpush1.msra.mxu0 0.0
      %6476 = vmatprep.subr.mxu0 0.0
      %6477 = vmatpush1.msra.mxu0 0.0
      %6478 = vmatprep.subr.mxu0 0.0
      %6479 = vmatpush1.msra.mxu0 0.0
      %6480 = vmatprep.subr.mxu0 0.0
      %6481 = vmatpush1.msra.mxu0 0.0
      %6482 = vmatprep.subr.mxu0 0.0
      %6483 = vmatpush1.msra.mxu0 0.0
      %6484 = vmatprep.subr.mxu0 0.0
      %6485 = vmatpush1.msra.mxu0 0.0
      %6486 = vmatprep.subr.mxu0 0.0
      %6487 = vmatpush1.msra.mxu0 0.0
      %6488 = vmatprep.subr.mxu0 0.0
      %6489 = vmatpush1.msra.mxu0 0.0
      %6490 = vmatprep.subr.mxu0 0.0
      %6491 = vmatpush1.msra.mxu0 0.0
      %6492 = vmatprep.mubr.f32.mxu0 0.0
      %6493 = vmatmul.mubr.f32.gmra.mrb[0].mxu0 %v6355
      %v6494 = vpop.f32.mrb[0].mxu0
      %v6495 = vadd.f32 0.0, %v6494
      %v6496 = vpop.f32.mrb[0].mxu0
      %v6497 = vadd.f32 0.0, %v6496
      %6498 = vdwg.mxu0
      %6499 = vmatprep.subr.mxu0 %v6343
      %6500 = vmatpush1.msra.mxu0 %v6342
      %6501 = vmatprep.subr.mxu0 0.0
      %6502 = vmatpush1.msra.mxu0 0.0
      %6503 = vmatprep.subr.mxu0 0.0
      %6504 = vmatpush1.msra.mxu0 0.0
      %6505 = vmatprep.subr.mxu0 0.0
      %6506 = vmatpush1.msra.mxu0 0.0
      %6507 = vmatprep.subr.mxu0 0.0
      %6508 = vmatpush1.msra.mxu0 0.0
      %6509 = vmatprep.subr.mxu0 0.0
      %6510 = vmatpush1.msra.mxu0 0.0
      %6511 = vmatprep.subr.mxu0 0.0
      %6512 = vmatpush1.msra.mxu0 0.0
      %6513 = vmatprep.subr.mxu0 0.0
      %6514 = vmatpush1.msra.mxu0 0.0
      %6515 = vmatprep.subr.mxu0 0.0
      %6516 = vmatpush1.msra.mxu0 0.0
      %6517 = vmatprep.subr.mxu0 0.0
      %6518 = vmatpush1.msra.mxu0 0.0
      %6519 = vmatprep.subr.mxu0 0.0
      %6520 = vmatpush1.msra.mxu0 0.0
      %6521 = vmatprep.subr.mxu0 0.0
      %6522 = vmatpush1.msra.mxu0 0.0
      %6523 = vmatprep.subr.mxu0 0.0
      %6524 = vmatpush1.msra.mxu0 0.0
      %6525 = vmatprep.subr.mxu0 0.0
      %6526 = vmatpush1.msra.mxu0 0.0
      %6527 = vmatprep.subr.mxu0 0.0
      %6528 = vmatpush1.msra.mxu0 0.0
      %6529 = vmatprep.subr.mxu0 0.0
      %6530 = vmatpush1.msra.mxu0 0.0
      %6531 = vmatprep.subr.mxu0 0.0
      %6532 = vmatpush1.msra.mxu0 0.0
      %6533 = vmatprep.subr.mxu0 0.0
      %6534 = vmatpush1.msra.mxu0 0.0
      %6535 = vmatprep.subr.mxu0 0.0
      %6536 = vmatpush1.msra.mxu0 0.0
      %6537 = vmatprep.subr.mxu0 0.0
      %6538 = vmatpush1.msra.mxu0 0.0
      %6539 = vmatprep.subr.mxu0 0.0
      %6540 = vmatpush1.msra.mxu0 0.0
      %6541 = vmatprep.subr.mxu0 0.0
      %6542 = vmatpush1.msra.mxu0 0.0
      %6543 = vmatprep.subr.mxu0 0.0
      %6544 = vmatpush1.msra.mxu0 0.0
      %6545 = vmatprep.subr.mxu0 0.0
      %6546 = vmatpush1.msra.mxu0 0.0
      %6547 = vmatprep.subr.mxu0 0.0
      %6548 = vmatpush1.msra.mxu0 0.0
      %6549 = vmatprep.subr.mxu0 0.0
      %6550 = vmatpush1.msra.mxu0 0.0
      %6551 = vmatprep.subr.mxu0 0.0
      %6552 = vmatpush1.msra.mxu0 0.0
      %6553 = vmatprep.subr.mxu0 0.0
      %6554 = vmatpush1.msra.mxu0 0.0
      %6555 = vmatprep.subr.mxu0 0.0
      %6556 = vmatpush1.msra.mxu0 0.0
      %6557 = vmatprep.subr.mxu0 0.0
      %6558 = vmatpush1.msra.mxu0 0.0
      %6559 = vmatprep.subr.mxu0 0.0
      %6560 = vmatpush1.msra.mxu0 0.0
      %6561 = vmatprep.subr.mxu0 0.0
      %6562 = vmatpush1.msra.mxu0 0.0
      %6563 = vmatprep.mubr.f32.mxu0 0.0
      %6564 = vmatmul.mubr.f32.gmra.mrb[0].mxu0 %v6355
      %v6565 = vpop.f32.mrb[0].mxu0
      %v6566 = vadd.f32 0.0, %v6565
      %v6567 = vpop.f32.mrb[0].mxu0
      %v6568 = vadd.f32 0.0, %v6567
      %6569 = vdwg.mxu0
      %6570 = vmatprep.subr.mxu0 %v6345
      %6571 = vmatpush1.msra.mxu0 %v6344
      %6572 = vmatprep.subr.mxu0 0.0
      %6573 = vmatpush1.msra.mxu0 0.0
      %6574 = vmatprep.subr.mxu0 0.0
      %6575 = vmatpush1.msra.mxu0 0.0
      %6576 = vmatprep.subr.mxu0 0.0
      %6577 = vmatpush1.msra.mxu0 0.0
      %6578 = vmatprep.subr.mxu0 0.0
      %6579 = vmatpush1.msra.mxu0 0.0
      %6580 = vmatprep.subr.mxu0 0.0
      %6581 = vmatpush1.msra.mxu0 0.0
      %6582 = vmatprep.subr.mxu0 0.0
      %6583 = vmatpush1.msra.mxu0 0.0
      %6584 = vmatprep.subr.mxu0 0.0
      %6585 = vmatpush1.msra.mxu0 0.0
      %6586 = vmatprep.subr.mxu0 0.0
      %6587 = vmatpush1.msra.mxu0 0.0
      %6588 = vmatprep.subr.mxu0 0.0
      %6589 = vmatpush1.msra.mxu0 0.0
      %6590 = vmatprep.subr.mxu0 0.0
      %6591 = vmatpush1.msra.mxu0 0.0
      %6592 = vmatprep.subr.mxu0 0.0
      %6593 = vmatpush1.msra.mxu0 0.0
      %6594 = vmatprep.subr.mxu0 0.0
      %6595 = vmatpush1.msra.mxu0 0.0
      %6596 = vmatprep.subr.mxu0 0.0
      %6597 = vmatpush1.msra.mxu0 0.0
      %6598 = vmatprep.subr.mxu0 0.0
      %6599 = vmatpush1.msra.mxu0 0.0
      %6600 = vmatprep.subr.mxu0 0.0
      %6601 = vmatpush1.msra.mxu0 0.0
      %6602 = vmatprep.subr.mxu0 0.0
      %6603 = vmatpush1.msra.mxu0 0.0
      %6604 = vmatprep.subr.mxu0 0.0
      %6605 = vmatpush1.msra.mxu0 0.0
      %6606 = vmatprep.subr.mxu0 0.0
      %6607 = vmatpush1.msra.mxu0 0.0
      %6608 = vmatprep.subr.mxu0 0.0
      %6609 = vmatpush1.msra.mxu0 0.0
      %6610 = vmatprep.subr.mxu0 0.0
      %6611 = vmatpush1.msra.mxu0 0.0
      %6612 = vmatprep.subr.mxu0 0.0
      %6613 = vmatpush1.msra.mxu0 0.0
      %6614 = vmatprep.subr.mxu0 0.0
      %6615 = vmatpush1.msra.mxu0 0.0
      %6616 = vmatprep.subr.mxu0 0.0
      %6617 = vmatpush1.msra.mxu0 0.0
      %6618 = vmatprep.subr.mxu0 0.0
      %6619 = vmatpush1.msra.mxu0 0.0
      %6620 = vmatprep.subr.mxu0 0.0
      %6621 = vmatpush1.msra.mxu0 0.0
      %6622 = vmatprep.subr.mxu0 0.0
      %6623 = vmatpush1.msra.mxu0 0.0
      %6624 = vmatprep.subr.mxu0 0.0
      %6625 = vmatpush1.msra.mxu0 0.0
      %6626 = vmatprep.subr.mxu0 0.0
      %6627 = vmatpush1.msra.mxu0 0.0
      %6628 = vmatprep.subr.mxu0 0.0
      %6629 = vmatpush1.msra.mxu0 0.0
      %6630 = vmatprep.subr.mxu0 0.0
      %6631 = vmatpush1.msra.mxu0 0.0
      %6632 = vmatprep.subr.mxu0 0.0
      %6633 = vmatpush1.msra.mxu0 0.0
      %6634 = vmatprep.mubr.f32.mxu0 0.0
      %6635 = vmatmul.mubr.f32.gmra.mrb[0].mxu0 %v6355
      %v6636 = vpop.f32.mrb[0].mxu0
      %v6637 = vadd.f32 0.0, %v6636
      %v6638 = vpop.f32.mrb[0].mxu0
      %v6639 = vadd.f32 0.0, %v6638
      %6640 = vdwg.mxu0
      %v6641 = vadd.f32 %v6291, %v6424
      %v6642 = vadd.f32 %v6292, %v6426
      %v6643 = vadd.f32 %v6293, %v6495
      %v6644 = vadd.f32 %v6294, %v6497
      %v6645 = vadd.f32 %v6295, %v6566
      %v6646 = vadd.f32 %v6296, %v6568
      %v6647 = vadd.f32 %v6297, %v6637
      %v6648 = vadd.f32 %v6298, %v6639
      %s6649 = scalar_lea.vmem %s2, 152
      %v6650 = vld [vmem:[%s6649] sm:$0xff]
      %6651 = vrot.lane.b32.xlu0 %v6301, 55
      %v6652 = vpop.permute.xlu0 %6651
      %6653 = vrot.lane.b32.xlu0 %v6302, 55
      %v6654 = vpop.permute.xlu0 %6653
      %6655 = vrot.lane.b32.xlu0 %v6303, 55
      %v6656 = vpop.permute.xlu0 %6655
      %6657 = vrot.lane.b32.xlu0 %v6304, 55
      %v6658 = vpop.permute.xlu0 %6657
      %6659 = vrot.lane.b32.xlu0 %v6305, 55
      %v6660 = vpop.permute.xlu0 %6659
      %6661 = vrot.lane.b32.xlu0 %v6306, 55
      %v6662 = vpop.permute.xlu0 %6661
      %6663 = vrot.lane.b32.xlu0 %v6307, 55
      %v6664 = vpop.permute.xlu0 %6663
      %6665 = vrot.lane.b32.xlu0 %v6308, 55
      %v6666 = vpop.permute.xlu0 %6665
      %6667 = vrot.lane.b32.xlu0 %v6309, 55
      %v6668 = vpop.permute.xlu0 %6667
      %vm6669 = vcmask 449536
      %v6670 = vsel %vm6669, %v6652, %v6654
      %v6671 = vsel %vm6669, %v6654, %v6656
      %v6672 = vsel %vm6669, %v6656, %v6658
      %v6673 = vsel %vm6669, %v6658, %v6660
      %v6674 = vsel %vm6669, %v6660, %v6662
      %v6675 = vsel %vm6669, %v6662, %v6664
      %v6676 = vsel %vm6669, %v6664, %v6666
      %v6677 = vsel %vm6669, %v6666, %v6668
      %v6687 = vsel %vm337, %v6650, 0
      %6689 = vmatprep.subr.mxu0 %v6671
      %6690 = vmatpush1.msra.mxu0 %v6670
      %6691 = vmatprep.subr.mxu0 0.0
      %6692 = vmatpush1.msra.mxu0 0.0
      %6693 = vmatprep.subr.mxu0 0.0
      %6694 = vmatpush1.msra.mxu0 0.0
      %6695 = vmatprep.subr.mxu0 0.0
      %6696 = vmatpush1.msra.mxu0 0.0
      %6697 = vmatprep.subr.mxu0 0.0
      %6698 = vmatpush1.msra.mxu0 0.0
      %6699 = vmatprep.subr.mxu0 0.0
      %6700 = vmatpush1.msra.mxu0 0.0
      %6701 = vmatprep.subr.mxu0 0.0
      %6702 = vmatpush1.msra.mxu0 0.0
      %6703 = vmatprep.subr.mxu0 0.0
      %6704 = vmatpush1.msra.mxu0 0.0
      %6705 = vmatprep.subr.mxu0 0.0
      %6706 = vmatpush1.msra.mxu0 0.0
      %6707 = vmatprep.subr.mxu0 0.0
      %6708 = vmatpush1.msra.mxu0 0.0
      %6709 = vmatprep.subr.mxu0 0.0
      %6710 = vmatpush1.msra.mxu0 0.0
      %6711 = vmatprep.subr.mxu0 0.0
      %6712 = vmatpush1.msra.mxu0 0.0
      %6713 = vmatprep.subr.mxu0 0.0
      %6714 = vmatpush1.msra.mxu0 0.0
      %6715 = vmatprep.subr.mxu0 0.0
      %6716 = vmatpush1.msra.mxu0 0.0
      %6717 = vmatprep.subr.mxu0 0.0
      %6718 = vmatpush1.msra.mxu0 0.0
      %6719 = vmatprep.subr.mxu0 0.0
      %6720 = vmatpush1.msra.mxu0 0.0
      %6721 = vmatprep.subr.mxu0 0.0
      %6722 = vmatpush1.msra.mxu0 0.0
      %6723 = vmatprep.subr.mxu0 0.0
      %6724 = vmatpush1.msra.mxu0 0.0
      %6725 = vmatprep.subr.mxu0 0.0
      %6726 = vmatpush1.msra.mxu0 0.0
      %6727 = vmatprep.subr.mxu0 0.0
      %6728 = vmatpush1.msra.mxu0 0.0
      %6729 = vmatprep.subr.mxu0 0.0
      %6730 = vmatpush1.msra.mxu0 0.0
      %6731 = vmatprep.subr.mxu0 0.0
      %6732 = vmatpush1.msra.mxu0 0.0
      %6733 = vmatprep.subr.mxu0 0.0
      %6734 = vmatpush1.msra.mxu0 0.0
      %6735 = vmatprep.subr.mxu0 0.0
      %6736 = vmatpush1.msra.mxu0 0.0
      %6737 = vmatprep.subr.mxu0 0.0
      %6738 = vmatpush1.msra.mxu0 0.0
      %6739 = vmatprep.subr.mxu0 0.0
      %6740 = vmatpush1.msra.mxu0 0.0
      %6741 = vmatprep.subr.mxu0 0.0
      %6742 = vmatpush1.msra.mxu0 0.0
      %6743 = vmatprep.subr.mxu0 0.0
      %6744 = vmatpush1.msra.mxu0 0.0
      %6745 = vmatprep.subr.mxu0 0.0
      %6746 = vmatpush1.msra.mxu0 0.0
      %6747 = vmatprep.subr.mxu0 0.0
      %6748 = vmatpush1.msra.mxu0 0.0
      %6749 = vmatprep.subr.mxu0 0.0
      %6750 = vmatpush1.msra.mxu0 0.0
      %6751 = vmatprep.subr.mxu0 0.0
      %6752 = vmatpush1.msra.mxu0 0.0
      %6753 = vmatprep.mubr.f32.mxu0 0.0
      %6754 = vmatmul.mubr.f32.gmra.mrb[0].mxu0 %v6687
      %v6755 = vpop.f32.mrb[0].mxu0
      %v6756 = vadd.f32 0.0, %v6755
      %v6757 = vpop.f32.mrb[0].mxu0
      %v6758 = vadd.f32 0.0, %v6757
      %6759 = vdwg.mxu0
      %6760 = vmatprep.subr.mxu0 %v6673
      %6761 = vmatpush1.msra.mxu0 %v6672
      %6762 = vmatprep.subr.mxu0 0.0
      %6763 = vmatpush1.msra.mxu0 0.0
      %6764 = vmatprep.subr.mxu0 0.0
      %6765 = vmatpush1.msra.mxu0 0.0
      %6766 = vmatprep.subr.mxu0 0.0
      %6767 = vmatpush1.msra.mxu0 0.0
      %6768 = vmatprep.subr.mxu0 0.0
      %6769 = vmatpush1.msra.mxu0 0.0
      %6770 = vmatprep.subr.mxu0 0.0
      %6771 = vmatpush1.msra.mxu0 0.0
      %6772 = vmatprep.subr.mxu0 0.0
      %6773 = vmatpush1.msra.mxu0 0.0
      %6774 = vmatprep.subr.mxu0 0.0
      %6775 = vmatpush1.msra.mxu0 0.0
      %6776 = vmatprep.subr.mxu0 0.0
      %6777 = vmatpush1.msra.mxu0 0.0
      %6778 = vmatprep.subr.mxu0 0.0
      %6779 = vmatpush1.msra.mxu0 0.0
      %6780 = vmatprep.subr.mxu0 0.0
      %6781 = vmatpush1.msra.mxu0 0.0
      %6782 = vmatprep.subr.mxu0 0.0
      %6783 = vmatpush1.msra.mxu0 0.0
      %6784 = vmatprep.subr.mxu0 0.0
      %6785 = vmatpush1.msra.mxu0 0.0
      %6786 = vmatprep.subr.mxu0 0.0
      %6787 = vmatpush1.msra.mxu0 0.0
      %6788 = vmatprep.subr.mxu0 0.0
      %6789 = vmatpush1.msra.mxu0 0.0
      %6790 = vmatprep.subr.mxu0 0.0
      %6791 = vmatpush1.msra.mxu0 0.0
      %6792 = vmatprep.subr.mxu0 0.0
      %6793 = vmatpush1.msra.mxu0 0.0
      %6794 = vmatprep.subr.mxu0 0.0
      %6795 = vmatpush1.msra.mxu0 0.0
      %6796 = vmatprep.subr.mxu0 0.0
      %6797 = vmatpush1.msra.mxu0 0.0
      %6798 = vmatprep.subr.mxu0 0.0
      %6799 = vmatpush1.msra.mxu0 0.0
      %6800 = vmatprep.subr.mxu0 0.0
      %6801 = vmatpush1.msra.mxu0 0.0
      %6802 = vmatprep.subr.mxu0 0.0
      %6803 = vmatpush1.msra.mxu0 0.0
      %6804 = vmatprep.subr.mxu0 0.0
      %6805 = vmatpush1.msra.mxu0 0.0
      %6806 = vmatprep.subr.mxu0 0.0
      %6807 = vmatpush1.msra.mxu0 0.0
      %6808 = vmatprep.subr.mxu0 0.0
      %6809 = vmatpush1.msra.mxu0 0.0
      %6810 = vmatprep.subr.mxu0 0.0
      %6811 = vmatpush1.msra.mxu0 0.0
      %6812 = vmatprep.subr.mxu0 0.0
      %6813 = vmatpush1.msra.mxu0 0.0
      %6814 = vmatprep.subr.mxu0 0.0
      %6815 = vmatpush1.msra.mxu0 0.0
      %6816 = vmatprep.subr.mxu0 0.0
      %6817 = vmatpush1.msra.mxu0 0.0
      %6818 = vmatprep.subr.mxu0 0.0
      %6819 = vmatpush1.msra.mxu0 0.0
      %6820 = vmatprep.subr.mxu0 0.0
      %6821 = vmatpush1.msra.mxu0 0.0
      %6822 = vmatprep.subr.mxu0 0.0
      %6823 = vmatpush1.msra.mxu0 0.0
      %6824 = vmatprep.mubr.f32.mxu0 0.0
      %6825 = vmatmul.mubr.f32.gmra.mrb[0].mxu0 %v6687
      %v6826 = vpop.f32.mrb[0].mxu0
      %v6827 = vadd.f32 0.0, %v6826
      %v6828 = vpop.f32.mrb[0].mxu0
      %v6829 = vadd.f32 0.0, %v6828
      %6830 = vdwg.mxu0
      %6831 = vmatprep.subr.mxu0 %v6675
      %6832 = vmatpush1.msra.mxu0 %v6674
      %6833 = vmatprep.subr.mxu0 0.0
      %6834 = vmatpush1.msra.mxu0 0.0
      %6835 = vmatprep.subr.mxu0 0.0
      %6836 = vmatpush1.msra.mxu0 0.0
      %6837 = vmatprep.subr.mxu0 0.0
      %6838 = vmatpush1.msra.mxu0 0.0
      %6839 = vmatprep.subr.mxu0 0.0
      %6840 = vmatpush1.msra.mxu0 0.0
      %6841 = vmatprep.subr.mxu0 0.0
      %6842 = vmatpush1.msra.mxu0 0.0
      %6843 = vmatprep.subr.mxu0 0.0
      %6844 = vmatpush1.msra.mxu0 0.0
      %6845 = vmatprep.subr.mxu0 0.0
      %6846 = vmatpush1.msra.mxu0 0.0
      %6847 = vmatprep.subr.mxu0 0.0
      %6848 = vmatpush1.msra.mxu0 0.0
      %6849 = vmatprep.subr.mxu0 0.0
      %6850 = vmatpush1.msra.mxu0 0.0
      %6851 = vmatprep.subr.mxu0 0.0
      %6852 = vmatpush1.msra.mxu0 0.0
      %6853 = vmatprep.subr.mxu0 0.0
      %6854 = vmatpush1.msra.mxu0 0.0
      %6855 = vmatprep.subr.mxu0 0.0
      %6856 = vmatpush1.msra.mxu0 0.0
      %6857 = vmatprep.subr.mxu0 0.0
      %6858 = vmatpush1.msra.mxu0 0.0
      %6859 = vmatprep.subr.mxu0 0.0
      %6860 = vmatpush1.msra.mxu0 0.0
      %6861 = vmatprep.subr.mxu0 0.0
      %6862 = vmatpush1.msra.mxu0 0.0
      %6863 = vmatprep.subr.mxu0 0.0
      %6864 = vmatpush1.msra.mxu0 0.0
      %6865 = vmatprep.subr.mxu0 0.0
      %6866 = vmatpush1.msra.mxu0 0.0
      %6867 = vmatprep.subr.mxu0 0.0
      %6868 = vmatpush1.msra.mxu0 0.0
      %6869 = vmatprep.subr.mxu0 0.0
      %6870 = vmatpush1.msra.mxu0 0.0
      %6871 = vmatprep.subr.mxu0 0.0
      %6872 = vmatpush1.msra.mxu0 0.0
      %6873 = vmatprep.subr.mxu0 0.0
      %6874 = vmatpush1.msra.mxu0 0.0
      %6875 = vmatprep.subr.mxu0 0.0
      %6876 = vmatpush1.msra.mxu0 0.0
      %6877 = vmatprep.subr.mxu0 0.0
      %6878 = vmatpush1.msra.mxu0 0.0
      %6879 = vmatprep.subr.mxu0 0.0
      %6880 = vmatpush1.msra.mxu0 0.0
      %6881 = vmatprep.subr.mxu0 0.0
      %6882 = vmatpush1.msra.mxu0 0.0
      %6883 = vmatprep.subr.mxu0 0.0
      %6884 = vmatpush1.msra.mxu0 0.0
      %6885 = vmatprep.subr.mxu0 0.0
      %6886 = vmatpush1.msra.mxu0 0.0
      %6887 = vmatprep.subr.mxu0 0.0
      %6888 = vmatpush1.msra.mxu0 0.0
      %6889 = vmatprep.subr.mxu0 0.0
      %6890 = vmatpush1.msra.mxu0 0.0
      %6891 = vmatprep.subr.mxu0 0.0
      %6892 = vmatpush1.msra.mxu0 0.0
      %6893 = vmatprep.subr.mxu0 0.0
      %6894 = vmatpush1.msra.mxu0 0.0
      %6895 = vmatprep.mubr.f32.mxu0 0.0
      %6896 = vmatmul.mubr.f32.gmra.mrb[0].mxu0 %v6687
      %v6897 = vpop.f32.mrb[0].mxu0
      %v6898 = vadd.f32 0.0, %v6897
      %v6899 = vpop.f32.mrb[0].mxu0
      %v6900 = vadd.f32 0.0, %v6899
      %6901 = vdwg.mxu0
      %6902 = vmatprep.subr.mxu0 %v6677
      %6903 = vmatpush1.msra.mxu0 %v6676
      %6904 = vmatprep.subr.mxu0 0.0
      %6905 = vmatpush1.msra.mxu0 0.0
      %6906 = vmatprep.subr.mxu0 0.0
      %6907 = vmatpush1.msra.mxu0 0.0
      %6908 = vmatprep.subr.mxu0 0.0
      %6909 = vmatpush1.msra.mxu0 0.0
      %6910 = vmatprep.subr.mxu0 0.0
      %6911 = vmatpush1.msra.mxu0 0.0
      %6912 = vmatprep.subr.mxu0 0.0
      %6913 = vmatpush1.msra.mxu0 0.0
      %6914 = vmatprep.subr.mxu0 0.0
      %6915 = vmatpush1.msra.mxu0 0.0
      %6916 = vmatprep.subr.mxu0 0.0
      %6917 = vmatpush1.msra.mxu0 0.0
      %6918 = vmatprep.subr.mxu0 0.0
      %6919 = vmatpush1.msra.mxu0 0.0
      %6920 = vmatprep.subr.mxu0 0.0
      %6921 = vmatpush1.msra.mxu0 0.0
      %6922 = vmatprep.subr.mxu0 0.0
      %6923 = vmatpush1.msra.mxu0 0.0
      %6924 = vmatprep.subr.mxu0 0.0
      %6925 = vmatpush1.msra.mxu0 0.0
      %6926 = vmatprep.subr.mxu0 0.0
      %6927 = vmatpush1.msra.mxu0 0.0
      %6928 = vmatprep.subr.mxu0 0.0
      %6929 = vmatpush1.msra.mxu0 0.0
      %6930 = vmatprep.subr.mxu0 0.0
      %6931 = vmatpush1.msra.mxu0 0.0
      %6932 = vmatprep.subr.mxu0 0.0
      %6933 = vmatpush1.msra.mxu0 0.0
      %6934 = vmatprep.subr.mxu0 0.0
      %6935 = vmatpush1.msra.mxu0 0.0
      %6936 = vmatprep.subr.mxu0 0.0
      %6937 = vmatpush1.msra.mxu0 0.0
      %6938 = vmatprep.subr.mxu0 0.0
      %6939 = vmatpush1.msra.mxu0 0.0
      %6940 = vmatprep.subr.mxu0 0.0
      %6941 = vmatpush1.msra.mxu0 0.0
      %6942 = vmatprep.subr.mxu0 0.0
      %6943 = vmatpush1.msra.mxu0 0.0
      %6944 = vmatprep.subr.mxu0 0.0
      %6945 = vmatpush1.msra.mxu0 0.0
      %6946 = vmatprep.subr.mxu0 0.0
      %6947 = vmatpush1.msra.mxu0 0.0
      %6948 = vmatprep.subr.mxu0 0.0
      %6949 = vmatpush1.msra.mxu0 0.0
      %6950 = vmatprep.subr.mxu0 0.0
      %6951 = vmatpush1.msra.mxu0 0.0
      %6952 = vmatprep.subr.mxu0 0.0
      %6953 = vmatpush1.msra.mxu0 0.0
      %6954 = vmatprep.subr.mxu0 0.0
      %6955 = vmatpush1.msra.mxu0 0.0
      %6956 = vmatprep.subr.mxu0 0.0
      %6957 = vmatpush1.msra.mxu0 0.0
      %6958 = vmatprep.subr.mxu0 0.0
      %6959 = vmatpush1.msra.mxu0 0.0
      %6960 = vmatprep.subr.mxu0 0.0
      %6961 = vmatpush1.msra.mxu0 0.0
      %6962 = vmatprep.subr.mxu0 0.0
      %6963 = vmatpush1.msra.mxu0 0.0
      %6964 = vmatprep.subr.mxu0 0.0
      %6965 = vmatpush1.msra.mxu0 0.0
      %6966 = vmatprep.mubr.f32.mxu0 0.0
      %6967 = vmatmul.mubr.f32.gmra.mrb[0].mxu0 %v6687
      %v6968 = vpop.f32.mrb[0].mxu0
      %v6969 = vadd.f32 0.0, %v6968
      %v6970 = vpop.f32.mrb[0].mxu0
      %v6971 = vadd.f32 0.0, %v6970
      %6972 = vdwg.mxu0
      %v6973 = vadd.f32 %v6641, %v6756
      %v6974 = vadd.f32 %v6642, %v6758
      %v6975 = vadd.f32 %v6643, %v6827
      %v6976 = vadd.f32 %v6644, %v6829
      %v6977 = vadd.f32 %v6645, %v6898
      %v6978 = vadd.f32 %v6646, %v6900
      %v6979 = vadd.f32 %v6647, %v6969
      %v6980 = vadd.f32 %v6648, %v6971
      %s6981 = scalar_lea.vmem %s2, 160
      %v6982 = vld [vmem:[%s6981] sm:$0xff]
      %6983 = vrot.lane.b32.xlu0 %v6301, 54
      %v6984 = vpop.permute.xlu0 %6983
      %6985 = vrot.lane.b32.xlu0 %v6302, 54
      %v6986 = vpop.permute.xlu0 %6985
      %6987 = vrot.lane.b32.xlu0 %v6303, 54
      %v6988 = vpop.permute.xlu0 %6987
      %6989 = vrot.lane.b32.xlu0 %v6304, 54
      %v6990 = vpop.permute.xlu0 %6989
      %6991 = vrot.lane.b32.xlu0 %v6305, 54
      %v6992 = vpop.permute.xlu0 %6991
      %6993 = vrot.lane.b32.xlu0 %v6306, 54
      %v6994 = vpop.permute.xlu0 %6993
      %6995 = vrot.lane.b32.xlu0 %v6307, 54
      %v6996 = vpop.permute.xlu0 %6995
      %6997 = vrot.lane.b32.xlu0 %v6308, 54
      %v6998 = vpop.permute.xlu0 %6997
      %6999 = vrot.lane.b32.xlu0 %v6309, 54
      %v7000 = vpop.permute.xlu0 %6999
      %vm7001 = vcmask 441344
      %v7002 = vsel %vm7001, %v6984, %v6986
      %v7003 = vsel %vm7001, %v6986, %v6988
      %v7004 = vsel %vm7001, %v6988, %v6990
      %v7005 = vsel %vm7001, %v6990, %v6992
      %v7006 = vsel %vm7001, %v6992, %v6994
      %v7007 = vsel %vm7001, %v6994, %v6996
      %v7008 = vsel %vm7001, %v6996, %v6998
      %v7009 = vsel %vm7001, %v6998, %v7000
      %v7019 = vsel %vm337, %v6982, 0
      %7021 = vmatprep.subr.mxu0 %v7003
      %7022 = vmatpush1.msra.mxu0 %v7002
      %7023 = vmatprep.subr.mxu0 0.0
      %7024 = vmatpush1.msra.mxu0 0.0
      %7025 = vmatprep.subr.mxu0 0.0
      %7026 = vmatpush1.msra.mxu0 0.0
      %7027 = vmatprep.subr.mxu0 0.0
      %7028 = vmatpush1.msra.mxu0 0.0
      %7029 = vmatprep.subr.mxu0 0.0
      %7030 = vmatpush1.msra.mxu0 0.0
      %7031 = vmatprep.subr.mxu0 0.0
      %7032 = vmatpush1.msra.mxu0 0.0
      %7033 = vmatprep.subr.mxu0 0.0
      %7034 = vmatpush1.msra.mxu0 0.0
      %7035 = vmatprep.subr.mxu0 0.0
      %7036 = vmatpush1.msra.mxu0 0.0
      %7037 = vmatprep.subr.mxu0 0.0
      %7038 = vmatpush1.msra.mxu0 0.0
      %7039 = vmatprep.subr.mxu0 0.0
      %7040 = vmatpush1.msra.mxu0 0.0
      %7041 = vmatprep.subr.mxu0 0.0
      %7042 = vmatpush1.msra.mxu0 0.0
      %7043 = vmatprep.subr.mxu0 0.0
      %7044 = vmatpush1.msra.mxu0 0.0
      %7045 = vmatprep.subr.mxu0 0.0
      %7046 = vmatpush1.msra.mxu0 0.0
      %7047 = vmatprep.subr.mxu0 0.0
      %7048 = vmatpush1.msra.mxu0 0.0
      %7049 = vmatprep.subr.mxu0 0.0
      %7050 = vmatpush1.msra.mxu0 0.0
      %7051 = vmatprep.subr.mxu0 0.0
      %7052 = vmatpush1.msra.mxu0 0.0
      %7053 = vmatprep.subr.mxu0 0.0
      %7054 = vmatpush1.msra.mxu0 0.0
      %7055 = vmatprep.subr.mxu0 0.0
      %7056 = vmatpush1.msra.mxu0 0.0
      %7057 = vmatprep.subr.mxu0 0.0
      %7058 = vmatpush1.msra.mxu0 0.0
      %7059 = vmatprep.subr.mxu0 0.0
      %7060 = vmatpush1.msra.mxu0 0.0
      %7061 = vmatprep.subr.mxu0 0.0
      %7062 = vmatpush1.msra.mxu0 0.0
      %7063 = vmatprep.subr.mxu0 0.0
      %7064 = vmatpush1.msra.mxu0 0.0
      %7065 = vmatprep.subr.mxu0 0.0
      %7066 = vmatpush1.msra.mxu0 0.0
      %7067 = vmatprep.subr.mxu0 0.0
      %7068 = vmatpush1.msra.mxu0 0.0
      %7069 = vmatprep.subr.mxu0 0.0
      %7070 = vmatpush1.msra.mxu0 0.0
      %7071 = vmatprep.subr.mxu0 0.0
      %7072 = vmatpush1.msra.mxu0 0.0
      %7073 = vmatprep.subr.mxu0 0.0
      %7074 = vmatpush1.msra.mxu0 0.0
      %7075 = vmatprep.subr.mxu0 0.0
      %7076 = vmatpush1.msra.mxu0 0.0
      %7077 = vmatprep.subr.mxu0 0.0
      %7078 = vmatpush1.msra.mxu0 0.0
      %7079 = vmatprep.subr.mxu0 0.0
      %7080 = vmatpush1.msra.mxu0 0.0
      %7081 = vmatprep.subr.mxu0 0.0
      %7082 = vmatpush1.msra.mxu0 0.0
      %7083 = vmatprep.subr.mxu0 0.0
      %7084 = vmatpush1.msra.mxu0 0.0
      %7085 = vmatprep.mubr.f32.mxu0 0.0
      %7086 = vmatmul.mubr.f32.gmra.mrb[0].mxu0 %v7019
      %v7087 = vpop.f32.mrb[0].mxu0
      %v7088 = vadd.f32 0.0, %v7087
      %v7089 = vpop.f32.mrb[0].mxu0
      %v7090 = vadd.f32 0.0, %v7089
      %7091 = vdwg.mxu0
      %7092 = vmatprep.subr.mxu0 %v7005
      %7093 = vmatpush1.msra.mxu0 %v7004
      %7094 = vmatprep.subr.mxu0 0.0
      %7095 = vmatpush1.msra.mxu0 0.0
      %7096 = vmatprep.subr.mxu0 0.0
      %7097 = vmatpush1.msra.mxu0 0.0
      %7098 = vmatprep.subr.mxu0 0.0
      %7099 = vmatpush1.msra.mxu0 0.0
      %7100 = vmatprep.subr.mxu0 0.0
      %7101 = vmatpush1.msra.mxu0 0.0
      %7102 = vmatprep.subr.mxu0 0.0
      %7103 = vmatpush1.msra.mxu0 0.0
      %7104 = vmatprep.subr.mxu0 0.0
      %7105 = vmatpush1.msra.mxu0 0.0
      %7106 = vmatprep.subr.mxu0 0.0
      %7107 = vmatpush1.msra.mxu0 0.0
      %7108 = vmatprep.subr.mxu0 0.0
      %7109 = vmatpush1.msra.mxu0 0.0
      %7110 = vmatprep.subr.mxu0 0.0
      %7111 = vmatpush1.msra.mxu0 0.0
      %7112 = vmatprep.subr.mxu0 0.0
      %7113 = vmatpush1.msra.mxu0 0.0
      %7114 = vmatprep.subr.mxu0 0.0
      %7115 = vmatpush1.msra.mxu0 0.0
      %7116 = vmatprep.subr.mxu0 0.0
      %7117 = vmatpush1.msra.mxu0 0.0
      %7118 = vmatprep.subr.mxu0 0.0
      %7119 = vmatpush1.msra.mxu0 0.0
      %7120 = vmatprep.subr.mxu0 0.0
      %7121 = vmatpush1.msra.mxu0 0.0
      %7122 = vmatprep.subr.mxu0 0.0
      %7123 = vmatpush1.msra.mxu0 0.0
      %7124 = vmatprep.subr.mxu0 0.0
      %7125 = vmatpush1.msra.mxu0 0.0
      %7126 = vmatprep.subr.mxu0 0.0
      %7127 = vmatpush1.msra.mxu0 0.0
      %7128 = vmatprep.subr.mxu0 0.0
      %7129 = vmatpush1.msra.mxu0 0.0
      %7130 = vmatprep.subr.mxu0 0.0
      %7131 = vmatpush1.msra.mxu0 0.0
      %7132 = vmatprep.subr.mxu0 0.0
      %7133 = vmatpush1.msra.mxu0 0.0
      %7134 = vmatprep.subr.mxu0 0.0
      %7135 = vmatpush1.msra.mxu0 0.0
      %7136 = vmatprep.subr.mxu0 0.0
      %7137 = vmatpush1.msra.mxu0 0.0
      %7138 = vmatprep.subr.mxu0 0.0
      %7139 = vmatpush1.msra.mxu0 0.0
      %7140 = vmatprep.subr.mxu0 0.0
      %7141 = vmatpush1.msra.mxu0 0.0
      %7142 = vmatprep.subr.mxu0 0.0
      %7143 = vmatpush1.msra.mxu0 0.0
      %7144 = vmatprep.subr.mxu0 0.0
      %7145 = vmatpush1.msra.mxu0 0.0
      %7146 = vmatprep.subr.mxu0 0.0
      %7147 = vmatpush1.msra.mxu0 0.0
      %7148 = vmatprep.subr.mxu0 0.0
      %7149 = vmatpush1.msra.mxu0 0.0
      %7150 = vmatprep.subr.mxu0 0.0
      %7151 = vmatpush1.msra.mxu0 0.0
      %7152 = vmatprep.subr.mxu0 0.0
      %7153 = vmatpush1.msra.mxu0 0.0
      %7154 = vmatprep.subr.mxu0 0.0
      %7155 = vmatpush1.msra.mxu0 0.0
      %7156 = vmatprep.mubr.f32.mxu0 0.0
      %7157 = vmatmul.mubr.f32.gmra.mrb[0].mxu0 %v7019
      %v7158 = vpop.f32.mrb[0].mxu0
      %v7159 = vadd.f32 0.0, %v7158
      %v7160 = vpop.f32.mrb[0].mxu0
      %v7161 = vadd.f32 0.0, %v7160
      %7162 = vdwg.mxu0
      %7163 = vmatprep.subr.mxu0 %v7007
      %7164 = vmatpush1.msra.mxu0 %v7006
      %7165 = vmatprep.subr.mxu0 0.0
      %7166 = vmatpush1.msra.mxu0 0.0
      %7167 = vmatprep.subr.mxu0 0.0
      %7168 = vmatpush1.msra.mxu0 0.0
      %7169 = vmatprep.subr.mxu0 0.0
      %7170 = vmatpush1.msra.mxu0 0.0
      %7171 = vmatprep.subr.mxu0 0.0
      %7172 = vmatpush1.msra.mxu0 0.0
      %7173 = vmatprep.subr.mxu0 0.0
      %7174 = vmatpush1.msra.mxu0 0.0
      %7175 = vmatprep.subr.mxu0 0.0
      %7176 = vmatpush1.msra.mxu0 0.0
      %7177 = vmatprep.subr.mxu0 0.0
      %7178 = vmatpush1.msra.mxu0 0.0
      %7179 = vmatprep.subr.mxu0 0.0
      %7180 = vmatpush1.msra.mxu0 0.0
      %7181 = vmatprep.subr.mxu0 0.0
      %7182 = vmatpush1.msra.mxu0 0.0
      %7183 = vmatprep.subr.mxu0 0.0
      %7184 = vmatpush1.msra.mxu0 0.0
      %7185 = vmatprep.subr.mxu0 0.0
      %7186 = vmatpush1.msra.mxu0 0.0
      %7187 = vmatprep.subr.mxu0 0.0
      %7188 = vmatpush1.msra.mxu0 0.0
      %7189 = vmatprep.subr.mxu0 0.0
      %7190 = vmatpush1.msra.mxu0 0.0
      %7191 = vmatprep.subr.mxu0 0.0
      %7192 = vmatpush1.msra.mxu0 0.0
      %7193 = vmatprep.subr.mxu0 0.0
      %7194 = vmatpush1.msra.mxu0 0.0
      %7195 = vmatprep.subr.mxu0 0.0
      %7196 = vmatpush1.msra.mxu0 0.0
      %7197 = vmatprep.subr.mxu0 0.0
      %7198 = vmatpush1.msra.mxu0 0.0
      %7199 = vmatprep.subr.mxu0 0.0
      %7200 = vmatpush1.msra.mxu0 0.0
      %7201 = vmatprep.subr.mxu0 0.0
      %7202 = vmatpush1.msra.mxu0 0.0
      %7203 = vmatprep.subr.mxu0 0.0
      %7204 = vmatpush1.msra.mxu0 0.0
      %7205 = vmatprep.subr.mxu0 0.0
      %7206 = vmatpush1.msra.mxu0 0.0
      %7207 = vmatprep.subr.mxu0 0.0
      %7208 = vmatpush1.msra.mxu0 0.0
      %7209 = vmatprep.subr.mxu0 0.0
      %7210 = vmatpush1.msra.mxu0 0.0
      %7211 = vmatprep.subr.mxu0 0.0
      %7212 = vmatpush1.msra.mxu0 0.0
      %7213 = vmatprep.subr.mxu0 0.0
      %7214 = vmatpush1.msra.mxu0 0.0
      %7215 = vmatprep.subr.mxu0 0.0
      %7216 = vmatpush1.msra.mxu0 0.0
      %7217 = vmatprep.subr.mxu0 0.0
      %7218 = vmatpush1.msra.mxu0 0.0
      %7219 = vmatprep.subr.mxu0 0.0
      %7220 = vmatpush1.msra.mxu0 0.0
      %7221 = vmatprep.subr.mxu0 0.0
      %7222 = vmatpush1.msra.mxu0 0.0
      %7223 = vmatprep.subr.mxu0 0.0
      %7224 = vmatpush1.msra.mxu0 0.0
      %7225 = vmatprep.subr.mxu0 0.0
      %7226 = vmatpush1.msra.mxu0 0.0
      %7227 = vmatprep.mubr.f32.mxu0 0.0
      %7228 = vmatmul.mubr.f32.gmra.mrb[0].mxu0 %v7019
      %v7229 = vpop.f32.mrb[0].mxu0
      %v7230 = vadd.f32 0.0, %v7229
      %v7231 = vpop.f32.mrb[0].mxu0
      %v7232 = vadd.f32 0.0, %v7231
      %7233 = vdwg.mxu0
      %7234 = vmatprep.subr.mxu0 %v7009
      %7235 = vmatpush1.msra.mxu0 %v7008
      %7236 = vmatprep.subr.mxu0 0.0
      %7237 = vmatpush1.msra.mxu0 0.0
      %7238 = vmatprep.subr.mxu0 0.0
      %7239 = vmatpush1.msra.mxu0 0.0
      %7240 = vmatprep.subr.mxu0 0.0
      %7241 = vmatpush1.msra.mxu0 0.0
      %7242 = vmatprep.subr.mxu0 0.0
      %7243 = vmatpush1.msra.mxu0 0.0
      %7244 = vmatprep.subr.mxu0 0.0
      %7245 = vmatpush1.msra.mxu0 0.0
      %7246 = vmatprep.subr.mxu0 0.0
      %7247 = vmatpush1.msra.mxu0 0.0
      %7248 = vmatprep.subr.mxu0 0.0
      %7249 = vmatpush1.msra.mxu0 0.0
      %7250 = vmatprep.subr.mxu0 0.0
      %7251 = vmatpush1.msra.mxu0 0.0
      %7252 = vmatprep.subr.mxu0 0.0
      %7253 = vmatpush1.msra.mxu0 0.0
      %7254 = vmatprep.subr.mxu0 0.0
      %7255 = vmatpush1.msra.mxu0 0.0
      %7256 = vmatprep.subr.mxu0 0.0
      %7257 = vmatpush1.msra.mxu0 0.0
      %7258 = vmatprep.subr.mxu0 0.0
      %7259 = vmatpush1.msra.mxu0 0.0
      %7260 = vmatprep.subr.mxu0 0.0
      %7261 = vmatpush1.msra.mxu0 0.0
      %7262 = vmatprep.subr.mxu0 0.0
      %7263 = vmatpush1.msra.mxu0 0.0
      %7264 = vmatprep.subr.mxu0 0.0
      %7265 = vmatpush1.msra.mxu0 0.0
      %7266 = vmatprep.subr.mxu0 0.0
      %7267 = vmatpush1.msra.mxu0 0.0
      %7268 = vmatprep.subr.mxu0 0.0
      %7269 = vmatpush1.msra.mxu0 0.0
      %7270 = vmatprep.subr.mxu0 0.0
      %7271 = vmatpush1.msra.mxu0 0.0
      %7272 = vmatprep.subr.mxu0 0.0
      %7273 = vmatpush1.msra.mxu0 0.0
      %7274 = vmatprep.subr.mxu0 0.0
      %7275 = vmatpush1.msra.mxu0 0.0
      %7276 = vmatprep.subr.mxu0 0.0
      %7277 = vmatpush1.msra.mxu0 0.0
      %7278 = vmatprep.subr.mxu0 0.0
      %7279 = vmatpush1.msra.mxu0 0.0
      %7280 = vmatprep.subr.mxu0 0.0
      %7281 = vmatpush1.msra.mxu0 0.0
      %7282 = vmatprep.subr.mxu0 0.0
      %7283 = vmatpush1.msra.mxu0 0.0
      %7284 = vmatprep.subr.mxu0 0.0
      %7285 = vmatpush1.msra.mxu0 0.0
      %7286 = vmatprep.subr.mxu0 0.0
      %7287 = vmatpush1.msra.mxu0 0.0
      %7288 = vmatprep.subr.mxu0 0.0
      %7289 = vmatpush1.msra.mxu0 0.0
      %7290 = vmatprep.subr.mxu0 0.0
      %7291 = vmatpush1.msra.mxu0 0.0
      %7292 = vmatprep.subr.mxu0 0.0
      %7293 = vmatpush1.msra.mxu0 0.0
      %7294 = vmatprep.subr.mxu0 0.0
      %7295 = vmatpush1.msra.mxu0 0.0
      %7296 = vmatprep.subr.mxu0 0.0
      %7297 = vmatpush1.msra.mxu0 0.0
      %7298 = vmatprep.mubr.f32.mxu0 0.0
      %7299 = vmatmul.mubr.f32.gmra.mrb[0].mxu0 %v7019
      %v7300 = vpop.f32.mrb[0].mxu0
      %v7301 = vadd.f32 0.0, %v7300
      %v7302 = vpop.f32.mrb[0].mxu0
      %v7303 = vadd.f32 0.0, %v7302
      %7304 = vdwg.mxu0
      %v7305 = vadd.f32 %v6973, %v7088
      %v7306 = vadd.f32 %v6974, %v7090
      %v7307 = vadd.f32 %v6975, %v7159
      %v7308 = vadd.f32 %v6976, %v7161
      %v7309 = vadd.f32 %v6977, %v7230
      %v7310 = vadd.f32 %v6978, %v7232
      %v7311 = vadd.f32 %v6979, %v7301
      %v7312 = vadd.f32 %v6980, %v7303
      %s7313 = scalar_lea.vmem %s2, 168
      %v7314 = vld [vmem:[%s7313] sm:$0xff]
      %7315 = vrot.lane.b32.xlu0 %v6301, 46
      %v7316 = vpop.permute.xlu0 %7315
      %7317 = vrot.lane.b32.xlu0 %v6302, 46
      %v7318 = vpop.permute.xlu0 %7317
      %7319 = vrot.lane.b32.xlu0 %v6303, 46
      %v7320 = vpop.permute.xlu0 %7319
      %7321 = vrot.lane.b32.xlu0 %v6304, 46
      %v7322 = vpop.permute.xlu0 %7321
      %7323 = vrot.lane.b32.xlu0 %v6305, 46
      %v7324 = vpop.permute.xlu0 %7323
      %7325 = vrot.lane.b32.xlu0 %v6306, 46
      %v7326 = vpop.permute.xlu0 %7325
      %7327 = vrot.lane.b32.xlu0 %v6307, 46
      %v7328 = vpop.permute.xlu0 %7327
      %7329 = vrot.lane.b32.xlu0 %v6308, 46
      %v7330 = vpop.permute.xlu0 %7329
      %7331 = vrot.lane.b32.xlu0 %v6309, 46
      %v7332 = vpop.permute.xlu0 %7331
      %vm7333 = vcmask 375808
      %v7334 = vsel %vm7333, %v7316, %v7318
      %v7335 = vsel %vm7333, %v7318, %v7320
      %v7336 = vsel %vm7333, %v7320, %v7322
      %v7337 = vsel %vm7333, %v7322, %v7324
      %v7338 = vsel %vm7333, %v7324, %v7326
      %v7339 = vsel %vm7333, %v7326, %v7328
      %v7340 = vsel %vm7333, %v7328, %v7330
      %v7341 = vsel %vm7333, %v7330, %v7332
      %v7351 = vsel %vm337, %v7314, 0
      %7353 = vmatprep.subr.mxu0 %v7335
      %7354 = vmatpush1.msra.mxu0 %v7334
      %7355 = vmatprep.subr.mxu0 0.0
      %7356 = vmatpush1.msra.mxu0 0.0
      %7357 = vmatprep.subr.mxu0 0.0
      %7358 = vmatpush1.msra.mxu0 0.0
      %7359 = vmatprep.subr.mxu0 0.0
      %7360 = vmatpush1.msra.mxu0 0.0
      %7361 = vmatprep.subr.mxu0 0.0
      %7362 = vmatpush1.msra.mxu0 0.0
      %7363 = vmatprep.subr.mxu0 0.0
      %7364 = vmatpush1.msra.mxu0 0.0
      %7365 = vmatprep.subr.mxu0 0.0
      %7366 = vmatpush1.msra.mxu0 0.0
      %7367 = vmatprep.subr.mxu0 0.0
      %7368 = vmatpush1.msra.mxu0 0.0
      %7369 = vmatprep.subr.mxu0 0.0
      %7370 = vmatpush1.msra.mxu0 0.0
      %7371 = vmatprep.subr.mxu0 0.0
      %7372 = vmatpush1.msra.mxu0 0.0
      %7373 = vmatprep.subr.mxu0 0.0
      %7374 = vmatpush1.msra.mxu0 0.0
      %7375 = vmatprep.subr.mxu0 0.0
      %7376 = vmatpush1.msra.mxu0 0.0
      %7377 = vmatprep.subr.mxu0 0.0
      %7378 = vmatpush1.msra.mxu0 0.0
      %7379 = vmatprep.subr.mxu0 0.0
      %7380 = vmatpush1.msra.mxu0 0.0
      %7381 = vmatprep.subr.mxu0 0.0
      %7382 = vmatpush1.msra.mxu0 0.0
      %7383 = vmatprep.subr.mxu0 0.0
      %7384 = vmatpush1.msra.mxu0 0.0
      %7385 = vmatprep.subr.mxu0 0.0
      %7386 = vmatpush1.msra.mxu0 0.0
      %7387 = vmatprep.subr.mxu0 0.0
      %7388 = vmatpush1.msra.mxu0 0.0
      %7389 = vmatprep.subr.mxu0 0.0
      %7390 = vmatpush1.msra.mxu0 0.0
      %7391 = vmatprep.subr.mxu0 0.0
      %7392 = vmatpush1.msra.mxu0 0.0
      %7393 = vmatprep.subr.mxu0 0.0
      %7394 = vmatpush1.msra.mxu0 0.0
      %7395 = vmatprep.subr.mxu0 0.0
      %7396 = vmatpush1.msra.mxu0 0.0
      %7397 = vmatprep.subr.mxu0 0.0
      %7398 = vmatpush1.msra.mxu0 0.0
      %7399 = vmatprep.subr.mxu0 0.0
      %7400 = vmatpush1.msra.mxu0 0.0
      %7401 = vmatprep.subr.mxu0 0.0
      %7402 = vmatpush1.msra.mxu0 0.0
      %7403 = vmatprep.subr.mxu0 0.0
      %7404 = vmatpush1.msra.mxu0 0.0
      %7405 = vmatprep.subr.mxu0 0.0
      %7406 = vmatpush1.msra.mxu0 0.0
      %7407 = vmatprep.subr.mxu0 0.0
      %7408 = vmatpush1.msra.mxu0 0.0
      %7409 = vmatprep.subr.mxu0 0.0
      %7410 = vmatpush1.msra.mxu0 0.0
      %7411 = vmatprep.subr.mxu0 0.0
      %7412 = vmatpush1.msra.mxu0 0.0
      %7413 = vmatprep.subr.mxu0 0.0
      %7414 = vmatpush1.msra.mxu0 0.0
      %7415 = vmatprep.subr.mxu0 0.0
      %7416 = vmatpush1.msra.mxu0 0.0
      %7417 = vmatprep.mubr.f32.mxu0 0.0
      %7418 = vmatmul.mubr.f32.gmra.mrb[0].mxu0 %v7351
      %v7419 = vpop.f32.mrb[0].mxu0
      %v7420 = vadd.f32 0.0, %v7419
      %v7421 = vpop.f32.mrb[0].mxu0
      %v7422 = vadd.f32 0.0, %v7421
      %7423 = vdwg.mxu0
      %7424 = vmatprep.subr.mxu0 %v7337
      %7425 = vmatpush1.msra.mxu0 %v7336
      %7426 = vmatprep.subr.mxu0 0.0
      %7427 = vmatpush1.msra.mxu0 0.0
      %7428 = vmatprep.subr.mxu0 0.0
      %7429 = vmatpush1.msra.mxu0 0.0
      %7430 = vmatprep.subr.mxu0 0.0
      %7431 = vmatpush1.msra.mxu0 0.0
      %7432 = vmatprep.subr.mxu0 0.0
      %7433 = vmatpush1.msra.mxu0 0.0
      %7434 = vmatprep.subr.mxu0 0.0
      %7435 = vmatpush1.msra.mxu0 0.0
      %7436 = vmatprep.subr.mxu0 0.0
      %7437 = vmatpush1.msra.mxu0 0.0
      %7438 = vmatprep.subr.mxu0 0.0
      %7439 = vmatpush1.msra.mxu0 0.0
      %7440 = vmatprep.subr.mxu0 0.0
      %7441 = vmatpush1.msra.mxu0 0.0
      %7442 = vmatprep.subr.mxu0 0.0
      %7443 = vmatpush1.msra.mxu0 0.0
      %7444 = vmatprep.subr.mxu0 0.0
      %7445 = vmatpush1.msra.mxu0 0.0
      %7446 = vmatprep.subr.mxu0 0.0
      %7447 = vmatpush1.msra.mxu0 0.0
      %7448 = vmatprep.subr.mxu0 0.0
      %7449 = vmatpush1.msra.mxu0 0.0
      %7450 = vmatprep.subr.mxu0 0.0
      %7451 = vmatpush1.msra.mxu0 0.0
      %7452 = vmatprep.subr.mxu0 0.0
      %7453 = vmatpush1.msra.mxu0 0.0
      %7454 = vmatprep.subr.mxu0 0.0
      %7455 = vmatpush1.msra.mxu0 0.0
      %7456 = vmatprep.subr.mxu0 0.0
      %7457 = vmatpush1.msra.mxu0 0.0
      %7458 = vmatprep.subr.mxu0 0.0
      %7459 = vmatpush1.msra.mxu0 0.0
      %7460 = vmatprep.subr.mxu0 0.0
      %7461 = vmatpush1.msra.mxu0 0.0
      %7462 = vmatprep.subr.mxu0 0.0
      %7463 = vmatpush1.msra.mxu0 0.0
      %7464 = vmatprep.subr.mxu0 0.0
      %7465 = vmatpush1.msra.mxu0 0.0
      %7466 = vmatprep.subr.mxu0 0.0
      %7467 = vmatpush1.msra.mxu0 0.0
      %7468 = vmatprep.subr.mxu0 0.0
      %7469 = vmatpush1.msra.mxu0 0.0
      %7470 = vmatprep.subr.mxu0 0.0
      %7471 = vmatpush1.msra.mxu0 0.0
      %7472 = vmatprep.subr.mxu0 0.0
      %7473 = vmatpush1.msra.mxu0 0.0
      %7474 = vmatprep.subr.mxu0 0.0
      %7475 = vmatpush1.msra.mxu0 0.0
      %7476 = vmatprep.subr.mxu0 0.0
      %7477 = vmatpush1.msra.mxu0 0.0
      %7478 = vmatprep.subr.mxu0 0.0
      %7479 = vmatpush1.msra.mxu0 0.0
      %7480 = vmatprep.subr.mxu0 0.0
      %7481 = vmatpush1.msra.mxu0 0.0
      %7482 = vmatprep.subr.mxu0 0.0
      %7483 = vmatpush1.msra.mxu0 0.0
      %7484 = vmatprep.subr.mxu0 0.0
      %7485 = vmatpush1.msra.mxu0 0.0
      %7486 = vmatprep.subr.mxu0 0.0
      %7487 = vmatpush1.msra.mxu0 0.0
      %7488 = vmatprep.mubr.f32.mxu0 0.0
      %7489 = vmatmul.mubr.f32.gmra.mrb[0].mxu0 %v7351
      %v7490 = vpop.f32.mrb[0].mxu0
      %v7491 = vadd.f32 0.0, %v7490
      %v7492 = vpop.f32.mrb[0].mxu0
      %v7493 = vadd.f32 0.0, %v7492
      %7494 = vdwg.mxu0
      %7495 = vmatprep.subr.mxu0 %v7339
      %7496 = vmatpush1.msra.mxu0 %v7338
      %7497 = vmatprep.subr.mxu0 0.0
      %7498 = vmatpush1.msra.mxu0 0.0
      %7499 = vmatprep.subr.mxu0 0.0
      %7500 = vmatpush1.msra.mxu0 0.0
      %7501 = vmatprep.subr.mxu0 0.0
      %7502 = vmatpush1.msra.mxu0 0.0
      %7503 = vmatprep.subr.mxu0 0.0
      %7504 = vmatpush1.msra.mxu0 0.0
      %7505 = vmatprep.subr.mxu0 0.0
      %7506 = vmatpush1.msra.mxu0 0.0
      %7507 = vmatprep.subr.mxu0 0.0
      %7508 = vmatpush1.msra.mxu0 0.0
      %7509 = vmatprep.subr.mxu0 0.0
      %7510 = vmatpush1.msra.mxu0 0.0
      %7511 = vmatprep.subr.mxu0 0.0
      %7512 = vmatpush1.msra.mxu0 0.0
      %7513 = vmatprep.subr.mxu0 0.0
      %7514 = vmatpush1.msra.mxu0 0.0
      %7515 = vmatprep.subr.mxu0 0.0
      %7516 = vmatpush1.msra.mxu0 0.0
      %7517 = vmatprep.subr.mxu0 0.0
      %7518 = vmatpush1.msra.mxu0 0.0
      %7519 = vmatprep.subr.mxu0 0.0
      %7520 = vmatpush1.msra.mxu0 0.0
      %7521 = vmatprep.subr.mxu0 0.0
      %7522 = vmatpush1.msra.mxu0 0.0
      %7523 = vmatprep.subr.mxu0 0.0
      %7524 = vmatpush1.msra.mxu0 0.0
      %7525 = vmatprep.subr.mxu0 0.0
      %7526 = vmatpush1.msra.mxu0 0.0
      %7527 = vmatprep.subr.mxu0 0.0
      %7528 = vmatpush1.msra.mxu0 0.0
      %7529 = vmatprep.subr.mxu0 0.0
      %7530 = vmatpush1.msra.mxu0 0.0
      %7531 = vmatprep.subr.mxu0 0.0
      %7532 = vmatpush1.msra.mxu0 0.0
      %7533 = vmatprep.subr.mxu0 0.0
      %7534 = vmatpush1.msra.mxu0 0.0
      %7535 = vmatprep.subr.mxu0 0.0
      %7536 = vmatpush1.msra.mxu0 0.0
      %7537 = vmatprep.subr.mxu0 0.0
      %7538 = vmatpush1.msra.mxu0 0.0
      %7539 = vmatprep.subr.mxu0 0.0
      %7540 = vmatpush1.msra.mxu0 0.0
      %7541 = vmatprep.subr.mxu0 0.0
      %7542 = vmatpush1.msra.mxu0 0.0
      %7543 = vmatprep.subr.mxu0 0.0
      %7544 = vmatpush1.msra.mxu0 0.0
      %7545 = vmatprep.subr.mxu0 0.0
      %7546 = vmatpush1.msra.mxu0 0.0
      %7547 = vmatprep.subr.mxu0 0.0
      %7548 = vmatpush1.msra.mxu0 0.0
      %7549 = vmatprep.subr.mxu0 0.0
      %7550 = vmatpush1.msra.mxu0 0.0
      %7551 = vmatprep.subr.mxu0 0.0
      %7552 = vmatpush1.msra.mxu0 0.0
      %7553 = vmatprep.subr.mxu0 0.0
      %7554 = vmatpush1.msra.mxu0 0.0
      %7555 = vmatprep.subr.mxu0 0.0
      %7556 = vmatpush1.msra.mxu0 0.0
      %7557 = vmatprep.subr.mxu0 0.0
      %7558 = vmatpush1.msra.mxu0 0.0
      %7559 = vmatprep.mubr.f32.mxu0 0.0
      %7560 = vmatmul.mubr.f32.gmra.mrb[0].mxu0 %v7351
      %v7561 = vpop.f32.mrb[0].mxu0
      %v7562 = vadd.f32 0.0, %v7561
      %v7563 = vpop.f32.mrb[0].mxu0
      %v7564 = vadd.f32 0.0, %v7563
      %7565 = vdwg.mxu0
      %7566 = vmatprep.subr.mxu0 %v7341
      %7567 = vmatpush1.msra.mxu0 %v7340
      %7568 = vmatprep.subr.mxu0 0.0
      %7569 = vmatpush1.msra.mxu0 0.0
      %7570 = vmatprep.subr.mxu0 0.0
      %7571 = vmatpush1.msra.mxu0 0.0
      %7572 = vmatprep.subr.mxu0 0.0
      %7573 = vmatpush1.msra.mxu0 0.0
      %7574 = vmatprep.subr.mxu0 0.0
      %7575 = vmatpush1.msra.mxu0 0.0
      %7576 = vmatprep.subr.mxu0 0.0
      %7577 = vmatpush1.msra.mxu0 0.0
      %7578 = vmatprep.subr.mxu0 0.0
      %7579 = vmatpush1.msra.mxu0 0.0
      %7580 = vmatprep.subr.mxu0 0.0
      %7581 = vmatpush1.msra.mxu0 0.0
      %7582 = vmatprep.subr.mxu0 0.0
      %7583 = vmatpush1.msra.mxu0 0.0
      %7584 = vmatprep.subr.mxu0 0.0
      %7585 = vmatpush1.msra.mxu0 0.0
      %7586 = vmatprep.subr.mxu0 0.0
      %7587 = vmatpush1.msra.mxu0 0.0
      %7588 = vmatprep.subr.mxu0 0.0
      %7589 = vmatpush1.msra.mxu0 0.0
      %7590 = vmatprep.subr.mxu0 0.0
      %7591 = vmatpush1.msra.mxu0 0.0
      %7592 = vmatprep.subr.mxu0 0.0
      %7593 = vmatpush1.msra.mxu0 0.0
      %7594 = vmatprep.subr.mxu0 0.0
      %7595 = vmatpush1.msra.mxu0 0.0
      %7596 = vmatprep.subr.mxu0 0.0
      %7597 = vmatpush1.msra.mxu0 0.0
      %7598 = vmatprep.subr.mxu0 0.0
      %7599 = vmatpush1.msra.mxu0 0.0
      %7600 = vmatprep.subr.mxu0 0.0
      %7601 = vmatpush1.msra.mxu0 0.0
      %7602 = vmatprep.subr.mxu0 0.0
      %7603 = vmatpush1.msra.mxu0 0.0
      %7604 = vmatprep.subr.mxu0 0.0
      %7605 = vmatpush1.msra.mxu0 0.0
      %7606 = vmatprep.subr.mxu0 0.0
      %7607 = vmatpush1.msra.mxu0 0.0
      %7608 = vmatprep.subr.mxu0 0.0
      %7609 = vmatpush1.msra.mxu0 0.0
      %7610 = vmatprep.subr.mxu0 0.0
      %7611 = vmatpush1.msra.mxu0 0.0
      %7612 = vmatprep.subr.mxu0 0.0
      %7613 = vmatpush1.msra.mxu0 0.0
      %7614 = vmatprep.subr.mxu0 0.0
      %7615 = vmatpush1.msra.mxu0 0.0
      %7616 = vmatprep.subr.mxu0 0.0
      %7617 = vmatpush1.msra.mxu0 0.0
      %7618 = vmatprep.subr.mxu0 0.0
      %7619 = vmatpush1.msra.mxu0 0.0
      %7620 = vmatprep.subr.mxu0 0.0
      %7621 = vmatpush1.msra.mxu0 0.0
      %7622 = vmatprep.subr.mxu0 0.0
      %7623 = vmatpush1.msra.mxu0 0.0
      %7624 = vmatprep.subr.mxu0 0.0
      %7625 = vmatpush1.msra.mxu0 0.0
      %7626 = vmatprep.subr.mxu0 0.0
      %7627 = vmatpush1.msra.mxu0 0.0
      %7628 = vmatprep.subr.mxu0 0.0
      %7629 = vmatpush1.msra.mxu0 0.0
      %7630 = vmatprep.mubr.f32.mxu0 0.0
      %7631 = vmatmul.mubr.f32.gmra.mrb[0].mxu0 %v7351
      %v7632 = vpop.f32.mrb[0].mxu0
      %v7633 = vadd.f32 0.0, %v7632
      %v7634 = vpop.f32.mrb[0].mxu0
      %v7635 = vadd.f32 0.0, %v7634
      %7636 = vdwg.mxu0
      %v7637 = vadd.f32 %v7305, %v7420
      %v7638 = vadd.f32 %v7306, %v7422
      %v7639 = vadd.f32 %v7307, %v7491
      %v7640 = vadd.f32 %v7308, %v7493
      %v7641 = vadd.f32 %v7309, %v7562
      %v7642 = vadd.f32 %v7310, %v7564
      %v7643 = vadd.f32 %v7311, %v7633
      %v7644 = vadd.f32 %v7312, %v7635
      %s7645 = scalar_lea.vmem %s2, 176
      %v7646 = vld [vmem:[%s7645] sm:$0xff]
      %7647 = vrot.lane.b32.xlu0 %v6301, 45
      %v7648 = vpop.permute.xlu0 %7647
      %7649 = vrot.lane.b32.xlu0 %v6302, 45
      %v7650 = vpop.permute.xlu0 %7649
      %7651 = vrot.lane.b32.xlu0 %v6303, 45
      %v7652 = vpop.permute.xlu0 %7651
      %7653 = vrot.lane.b32.xlu0 %v6304, 45
      %v7654 = vpop.permute.xlu0 %7653
      %7655 = vrot.lane.b32.xlu0 %v6305, 45
      %v7656 = vpop.permute.xlu0 %7655
      %7657 = vrot.lane.b32.xlu0 %v6306, 45
      %v7658 = vpop.permute.xlu0 %7657
      %7659 = vrot.lane.b32.xlu0 %v6307, 45
      %v7660 = vpop.permute.xlu0 %7659
      %7661 = vrot.lane.b32.xlu0 %v6308, 45
      %v7662 = vpop.permute.xlu0 %7661
      %7663 = vrot.lane.b32.xlu0 %v6309, 45
      %v7664 = vpop.permute.xlu0 %7663
      %vm7665 = vcmask 367616
      %v7666 = vsel %vm7665, %v7648, %v7650
      %v7667 = vsel %vm7665, %v7650, %v7652
      %v7668 = vsel %vm7665, %v7652, %v7654
      %v7669 = vsel %vm7665, %v7654, %v7656
      %v7670 = vsel %vm7665, %v7656, %v7658
      %v7671 = vsel %vm7665, %v7658, %v7660
      %v7672 = vsel %vm7665, %v7660, %v7662
      %v7673 = vsel %vm7665, %v7662, %v7664
      %v7683 = vsel %vm337, %v7646, 0
      %7685 = vmatprep.subr.mxu0 %v7667
      %7686 = vmatpush1.msra.mxu0 %v7666
      %7687 = vmatprep.subr.mxu0 0.0
      %7688 = vmatpush1.msra.mxu0 0.0
      %7689 = vmatprep.subr.mxu0 0.0
      %7690 = vmatpush1.msra.mxu0 0.0
      %7691 = vmatprep.subr.mxu0 0.0
      %7692 = vmatpush1.msra.mxu0 0.0
      %7693 = vmatprep.subr.mxu0 0.0
      %7694 = vmatpush1.msra.mxu0 0.0
      %7695 = vmatprep.subr.mxu0 0.0
      %7696 = vmatpush1.msra.mxu0 0.0
      %7697 = vmatprep.subr.mxu0 0.0
      %7698 = vmatpush1.msra.mxu0 0.0
      %7699 = vmatprep.subr.mxu0 0.0
      %7700 = vmatpush1.msra.mxu0 0.0
      %7701 = vmatprep.subr.mxu0 0.0
      %7702 = vmatpush1.msra.mxu0 0.0
      %7703 = vmatprep.subr.mxu0 0.0
      %7704 = vmatpush1.msra.mxu0 0.0
      %7705 = vmatprep.subr.mxu0 0.0
      %7706 = vmatpush1.msra.mxu0 0.0
      %7707 = vmatprep.subr.mxu0 0.0
      %7708 = vmatpush1.msra.mxu0 0.0
      %7709 = vmatprep.subr.mxu0 0.0
      %7710 = vmatpush1.msra.mxu0 0.0
      %7711 = vmatprep.subr.mxu0 0.0
      %7712 = vmatpush1.msra.mxu0 0.0
      %7713 = vmatprep.subr.mxu0 0.0
      %7714 = vmatpush1.msra.mxu0 0.0
      %7715 = vmatprep.subr.mxu0 0.0
      %7716 = vmatpush1.msra.mxu0 0.0
      %7717 = vmatprep.subr.mxu0 0.0
      %7718 = vmatpush1.msra.mxu0 0.0
      %7719 = vmatprep.subr.mxu0 0.0
      %7720 = vmatpush1.msra.mxu0 0.0
      %7721 = vmatprep.subr.mxu0 0.0
      %7722 = vmatpush1.msra.mxu0 0.0
      %7723 = vmatprep.subr.mxu0 0.0
      %7724 = vmatpush1.msra.mxu0 0.0
      %7725 = vmatprep.subr.mxu0 0.0
      %7726 = vmatpush1.msra.mxu0 0.0
      %7727 = vmatprep.subr.mxu0 0.0
      %7728 = vmatpush1.msra.mxu0 0.0
      %7729 = vmatprep.subr.mxu0 0.0
      %7730 = vmatpush1.msra.mxu0 0.0
      %7731 = vmatprep.subr.mxu0 0.0
      %7732 = vmatpush1.msra.mxu0 0.0
      %7733 = vmatprep.subr.mxu0 0.0
      %7734 = vmatpush1.msra.mxu0 0.0
      %7735 = vmatprep.subr.mxu0 0.0
      %7736 = vmatpush1.msra.mxu0 0.0
      %7737 = vmatprep.subr.mxu0 0.0
      %7738 = vmatpush1.msra.mxu0 0.0
      %7739 = vmatprep.subr.mxu0 0.0
      %7740 = vmatpush1.msra.mxu0 0.0
      %7741 = vmatprep.subr.mxu0 0.0
      %7742 = vmatpush1.msra.mxu0 0.0
      %7743 = vmatprep.subr.mxu0 0.0
      %7744 = vmatpush1.msra.mxu0 0.0
      %7745 = vmatprep.subr.mxu0 0.0
      %7746 = vmatpush1.msra.mxu0 0.0
      %7747 = vmatprep.subr.mxu0 0.0
      %7748 = vmatpush1.msra.mxu0 0.0
      %7749 = vmatprep.mubr.f32.mxu0 0.0
      %7750 = vmatmul.mubr.f32.gmra.mrb[0].mxu0 %v7683
      %v7751 = vpop.f32.mrb[0].mxu0
      %v7752 = vadd.f32 0.0, %v7751
      %v7753 = vpop.f32.mrb[0].mxu0
      %v7754 = vadd.f32 0.0, %v7753
      %7755 = vdwg.mxu0
      %7756 = vmatprep.subr.mxu0 %v7669
      %7757 = vmatpush1.msra.mxu0 %v7668
      %7758 = vmatprep.subr.mxu0 0.0
      %7759 = vmatpush1.msra.mxu0 0.0
      %7760 = vmatprep.subr.mxu0 0.0
      %7761 = vmatpush1.msra.mxu0 0.0
      %7762 = vmatprep.subr.mxu0 0.0
      %7763 = vmatpush1.msra.mxu0 0.0
      %7764 = vmatprep.subr.mxu0 0.0
      %7765 = vmatpush1.msra.mxu0 0.0
      %7766 = vmatprep.subr.mxu0 0.0
      %7767 = vmatpush1.msra.mxu0 0.0
      %7768 = vmatprep.subr.mxu0 0.0
      %7769 = vmatpush1.msra.mxu0 0.0
      %7770 = vmatprep.subr.mxu0 0.0
      %7771 = vmatpush1.msra.mxu0 0.0
      %7772 = vmatprep.subr.mxu0 0.0
      %7773 = vmatpush1.msra.mxu0 0.0
      %7774 = vmatprep.subr.mxu0 0.0
      %7775 = vmatpush1.msra.mxu0 0.0
      %7776 = vmatprep.subr.mxu0 0.0
      %7777 = vmatpush1.msra.mxu0 0.0
      %7778 = vmatprep.subr.mxu0 0.0
      %7779 = vmatpush1.msra.mxu0 0.0
      %7780 = vmatprep.subr.mxu0 0.0
      %7781 = vmatpush1.msra.mxu0 0.0
      %7782 = vmatprep.subr.mxu0 0.0
      %7783 = vmatpush1.msra.mxu0 0.0
      %7784 = vmatprep.subr.mxu0 0.0
      %7785 = vmatpush1.msra.mxu0 0.0
      %7786 = vmatprep.subr.mxu0 0.0
      %7787 = vmatpush1.msra.mxu0 0.0
      %7788 = vmatprep.subr.mxu0 0.0
      %7789 = vmatpush1.msra.mxu0 0.0
      %7790 = vmatprep.subr.mxu0 0.0
      %7791 = vmatpush1.msra.mxu0 0.0
      %7792 = vmatprep.subr.mxu0 0.0
      %7793 = vmatpush1.msra.mxu0 0.0
      %7794 = vmatprep.subr.mxu0 0.0
      %7795 = vmatpush1.msra.mxu0 0.0
      %7796 = vmatprep.subr.mxu0 0.0
      %7797 = vmatpush1.msra.mxu0 0.0
      %7798 = vmatprep.subr.mxu0 0.0
      %7799 = vmatpush1.msra.mxu0 0.0
      %7800 = vmatprep.subr.mxu0 0.0
      %7801 = vmatpush1.msra.mxu0 0.0
      %7802 = vmatprep.subr.mxu0 0.0
      %7803 = vmatpush1.msra.mxu0 0.0
      %7804 = vmatprep.subr.mxu0 0.0
      %7805 = vmatpush1.msra.mxu0 0.0
      %7806 = vmatprep.subr.mxu0 0.0
      %7807 = vmatpush1.msra.mxu0 0.0
      %7808 = vmatprep.subr.mxu0 0.0
      %7809 = vmatpush1.msra.mxu0 0.0
      %7810 = vmatprep.subr.mxu0 0.0
      %7811 = vmatpush1.msra.mxu0 0.0
      %7812 = vmatprep.subr.mxu0 0.0
      %7813 = vmatpush1.msra.mxu0 0.0
      %7814 = vmatprep.subr.mxu0 0.0
      %7815 = vmatpush1.msra.mxu0 0.0
      %7816 = vmatprep.subr.mxu0 0.0
      %7817 = vmatpush1.msra.mxu0 0.0
      %7818 = vmatprep.subr.mxu0 0.0
      %7819 = vmatpush1.msra.mxu0 0.0
      %7820 = vmatprep.mubr.f32.mxu0 0.0
      %7821 = vmatmul.mubr.f32.gmra.mrb[0].mxu0 %v7683
      %v7822 = vpop.f32.mrb[0].mxu0
      %v7823 = vadd.f32 0.0, %v7822
      %v7824 = vpop.f32.mrb[0].mxu0
      %v7825 = vadd.f32 0.0, %v7824
      %7826 = vdwg.mxu0
      %7827 = vmatprep.subr.mxu0 %v7671
      %7828 = vmatpush1.msra.mxu0 %v7670
      %7829 = vmatprep.subr.mxu0 0.0
      %7830 = vmatpush1.msra.mxu0 0.0
      %7831 = vmatprep.subr.mxu0 0.0
      %7832 = vmatpush1.msra.mxu0 0.0
      %7833 = vmatprep.subr.mxu0 0.0
      %7834 = vmatpush1.msra.mxu0 0.0
      %7835 = vmatprep.subr.mxu0 0.0
      %7836 = vmatpush1.msra.mxu0 0.0
      %7837 = vmatprep.subr.mxu0 0.0
      %7838 = vmatpush1.msra.mxu0 0.0
      %7839 = vmatprep.subr.mxu0 0.0
      %7840 = vmatpush1.msra.mxu0 0.0
      %7841 = vmatprep.subr.mxu0 0.0
      %7842 = vmatpush1.msra.mxu0 0.0
      %7843 = vmatprep.subr.mxu0 0.0
      %7844 = vmatpush1.msra.mxu0 0.0
      %7845 = vmatprep.subr.mxu0 0.0
      %7846 = vmatpush1.msra.mxu0 0.0
      %7847 = vmatprep.subr.mxu0 0.0
      %7848 = vmatpush1.msra.mxu0 0.0
      %7849 = vmatprep.subr.mxu0 0.0
      %7850 = vmatpush1.msra.mxu0 0.0
      %7851 = vmatprep.subr.mxu0 0.0
      %7852 = vmatpush1.msra.mxu0 0.0
      %7853 = vmatprep.subr.mxu0 0.0
      %7854 = vmatpush1.msra.mxu0 0.0
      %7855 = vmatprep.subr.mxu0 0.0
      %7856 = vmatpush1.msra.mxu0 0.0
      %7857 = vmatprep.subr.mxu0 0.0
      %7858 = vmatpush1.msra.mxu0 0.0
      %7859 = vmatprep.subr.mxu0 0.0
      %7860 = vmatpush1.msra.mxu0 0.0
      %7861 = vmatprep.subr.mxu0 0.0
      %7862 = vmatpush1.msra.mxu0 0.0
      %7863 = vmatprep.subr.mxu0 0.0
      %7864 = vmatpush1.msra.mxu0 0.0
      %7865 = vmatprep.subr.mxu0 0.0
      %7866 = vmatpush1.msra.mxu0 0.0
      %7867 = vmatprep.subr.mxu0 0.0
      %7868 = vmatpush1.msra.mxu0 0.0
      %7869 = vmatprep.subr.mxu0 0.0
      %7870 = vmatpush1.msra.mxu0 0.0
      %7871 = vmatprep.subr.mxu0 0.0
      %7872 = vmatpush1.msra.mxu0 0.0
      %7873 = vmatprep.subr.mxu0 0.0
      %7874 = vmatpush1.msra.mxu0 0.0
      %7875 = vmatprep.subr.mxu0 0.0
      %7876 = vmatpush1.msra.mxu0 0.0
      %7877 = vmatprep.subr.mxu0 0.0
      %7878 = vmatpush1.msra.mxu0 0.0
      %7879 = vmatprep.subr.mxu0 0.0
      %7880 = vmatpush1.msra.mxu0 0.0
      %7881 = vmatprep.subr.mxu0 0.0
      %7882 = vmatpush1.msra.mxu0 0.0
      %7883 = vmatprep.subr.mxu0 0.0
      %7884 = vmatpush1.msra.mxu0 0.0
      %7885 = vmatprep.subr.mxu0 0.0
      %7886 = vmatpush1.msra.mxu0 0.0
      %7887 = vmatprep.subr.mxu0 0.0
      %7888 = vmatpush1.msra.mxu0 0.0
      %7889 = vmatprep.subr.mxu0 0.0
      %7890 = vmatpush1.msra.mxu0 0.0
      %7891 = vmatprep.mubr.f32.mxu0 0.0
      %7892 = vmatmul.mubr.f32.gmra.mrb[0].mxu0 %v7683
      %v7893 = vpop.f32.mrb[0].mxu0
      %v7894 = vadd.f32 0.0, %v7893
      %v7895 = vpop.f32.mrb[0].mxu0
      %v7896 = vadd.f32 0.0, %v7895
      %7897 = vdwg.mxu0
      %7898 = vmatprep.subr.mxu0 %v7673
      %7899 = vmatpush1.msra.mxu0 %v7672
      %7900 = vmatprep.subr.mxu0 0.0
      %7901 = vmatpush1.msra.mxu0 0.0
      %7902 = vmatprep.subr.mxu0 0.0
      %7903 = vmatpush1.msra.mxu0 0.0
      %7904 = vmatprep.subr.mxu0 0.0
      %7905 = vmatpush1.msra.mxu0 0.0
      %7906 = vmatprep.subr.mxu0 0.0
      %7907 = vmatpush1.msra.mxu0 0.0
      %7908 = vmatprep.subr.mxu0 0.0
      %7909 = vmatpush1.msra.mxu0 0.0
      %7910 = vmatprep.subr.mxu0 0.0
      %7911 = vmatpush1.msra.mxu0 0.0
      %7912 = vmatprep.subr.mxu0 0.0
      %7913 = vmatpush1.msra.mxu0 0.0
      %7914 = vmatprep.subr.mxu0 0.0
      %7915 = vmatpush1.msra.mxu0 0.0
      %7916 = vmatprep.subr.mxu0 0.0
      %7917 = vmatpush1.msra.mxu0 0.0
      %7918 = vmatprep.subr.mxu0 0.0
      %7919 = vmatpush1.msra.mxu0 0.0
      %7920 = vmatprep.subr.mxu0 0.0
      %7921 = vmatpush1.msra.mxu0 0.0
      %7922 = vmatprep.subr.mxu0 0.0
      %7923 = vmatpush1.msra.mxu0 0.0
      %7924 = vmatprep.subr.mxu0 0.0
      %7925 = vmatpush1.msra.mxu0 0.0
      %7926 = vmatprep.subr.mxu0 0.0
      %7927 = vmatpush1.msra.mxu0 0.0
      %7928 = vmatprep.subr.mxu0 0.0
      %7929 = vmatpush1.msra.mxu0 0.0
      %7930 = vmatprep.subr.mxu0 0.0
      %7931 = vmatpush1.msra.mxu0 0.0
      %7932 = vmatprep.subr.mxu0 0.0
      %7933 = vmatpush1.msra.mxu0 0.0
      %7934 = vmatprep.subr.mxu0 0.0
      %7935 = vmatpush1.msra.mxu0 0.0
      %7936 = vmatprep.subr.mxu0 0.0
      %7937 = vmatpush1.msra.mxu0 0.0
      %7938 = vmatprep.subr.mxu0 0.0
      %7939 = vmatpush1.msra.mxu0 0.0
      %7940 = vmatprep.subr.mxu0 0.0
      %7941 = vmatpush1.msra.mxu0 0.0
      %7942 = vmatprep.subr.mxu0 0.0
      %7943 = vmatpush1.msra.mxu0 0.0
      %7944 = vmatprep.subr.mxu0 0.0
      %7945 = vmatpush1.msra.mxu0 0.0
      %7946 = vmatprep.subr.mxu0 0.0
      %7947 = vmatpush1.msra.mxu0 0.0
      %7948 = vmatprep.subr.mxu0 0.0
      %7949 = vmatpush1.msra.mxu0 0.0
      %7950 = vmatprep.subr.mxu0 0.0
      %7951 = vmatpush1.msra.mxu0 0.0
      %7952 = vmatprep.subr.mxu0 0.0
      %7953 = vmatpush1.msra.mxu0 0.0
      %7954 = vmatprep.subr.mxu0 0.0
      %7955 = vmatpush1.msra.mxu0 0.0
      %7956 = vmatprep.subr.mxu0 0.0
      %7957 = vmatpush1.msra.mxu0 0.0
      %7958 = vmatprep.subr.mxu0 0.0
      %7959 = vmatpush1.msra.mxu0 0.0
      %7960 = vmatprep.subr.mxu0 0.0
      %7961 = vmatpush1.msra.mxu0 0.0
      %7962 = vmatprep.mubr.f32.mxu0 0.0
      %7963 = vmatmul.mubr.f32.gmra.mrb[0].mxu0 %v7683
      %v7964 = vpop.f32.mrb[0].mxu0
      %v7965 = vadd.f32 0.0, %v7964
      %v7966 = vpop.f32.mrb[0].mxu0
      %v7967 = vadd.f32 0.0, %v7966
      %7968 = vdwg.mxu0
      %v7969 = vadd.f32 %v7637, %v7752
      %v7970 = vadd.f32 %v7638, %v7754
      %v7971 = vadd.f32 %v7639, %v7823
      %v7972 = vadd.f32 %v7640, %v7825
      %v7973 = vadd.f32 %v7641, %v7894
      %v7974 = vadd.f32 %v7642, %v7896
      %v7975 = vadd.f32 %v7643, %v7965
      %v7976 = vadd.f32 %v7644, %v7967
      %s7977 = scalar_lea.vmem %s2, 184
      %v7978 = vld [vmem:[%s7977] sm:$0xff]
      %7979 = vrot.lane.b32.xlu0 %v6301, 44
      %v7980 = vpop.permute.xlu0 %7979
      %7981 = vrot.lane.b32.xlu0 %v6302, 44
      %v7982 = vpop.permute.xlu0 %7981
      %7983 = vrot.lane.b32.xlu0 %v6303, 44
      %v7984 = vpop.permute.xlu0 %7983
      %7985 = vrot.lane.b32.xlu0 %v6304, 44
      %v7986 = vpop.permute.xlu0 %7985
      %7987 = vrot.lane.b32.xlu0 %v6305, 44
      %v7988 = vpop.permute.xlu0 %7987
      %7989 = vrot.lane.b32.xlu0 %v6306, 44
      %v7990 = vpop.permute.xlu0 %7989
      %7991 = vrot.lane.b32.xlu0 %v6307, 44
      %v7992 = vpop.permute.xlu0 %7991
      %7993 = vrot.lane.b32.xlu0 %v6308, 44
      %v7994 = vpop.permute.xlu0 %7993
      %7995 = vrot.lane.b32.xlu0 %v6309, 44
      %v7996 = vpop.permute.xlu0 %7995
      %vm7997 = vcmask 359424
      %v7998 = vsel %vm7997, %v7980, %v7982
      %v7999 = vsel %vm7997, %v7982, %v7984
      %v8000 = vsel %vm7997, %v7984, %v7986
      %v8001 = vsel %vm7997, %v7986, %v7988
      %v8002 = vsel %vm7997, %v7988, %v7990
      %v8003 = vsel %vm7997, %v7990, %v7992
      %v8004 = vsel %vm7997, %v7992, %v7994
      %v8005 = vsel %vm7997, %v7994, %v7996
      %v8015 = vsel %vm337, %v7978, 0
      %8017 = vmatprep.subr.mxu0 %v7999
      %8018 = vmatpush1.msra.mxu0 %v7998
      %8019 = vmatprep.subr.mxu0 0.0
      %8020 = vmatpush1.msra.mxu0 0.0
      %8021 = vmatprep.subr.mxu0 0.0
      %8022 = vmatpush1.msra.mxu0 0.0
      %8023 = vmatprep.subr.mxu0 0.0
      %8024 = vmatpush1.msra.mxu0 0.0
      %8025 = vmatprep.subr.mxu0 0.0
      %8026 = vmatpush1.msra.mxu0 0.0
      %8027 = vmatprep.subr.mxu0 0.0
      %8028 = vmatpush1.msra.mxu0 0.0
      %8029 = vmatprep.subr.mxu0 0.0
      %8030 = vmatpush1.msra.mxu0 0.0
      %8031 = vmatprep.subr.mxu0 0.0
      %8032 = vmatpush1.msra.mxu0 0.0
      %8033 = vmatprep.subr.mxu0 0.0
      %8034 = vmatpush1.msra.mxu0 0.0
      %8035 = vmatprep.subr.mxu0 0.0
      %8036 = vmatpush1.msra.mxu0 0.0
      %8037 = vmatprep.subr.mxu0 0.0
      %8038 = vmatpush1.msra.mxu0 0.0
      %8039 = vmatprep.subr.mxu0 0.0
      %8040 = vmatpush1.msra.mxu0 0.0
      %8041 = vmatprep.subr.mxu0 0.0
      %8042 = vmatpush1.msra.mxu0 0.0
      %8043 = vmatprep.subr.mxu0 0.0
      %8044 = vmatpush1.msra.mxu0 0.0
      %8045 = vmatprep.subr.mxu0 0.0
      %8046 = vmatpush1.msra.mxu0 0.0
      %8047 = vmatprep.subr.mxu0 0.0
      %8048 = vmatpush1.msra.mxu0 0.0
      %8049 = vmatprep.subr.mxu0 0.0
      %8050 = vmatpush1.msra.mxu0 0.0
      %8051 = vmatprep.subr.mxu0 0.0
      %8052 = vmatpush1.msra.mxu0 0.0
      %8053 = vmatprep.subr.mxu0 0.0
      %8054 = vmatpush1.msra.mxu0 0.0
      %8055 = vmatprep.subr.mxu0 0.0
      %8056 = vmatpush1.msra.mxu0 0.0
      %8057 = vmatprep.subr.mxu0 0.0
      %8058 = vmatpush1.msra.mxu0 0.0
      %8059 = vmatprep.subr.mxu0 0.0
      %8060 = vmatpush1.msra.mxu0 0.0
      %8061 = vmatprep.subr.mxu0 0.0
      %8062 = vmatpush1.msra.mxu0 0.0
      %8063 = vmatprep.subr.mxu0 0.0
      %8064 = vmatpush1.msra.mxu0 0.0
      %8065 = vmatprep.subr.mxu0 0.0
      %8066 = vmatpush1.msra.mxu0 0.0
      %8067 = vmatprep.subr.mxu0 0.0
      %8068 = vmatpush1.msra.mxu0 0.0
      %8069 = vmatprep.subr.mxu0 0.0
      %8070 = vmatpush1.msra.mxu0 0.0
      %8071 = vmatprep.subr.mxu0 0.0
      %8072 = vmatpush1.msra.mxu0 0.0
      %8073 = vmatprep.subr.mxu0 0.0
      %8074 = vmatpush1.msra.mxu0 0.0
      %8075 = vmatprep.subr.mxu0 0.0
      %8076 = vmatpush1.msra.mxu0 0.0
      %8077 = vmatprep.subr.mxu0 0.0
      %8078 = vmatpush1.msra.mxu0 0.0
      %8079 = vmatprep.subr.mxu0 0.0
      %8080 = vmatpush1.msra.mxu0 0.0
      %8081 = vmatprep.mubr.f32.mxu0 0.0
      %8082 = vmatmul.mubr.f32.gmra.mrb[0].mxu0 %v8015
      %v8083 = vpop.f32.mrb[0].mxu0
      %v8084 = vadd.f32 0.0, %v8083
      %v8085 = vpop.f32.mrb[0].mxu0
      %v8086 = vadd.f32 0.0, %v8085
      %8087 = vdwg.mxu0
      %8088 = vmatprep.subr.mxu0 %v8001
      %8089 = vmatpush1.msra.mxu0 %v8000
      %8090 = vmatprep.subr.mxu0 0.0
      %8091 = vmatpush1.msra.mxu0 0.0
      %8092 = vmatprep.subr.mxu0 0.0
      %8093 = vmatpush1.msra.mxu0 0.0
      %8094 = vmatprep.subr.mxu0 0.0
      %8095 = vmatpush1.msra.mxu0 0.0
      %8096 = vmatprep.subr.mxu0 0.0
      %8097 = vmatpush1.msra.mxu0 0.0
      %8098 = vmatprep.subr.mxu0 0.0
      %8099 = vmatpush1.msra.mxu0 0.0
      %8100 = vmatprep.subr.mxu0 0.0
      %8101 = vmatpush1.msra.mxu0 0.0
      %8102 = vmatprep.subr.mxu0 0.0
      %8103 = vmatpush1.msra.mxu0 0.0
      %8104 = vmatprep.subr.mxu0 0.0
      %8105 = vmatpush1.msra.mxu0 0.0
      %8106 = vmatprep.subr.mxu0 0.0
      %8107 = vmatpush1.msra.mxu0 0.0
      %8108 = vmatprep.subr.mxu0 0.0
      %8109 = vmatpush1.msra.mxu0 0.0
      %8110 = vmatprep.subr.mxu0 0.0
      %8111 = vmatpush1.msra.mxu0 0.0
      %8112 = vmatprep.subr.mxu0 0.0
      %8113 = vmatpush1.msra.mxu0 0.0
      %8114 = vmatprep.subr.mxu0 0.0
      %8115 = vmatpush1.msra.mxu0 0.0
      %8116 = vmatprep.subr.mxu0 0.0
      %8117 = vmatpush1.msra.mxu0 0.0
      %8118 = vmatprep.subr.mxu0 0.0
      %8119 = vmatpush1.msra.mxu0 0.0
      %8120 = vmatprep.subr.mxu0 0.0
      %8121 = vmatpush1.msra.mxu0 0.0
      %8122 = vmatprep.subr.mxu0 0.0
      %8123 = vmatpush1.msra.mxu0 0.0
      %8124 = vmatprep.subr.mxu0 0.0
      %8125 = vmatpush1.msra.mxu0 0.0
      %8126 = vmatprep.subr.mxu0 0.0
      %8127 = vmatpush1.msra.mxu0 0.0
      %8128 = vmatprep.subr.mxu0 0.0
      %8129 = vmatpush1.msra.mxu0 0.0
      %8130 = vmatprep.subr.mxu0 0.0
      %8131 = vmatpush1.msra.mxu0 0.0
      %8132 = vmatprep.subr.mxu0 0.0
      %8133 = vmatpush1.msra.mxu0 0.0
      %8134 = vmatprep.subr.mxu0 0.0
      %8135 = vmatpush1.msra.mxu0 0.0
      %8136 = vmatprep.subr.mxu0 0.0
      %8137 = vmatpush1.msra.mxu0 0.0
      %8138 = vmatprep.subr.mxu0 0.0
      %8139 = vmatpush1.msra.mxu0 0.0
      %8140 = vmatprep.subr.mxu0 0.0
      %8141 = vmatpush1.msra.mxu0 0.0
      %8142 = vmatprep.subr.mxu0 0.0
      %8143 = vmatpush1.msra.mxu0 0.0
      %8144 = vmatprep.subr.mxu0 0.0
      %8145 = vmatpush1.msra.mxu0 0.0
      %8146 = vmatprep.subr.mxu0 0.0
      %8147 = vmatpush1.msra.mxu0 0.0
      %8148 = vmatprep.subr.mxu0 0.0
      %8149 = vmatpush1.msra.mxu0 0.0
      %8150 = vmatprep.subr.mxu0 0.0
      %8151 = vmatpush1.msra.mxu0 0.0
      %8152 = vmatprep.mubr.f32.mxu0 0.0
      %8153 = vmatmul.mubr.f32.gmra.mrb[0].mxu0 %v8015
      %v8154 = vpop.f32.mrb[0].mxu0
      %v8155 = vadd.f32 0.0, %v8154
      %v8156 = vpop.f32.mrb[0].mxu0
      %v8157 = vadd.f32 0.0, %v8156
      %8158 = vdwg.mxu0
      %8159 = vmatprep.subr.mxu0 %v8003
      %8160 = vmatpush1.msra.mxu0 %v8002
      %8161 = vmatprep.subr.mxu0 0.0
      %8162 = vmatpush1.msra.mxu0 0.0
      %8163 = vmatprep.subr.mxu0 0.0
      %8164 = vmatpush1.msra.mxu0 0.0
      %8165 = vmatprep.subr.mxu0 0.0
      %8166 = vmatpush1.msra.mxu0 0.0
      %8167 = vmatprep.subr.mxu0 0.0
      %8168 = vmatpush1.msra.mxu0 0.0
      %8169 = vmatprep.subr.mxu0 0.0
      %8170 = vmatpush1.msra.mxu0 0.0
      %8171 = vmatprep.subr.mxu0 0.0
      %8172 = vmatpush1.msra.mxu0 0.0
      %8173 = vmatprep.subr.mxu0 0.0
      %8174 = vmatpush1.msra.mxu0 0.0
      %8175 = vmatprep.subr.mxu0 0.0
      %8176 = vmatpush1.msra.mxu0 0.0
      %8177 = vmatprep.subr.mxu0 0.0
      %8178 = vmatpush1.msra.mxu0 0.0
      %8179 = vmatprep.subr.mxu0 0.0
      %8180 = vmatpush1.msra.mxu0 0.0
      %8181 = vmatprep.subr.mxu0 0.0
      %8182 = vmatpush1.msra.mxu0 0.0
      %8183 = vmatprep.subr.mxu0 0.0
      %8184 = vmatpush1.msra.mxu0 0.0
      %8185 = vmatprep.subr.mxu0 0.0
      %8186 = vmatpush1.msra.mxu0 0.0
      %8187 = vmatprep.subr.mxu0 0.0
      %8188 = vmatpush1.msra.mxu0 0.0
      %8189 = vmatprep.subr.mxu0 0.0
      %8190 = vmatpush1.msra.mxu0 0.0
      %8191 = vmatprep.subr.mxu0 0.0
      %8192 = vmatpush1.msra.mxu0 0.0
      %8193 = vmatprep.subr.mxu0 0.0
      %8194 = vmatpush1.msra.mxu0 0.0
      %8195 = vmatprep.subr.mxu0 0.0
      %8196 = vmatpush1.msra.mxu0 0.0
      %8197 = vmatprep.subr.mxu0 0.0
      %8198 = vmatpush1.msra.mxu0 0.0
      %8199 = vmatprep.subr.mxu0 0.0
      %8200 = vmatpush1.msra.mxu0 0.0
      %8201 = vmatprep.subr.mxu0 0.0
      %8202 = vmatpush1.msra.mxu0 0.0
      %8203 = vmatprep.subr.mxu0 0.0
      %8204 = vmatpush1.msra.mxu0 0.0
      %8205 = vmatprep.subr.mxu0 0.0
      %8206 = vmatpush1.msra.mxu0 0.0
      %8207 = vmatprep.subr.mxu0 0.0
      %8208 = vmatpush1.msra.mxu0 0.0
      %8209 = vmatprep.subr.mxu0 0.0
      %8210 = vmatpush1.msra.mxu0 0.0
      %8211 = vmatprep.subr.mxu0 0.0
      %8212 = vmatpush1.msra.mxu0 0.0
      %8213 = vmatprep.subr.mxu0 0.0
      %8214 = vmatpush1.msra.mxu0 0.0
      %8215 = vmatprep.subr.mxu0 0.0
      %8216 = vmatpush1.msra.mxu0 0.0
      %8217 = vmatprep.subr.mxu0 0.0
      %8218 = vmatpush1.msra.mxu0 0.0
      %8219 = vmatprep.subr.mxu0 0.0
      %8220 = vmatpush1.msra.mxu0 0.0
      %8221 = vmatprep.subr.mxu0 0.0
      %8222 = vmatpush1.msra.mxu0 0.0
      %8223 = vmatprep.mubr.f32.mxu0 0.0
      %8224 = vmatmul.mubr.f32.gmra.mrb[0].mxu0 %v8015
      %v8225 = vpop.f32.mrb[0].mxu0
      %v8226 = vadd.f32 0.0, %v8225
      %v8227 = vpop.f32.mrb[0].mxu0
      %v8228 = vadd.f32 0.0, %v8227
      %8229 = vdwg.mxu0
      %8230 = vmatprep.subr.mxu0 %v8005
      %8231 = vmatpush1.msra.mxu0 %v8004
      %8232 = vmatprep.subr.mxu0 0.0
      %8233 = vmatpush1.msra.mxu0 0.0
      %8234 = vmatprep.subr.mxu0 0.0
      %8235 = vmatpush1.msra.mxu0 0.0
      %8236 = vmatprep.subr.mxu0 0.0
      %8237 = vmatpush1.msra.mxu0 0.0
      %8238 = vmatprep.subr.mxu0 0.0
      %8239 = vmatpush1.msra.mxu0 0.0
      %8240 = vmatprep.subr.mxu0 0.0
      %8241 = vmatpush1.msra.mxu0 0.0
      %8242 = vmatprep.subr.mxu0 0.0
      %8243 = vmatpush1.msra.mxu0 0.0
      %8244 = vmatprep.subr.mxu0 0.0
      %8245 = vmatpush1.msra.mxu0 0.0
      %8246 = vmatprep.subr.mxu0 0.0
      %8247 = vmatpush1.msra.mxu0 0.0
      %8248 = vmatprep.subr.mxu0 0.0
      %8249 = vmatpush1.msra.mxu0 0.0
      %8250 = vmatprep.subr.mxu0 0.0
      %8251 = vmatpush1.msra.mxu0 0.0
      %8252 = vmatprep.subr.mxu0 0.0
      %8253 = vmatpush1.msra.mxu0 0.0
      %8254 = vmatprep.subr.mxu0 0.0
      %8255 = vmatpush1.msra.mxu0 0.0
      %8256 = vmatprep.subr.mxu0 0.0
      %8257 = vmatpush1.msra.mxu0 0.0
      %8258 = vmatprep.subr.mxu0 0.0
      %8259 = vmatpush1.msra.mxu0 0.0
      %8260 = vmatprep.subr.mxu0 0.0
      %8261 = vmatpush1.msra.mxu0 0.0
      %8262 = vmatprep.subr.mxu0 0.0
      %8263 = vmatpush1.msra.mxu0 0.0
      %8264 = vmatprep.subr.mxu0 0.0
      %8265 = vmatpush1.msra.mxu0 0.0
      %8266 = vmatprep.subr.mxu0 0.0
      %8267 = vmatpush1.msra.mxu0 0.0
      %8268 = vmatprep.subr.mxu0 0.0
      %8269 = vmatpush1.msra.mxu0 0.0
      %8270 = vmatprep.subr.mxu0 0.0
      %8271 = vmatpush1.msra.mxu0 0.0
      %8272 = vmatprep.subr.mxu0 0.0
      %8273 = vmatpush1.msra.mxu0 0.0
      %8274 = vmatprep.subr.mxu0 0.0
      %8275 = vmatpush1.msra.mxu0 0.0
      %8276 = vmatprep.subr.mxu0 0.0
      %8277 = vmatpush1.msra.mxu0 0.0
      %8278 = vmatprep.subr.mxu0 0.0
      %8279 = vmatpush1.msra.mxu0 0.0
      %8280 = vmatprep.subr.mxu0 0.0
      %8281 = vmatpush1.msra.mxu0 0.0
      %8282 = vmatprep.subr.mxu0 0.0
      %8283 = vmatpush1.msra.mxu0 0.0
      %8284 = vmatprep.subr.mxu0 0.0
      %8285 = vmatpush1.msra.mxu0 0.0
      %8286 = vmatprep.subr.mxu0 0.0
      %8287 = vmatpush1.msra.mxu0 0.0
      %8288 = vmatprep.subr.mxu0 0.0
      %8289 = vmatpush1.msra.mxu0 0.0
      %8290 = vmatprep.subr.mxu0 0.0
      %8291 = vmatpush1.msra.mxu0 0.0
      %8292 = vmatprep.subr.mxu0 0.0
      %8293 = vmatpush1.msra.mxu0 0.0
      %8294 = vmatprep.mubr.f32.mxu0 0.0
      %8295 = vmatmul.mubr.f32.gmra.mrb[0].mxu0 %v8015
      %v8296 = vpop.f32.mrb[0].mxu0
      %v8297 = vadd.f32 0.0, %v8296
      %v8298 = vpop.f32.mrb[0].mxu0
      %v8299 = vadd.f32 0.0, %v8298
      %8300 = vdwg.mxu0
      %v8301 = vadd.f32 %v7969, %v8084
      %v8302 = vadd.f32 %v7970, %v8086
      %v8303 = vadd.f32 %v7971, %v8155
      %v8304 = vadd.f32 %v7972, %v8157
      %v8305 = vadd.f32 %v7973, %v8226
      %v8306 = vadd.f32 %v7974, %v8228
      %v8307 = vadd.f32 %v7975, %v8297
      %v8308 = vadd.f32 %v7976, %v8299
      %s8309 = scalar_lea.vmem %s2, 192
      %v8310 = vld [vmem:[%s8309] sm:$0xff]
      %8311 = vrot.lane.b32.xlu0 %v6301, 36
      %v8312 = vpop.permute.xlu0 %8311
      %8313 = vrot.lane.b32.xlu0 %v6302, 36
      %v8314 = vpop.permute.xlu0 %8313
      %8315 = vrot.lane.b32.xlu0 %v6303, 36
      %v8316 = vpop.permute.xlu0 %8315
      %8317 = vrot.lane.b32.xlu0 %v6304, 36
      %v8318 = vpop.permute.xlu0 %8317
      %8319 = vrot.lane.b32.xlu0 %v6305, 36
      %v8320 = vpop.permute.xlu0 %8319
      %8321 = vrot.lane.b32.xlu0 %v6306, 36
      %v8322 = vpop.permute.xlu0 %8321
      %8323 = vrot.lane.b32.xlu0 %v6307, 36
      %v8324 = vpop.permute.xlu0 %8323
      %8325 = vrot.lane.b32.xlu0 %v6308, 36
      %v8326 = vpop.permute.xlu0 %8325
      %8327 = vrot.lane.b32.xlu0 %v6309, 36
      %v8328 = vpop.permute.xlu0 %8327
      %vm8329 = vcmask 293888
      %v8330 = vsel %vm8329, %v8312, %v8314
      %v8331 = vsel %vm8329, %v8314, %v8316
      %v8332 = vsel %vm8329, %v8316, %v8318
      %v8333 = vsel %vm8329, %v8318, %v8320
      %v8334 = vsel %vm8329, %v8320, %v8322
      %v8335 = vsel %vm8329, %v8322, %v8324
      %v8336 = vsel %vm8329, %v8324, %v8326
      %v8337 = vsel %vm8329, %v8326, %v8328
      %v8347 = vsel %vm337, %v8310, 0
      %8349 = vmatprep.subr.mxu0 %v8331
      %8350 = vmatpush1.msra.mxu0 %v8330
      %8351 = vmatprep.subr.mxu0 0.0
      %8352 = vmatpush1.msra.mxu0 0.0
      %8353 = vmatprep.subr.mxu0 0.0
      %8354 = vmatpush1.msra.mxu0 0.0
      %8355 = vmatprep.subr.mxu0 0.0
      %8356 = vmatpush1.msra.mxu0 0.0
      %8357 = vmatprep.subr.mxu0 0.0
      %8358 = vmatpush1.msra.mxu0 0.0
      %8359 = vmatprep.subr.mxu0 0.0
      %8360 = vmatpush1.msra.mxu0 0.0
      %8361 = vmatprep.subr.mxu0 0.0
      %8362 = vmatpush1.msra.mxu0 0.0
      %8363 = vmatprep.subr.mxu0 0.0
      %8364 = vmatpush1.msra.mxu0 0.0
      %8365 = vmatprep.subr.mxu0 0.0
      %8366 = vmatpush1.msra.mxu0 0.0
      %8367 = vmatprep.subr.mxu0 0.0
      %8368 = vmatpush1.msra.mxu0 0.0
      %8369 = vmatprep.subr.mxu0 0.0
      %8370 = vmatpush1.msra.mxu0 0.0
      %8371 = vmatprep.subr.mxu0 0.0
      %8372 = vmatpush1.msra.mxu0 0.0
      %8373 = vmatprep.subr.mxu0 0.0
      %8374 = vmatpush1.msra.mxu0 0.0
      %8375 = vmatprep.subr.mxu0 0.0
      %8376 = vmatpush1.msra.mxu0 0.0
      %8377 = vmatprep.subr.mxu0 0.0
      %8378 = vmatpush1.msra.mxu0 0.0
      %8379 = vmatprep.subr.mxu0 0.0
      %8380 = vmatpush1.msra.mxu0 0.0
      %8381 = vmatprep.subr.mxu0 0.0
      %8382 = vmatpush1.msra.mxu0 0.0
      %8383 = vmatprep.subr.mxu0 0.0
      %8384 = vmatpush1.msra.mxu0 0.0
      %8385 = vmatprep.subr.mxu0 0.0
      %8386 = vmatpush1.msra.mxu0 0.0
      %8387 = vmatprep.subr.mxu0 0.0
      %8388 = vmatpush1.msra.mxu0 0.0
      %8389 = vmatprep.subr.mxu0 0.0
      %8390 = vmatpush1.msra.mxu0 0.0
      %8391 = vmatprep.subr.mxu0 0.0
      %8392 = vmatpush1.msra.mxu0 0.0
      %8393 = vmatprep.subr.mxu0 0.0
      %8394 = vmatpush1.msra.mxu0 0.0
      %8395 = vmatprep.subr.mxu0 0.0
      %8396 = vmatpush1.msra.mxu0 0.0
      %8397 = vmatprep.subr.mxu0 0.0
      %8398 = vmatpush1.msra.mxu0 0.0
      %8399 = vmatprep.subr.mxu0 0.0
      %8400 = vmatpush1.msra.mxu0 0.0
      %8401 = vmatprep.subr.mxu0 0.0
      %8402 = vmatpush1.msra.mxu0 0.0
      %8403 = vmatprep.subr.mxu0 0.0
      %8404 = vmatpush1.msra.mxu0 0.0
      %8405 = vmatprep.subr.mxu0 0.0
      %8406 = vmatpush1.msra.mxu0 0.0
      %8407 = vmatprep.subr.mxu0 0.0
      %8408 = vmatpush1.msra.mxu0 0.0
      %8409 = vmatprep.subr.mxu0 0.0
      %8410 = vmatpush1.msra.mxu0 0.0
      %8411 = vmatprep.subr.mxu0 0.0
      %8412 = vmatpush1.msra.mxu0 0.0
      %8413 = vmatprep.mubr.f32.mxu0 0.0
      %8414 = vmatmul.mubr.f32.gmra.mrb[0].mxu0 %v8347
      %v8415 = vpop.f32.mrb[0].mxu0
      %v8416 = vadd.f32 0.0, %v8415
      %v8417 = vpop.f32.mrb[0].mxu0
      %v8418 = vadd.f32 0.0, %v8417
      %8419 = vdwg.mxu0
      %8420 = vmatprep.subr.mxu0 %v8333
      %8421 = vmatpush1.msra.mxu0 %v8332
      %8422 = vmatprep.subr.mxu0 0.0
      %8423 = vmatpush1.msra.mxu0 0.0
      %8424 = vmatprep.subr.mxu0 0.0
      %8425 = vmatpush1.msra.mxu0 0.0
      %8426 = vmatprep.subr.mxu0 0.0
      %8427 = vmatpush1.msra.mxu0 0.0
      %8428 = vmatprep.subr.mxu0 0.0
      %8429 = vmatpush1.msra.mxu0 0.0
      %8430 = vmatprep.subr.mxu0 0.0
      %8431 = vmatpush1.msra.mxu0 0.0
      %8432 = vmatprep.subr.mxu0 0.0
      %8433 = vmatpush1.msra.mxu0 0.0
      %8434 = vmatprep.subr.mxu0 0.0
      %8435 = vmatpush1.msra.mxu0 0.0
      %8436 = vmatprep.subr.mxu0 0.0
      %8437 = vmatpush1.msra.mxu0 0.0
      %8438 = vmatprep.subr.mxu0 0.0
      %8439 = vmatpush1.msra.mxu0 0.0
      %8440 = vmatprep.subr.mxu0 0.0
      %8441 = vmatpush1.msra.mxu0 0.0
      %8442 = vmatprep.subr.mxu0 0.0
      %8443 = vmatpush1.msra.mxu0 0.0
      %8444 = vmatprep.subr.mxu0 0.0
      %8445 = vmatpush1.msra.mxu0 0.0
      %8446 = vmatprep.subr.mxu0 0.0
      %8447 = vmatpush1.msra.mxu0 0.0
      %8448 = vmatprep.subr.mxu0 0.0
      %8449 = vmatpush1.msra.mxu0 0.0
      %8450 = vmatprep.subr.mxu0 0.0
      %8451 = vmatpush1.msra.mxu0 0.0
      %8452 = vmatprep.subr.mxu0 0.0
      %8453 = vmatpush1.msra.mxu0 0.0
      %8454 = vmatprep.subr.mxu0 0.0
      %8455 = vmatpush1.msra.mxu0 0.0
      %8456 = vmatprep.subr.mxu0 0.0
      %8457 = vmatpush1.msra.mxu0 0.0
      %8458 = vmatprep.subr.mxu0 0.0
      %8459 = vmatpush1.msra.mxu0 0.0
      %8460 = vmatprep.subr.mxu0 0.0
      %8461 = vmatpush1.msra.mxu0 0.0
      %8462 = vmatprep.subr.mxu0 0.0
      %8463 = vmatpush1.msra.mxu0 0.0
      %8464 = vmatprep.subr.mxu0 0.0
      %8465 = vmatpush1.msra.mxu0 0.0
      %8466 = vmatprep.subr.mxu0 0.0
      %8467 = vmatpush1.msra.mxu0 0.0
      %8468 = vmatprep.subr.mxu0 0.0
      %8469 = vmatpush1.msra.mxu0 0.0
      %8470 = vmatprep.subr.mxu0 0.0
      %8471 = vmatpush1.msra.mxu0 0.0
      %8472 = vmatprep.subr.mxu0 0.0
      %8473 = vmatpush1.msra.mxu0 0.0
      %8474 = vmatprep.subr.mxu0 0.0
      %8475 = vmatpush1.msra.mxu0 0.0
      %8476 = vmatprep.subr.mxu0 0.0
      %8477 = vmatpush1.msra.mxu0 0.0
      %8478 = vmatprep.subr.mxu0 0.0
      %8479 = vmatpush1.msra.mxu0 0.0
      %8480 = vmatprep.subr.mxu0 0.0
      %8481 = vmatpush1.msra.mxu0 0.0
      %8482 = vmatprep.subr.mxu0 0.0
      %8483 = vmatpush1.msra.mxu0 0.0
      %8484 = vmatprep.mubr.f32.mxu0 0.0
      %8485 = vmatmul.mubr.f32.gmra.mrb[0].mxu0 %v8347
      %v8486 = vpop.f32.mrb[0].mxu0
      %v8487 = vadd.f32 0.0, %v8486
      %v8488 = vpop.f32.mrb[0].mxu0
      %v8489 = vadd.f32 0.0, %v8488
      %8490 = vdwg.mxu0
      %8491 = vmatprep.subr.mxu0 %v8335
      %8492 = vmatpush1.msra.mxu0 %v8334
      %8493 = vmatprep.subr.mxu0 0.0
      %8494 = vmatpush1.msra.mxu0 0.0
      %8495 = vmatprep.subr.mxu0 0.0
      %8496 = vmatpush1.msra.mxu0 0.0
      %8497 = vmatprep.subr.mxu0 0.0
      %8498 = vmatpush1.msra.mxu0 0.0
      %8499 = vmatprep.subr.mxu0 0.0
      %8500 = vmatpush1.msra.mxu0 0.0
      %8501 = vmatprep.subr.mxu0 0.0
      %8502 = vmatpush1.msra.mxu0 0.0
      %8503 = vmatprep.subr.mxu0 0.0
      %8504 = vmatpush1.msra.mxu0 0.0
      %8505 = vmatprep.subr.mxu0 0.0
      %8506 = vmatpush1.msra.mxu0 0.0
      %8507 = vmatprep.subr.mxu0 0.0
      %8508 = vmatpush1.msra.mxu0 0.0
      %8509 = vmatprep.subr.mxu0 0.0
      %8510 = vmatpush1.msra.mxu0 0.0
      %8511 = vmatprep.subr.mxu0 0.0
      %8512 = vmatpush1.msra.mxu0 0.0
      %8513 = vmatprep.subr.mxu0 0.0
      %8514 = vmatpush1.msra.mxu0 0.0
      %8515 = vmatprep.subr.mxu0 0.0
      %8516 = vmatpush1.msra.mxu0 0.0
      %8517 = vmatprep.subr.mxu0 0.0
      %8518 = vmatpush1.msra.mxu0 0.0
      %8519 = vmatprep.subr.mxu0 0.0
      %8520 = vmatpush1.msra.mxu0 0.0
      %8521 = vmatprep.subr.mxu0 0.0
      %8522 = vmatpush1.msra.mxu0 0.0
      %8523 = vmatprep.subr.mxu0 0.0
      %8524 = vmatpush1.msra.mxu0 0.0
      %8525 = vmatprep.subr.mxu0 0.0
      %8526 = vmatpush1.msra.mxu0 0.0
      %8527 = vmatprep.subr.mxu0 0.0
      %8528 = vmatpush1.msra.mxu0 0.0
      %8529 = vmatprep.subr.mxu0 0.0
      %8530 = vmatpush1.msra.mxu0 0.0
      %8531 = vmatprep.subr.mxu0 0.0
      %8532 = vmatpush1.msra.mxu0 0.0
      %8533 = vmatprep.subr.mxu0 0.0
      %8534 = vmatpush1.msra.mxu0 0.0
      %8535 = vmatprep.subr.mxu0 0.0
      %8536 = vmatpush1.msra.mxu0 0.0
      %8537 = vmatprep.subr.mxu0 0.0
      %8538 = vmatpush1.msra.mxu0 0.0
      %8539 = vmatprep.subr.mxu0 0.0
      %8540 = vmatpush1.msra.mxu0 0.0
      %8541 = vmatprep.subr.mxu0 0.0
      %8542 = vmatpush1.msra.mxu0 0.0
      %8543 = vmatprep.subr.mxu0 0.0
      %8544 = vmatpush1.msra.mxu0 0.0
      %8545 = vmatprep.subr.mxu0 0.0
      %8546 = vmatpush1.msra.mxu0 0.0
      %8547 = vmatprep.subr.mxu0 0.0
      %8548 = vmatpush1.msra.mxu0 0.0
      %8549 = vmatprep.subr.mxu0 0.0
      %8550 = vmatpush1.msra.mxu0 0.0
      %8551 = vmatprep.subr.mxu0 0.0
      %8552 = vmatpush1.msra.mxu0 0.0
      %8553 = vmatprep.subr.mxu0 0.0
      %8554 = vmatpush1.msra.mxu0 0.0
      %8555 = vmatprep.mubr.f32.mxu0 0.0
      %8556 = vmatmul.mubr.f32.gmra.mrb[0].mxu0 %v8347
      %v8557 = vpop.f32.mrb[0].mxu0
      %v8558 = vadd.f32 0.0, %v8557
      %v8559 = vpop.f32.mrb[0].mxu0
      %v8560 = vadd.f32 0.0, %v8559
      %8561 = vdwg.mxu0
      %8562 = vmatprep.subr.mxu0 %v8337
      %8563 = vmatpush1.msra.mxu0 %v8336
      %8564 = vmatprep.subr.mxu0 0.0
      %8565 = vmatpush1.msra.mxu0 0.0
      %8566 = vmatprep.subr.mxu0 0.0
      %8567 = vmatpush1.msra.mxu0 0.0
      %8568 = vmatprep.subr.mxu0 0.0
      %8569 = vmatpush1.msra.mxu0 0.0
      %8570 = vmatprep.subr.mxu0 0.0
      %8571 = vmatpush1.msra.mxu0 0.0
      %8572 = vmatprep.subr.mxu0 0.0
      %8573 = vmatpush1.msra.mxu0 0.0
      %8574 = vmatprep.subr.mxu0 0.0
      %8575 = vmatpush1.msra.mxu0 0.0
      %8576 = vmatprep.subr.mxu0 0.0
      %8577 = vmatpush1.msra.mxu0 0.0
      %8578 = vmatprep.subr.mxu0 0.0
      %8579 = vmatpush1.msra.mxu0 0.0
      %8580 = vmatprep.subr.mxu0 0.0
      %8581 = vmatpush1.msra.mxu0 0.0
      %8582 = vmatprep.subr.mxu0 0.0
      %8583 = vmatpush1.msra.mxu0 0.0
      %8584 = vmatprep.subr.mxu0 0.0
      %8585 = vmatpush1.msra.mxu0 0.0
      %8586 = vmatprep.subr.mxu0 0.0
      %8587 = vmatpush1.msra.mxu0 0.0
      %8588 = vmatprep.subr.mxu0 0.0
      %8589 = vmatpush1.msra.mxu0 0.0
      %8590 = vmatprep.subr.mxu0 0.0
      %8591 = vmatpush1.msra.mxu0 0.0
      %8592 = vmatprep.subr.mxu0 0.0
      %8593 = vmatpush1.msra.mxu0 0.0
      %8594 = vmatprep.subr.mxu0 0.0
      %8595 = vmatpush1.msra.mxu0 0.0
      %8596 = vmatprep.subr.mxu0 0.0
      %8597 = vmatpush1.msra.mxu0 0.0
      %8598 = vmatprep.subr.mxu0 0.0
      %8599 = vmatpush1.msra.mxu0 0.0
      %8600 = vmatprep.subr.mxu0 0.0
      %8601 = vmatpush1.msra.mxu0 0.0
      %8602 = vmatprep.subr.mxu0 0.0
      %8603 = vmatpush1.msra.mxu0 0.0
      %8604 = vmatprep.subr.mxu0 0.0
      %8605 = vmatpush1.msra.mxu0 0.0
      %8606 = vmatprep.subr.mxu0 0.0
      %8607 = vmatpush1.msra.mxu0 0.0
      %8608 = vmatprep.subr.mxu0 0.0
      %8609 = vmatpush1.msra.mxu0 0.0
      %8610 = vmatprep.subr.mxu0 0.0
      %8611 = vmatpush1.msra.mxu0 0.0
      %8612 = vmatprep.subr.mxu0 0.0
      %8613 = vmatpush1.msra.mxu0 0.0
      %8614 = vmatprep.subr.mxu0 0.0
      %8615 = vmatpush1.msra.mxu0 0.0
      %8616 = vmatprep.subr.mxu0 0.0
      %8617 = vmatpush1.msra.mxu0 0.0
      %8618 = vmatprep.subr.mxu0 0.0
      %8619 = vmatpush1.msra.mxu0 0.0
      %8620 = vmatprep.subr.mxu0 0.0
      %8621 = vmatpush1.msra.mxu0 0.0
      %8622 = vmatprep.subr.mxu0 0.0
      %8623 = vmatpush1.msra.mxu0 0.0
      %8624 = vmatprep.subr.mxu0 0.0
      %8625 = vmatpush1.msra.mxu0 0.0
      %8626 = vmatprep.mubr.f32.mxu0 0.0
      %8627 = vmatmul.mubr.f32.gmra.mrb[0].mxu0 %v8347
      %v8628 = vpop.f32.mrb[0].mxu0
      %v8629 = vadd.f32 0.0, %v8628
      %v8630 = vpop.f32.mrb[0].mxu0
      %v8631 = vadd.f32 0.0, %v8630
      %8632 = vdwg.mxu0
      %v8633 = vadd.f32 %v8301, %v8416
      %v8634 = vadd.f32 %v8302, %v8418
      %v8635 = vadd.f32 %v8303, %v8487
      %v8636 = vadd.f32 %v8304, %v8489
      %v8637 = vadd.f32 %v8305, %v8558
      %v8638 = vadd.f32 %v8306, %v8560
      %v8639 = vadd.f32 %v8307, %v8629
      %v8640 = vadd.f32 %v8308, %v8631
      %s8641 = scalar_lea.vmem %s2, 200
      %v8642 = vld [vmem:[%s8641] sm:$0xff]
      %8643 = vrot.lane.b32.xlu0 %v6301, 35
      %v8644 = vpop.permute.xlu0 %8643
      %8645 = vrot.lane.b32.xlu0 %v6302, 35
      %v8646 = vpop.permute.xlu0 %8645
      %8647 = vrot.lane.b32.xlu0 %v6303, 35
      %v8648 = vpop.permute.xlu0 %8647
      %8649 = vrot.lane.b32.xlu0 %v6304, 35
      %v8650 = vpop.permute.xlu0 %8649
      %8651 = vrot.lane.b32.xlu0 %v6305, 35
      %v8652 = vpop.permute.xlu0 %8651
      %8653 = vrot.lane.b32.xlu0 %v6306, 35
      %v8654 = vpop.permute.xlu0 %8653
      %8655 = vrot.lane.b32.xlu0 %v6307, 35
      %v8656 = vpop.permute.xlu0 %8655
      %8657 = vrot.lane.b32.xlu0 %v6308, 35
      %v8658 = vpop.permute.xlu0 %8657
      %8659 = vrot.lane.b32.xlu0 %v6309, 35
      %v8660 = vpop.permute.xlu0 %8659
      %vm8661 = vcmask 285696
      %v8662 = vsel %vm8661, %v8644, %v8646
      %v8663 = vsel %vm8661, %v8646, %v8648
      %v8664 = vsel %vm8661, %v8648, %v8650
      %v8665 = vsel %vm8661, %v8650, %v8652
      %v8666 = vsel %vm8661, %v8652, %v8654
      %v8667 = vsel %vm8661, %v8654, %v8656
      %v8668 = vsel %vm8661, %v8656, %v8658
      %v8669 = vsel %vm8661, %v8658, %v8660
      %v8679 = vsel %vm337, %v8642, 0
      %8681 = vmatprep.subr.mxu0 %v8663
      %8682 = vmatpush1.msra.mxu0 %v8662
      %8683 = vmatprep.subr.mxu0 0.0
      %8684 = vmatpush1.msra.mxu0 0.0
      %8685 = vmatprep.subr.mxu0 0.0
      %8686 = vmatpush1.msra.mxu0 0.0
      %8687 = vmatprep.subr.mxu0 0.0
      %8688 = vmatpush1.msra.mxu0 0.0
      %8689 = vmatprep.subr.mxu0 0.0
      %8690 = vmatpush1.msra.mxu0 0.0
      %8691 = vmatprep.subr.mxu0 0.0
      %8692 = vmatpush1.msra.mxu0 0.0
      %8693 = vmatprep.subr.mxu0 0.0
      %8694 = vmatpush1.msra.mxu0 0.0
      %8695 = vmatprep.subr.mxu0 0.0
      %8696 = vmatpush1.msra.mxu0 0.0
      %8697 = vmatprep.subr.mxu0 0.0
      %8698 = vmatpush1.msra.mxu0 0.0
      %8699 = vmatprep.subr.mxu0 0.0
      %8700 = vmatpush1.msra.mxu0 0.0
      %8701 = vmatprep.subr.mxu0 0.0
      %8702 = vmatpush1.msra.mxu0 0.0
      %8703 = vmatprep.subr.mxu0 0.0
      %8704 = vmatpush1.msra.mxu0 0.0
      %8705 = vmatprep.subr.mxu0 0.0
      %8706 = vmatpush1.msra.mxu0 0.0
      %8707 = vmatprep.subr.mxu0 0.0
      %8708 = vmatpush1.msra.mxu0 0.0
      %8709 = vmatprep.subr.mxu0 0.0
      %8710 = vmatpush1.msra.mxu0 0.0
      %8711 = vmatprep.subr.mxu0 0.0
      %8712 = vmatpush1.msra.mxu0 0.0
      %8713 = vmatprep.subr.mxu0 0.0
      %8714 = vmatpush1.msra.mxu0 0.0
      %8715 = vmatprep.subr.mxu0 0.0
      %8716 = vmatpush1.msra.mxu0 0.0
      %8717 = vmatprep.subr.mxu0 0.0
      %8718 = vmatpush1.msra.mxu0 0.0
      %8719 = vmatprep.subr.mxu0 0.0
      %8720 = vmatpush1.msra.mxu0 0.0
      %8721 = vmatprep.subr.mxu0 0.0
      %8722 = vmatpush1.msra.mxu0 0.0
      %8723 = vmatprep.subr.mxu0 0.0
      %8724 = vmatpush1.msra.mxu0 0.0
      %8725 = vmatprep.subr.mxu0 0.0
      %8726 = vmatpush1.msra.mxu0 0.0
      %8727 = vmatprep.subr.mxu0 0.0
      %8728 = vmatpush1.msra.mxu0 0.0
      %8729 = vmatprep.subr.mxu0 0.0
      %8730 = vmatpush1.msra.mxu0 0.0
      %8731 = vmatprep.subr.mxu0 0.0
      %8732 = vmatpush1.msra.mxu0 0.0
      %8733 = vmatprep.subr.mxu0 0.0
      %8734 = vmatpush1.msra.mxu0 0.0
      %8735 = vmatprep.subr.mxu0 0.0
      %8736 = vmatpush1.msra.mxu0 0.0
      %8737 = vmatprep.subr.mxu0 0.0
      %8738 = vmatpush1.msra.mxu0 0.0
      %8739 = vmatprep.subr.mxu0 0.0
      %8740 = vmatpush1.msra.mxu0 0.0
      %8741 = vmatprep.subr.mxu0 0.0
      %8742 = vmatpush1.msra.mxu0 0.0
      %8743 = vmatprep.subr.mxu0 0.0
      %8744 = vmatpush1.msra.mxu0 0.0
      %8745 = vmatprep.mubr.f32.mxu0 0.0
      %8746 = vmatmul.mubr.f32.gmra.mrb[0].mxu0 %v8679
      %v8747 = vpop.f32.mrb[0].mxu0
      %v8748 = vadd.f32 0.0, %v8747
      %v8749 = vpop.f32.mrb[0].mxu0
      %v8750 = vadd.f32 0.0, %v8749
      %8751 = vdwg.mxu0
      %8752 = vmatprep.subr.mxu0 %v8665
      %8753 = vmatpush1.msra.mxu0 %v8664
      %8754 = vmatprep.subr.mxu0 0.0
      %8755 = vmatpush1.msra.mxu0 0.0
      %8756 = vmatprep.subr.mxu0 0.0
      %8757 = vmatpush1.msra.mxu0 0.0
      %8758 = vmatprep.subr.mxu0 0.0
      %8759 = vmatpush1.msra.mxu0 0.0
      %8760 = vmatprep.subr.mxu0 0.0
      %8761 = vmatpush1.msra.mxu0 0.0
      %8762 = vmatprep.subr.mxu0 0.0
      %8763 = vmatpush1.msra.mxu0 0.0
      %8764 = vmatprep.subr.mxu0 0.0
      %8765 = vmatpush1.msra.mxu0 0.0
      %8766 = vmatprep.subr.mxu0 0.0
      %8767 = vmatpush1.msra.mxu0 0.0
      %8768 = vmatprep.subr.mxu0 0.0
      %8769 = vmatpush1.msra.mxu0 0.0
      %8770 = vmatprep.subr.mxu0 0.0
      %8771 = vmatpush1.msra.mxu0 0.0
      %8772 = vmatprep.subr.mxu0 0.0
      %8773 = vmatpush1.msra.mxu0 0.0
      %8774 = vmatprep.subr.mxu0 0.0
      %8775 = vmatpush1.msra.mxu0 0.0
      %8776 = vmatprep.subr.mxu0 0.0
      %8777 = vmatpush1.msra.mxu0 0.0
      %8778 = vmatprep.subr.mxu0 0.0
      %8779 = vmatpush1.msra.mxu0 0.0
      %8780 = vmatprep.subr.mxu0 0.0
      %8781 = vmatpush1.msra.mxu0 0.0
      %8782 = vmatprep.subr.mxu0 0.0
      %8783 = vmatpush1.msra.mxu0 0.0
      %8784 = vmatprep.subr.mxu0 0.0
      %8785 = vmatpush1.msra.mxu0 0.0
      %8786 = vmatprep.subr.mxu0 0.0
      %8787 = vmatpush1.msra.mxu0 0.0
      %8788 = vmatprep.subr.mxu0 0.0
      %8789 = vmatpush1.msra.mxu0 0.0
      %8790 = vmatprep.subr.mxu0 0.0
      %8791 = vmatpush1.msra.mxu0 0.0
      %8792 = vmatprep.subr.mxu0 0.0
      %8793 = vmatpush1.msra.mxu0 0.0
      %8794 = vmatprep.subr.mxu0 0.0
      %8795 = vmatpush1.msra.mxu0 0.0
      %8796 = vmatprep.subr.mxu0 0.0
      %8797 = vmatpush1.msra.mxu0 0.0
      %8798 = vmatprep.subr.mxu0 0.0
      %8799 = vmatpush1.msra.mxu0 0.0
      %8800 = vmatprep.subr.mxu0 0.0
      %8801 = vmatpush1.msra.mxu0 0.0
      %8802 = vmatprep.subr.mxu0 0.0
      %8803 = vmatpush1.msra.mxu0 0.0
      %8804 = vmatprep.subr.mxu0 0.0
      %8805 = vmatpush1.msra.mxu0 0.0
      %8806 = vmatprep.subr.mxu0 0.0
      %8807 = vmatpush1.msra.mxu0 0.0
      %8808 = vmatprep.subr.mxu0 0.0
      %8809 = vmatpush1.msra.mxu0 0.0
      %8810 = vmatprep.subr.mxu0 0.0
      %8811 = vmatpush1.msra.mxu0 0.0
      %8812 = vmatprep.subr.mxu0 0.0
      %8813 = vmatpush1.msra.mxu0 0.0
      %8814 = vmatprep.subr.mxu0 0.0
      %8815 = vmatpush1.msra.mxu0 0.0
      %8816 = vmatprep.mubr.f32.mxu0 0.0
      %8817 = vmatmul.mubr.f32.gmra.mrb[0].mxu0 %v8679
      %v8818 = vpop.f32.mrb[0].mxu0
      %v8819 = vadd.f32 0.0, %v8818
      %v8820 = vpop.f32.mrb[0].mxu0
      %v8821 = vadd.f32 0.0, %v8820
      %8822 = vdwg.mxu0
      %8823 = vmatprep.subr.mxu0 %v8667
      %8824 = vmatpush1.msra.mxu0 %v8666
      %8825 = vmatprep.subr.mxu0 0.0
      %8826 = vmatpush1.msra.mxu0 0.0
      %8827 = vmatprep.subr.mxu0 0.0
      %8828 = vmatpush1.msra.mxu0 0.0
      %8829 = vmatprep.subr.mxu0 0.0
      %8830 = vmatpush1.msra.mxu0 0.0
      %8831 = vmatprep.subr.mxu0 0.0
      %8832 = vmatpush1.msra.mxu0 0.0
      %8833 = vmatprep.subr.mxu0 0.0
      %8834 = vmatpush1.msra.mxu0 0.0
      %8835 = vmatprep.subr.mxu0 0.0
      %8836 = vmatpush1.msra.mxu0 0.0
      %8837 = vmatprep.subr.mxu0 0.0
      %8838 = vmatpush1.msra.mxu0 0.0
      %8839 = vmatprep.subr.mxu0 0.0
      %8840 = vmatpush1.msra.mxu0 0.0
      %8841 = vmatprep.subr.mxu0 0.0
      %8842 = vmatpush1.msra.mxu0 0.0
      %8843 = vmatprep.subr.mxu0 0.0
      %8844 = vmatpush1.msra.mxu0 0.0
      %8845 = vmatprep.subr.mxu0 0.0
      %8846 = vmatpush1.msra.mxu0 0.0
      %8847 = vmatprep.subr.mxu0 0.0
      %8848 = vmatpush1.msra.mxu0 0.0
      %8849 = vmatprep.subr.mxu0 0.0
      %8850 = vmatpush1.msra.mxu0 0.0
      %8851 = vmatprep.subr.mxu0 0.0
      %8852 = vmatpush1.msra.mxu0 0.0
      %8853 = vmatprep.subr.mxu0 0.0
      %8854 = vmatpush1.msra.mxu0 0.0
      %8855 = vmatprep.subr.mxu0 0.0
      %8856 = vmatpush1.msra.mxu0 0.0
      %8857 = vmatprep.subr.mxu0 0.0
      %8858 = vmatpush1.msra.mxu0 0.0
      %8859 = vmatprep.subr.mxu0 0.0
      %8860 = vmatpush1.msra.mxu0 0.0
      %8861 = vmatprep.subr.mxu0 0.0
      %8862 = vmatpush1.msra.mxu0 0.0
      %8863 = vmatprep.subr.mxu0 0.0
      %8864 = vmatpush1.msra.mxu0 0.0
      %8865 = vmatprep.subr.mxu0 0.0
      %8866 = vmatpush1.msra.mxu0 0.0
      %8867 = vmatprep.subr.mxu0 0.0
      %8868 = vmatpush1.msra.mxu0 0.0
      %8869 = vmatprep.subr.mxu0 0.0
      %8870 = vmatpush1.msra.mxu0 0.0
      %8871 = vmatprep.subr.mxu0 0.0
      %8872 = vmatpush1.msra.mxu0 0.0
      %8873 = vmatprep.subr.mxu0 0.0
      %8874 = vmatpush1.msra.mxu0 0.0
      %8875 = vmatprep.subr.mxu0 0.0
      %8876 = vmatpush1.msra.mxu0 0.0
      %8877 = vmatprep.subr.mxu0 0.0
      %8878 = vmatpush1.msra.mxu0 0.0
      %8879 = vmatprep.subr.mxu0 0.0
      %8880 = vmatpush1.msra.mxu0 0.0
      %8881 = vmatprep.subr.mxu0 0.0
      %8882 = vmatpush1.msra.mxu0 0.0
      %8883 = vmatprep.subr.mxu0 0.0
      %8884 = vmatpush1.msra.mxu0 0.0
      %8885 = vmatprep.subr.mxu0 0.0
      %8886 = vmatpush1.msra.mxu0 0.0
      %8887 = vmatprep.mubr.f32.mxu0 0.0
      %8888 = vmatmul.mubr.f32.gmra.mrb[0].mxu0 %v8679
      %v8889 = vpop.f32.mrb[0].mxu0
      %v8890 = vadd.f32 0.0, %v8889
      %v8891 = vpop.f32.mrb[0].mxu0
      %v8892 = vadd.f32 0.0, %v8891
      %8893 = vdwg.mxu0
      %8894 = vmatprep.subr.mxu0 %v8669
      %8895 = vmatpush1.msra.mxu0 %v8668
      %8896 = vmatprep.subr.mxu0 0.0
      %8897 = vmatpush1.msra.mxu0 0.0
      %8898 = vmatprep.subr.mxu0 0.0
      %8899 = vmatpush1.msra.mxu0 0.0
      %8900 = vmatprep.subr.mxu0 0.0
      %8901 = vmatpush1.msra.mxu0 0.0
      %8902 = vmatprep.subr.mxu0 0.0
      %8903 = vmatpush1.msra.mxu0 0.0
      %8904 = vmatprep.subr.mxu0 0.0
      %8905 = vmatpush1.msra.mxu0 0.0
      %8906 = vmatprep.subr.mxu0 0.0
      %8907 = vmatpush1.msra.mxu0 0.0
      %8908 = vmatprep.subr.mxu0 0.0
      %8909 = vmatpush1.msra.mxu0 0.0
      %8910 = vmatprep.subr.mxu0 0.0
      %8911 = vmatpush1.msra.mxu0 0.0
      %8912 = vmatprep.subr.mxu0 0.0
      %8913 = vmatpush1.msra.mxu0 0.0
      %8914 = vmatprep.subr.mxu0 0.0
      %8915 = vmatpush1.msra.mxu0 0.0
      %8916 = vmatprep.subr.mxu0 0.0
      %8917 = vmatpush1.msra.mxu0 0.0
      %8918 = vmatprep.subr.mxu0 0.0
      %8919 = vmatpush1.msra.mxu0 0.0
      %8920 = vmatprep.subr.mxu0 0.0
      %8921 = vmatpush1.msra.mxu0 0.0
      %8922 = vmatprep.subr.mxu0 0.0
      %8923 = vmatpush1.msra.mxu0 0.0
      %8924 = vmatprep.subr.mxu0 0.0
      %8925 = vmatpush1.msra.mxu0 0.0
      %8926 = vmatprep.subr.mxu0 0.0
      %8927 = vmatpush1.msra.mxu0 0.0
      %8928 = vmatprep.subr.mxu0 0.0
      %8929 = vmatpush1.msra.mxu0 0.0
      %8930 = vmatprep.subr.mxu0 0.0
      %8931 = vmatpush1.msra.mxu0 0.0
      %8932 = vmatprep.subr.mxu0 0.0
      %8933 = vmatpush1.msra.mxu0 0.0
      %8934 = vmatprep.subr.mxu0 0.0
      %8935 = vmatpush1.msra.mxu0 0.0
      %8936 = vmatprep.subr.mxu0 0.0
      %8937 = vmatpush1.msra.mxu0 0.0
      %8938 = vmatprep.subr.mxu0 0.0
      %8939 = vmatpush1.msra.mxu0 0.0
      %8940 = vmatprep.subr.mxu0 0.0
      %8941 = vmatpush1.msra.mxu0 0.0
      %8942 = vmatprep.subr.mxu0 0.0
      %8943 = vmatpush1.msra.mxu0 0.0
      %8944 = vmatprep.subr.mxu0 0.0
      %8945 = vmatpush1.msra.mxu0 0.0
      %8946 = vmatprep.subr.mxu0 0.0
      %8947 = vmatpush1.msra.mxu0 0.0
      %8948 = vmatprep.subr.mxu0 0.0
      %8949 = vmatpush1.msra.mxu0 0.0
      %8950 = vmatprep.subr.mxu0 0.0
      %8951 = vmatpush1.msra.mxu0 0.0
      %8952 = vmatprep.subr.mxu0 0.0
      %8953 = vmatpush1.msra.mxu0 0.0
      %8954 = vmatprep.subr.mxu0 0.0
      %8955 = vmatpush1.msra.mxu0 0.0
      %8956 = vmatprep.subr.mxu0 0.0
      %8957 = vmatpush1.msra.mxu0 0.0
      %8958 = vmatprep.mubr.f32.mxu0 0.0
      %8959 = vmatmul.mubr.f32.gmra.mrb[0].mxu0 %v8679
      %v8960 = vpop.f32.mrb[0].mxu0
      %v8961 = vadd.f32 0.0, %v8960
      %v8962 = vpop.f32.mrb[0].mxu0
      %v8963 = vadd.f32 0.0, %v8962
      %8964 = vdwg.mxu0
      %v8965 = vadd.f32 %v8633, %v8748
      %v8966 = vadd.f32 %v8634, %v8750
      %v8967 = vadd.f32 %v8635, %v8819
      %v8968 = vadd.f32 %v8636, %v8821
      %v8969 = vadd.f32 %v8637, %v8890
      %v8970 = vadd.f32 %v8638, %v8892
      %v8971 = vadd.f32 %v8639, %v8961
      %v8972 = vadd.f32 %v8640, %v8963
      %s8973 = scalar_lea.vmem %s2, 208
      %v8974 = vld [vmem:[%s8973] sm:$0xff]
      %8975 = vrot.lane.b32.xlu0 %v6301, 34
      %v8976 = vpop.permute.xlu0 %8975
      %8977 = vrot.lane.b32.xlu0 %v6302, 34
      %v8978 = vpop.permute.xlu0 %8977
      %8979 = vrot.lane.b32.xlu0 %v6303, 34
      %v8980 = vpop.permute.xlu0 %8979
      %8981 = vrot.lane.b32.xlu0 %v6304, 34
      %v8982 = vpop.permute.xlu0 %8981
      %8983 = vrot.lane.b32.xlu0 %v6305, 34
      %v8984 = vpop.permute.xlu0 %8983
      %8985 = vrot.lane.b32.xlu0 %v6306, 34
      %v8986 = vpop.permute.xlu0 %8985
      %8987 = vrot.lane.b32.xlu0 %v6307, 34
      %v8988 = vpop.permute.xlu0 %8987
      %8989 = vrot.lane.b32.xlu0 %v6308, 34
      %v8990 = vpop.permute.xlu0 %8989
      %8991 = vrot.lane.b32.xlu0 %v6309, 34
      %v8992 = vpop.permute.xlu0 %8991
      %vm8993 = vcmask 277504
      %v8994 = vsel %vm8993, %v8976, %v8978
      %v8995 = vsel %vm8993, %v8978, %v8980
      %v8996 = vsel %vm8993, %v8980, %v8982
      %v8997 = vsel %vm8993, %v8982, %v8984
      %v8998 = vsel %vm8993, %v8984, %v8986
      %v8999 = vsel %vm8993, %v8986, %v8988
      %v9000 = vsel %vm8993, %v8988, %v8990
      %v9001 = vsel %vm8993, %v8990, %v8992
      %v9011 = vsel %vm337, %v8974, 0
      %9013 = vmatprep.subr.mxu0 %v8995
      %9014 = vmatpush1.msra.mxu0 %v8994
      %9015 = vmatprep.subr.mxu0 0.0
      %9016 = vmatpush1.msra.mxu0 0.0
      %9017 = vmatprep.subr.mxu0 0.0
      %9018 = vmatpush1.msra.mxu0 0.0
      %9019 = vmatprep.subr.mxu0 0.0
      %9020 = vmatpush1.msra.mxu0 0.0
      %9021 = vmatprep.subr.mxu0 0.0
      %9022 = vmatpush1.msra.mxu0 0.0
      %9023 = vmatprep.subr.mxu0 0.0
      %9024 = vmatpush1.msra.mxu0 0.0
      %9025 = vmatprep.subr.mxu0 0.0
      %9026 = vmatpush1.msra.mxu0 0.0
      %9027 = vmatprep.subr.mxu0 0.0
      %9028 = vmatpush1.msra.mxu0 0.0
      %9029 = vmatprep.subr.mxu0 0.0
      %9030 = vmatpush1.msra.mxu0 0.0
      %9031 = vmatprep.subr.mxu0 0.0
      %9032 = vmatpush1.msra.mxu0 0.0
      %9033 = vmatprep.subr.mxu0 0.0
      %9034 = vmatpush1.msra.mxu0 0.0
      %9035 = vmatprep.subr.mxu0 0.0
      %9036 = vmatpush1.msra.mxu0 0.0
      %9037 = vmatprep.subr.mxu0 0.0
      %9038 = vmatpush1.msra.mxu0 0.0
      %9039 = vmatprep.subr.mxu0 0.0
      %9040 = vmatpush1.msra.mxu0 0.0
      %9041 = vmatprep.subr.mxu0 0.0
      %9042 = vmatpush1.msra.mxu0 0.0
      %9043 = vmatprep.subr.mxu0 0.0
      %9044 = vmatpush1.msra.mxu0 0.0
      %9045 = vmatprep.subr.mxu0 0.0
      %9046 = vmatpush1.msra.mxu0 0.0
      %9047 = vmatprep.subr.mxu0 0.0
      %9048 = vmatpush1.msra.mxu0 0.0
      %9049 = vmatprep.subr.mxu0 0.0
      %9050 = vmatpush1.msra.mxu0 0.0
      %9051 = vmatprep.subr.mxu0 0.0
      %9052 = vmatpush1.msra.mxu0 0.0
      %9053 = vmatprep.subr.mxu0 0.0
      %9054 = vmatpush1.msra.mxu0 0.0
      %9055 = vmatprep.subr.mxu0 0.0
      %9056 = vmatpush1.msra.mxu0 0.0
      %9057 = vmatprep.subr.mxu0 0.0
      %9058 = vmatpush1.msra.mxu0 0.0
      %9059 = vmatprep.subr.mxu0 0.0
      %9060 = vmatpush1.msra.mxu0 0.0
      %9061 = vmatprep.subr.mxu0 0.0
      %9062 = vmatpush1.msra.mxu0 0.0
      %9063 = vmatprep.subr.mxu0 0.0
      %9064 = vmatpush1.msra.mxu0 0.0
      %9065 = vmatprep.subr.mxu0 0.0
      %9066 = vmatpush1.msra.mxu0 0.0
      %9067 = vmatprep.subr.mxu0 0.0
      %9068 = vmatpush1.msra.mxu0 0.0
      %9069 = vmatprep.subr.mxu0 0.0
      %9070 = vmatpush1.msra.mxu0 0.0
      %9071 = vmatprep.subr.mxu0 0.0
      %9072 = vmatpush1.msra.mxu0 0.0
      %9073 = vmatprep.subr.mxu0 0.0
      %9074 = vmatpush1.msra.mxu0 0.0
      %9075 = vmatprep.subr.mxu0 0.0
      %9076 = vmatpush1.msra.mxu0 0.0
      %9077 = vmatprep.mubr.f32.mxu0 0.0
      %9078 = vmatmul.mubr.f32.gmra.mrb[0].mxu0 %v9011
      %v9079 = vpop.f32.mrb[0].mxu0
      %v9080 = vadd.f32 0.0, %v9079
      %v9081 = vpop.f32.mrb[0].mxu0
      %v9082 = vadd.f32 0.0, %v9081
      %9083 = vdwg.mxu0
      %9084 = vmatprep.subr.mxu0 %v8997
      %9085 = vmatpush1.msra.mxu0 %v8996
      %9086 = vmatprep.subr.mxu0 0.0
      %9087 = vmatpush1.msra.mxu0 0.0
      %9088 = vmatprep.subr.mxu0 0.0
      %9089 = vmatpush1.msra.mxu0 0.0
      %9090 = vmatprep.subr.mxu0 0.0
      %9091 = vmatpush1.msra.mxu0 0.0
      %9092 = vmatprep.subr.mxu0 0.0
      %9093 = vmatpush1.msra.mxu0 0.0
      %9094 = vmatprep.subr.mxu0 0.0
      %9095 = vmatpush1.msra.mxu0 0.0
      %9096 = vmatprep.subr.mxu0 0.0
      %9097 = vmatpush1.msra.mxu0 0.0
      %9098 = vmatprep.subr.mxu0 0.0
      %9099 = vmatpush1.msra.mxu0 0.0
      %9100 = vmatprep.subr.mxu0 0.0
      %9101 = vmatpush1.msra.mxu0 0.0
      %9102 = vmatprep.subr.mxu0 0.0
      %9103 = vmatpush1.msra.mxu0 0.0
      %9104 = vmatprep.subr.mxu0 0.0
      %9105 = vmatpush1.msra.mxu0 0.0
      %9106 = vmatprep.subr.mxu0 0.0
      %9107 = vmatpush1.msra.mxu0 0.0
      %9108 = vmatprep.subr.mxu0 0.0
      %9109 = vmatpush1.msra.mxu0 0.0
      %9110 = vmatprep.subr.mxu0 0.0
      %9111 = vmatpush1.msra.mxu0 0.0
      %9112 = vmatprep.subr.mxu0 0.0
      %9113 = vmatpush1.msra.mxu0 0.0
      %9114 = vmatprep.subr.mxu0 0.0
      %9115 = vmatpush1.msra.mxu0 0.0
      %9116 = vmatprep.subr.mxu0 0.0
      %9117 = vmatpush1.msra.mxu0 0.0
      %9118 = vmatprep.subr.mxu0 0.0
      %9119 = vmatpush1.msra.mxu0 0.0
      %9120 = vmatprep.subr.mxu0 0.0
      %9121 = vmatpush1.msra.mxu0 0.0
      %9122 = vmatprep.subr.mxu0 0.0
      %9123 = vmatpush1.msra.mxu0 0.0
      %9124 = vmatprep.subr.mxu0 0.0
      %9125 = vmatpush1.msra.mxu0 0.0
      %9126 = vmatprep.subr.mxu0 0.0
      %9127 = vmatpush1.msra.mxu0 0.0
      %9128 = vmatprep.subr.mxu0 0.0
      %9129 = vmatpush1.msra.mxu0 0.0
      %9130 = vmatprep.subr.mxu0 0.0
      %9131 = vmatpush1.msra.mxu0 0.0
      %9132 = vmatprep.subr.mxu0 0.0
      %9133 = vmatpush1.msra.mxu0 0.0
      %9134 = vmatprep.subr.mxu0 0.0
      %9135 = vmatpush1.msra.mxu0 0.0
      %9136 = vmatprep.subr.mxu0 0.0
      %9137 = vmatpush1.msra.mxu0 0.0
      %9138 = vmatprep.subr.mxu0 0.0
      %9139 = vmatpush1.msra.mxu0 0.0
      %9140 = vmatprep.subr.mxu0 0.0
      %9141 = vmatpush1.msra.mxu0 0.0
      %9142 = vmatprep.subr.mxu0 0.0
      %9143 = vmatpush1.msra.mxu0 0.0
      %9144 = vmatprep.subr.mxu0 0.0
      %9145 = vmatpush1.msra.mxu0 0.0
      %9146 = vmatprep.subr.mxu0 0.0
      %9147 = vmatpush1.msra.mxu0 0.0
      %9148 = vmatprep.mubr.f32.mxu0 0.0
      %9149 = vmatmul.mubr.f32.gmra.mrb[0].mxu0 %v9011
      %v9150 = vpop.f32.mrb[0].mxu0
      %v9151 = vadd.f32 0.0, %v9150
      %v9152 = vpop.f32.mrb[0].mxu0
      %v9153 = vadd.f32 0.0, %v9152
      %9154 = vdwg.mxu0
      %9155 = vmatprep.subr.mxu0 %v8999
      %9156 = vmatpush1.msra.mxu0 %v8998
      %9157 = vmatprep.subr.mxu0 0.0
      %9158 = vmatpush1.msra.mxu0 0.0
      %9159 = vmatprep.subr.mxu0 0.0
      %9160 = vmatpush1.msra.mxu0 0.0
      %9161 = vmatprep.subr.mxu0 0.0
      %9162 = vmatpush1.msra.mxu0 0.0
      %9163 = vmatprep.subr.mxu0 0.0
      %9164 = vmatpush1.msra.mxu0 0.0
      %9165 = vmatprep.subr.mxu0 0.0
      %9166 = vmatpush1.msra.mxu0 0.0
      %9167 = vmatprep.subr.mxu0 0.0
      %9168 = vmatpush1.msra.mxu0 0.0
      %9169 = vmatprep.subr.mxu0 0.0
      %9170 = vmatpush1.msra.mxu0 0.0
      %9171 = vmatprep.subr.mxu0 0.0
      %9172 = vmatpush1.msra.mxu0 0.0
      %9173 = vmatprep.subr.mxu0 0.0
      %9174 = vmatpush1.msra.mxu0 0.0
      %9175 = vmatprep.subr.mxu0 0.0
      %9176 = vmatpush1.msra.mxu0 0.0
      %9177 = vmatprep.subr.mxu0 0.0
      %9178 = vmatpush1.msra.mxu0 0.0
      %9179 = vmatprep.subr.mxu0 0.0
      %9180 = vmatpush1.msra.mxu0 0.0
      %9181 = vmatprep.subr.mxu0 0.0
      %9182 = vmatpush1.msra.mxu0 0.0
      %9183 = vmatprep.subr.mxu0 0.0
      %9184 = vmatpush1.msra.mxu0 0.0
      %9185 = vmatprep.subr.mxu0 0.0
      %9186 = vmatpush1.msra.mxu0 0.0
      %9187 = vmatprep.subr.mxu0 0.0
      %9188 = vmatpush1.msra.mxu0 0.0
      %9189 = vmatprep.subr.mxu0 0.0
      %9190 = vmatpush1.msra.mxu0 0.0
      %9191 = vmatprep.subr.mxu0 0.0
      %9192 = vmatpush1.msra.mxu0 0.0
      %9193 = vmatprep.subr.mxu0 0.0
      %9194 = vmatpush1.msra.mxu0 0.0
      %9195 = vmatprep.subr.mxu0 0.0
      %9196 = vmatpush1.msra.mxu0 0.0
      %9197 = vmatprep.subr.mxu0 0.0
      %9198 = vmatpush1.msra.mxu0 0.0
      %9199 = vmatprep.subr.mxu0 0.0
      %9200 = vmatpush1.msra.mxu0 0.0
      %9201 = vmatprep.subr.mxu0 0.0
      %9202 = vmatpush1.msra.mxu0 0.0
      %9203 = vmatprep.subr.mxu0 0.0
      %9204 = vmatpush1.msra.mxu0 0.0
      %9205 = vmatprep.subr.mxu0 0.0
      %9206 = vmatpush1.msra.mxu0 0.0
      %9207 = vmatprep.subr.mxu0 0.0
      %9208 = vmatpush1.msra.mxu0 0.0
      %9209 = vmatprep.subr.mxu0 0.0
      %9210 = vmatpush1.msra.mxu0 0.0
      %9211 = vmatprep.subr.mxu0 0.0
      %9212 = vmatpush1.msra.mxu0 0.0
      %9213 = vmatprep.subr.mxu0 0.0
      %9214 = vmatpush1.msra.mxu0 0.0
      %9215 = vmatprep.subr.mxu0 0.0
      %9216 = vmatpush1.msra.mxu0 0.0
      %9217 = vmatprep.subr.mxu0 0.0
      %9218 = vmatpush1.msra.mxu0 0.0
      %9219 = vmatprep.mubr.f32.mxu0 0.0
      %9220 = vmatmul.mubr.f32.gmra.mrb[0].mxu0 %v9011
      %v9221 = vpop.f32.mrb[0].mxu0
      %v9222 = vadd.f32 0.0, %v9221
      %v9223 = vpop.f32.mrb[0].mxu0
      %v9224 = vadd.f32 0.0, %v9223
      %9225 = vdwg.mxu0
      %9226 = vmatprep.subr.mxu0 %v9001
      %9227 = vmatpush1.msra.mxu0 %v9000
      %9228 = vmatprep.subr.mxu0 0.0
      %9229 = vmatpush1.msra.mxu0 0.0
      %9230 = vmatprep.subr.mxu0 0.0
      %9231 = vmatpush1.msra.mxu0 0.0
      %9232 = vmatprep.subr.mxu0 0.0
      %9233 = vmatpush1.msra.mxu0 0.0
      %9234 = vmatprep.subr.mxu0 0.0
      %9235 = vmatpush1.msra.mxu0 0.0
      %9236 = vmatprep.subr.mxu0 0.0
      %9237 = vmatpush1.msra.mxu0 0.0
      %9238 = vmatprep.subr.mxu0 0.0
      %9239 = vmatpush1.msra.mxu0 0.0
      %9240 = vmatprep.subr.mxu0 0.0
      %9241 = vmatpush1.msra.mxu0 0.0
      %9242 = vmatprep.subr.mxu0 0.0
      %9243 = vmatpush1.msra.mxu0 0.0
      %9244 = vmatprep.subr.mxu0 0.0
      %9245 = vmatpush1.msra.mxu0 0.0
      %9246 = vmatprep.subr.mxu0 0.0
      %9247 = vmatpush1.msra.mxu0 0.0
      %9248 = vmatprep.subr.mxu0 0.0
      %9249 = vmatpush1.msra.mxu0 0.0
      %9250 = vmatprep.subr.mxu0 0.0
      %9251 = vmatpush1.msra.mxu0 0.0
      %9252 = vmatprep.subr.mxu0 0.0
      %9253 = vmatpush1.msra.mxu0 0.0
      %9254 = vmatprep.subr.mxu0 0.0
      %9255 = vmatpush1.msra.mxu0 0.0
      %9256 = vmatprep.subr.mxu0 0.0
      %9257 = vmatpush1.msra.mxu0 0.0
      %9258 = vmatprep.subr.mxu0 0.0
      %9259 = vmatpush1.msra.mxu0 0.0
      %9260 = vmatprep.subr.mxu0 0.0
      %9261 = vmatpush1.msra.mxu0 0.0
      %9262 = vmatprep.subr.mxu0 0.0
      %9263 = vmatpush1.msra.mxu0 0.0
      %9264 = vmatprep.subr.mxu0 0.0
      %9265 = vmatpush1.msra.mxu0 0.0
      %9266 = vmatprep.subr.mxu0 0.0
      %9267 = vmatpush1.msra.mxu0 0.0
      %9268 = vmatprep.subr.mxu0 0.0
      %9269 = vmatpush1.msra.mxu0 0.0
      %9270 = vmatprep.subr.mxu0 0.0
      %9271 = vmatpush1.msra.mxu0 0.0
      %9272 = vmatprep.subr.mxu0 0.0
      %9273 = vmatpush1.msra.mxu0 0.0
      %9274 = vmatprep.subr.mxu0 0.0
      %9275 = vmatpush1.msra.mxu0 0.0
      %9276 = vmatprep.subr.mxu0 0.0
      %9277 = vmatpush1.msra.mxu0 0.0
      %9278 = vmatprep.subr.mxu0 0.0
      %9279 = vmatpush1.msra.mxu0 0.0
      %9280 = vmatprep.subr.mxu0 0.0
      %9281 = vmatpush1.msra.mxu0 0.0
      %9282 = vmatprep.subr.mxu0 0.0
      %9283 = vmatpush1.msra.mxu0 0.0
      %9284 = vmatprep.subr.mxu0 0.0
      %9285 = vmatpush1.msra.mxu0 0.0
      %9286 = vmatprep.subr.mxu0 0.0
      %9287 = vmatpush1.msra.mxu0 0.0
      %9288 = vmatprep.subr.mxu0 0.0
      %9289 = vmatpush1.msra.mxu0 0.0
      %9290 = vmatprep.mubr.f32.mxu0 0.0
      %9291 = vmatmul.mubr.f32.gmra.mrb[0].mxu0 %v9011
      %v9292 = vpop.f32.mrb[0].mxu0
      %v9293 = vadd.f32 0.0, %v9292
      %v9294 = vpop.f32.mrb[0].mxu0
      %v9295 = vadd.f32 0.0, %v9294
      %9296 = vdwg.mxu0
      %v9297 = vadd.f32 %v8965, %v9080
      %v9298 = vadd.f32 %v8966, %v9082
      %v9299 = vadd.f32 %v8967, %v9151
      %v9300 = vadd.f32 %v8968, %v9153
      %v9301 = vadd.f32 %v8969, %v9222
      %v9302 = vadd.f32 %v8970, %v9224
      %v9303 = vadd.f32 %v8971, %v9293
      %v9304 = vadd.f32 %v8972, %v9295
      %v9305 = vsub.f32 0.0, %v9297
      %v9306 = vsub.f32 0.0, %v9298
      %v9307 = vsub.f32 0.0, %v9299
      %v9308 = vsub.f32 0.0, %v9300
      %v9309 = vsub.f32 0.0, %v9301
      %v9310 = vsub.f32 0.0, %v9302
      %v9311 = vsub.f32 0.0, %v9303
      %v9312 = vsub.f32 0.0, %v9304
      %v9313 = vmul.f32 %v9305, 1.442695
      %v9314 = vpow.pop %v9313
      %v9315 = vmul.f32 %v9306, 1.442695
      %v9316 = vpow.pop %v9315
      %v9317 = vmul.f32 %v9307, 1.442695
      %v9318 = vpow.pop %v9317
      %v9319 = vmul.f32 %v9308, 1.442695
      %v9320 = vpow.pop %v9319
      %v9321 = vmul.f32 %v9309, 1.442695
      %v9322 = vpow.pop %v9321
      %v9323 = vmul.f32 %v9310, 1.442695
      %v9324 = vpow.pop %v9323
      %v9325 = vmul.f32 %v9311, 1.442695
      %v9326 = vpow.pop %v9325
      %v9327 = vmul.f32 %v9312, 1.442695
      %v9328 = vpow.pop %v9327
      %v9329 = vadd.f32 %v9314, 1.0
      %v9330 = vadd.f32 %v9316, 1.0
      %v9331 = vadd.f32 %v9318, 1.0
      %v9332 = vadd.f32 %v9320, 1.0
      %v9333 = vadd.f32 %v9322, 1.0
      %v9334 = vadd.f32 %v9324, 1.0
      %v9335 = vadd.f32 %v9326, 1.0
      %v9336 = vadd.f32 %v9328, 1.0
      %v9337 = vrcp.pop %v9329
      %v9338 = vmul.f32 1.0, %v9337
      %v9339 = vrcp.pop %v9330
      %v9340 = vmul.f32 1.0, %v9339
      %v9341 = vrcp.pop %v9331
      %v9342 = vmul.f32 1.0, %v9341
      %v9343 = vrcp.pop %v9332
      %v9344 = vmul.f32 1.0, %v9343
      %v9345 = vrcp.pop %v9333
      %v9346 = vmul.f32 1.0, %v9345
      %v9347 = vrcp.pop %v9334
      %v9348 = vmul.f32 1.0, %v9347
      %v9349 = vrcp.pop %v9335
      %v9350 = vmul.f32 1.0, %v9349
      %v9351 = vrcp.pop %v9336
      %v9352 = vmul.f32 1.0, %v9351
      %9353 = vst [vmem:[%s305] sm:$0xff] %v9338
      %9354 = vst [vmem:[%s305 + $0x8] sm:$0xff] %v9340
      %9355 = vst [vmem:[%s305 + $0x10] sm:$0xff] %v9342
      %9356 = vst [vmem:[%s305 + $0x18] sm:$0xff] %v9344
      %9357 = vst [vmem:[%s305 + $0x20] sm:$0xff] %v9346
      %9358 = vst [vmem:[%s305 + $0x28] sm:$0xff] %v9348
      %9359 = vst [vmem:[%s305 + $0x30] sm:$0xff] %v9350
      %9360 = vst [vmem:[%s305 + $0x38] sm:$0xff] %v9352
      %s9361 = smul.u32 8, %s20
      %p9362 = scmp.lt.s32.totalorder %s19, 1
      %s9363 = scalar_select %p9362, %s19, 1
      %p9364 = scmp.lt.s32.totalorder %s9361, 7
      %s9365 = scalar_select %p9364, %s9361, 7
      %s9366 = smul.addr %s9363, 8
      %s9367 = sadd.s32 %s9365, %s9366
      %s9368 = smul.addr %s9367, 8
      %s9369 = scalar_lea.vmem %s4, %s9368
      // Predicated region
      $region37: #{conv3d_sigmoid_pallas.1} parent=35 // pred_check
        %p9370 = pneg %p149
      $region38: #{conv3d_sigmoid_pallas.1} parent=35 // pred_check_branch
        %9372 = sbr.rel (%p9370) target = $region40
      $region39: #{conv3d_sigmoid_pallas.1} parent=35 // pred_region
        %s9373 = smul.u32 8, %s20
      $region40: #{conv3d_sigmoid_pallas.1} parent=35 // pred_fallthru
        _
    $region36: #{conv3d_sigmoid_pallas.1} parent=5 // pred_fallthru
      _
    %p9374 = scmp.le.s32.totalorder 2, %s10
    // Predicated region
    $region41: #{conv3d_sigmoid_pallas.1} parent=5 // pred_check
      %p9375 = pneg %p9374
    $region42: #{conv3d_sigmoid_pallas.1} parent=5 // pred_check_branch
      %9377 = sbr.rel (%p9375) target = $region44
    $region43: #{conv3d_sigmoid_pallas.1} parent=5 // pred_region
      %s9378 = ssub.s32 %s10, 2
      // Predicated region
      $region45: #{conv3d_sigmoid_pallas.1} parent=43 // pred_check
        %p9379 = pneg %p155
      $region46: #{conv3d_sigmoid_pallas.1} parent=43 // pred_check_branch
        %9381 = sbr.rel (%p9379) target = $region48
      $region47: #{conv3d_sigmoid_pallas.1} parent=43 // pred_region
        %s9382 = smul.u32 8, %s22
        %p9383 = scmp.lt.s32.totalorder %s21, 1
        %s9384 = scalar_select %p9383, %s21, 1
        %p9385 = scmp.lt.s32.totalorder %s9382, 7
        %s9386 = scalar_select %p9385, %s9382, 7
        %s9387 = smul.addr %s9384, 8
        %s9388 = sadd.s32 %s9386, %s9387
        %s9389 = smul.addr %s9388, 8
        %s9390 = scalar_lea.vmem %s4, %s9389
      $region48: #{conv3d_sigmoid_pallas.1} parent=43 // pred_fallthru
        _
    $region44: #{conv3d_sigmoid_pallas.1} parent=5 // pred_fallthru
      _
  $region6: #{conv3d_sigmoid_pallas.1} parent=0 // loop_footer
    %s14 = sadd.s32 1, %s10
  $region7: #{conv3d_sigmoid_pallas.1} parent=0 // loop_footer_branch
    %9 = sbr.rel target = $region3
  $region8: #{conv3d_sigmoid_pallas.1} parent=0 // loop_exit
    _

</llo_original>
